<compile_context>
chip_gen: v6e
topology: v6e:2x2x1
jax: 0.10.0
libtpu: 0.0.40
codegen_flags: <defaults>
</compile_context>

<pallas_src>
import numpy as np
import jax
import jax.numpy as jnp
from jax import lax
from jax.experimental import pallas as pl
from jax.experimental.pallas import tpu as pltpu

ACT_DTYPE = jnp.bfloat16       # storage / MXU-input dtype for activations & weights
EPS = 1e-5                     # nn.InstanceNorm2d default
NEG_SLOPE = 0.2                # LeakyReLU slope


# ---------------------------------------------------------------------------
# Fused layer kernel (conv taps -> optional depthwise blur -> bias -> epilogue)
# ---------------------------------------------------------------------------

def _make_fused_kernel(*, conv_offsets, out_len, blur=None, epilogue=None):
    """Build a fused kernel body.

    conv_offsets : static lane offsets of the conv taps (im2col done in VMEM).
    out_len      : L0 = H * Ww (lane length of the output layout, Ww = W + 2*radius).
    blur         : None or (blur_offsets, blur_weights, mid_len) -> depthwise VPU stage.
    epilogue     : None or n_valid (=H*W) -> noise + LeakyReLU + InstanceNorm + StyleMod.
    """
    epi = epilogue

    def conv_stage(x_ref, w_ref, length):
        acc = None
        for t, off in enumerate(conv_offsets):
            xs = x_ref[0, :, off:off + length]                       # (C, length) bf16
            part = jnp.dot(w_ref[t], xs, preferred_element_type=jnp.float32)
            acc = part if acc is None else acc + part
        return acc                                                   # (O, length) f32

    def finish(acc, aux_ref, noise_ref, mask_out_ref, o_ref):
        aux = aux_ref[0]                                             # (O, 4) f32
        acc = acc + aux[:, 0:1]                                      # conv / post-blur bias
        if epi is not None:
            acc = acc + aux[:, 1:2] * noise_ref[0]                   # NoiseLayer
            acc = jnp.where(acc >= 0.0, acc, NEG_SLOPE * acc)        # LeakyReLU(0.2)
            acc = acc * mask_out_ref[...]                            # zero layout-junk columns
            inv_n = 1.0 / float(epi)
            mean = jnp.sum(acc, axis=1, keepdims=True) * inv_n       # InstanceNorm (biased var)
            var = jnp.sum(acc * acc, axis=1, keepdims=True) * inv_n - mean * mean
            acc = (acc - mean) * lax.rsqrt(jnp.maximum(var, 0.0) + EPS)
            acc = acc * (aux[:, 2:3] + 1.0) + aux[:, 3:4]            # StyleMod
        o_ref[0] = acc.astype(o_ref.dtype)

    if blur is not None:
        blur_offsets, blur_weights, mid_len = blur

        def kernel(x_ref, w_ref, aux_ref, noise_ref, mask_mid_ref, mask_out_ref,
                   o_ref, mid_ref):
            # stage 1: 3x3 conv (flipped weights), masked so the blur sees exact zero padding
            mid_ref[...] = conv_stage(x_ref, w_ref, mid_len) * mask_mid_ref[...]
            # stage 2: depthwise [1,2,1] (x) [1,2,1] / 16 blur -- scalar-weighted shifted adds
            acc = None
            for off, bw in zip(blur_offsets, blur_weights):
                part = bw * mid_ref[:, off:off + out_len]
                acc = part if acc is None else acc + part
            finish(acc, aux_ref, noise_ref, mask_out_ref, o_ref)
        return kernel

    if epi is not None:
        def kernel(x_ref, w_ref, aux_ref, noise_ref, mask_out_ref, o_ref):
            finish(conv_stage(x_ref, w_ref, out_len), aux_ref, noise_ref,
                   mask_out_ref, o_ref)
        return kernel

    def kernel(x_ref, w_ref, aux_ref, o_ref):                        # toRGB: conv + bias only
        finish(conv_stage(x_ref, w_ref, out_len), aux_ref, None, None, o_ref)
    return kernel


def fused_layer(x, w_taps, aux, noise=None, *, radius, blur=False, out_dtype=ACT_DTYPE):
    """One fused G_synthesis layer.

    x      : (B, C, H, W) activation.
    w_taps : (T, O, C) per-tap weight matrices (w_mul / flips already folded in).
    aux    : (B, O, 4) packed [bias, noise_weight, style_scale, style_shift].
    noise  : (B, 1, H, W) per-pixel noise, or None -> conv + bias only (toRGB).
    radius : in-kernel receptive radius (0: 1x1, 1: 3x3, 2: 3x3 conv + 3x3 blur).
    """
    B, C, H, W = x.shape
    T, O, _ = w_taps.shape
    R = radius
    Ww = W + 2 * R                       # row width of the flattened layout
    L0 = H * Ww                          # output lane length (junk cols masked / dropped)
    k = int(round(np.sqrt(T)))
    conv_offsets = tuple(u * Ww + v for u in range(k) for v in range(k))

    # Zero-pad by R on every side and flatten, so each conv tap is a constant lane offset
    # into one VMEM-resident tile (this *is* the im2col, but it never touches HBM).
    xp = jnp.pad(x.astype(ACT_DTYPE), ((0, 0), (0, 0), (R, R), (R, R)))
    xf = jnp.pad(xp.reshape(B, C, (H + 2 * R) * Ww), ((0, 0), (0, 0), (0, 4)))
    Lin = xf.shape[2]

    in_arrays = [xf, w_taps.astype(ACT_DTYPE), aux.astype(jnp.float32)]
    in_specs = [
        pl.BlockSpec((1, C, Lin), lambda b: (b, 0, 0)),
        pl.BlockSpec((T, O, C), lambda b: (0, 0, 0)),
        pl.BlockSpec((1, O, 4), lambda b: (b, 0, 0)),
    ]
    scratch_shapes = []
    blur_arg = None
    epi_arg = None

    if noise is not None:
        nz = jnp.pad(noise.astype(jnp.float32),
                     ((0, 0), (0, 0), (0, 0), (0, Ww - W))).reshape(B, 1, L0)
        in_arrays.append(nz)
        in_specs.append(pl.BlockSpec((1, 1, L0), lambda b: (b, 0, 0)))
        if blur:
            Lmid = (H + 2) * Ww + 2      # conv intermediate incl. the blur's zero halo
            p = np.arange(Lmid)
            mm = ((p // Ww >= 1) & (p // Ww <= H) & (p % Ww >= 1) & (p % Ww <= W))
            in_arrays.append(jnp.asarray(mm.astype(np.float32))[None, :])
            in_specs.append(pl.BlockSpec((1, Lmid), lambda b: (0, 0)))
            bk = np.array([1.0, 2.0, 1.0])
            bk2 = bk[:, None] * bk[None, :]
            bk2 = bk2 / bk2.sum()
            blur_arg = (tuple(u * Ww + v for u in range(3) for v in range(3)),
                        tuple(float(bk2[u, v]) for u in range(3) for v in range(3)),
                        Lmid)
            scratch_shapes.append(pltpu.VMEM((O, Lmid), jnp.float32))
        q = np.arange(L0)
        in_arrays.append(jnp.asarray((q % Ww < W).astype(np.float32))[None, :])
        in_specs.append(pl.BlockSpec((1, L0), lambda b: (0, 0)))
        epi_arg = H * W                  # InstanceNorm statistics over valid pixels only

    kernel = _make_fused_kernel(conv_offsets=conv_offsets, out_len=L0,
                                blur=blur_arg, epilogue=epi_arg)
    out = pl.pallas_call(
        kernel,
        out_shape=jax.ShapeDtypeStruct((B, O, L0), out_dtype),
        grid_spec=pltpu.PrefetchScalarGridSpec(
            num_scalar_prefetch=0,
            grid=(B,),
            in_specs=in_specs,
            out_specs=pl.BlockSpec((1, O, L0), lambda b: (b, 0, 0)),
            scratch_shapes=scratch_shapes,
        ),
        compiler_params=pltpu.CompilerParams(
            dimension_semantics=("parallel",),
            vmem_limit_bytes=32 * 1024 * 1024,
        ),
    )(*in_arrays)
    return out.reshape(B, O, H, Ww)[:, :, :, :W]


# ---------------------------------------------------------------------------
# Plain-JAX glue
# ---------------------------------------------------------------------------

def upscale2d(x, factor=2):
    """Nearest-neighbor upsample (Upscale2d with gain=1)."""
    return jnp.repeat(jnp.repeat(x, factor, axis=2), factor, axis=3)


def _style_scale_shift(latent, epi):
    """StyleMod's MyLinear (w_mul already folded into style_w)."""
    s = latent @ epi['style_w'].T + epi['style_b']            # (B, 2C)
    C = epi['noise_w'].shape[0]
    return s[:, :C], s[:, C:]


def _pack_aux(bias, noise_w, scale, shift):
    """Pack per-channel epilogue params into one lane-dense (B, O, 4) side tensor."""
    B, O = scale.shape
    b = jnp.broadcast_to(bias.reshape(1, O), (B, O))
    nw = jnp.broadcast_to(noise_w.reshape(1, O), (B, O))
    return jnp.stack([b, nw, scale, shift], axis=-1)


# ---------------------------------------------------------------------------
# Parameters (deterministic, shapes per G_synthesis.__init__) and one-time prep
# ---------------------------------------------------------------------------

def make_params(key, L, num_channels, resolution, fmap_base, fmap_max):
    resolution_log2 = int(np.log2(resolution))
    gain = float(np.sqrt(2.0))

    def nf(stage):
        return min(int(fmap_base / 2.0 ** stage), fmap_max)

    keys = iter(jax.random.split(key, 64))

    def conv_p(cin, cout, ksize, g):
        w = jax.random.normal(next(keys), (cout, cin, ksize, ksize), jnp.float32)
        return dict(w=w, w_mul=g * (cin * ksize ** 2) ** (-0.5),
                    b=jnp.zeros((cout,), jnp.float32))

    def epi_p(C):
        sw = jax.random.normal(next(keys), (2 * C, L), jnp.float32)
        return dict(noise_w=jnp.zeros((C,), jnp.float32),     # NoiseLayer init = zeros
                    style_w=sw,
                    style_b=jnp.zeros((2 * C,), jnp.float32),
                    style_wmul=float(L) ** (-0.5))            # gain=1.0, use_wscale=True

    nf0 = nf(1)
    params = dict(
        input=dict(const=jnp.ones((1, nf0, 4, 4), jnp.float32),
                   bias=jnp.ones((nf0,), jnp.float32),
                   epi1=epi_p(nf0),
                   conv=conv_p(nf0, nf0, 3, gain),
                   epi2=epi_p(nf0)),
        blocks=[])
    last = nf0
    for res in range(3, resolution_log2 + 1):
        ch = nf(res - 1)
        params['blocks'].append(dict(
            conv0=conv_p(last, ch, 3, gain), epi1=epi_p(ch),
            conv1=conv_p(ch, ch, 3, gain), epi2=epi_p(ch)))
        last = ch
    params['torgb'] = conv_p(last, num_channels, 1, 1.0)
    return params


def _taps_from_conv_weight(w, w_mul, flip=False):
    """(O, C, k, k) -> (k*k, O, C) per-tap matrices, w_mul (and 180deg flip) folded in."""
    if flip:
        w = w[:, :, ::-1, ::-1]
    O, C, k, _ = w.shape
    return jnp.transpose(w * w_mul, (2, 3, 0, 1)).reshape(k * k, O, C)


def _prep_epi(epi):
    return dict(noise_w=epi['noise_w'],
                style_w=epi['style_w'] * epi['style_wmul'],
                style_b=epi['style_b'])


def prepare_params(params):
    """Hoist all weight preprocessing out of the forward path (runs once)."""
    p = params['input']
    nf0 = p['const'].shape[1]
    prep_input = dict(
        const=p['const'], bias=p['bias'],
        eye_taps=jnp.eye(nf0, dtype=jnp.float32)[None],       # epilogue-only layer as identity conv
        conv_taps=_taps_from_conv_weight(p['conv']['w'], p['conv']['w_mul']),
        conv_b=p['conv']['b'],
        epi1=_prep_epi(p['epi1']), epi2=_prep_epi(p['epi2']))
    blocks = []
    for blk in params['blocks']:
        cin = blk['conv0']['w'].shape[1]
        # Fused-upscale path (cin < 512): conv_transpose2d(stride 2, summed 4x4 kernel)
        # == NN-upsample + 3x3 conv with the 180deg-flipped kernel (exact incl. borders).
        # Non-fused path (cin >= 512): NN-upsample + plain (unflipped) 3x3 conv.
        blocks.append(dict(
            conv0_taps=_taps_from_conv_weight(blk['conv0']['w'], blk['conv0']['w_mul'],
                                              flip=(cin < 512)),
            conv0_b=blk['conv0']['b'],
            conv1_taps=_taps_from_conv_weight(blk['conv1']['w'], blk['conv1']['w_mul']),
            conv1_b=blk['conv1']['b'],
            epi1=_prep_epi(blk['epi1']), epi2=_prep_epi(blk['epi2'])))
    t = params['torgb']
    return dict(input=prep_input, blocks=blocks,
                torgb=dict(taps=_taps_from_conv_weight(t['w'], t['w_mul']), b=t['b']))


# ---------------------------------------------------------------------------
# G_synthesis forward
# ---------------------------------------------------------------------------

def g_synthesis_forward(prep, dlatents, noises):
    """dlatents: (B, num_layers, L) -> rgb (B, num_channels, R, R)."""
    B = dlatents.shape[0]
    ib = prep['input']
    nf0 = ib['const'].shape[1]

    # InputBlock (4x4), const_input_layer=True: (const + bias) then epi1, fully fused.
    x = jnp.broadcast_to(ib['const'], (B, nf0, 4, 4))
    sc, sh = _style_scale_shift(dlatents[:, 0], ib['epi1'])
    aux = _pack_aux(ib['bias'], ib['epi1']['noise_w'], sc, sh)
    x = fused_layer(x, ib['eye_taps'], aux, noises[0], radius=0)

    # InputBlock 3x3 conv + epi2.
    sc, sh = _style_scale_shift(dlatents[:, 1], ib['epi2'])
    aux = _pack_aux(ib['conv_b'], ib['epi2']['noise_w'], sc, sh)
    x = fused_layer(x, ib['conv_taps'], aux, noises[1], radius=1)

    # GSynthesisBlocks.
    for bi, blk in enumerate(prep['blocks']):
        li = 2 * (bi + 1)
        x = upscale2d(x)  # TODO(synk): fuse the 2x upsample into the kernel (4 sub-pixel matmuls)
        # conv0_up (flipped 3x3) + blur + bias + epi1, one fused kernel.
        sc, sh = _style_scale_shift(dlatents[:, li], blk['epi1'])
        aux = _pack_aux(blk['conv0_b'], blk['epi1']['noise_w'], sc, sh)
        x = fused_layer(x, blk['conv0_taps'], aux, noises[li], radius=2, blur=True)
        # conv1 (3x3) + bias + epi2.
        sc, sh = _style_scale_shift(dlatents[:, li + 1], blk['epi2'])
        aux = _pack_aux(blk['conv1_b'], blk['epi2']['noise_w'], sc, sh)
        x = fused_layer(x, blk['conv1_taps'], aux, noises[li + 1], radius=1)

    # toRGB: 1x1 conv + bias, no epilogue.
    t = prep['torgb']
    O = t['b'].shape[0]
    aux = _pack_aux(t['b'], jnp.zeros_like(t['b']),
                    jnp.zeros((B, O), jnp.float32), jnp.zeros((B, O), jnp.float32))
    return fused_layer(x, t['taps'], aux, None, radius=0, out_dtype=jnp.float32)


# ---------------------------------------------------------------------------
# Main
# ---------------------------------------------------------------------------

if __name__ == "__main__":
    B = 2
    dlatent_size = 32
    num_channels = 3
    resolution = 16            # small: 4x4 -> 8x8 -> 16x16
    fmap_base, fmap_max = 128, 32

    resolution_log2 = int(np.log2(resolution))
    num_layers = 2 * resolution_log2 - 2

    key = jax.random.PRNGKey(0)
    kp, kd, kn = jax.random.split(key, 3)
    params = make_params(kp, dlatent_size, num_channels, resolution, fmap_base, fmap_max)
    prep = prepare_params(params)
    dlatents = jax.random.normal(kd, (B, num_layers, dlatent_size), jnp.float32)

    # randomize_noise -> explicit deterministic per-layer noise tensors (B, 1, r, r)
    noises = []
    nkeys = jax.random.split(kn, num_layers)
    for i in range(num_layers):
        r = 2 ** (2 + i // 2)
        noises.append(jax.random.normal(nkeys[i], (B, 1, r, r), jnp.float32))

    fwd = jax.jit(g_synthesis_forward)
    rgb = fwd(prep, dlatents, tuple(noises))
    rgb = jax.block_until_ready(rgb)

    assert rgb.shape == (B, num_channels, resolution, resolution), rgb.shape
    assert bool(jnp.all(jnp.isfinite(rgb)))
    print("KERNEL_OK")
</pallas_src>

<mosaic_0001>
module attributes {stable_mosaic.version = 11 : i64} {
  func.func @kernel(%arg0: i32, %arg1: memref<1x32x20xbf16, #tpu.memory_space<vmem>>, %arg2: memref<1x32x32xbf16, #tpu.memory_space<vmem>>, %arg3: memref<1x32x4xf32, #tpu.memory_space<vmem>>, %arg4: memref<1x1x16xf32, #tpu.memory_space<vmem>>, %arg5: memref<1x16xf32, #tpu.memory_space<vmem>>, %arg6: memref<1x32x16xbf16, #tpu.memory_space<vmem>>) attributes {dimension_semantics = [#tpu.dimension_semantics<parallel>], iteration_bounds = array<i64: 2>, scalar_prefetch = 0 : i64, scratch_operands = 0 : i64, tpu.core_type = #tpu.core_type<tc>, window_params = [{transform_indices = @transform_0, window_bounds = array<i64: 1, 32, 20>}, {pipeline_mode = #tpu.pipeline_mode<synchronous>, transform_indices = @transform_1, window_bounds = array<i64: 1, 32, 32>}, {transform_indices = @transform_2, window_bounds = array<i64: 1, 32, 4>}, {transform_indices = @transform_3, window_bounds = array<i64: 1, 1, 16>}, {pipeline_mode = #tpu.pipeline_mode<synchronous>, transform_indices = @transform_4, window_bounds = array<i64: 1, 16>}, {transform_indices = @transform_5, window_bounds = array<i64: 1, 32, 16>}]} {
    %c0 = arith.constant 0 : index
    %c0_0 = arith.constant 0 : index
    %c0_1 = arith.constant 0 : index
    %0 = vector.load %arg1[%c0, %c0_0, %c0_1] : memref<1x32x20xbf16, #tpu.memory_space<vmem>>, vector<1x32x16xbf16>
    %1 = vector.shape_cast %0 : vector<1x32x16xbf16> to vector<32x16xbf16>
    %c0_2 = arith.constant 0 : index
    %c0_3 = arith.constant 0 : index
    %c0_4 = arith.constant 0 : index
    %2 = vector.load %arg2[%c0_2, %c0_3, %c0_4] : memref<1x32x32xbf16, #tpu.memory_space<vmem>>, vector<1x32x32xbf16>
    %3 = vector.shape_cast %2 : vector<1x32x32xbf16> to vector<32x32xbf16>
    %cst = arith.constant dense<0.000000e+00> : vector<32x16xf32>
    %4 = tpu.matmul %3, %1, %cst {dimension_numbers = #tpu.dot_dimension_numbers<[1], [0], [0], [1], [0, 0, 1, 1], [], []>} : vector<32x32xbf16>, vector<32x16xbf16>, vector<32x16xf32> -> vector<32x16xf32>
    %c0_5 = arith.constant 0 : index
    %c0_6 = arith.constant 0 : index
    %c0_7 = arith.constant 0 : index
    %5 = vector.load %arg3[%c0_5, %c0_6, %c0_7] : memref<1x32x4xf32, #tpu.memory_space<vmem>>, vector<1x32x4xf32>
    %6 = vector.shape_cast %5 : vector<1x32x4xf32> to vector<32x4xf32>
    %7 = vector.extract_strided_slice %6 {offsets = [0, 0], sizes = [32, 1], strides = [1, 1]} : vector<32x4xf32> to vector<32x1xf32>
    %8 = vector.broadcast %7 : vector<32x1xf32> to vector<32x16xf32>
    %9 = arith.addf %4, %8 : vector<32x16xf32>
    %10 = vector.extract_strided_slice %6 {offsets = [0, 1], sizes = [32, 1], strides = [1, 1]} : vector<32x4xf32> to vector<32x1xf32>
    %c0_8 = arith.constant 0 : index
    %c0_9 = arith.constant 0 : index
    %c0_10 = arith.constant 0 : index
    %11 = vector.load %arg4[%c0_8, %c0_9, %c0_10] : memref<1x1x16xf32, #tpu.memory_space<vmem>>, vector<1x1x16xf32>
    %12 = vector.shape_cast %11 : vector<1x1x16xf32> to vector<1x16xf32>
    %13 = vector.broadcast %10 : vector<32x1xf32> to vector<32x16xf32>
    %14 = vector.broadcast %12 : vector<1x16xf32> to vector<32x16xf32>
    %15 = arith.mulf %13, %14 : vector<32x16xf32>
    %16 = arith.addf %9, %15 : vector<32x16xf32>
    %cst_11 = arith.constant 0.000000e+00 : f32
    %17 = vector.broadcast %cst_11 : f32 to vector<32x16xf32>
    %18 = arith.cmpf oge, %16, %17 : vector<32x16xf32>
    %cst_12 = arith.constant 2.000000e-01 : f32
    %19 = vector.broadcast %cst_12 : f32 to vector<32x16xf32>
    %20 = arith.mulf %19, %16 : vector<32x16xf32>
    %21 = arith.select %18, %16, %20 : vector<32x16xi1>, vector<32x16xf32>
    %c0_13 = arith.constant 0 : index
    %c0_14 = arith.constant 0 : index
    %22 = vector.load %arg5[%c0_13, %c0_14] : memref<1x16xf32, #tpu.memory_space<vmem>>, vector<1x16xf32>
    %23 = vector.broadcast %22 : vector<1x16xf32> to vector<32x16xf32>
    %24 = arith.mulf %21, %23 : vector<32x16xf32>
    %cst_15 = arith.constant dense<0.000000e+00> : vector<32xf32>
    %25 = vector.multi_reduction <add>, %24, %cst_15 [1] : vector<32x16xf32> to vector<32xf32>
    %26 = vector.shape_cast %25 : vector<32xf32> to vector<32x1xf32>
    %cst_16 = arith.constant 6.250000e-02 : f32
    %27 = vector.broadcast %cst_16 : f32 to vector<32x1xf32>
    %28 = arith.mulf %26, %27 : vector<32x1xf32>
    %29 = arith.mulf %24, %24 : vector<32x16xf32>
    %cst_17 = arith.constant dense<0.000000e+00> : vector<32xf32>
    %30 = vector.multi_reduction <add>, %29, %cst_17 [1] : vector<32x16xf32> to vector<32xf32>
    %31 = vector.shape_cast %30 : vector<32xf32> to vector<32x1xf32>
    %cst_18 = arith.constant 6.250000e-02 : f32
    %32 = vector.broadcast %cst_18 : f32 to vector<32x1xf32>
    %33 = arith.mulf %31, %32 : vector<32x1xf32>
    %34 = arith.mulf %28, %28 : vector<32x1xf32>
    %35 = arith.subf %33, %34 : vector<32x1xf32>
    %36 = vector.broadcast %28 : vector<32x1xf32> to vector<32x16xf32>
    %37 = arith.subf %24, %36 : vector<32x16xf32>
    %cst_19 = arith.constant 0.000000e+00 : f32
    %38 = vector.broadcast %cst_19 : f32 to vector<32x1xf32>
    %39 = arith.maximumf %35, %38 : vector<32x1xf32>
    %cst_20 = arith.constant 9.99999974E-6 : f32
    %40 = vector.broadcast %cst_20 : f32 to vector<32x1xf32>
    %41 = arith.addf %39, %40 : vector<32x1xf32>
    %42 = math.rsqrt %41 : vector<32x1xf32>
    %43 = vector.broadcast %42 : vector<32x1xf32> to vector<32x16xf32>
    %44 = arith.mulf %37, %43 : vector<32x16xf32>
    %45 = vector.extract_strided_slice %6 {offsets = [0, 2], sizes = [32, 1], strides = [1, 1]} : vector<32x4xf32> to vector<32x1xf32>
    %cst_21 = arith.constant 1.000000e+00 : f32
    %46 = vector.broadcast %cst_21 : f32 to vector<32x1xf32>
    %47 = arith.addf %45, %46 : vector<32x1xf32>
    %48 = vector.broadcast %47 : vector<32x1xf32> to vector<32x16xf32>
    %49 = arith.mulf %44, %48 : vector<32x16xf32>
    %50 = vector.extract_strided_slice %6 {offsets = [0, 3], sizes = [32, 1], strides = [1, 1]} : vector<32x4xf32> to vector<32x1xf32>
    %51 = vector.broadcast %50 : vector<32x1xf32> to vector<32x16xf32>
    %52 = arith.addf %49, %51 : vector<32x16xf32>
    %53 = arith.truncf %52 : vector<32x16xf32> to vector<32x16xbf16>
    %c0_22 = arith.constant 0 : index
    %c0_23 = arith.constant 0 : index
    %c0_24 = arith.constant 0 : index
    %54 = vector.load %arg6[%c0_22, %c0_23, %c0_24] : memref<1x32x16xbf16, #tpu.memory_space<vmem>>, vector<1x32x16xbf16>
    %55 = vector.shape_cast %54 : vector<1x32x16xbf16> to vector<32x16xbf16>
    %56 = vector.shape_cast %53 : vector<32x16xbf16> to vector<1x32x16xbf16>
    tpu.vector_store %arg6[%c0_22, %c0_23, %c0_24], %56 {strides = array<i32>} : memref<1x32x16xbf16, #tpu.memory_space<vmem>>, vector<1x32x16xbf16>,
    return
  }
  func.func @transform_0(%arg0: i32) -> (i32, i32, i32) {
    %c0_i32 = arith.constant 0 : i32
    %c0_i32_0 = arith.constant 0 : i32
    %c0_i32_1 = arith.constant 0 : i32
    return %arg0, %c0_i32, %c0_i32_0 : i32, i32, i32
  }
  func.func @transform_1(%arg0: i32) -> (i32, i32, i32) {
    %c0_i32 = arith.constant 0 : i32
    %c0_i32_0 = arith.constant 0 : i32
    %c0_i32_1 = arith.constant 0 : i32
    %c0_i32_2 = arith.constant 0 : i32
    return %c0_i32, %c0_i32_0, %c0_i32_1 : i32, i32, i32
  }
  func.func @transform_2(%arg0: i32) -> (i32, i32, i32) {
    %c0_i32 = arith.constant 0 : i32
    %c0_i32_0 = arith.constant 0 : i32
    %c0_i32_1 = arith.constant 0 : i32
    return %arg0, %c0_i32, %c0_i32_0 : i32, i32, i32
  }
  func.func @transform_3(%arg0: i32) -> (i32, i32, i32) {
    %c0_i32 = arith.constant 0 : i32
    %c0_i32_0 = arith.constant 0 : i32
    %c0_i32_1 = arith.constant 0 : i32
    return %arg0, %c0_i32, %c0_i32_0 : i32, i32, i32
  }
  func.func @transform_4(%arg0: i32) -> (i32, i32) {
    %c0_i32 = arith.constant 0 : i32
    %c0_i32_0 = arith.constant 0 : i32
    %c0_i32_1 = arith.constant 0 : i32
    return %c0_i32, %c0_i32_0 : i32, i32
  }
  func.func @transform_5(%arg0: i32) -> (i32, i32, i32) {
    %c0_i32 = arith.constant 0 : i32
    %c0_i32_0 = arith.constant 0 : i32
    %c0_i32_1 = arith.constant 0 : i32
    return %arg0, %c0_i32, %c0_i32_0 : i32, i32, i32
  }
}

module attributes {stable_mosaic.version = 11 : i64} {
  func.func @kernel(%arg0: i32, %arg1: memref<1x32x40xbf16, #tpu.memory_space<vmem>>, %arg2: memref<9x32x32xbf16, #tpu.memory_space<vmem>>, %arg3: memref<1x32x4xf32, #tpu.memory_space<vmem>>, %arg4: memref<1x1x24xf32, #tpu.memory_space<vmem>>, %arg5: memref<1x24xf32, #tpu.memory_space<vmem>>, %arg6: memref<1x32x24xbf16, #tpu.memory_space<vmem>>) attributes {dimension_semantics = [#tpu.dimension_semantics<parallel>], iteration_bounds = array<i64: 2>, scalar_prefetch = 0 : i64, scratch_operands = 0 : i64, tpu.core_type = #tpu.core_type<tc>, window_params = [{transform_indices = @transform_0, window_bounds = array<i64: 1, 32, 40>}, {pipeline_mode = #tpu.pipeline_mode<synchronous>, transform_indices = @transform_1, window_bounds = array<i64: 9, 32, 32>}, {transform_indices = @transform_2, window_bounds = array<i64: 1, 32, 4>}, {transform_indices = @transform_3, window_bounds = array<i64: 1, 1, 24>}, {pipeline_mode = #tpu.pipeline_mode<synchronous>, transform_indices = @transform_4, window_bounds = array<i64: 1, 24>}, {transform_indices = @transform_5, window_bounds = array<i64: 1, 32, 24>}]} {
    %c0 = arith.constant 0 : index
    %c0_0 = arith.constant 0 : index
    %c0_1 = arith.constant 0 : index
    %0 = vector.load %arg1[%c0, %c0_0, %c0_1] : memref<1x32x40xbf16, #tpu.memory_space<vmem>>, vector<1x32x24xbf16>
    %1 = vector.shape_cast %0 : vector<1x32x24xbf16> to vector<32x24xbf16>
    %c0_2 = arith.constant 0 : index
    %c0_3 = arith.constant 0 : index
    %c0_4 = arith.constant 0 : index
    %2 = vector.load %arg2[%c0_2, %c0_3, %c0_4] : memref<9x32x32xbf16, #tpu.memory_space<vmem>>, vector<1x32x32xbf16>
    %3 = vector.shape_cast %2 : vector<1x32x32xbf16> to vector<32x32xbf16>
    %cst = arith.constant dense<0.000000e+00> : vector<32x24xf32>
    %4 = tpu.matmul %3, %1, %cst {dimension_numbers = #tpu.dot_dimension_numbers<[1], [0], [0], [1], [0, 0, 1, 1], [], []>} : vector<32x32xbf16>, vector<32x24xbf16>, vector<32x24xf32> -> vector<32x24xf32>
    %c0_5 = arith.constant 0 : index
    %c0_6 = arith.constant 0 : index
    %c1 = arith.constant 1 : index
    %5 = vector.load %arg1[%c0_5, %c0_6, %c1] : memref<1x32x40xbf16, #tpu.memory_space<vmem>>, vector<1x32x24xbf16>
    %6 = vector.shape_cast %5 : vector<1x32x24xbf16> to vector<32x24xbf16>
    %c1_7 = arith.constant 1 : index
    %c0_8 = arith.constant 0 : index
    %c0_9 = arith.constant 0 : index
    %7 = vector.load %arg2[%c1_7, %c0_8, %c0_9] : memref<9x32x32xbf16, #tpu.memory_space<vmem>>, vector<1x32x32xbf16>
    %8 = vector.shape_cast %7 : vector<1x32x32xbf16> to vector<32x32xbf16>
    %cst_10 = arith.constant dense<0.000000e+00> : vector<32x24xf32>
    %9 = tpu.matmul %8, %6, %cst_10 {dimension_numbers = #tpu.dot_dimension_numbers<[1], [0], [0], [1], [0, 0, 1, 1], [], []>} : vector<32x32xbf16>, vector<32x24xbf16>, vector<32x24xf32> -> vector<32x24xf32>
    %10 = arith.addf %4, %9 : vector<32x24xf32>
    %c0_11 = arith.constant 0 : index
    %c0_12 = arith.constant 0 : index
    %c2 = arith.constant 2 : index
    %11 = vector.load %arg1[%c0_11, %c0_12, %c2] : memref<1x32x40xbf16, #tpu.memory_space<vmem>>, vector<1x32x24xbf16>
    %12 = vector.shape_cast %11 : vector<1x32x24xbf16> to vector<32x24xbf16>
    %c2_13 = arith.constant 2 : index
    %c0_14 = arith.constant 0 : index
    %c0_15 = arith.constant 0 : index
    %13 = vector.load %arg2[%c2_13, %c0_14, %c0_15] : memref<9x32x32xbf16, #tpu.memory_space<vmem>>, vector<1x32x32xbf16>
    %14 = vector.shape_cast %13 : vector<1x32x32xbf16> to vector<32x32xbf16>
    %cst_16 = arith.constant dense<0.000000e+00> : vector<32x24xf32>
    %15 = tpu.matmul %14, %12, %cst_16 {dimension_numbers = #tpu.dot_dimension_numbers<[1], [0], [0], [1], [0, 0, 1, 1], [], []>} : vector<32x32xbf16>, vector<32x24xbf16>, vector<32x24xf32> -> vector<32x24xf32>
    %16 = arith.addf %10, %15 : vector<32x24xf32>
    %c0_17 = arith.constant 0 : index
    %c0_18 = arith.constant 0 : index
    %c6 = arith.constant 6 : index
    %17 = vector.load %arg1[%c0_17, %c0_18, %c6] : memref<1x32x40xbf16, #tpu.memory_space<vmem>>, vector<1x32x24xbf16>
    %18 = vector.shape_cast %17 : vector<1x32x24xbf16> to vector<32x24xbf16>
    %c3 = arith.constant 3 : index
    %c0_19 = arith.constant 0 : index
    %c0_20 = arith.constant 0 : index
    %19 = vector.load %arg2[%c3, %c0_19, %c0_20] : memref<9x32x32xbf16, #tpu.memory_space<vmem>>, vector<1x32x32xbf16>
    %20 = vector.shape_cast %19 : vector<1x32x32xbf16> to vector<32x32xbf16>
    %cst_21 = arith.constant dense<0.000000e+00> : vector<32x24xf32>
    %21 = tpu.matmul %20, %18, %cst_21 {dimension_numbers = #tpu.dot_dimension_numbers<[1], [0], [0], [1], [0, 0, 1, 1], [], []>} : vector<32x32xbf16>, vector<32x24xbf16>, vector<32x24xf32> -> vector<32x24xf32>
    %22 = arith.addf %16, %21 : vector<32x24xf32>
    %c0_22 = arith.constant 0 : index
    %c0_23 = arith.constant 0 : index
    %c7 = arith.constant 7 : index
    %23 = vector.load %arg1[%c0_22, %c0_23, %c7] : memref<1x32x40xbf16, #tpu.memory_space<vmem>>, vector<1x32x24xbf16>
    %24 = vector.shape_cast %23 : vector<1x32x24xbf16> to vector<32x24xbf16>
    %c4 = arith.constant 4 : index
    %c0_24 = arith.constant 0 : index
    %c0_25 = arith.constant 0 : index
    %25 = vector.load %arg2[%c4, %c0_24, %c0_25] : memref<9x32x32xbf16, #tpu.memory_space<vmem>>, vector<1x32x32xbf16>
    %26 = vector.shape_cast %25 : vector<1x32x32xbf16> to vector<32x32xbf16>
    %cst_26 = arith.constant dense<0.000000e+00> : vector<32x24xf32>
    %27 = tpu.matmul %26, %24, %cst_26 {dimension_numbers = #tpu.dot_dimension_numbers<[1], [0], [0], [1], [0, 0, 1, 1], [], []>} : vector<32x32xbf16>, vector<32x24xbf16>, vector<32x24xf32> -> vector<32x24xf32>
    %28 = arith.addf %22, %27 : vector<32x24xf32>
    %c0_27 = arith.constant 0 : index
    %c0_28 = arith.constant 0 : index
    %c8 = arith.constant 8 : index
    %29 = vector.load %arg1[%c0_27, %c0_28, %c8] : memref<1x32x40xbf16, #tpu.memory_space<vmem>>, vector<1x32x24xbf16>
    %30 = vector.shape_cast %29 : vector<1x32x24xbf16> to vector<32x24xbf16>
    %c5 = arith.constant 5 : index
    %c0_29 = arith.constant 0 : index
    %c0_30 = arith.constant 0 : index
    %31 = vector.load %arg2[%c5, %c0_29, %c0_30] : memref<9x32x32xbf16, #tpu.memory_space<vmem>>, vector<1x32x32xbf16>
    %32 = vector.shape_cast %31 : vector<1x32x32xbf16> to vector<32x32xbf16>
    %cst_31 = arith.constant dense<0.000000e+00> : vector<32x24xf32>
    %33 = tpu.matmul %32, %30, %cst_31 {dimension_numbers = #tpu.dot_dimension_numbers<[1], [0], [0], [1], [0, 0, 1, 1], [], []>} : vector<32x32xbf16>, vector<32x24xbf16>, vector<32x24xf32> -> vector<32x24xf32>
    %34 = arith.addf %28, %33 : vector<32x24xf32>
    %c0_32 = arith.constant 0 : index
    %c0_33 = arith.constant 0 : index
    %c12 = arith.constant 12 : index
    %35 = vector.load %arg1[%c0_32, %c0_33, %c12] : memref<1x32x40xbf16, #tpu.memory_space<vmem>>, vector<1x32x24xbf16>
    %36 = vector.shape_cast %35 : vector<1x32x24xbf16> to vector<32x24xbf16>
    %c6_34 = arith.constant 6 : index
    %c0_35 = arith.constant 0 : index
    %c0_36 = arith.constant 0 : index
    %37 = vector.load %arg2[%c6_34, %c0_35, %c0_36] : memref<9x32x32xbf16, #tpu.memory_space<vmem>>, vector<1x32x32xbf16>
    %38 = vector.shape_cast %37 : vector<1x32x32xbf16> to vector<32x32xbf16>
    %cst_37 = arith.constant dense<0.000000e+00> : vector<32x24xf32>
    %39 = tpu.matmul %38, %36, %cst_37 {dimension_numbers = #tpu.dot_dimension_numbers<[1], [0], [0], [1], [0, 0, 1, 1], [], []>} : vector<32x32xbf16>, vector<32x24xbf16>, vector<32x24xf32> -> vector<32x24xf32>
    %40 = arith.addf %34, %39 : vector<32x24xf32>
    %c0_38 = arith.constant 0 : index
    %c0_39 = arith.constant 0 : index
    %c13 = arith.constant 13 : index
    %41 = vector.load %arg1[%c0_38, %c0_39, %c13] : memref<1x32x40xbf16, #tpu.memory_space<vmem>>, vector<1x32x24xbf16>
    %42 = vector.shape_cast %41 : vector<1x32x24xbf16> to vector<32x24xbf16>
    %c7_40 = arith.constant 7 : index
    %c0_41 = arith.constant 0 : index
    %c0_42 = arith.constant 0 : index
    %43 = vector.load %arg2[%c7_40, %c0_41, %c0_42] : memref<9x32x32xbf16, #tpu.memory_space<vmem>>, vector<1x32x32xbf16>
    %44 = vector.shape_cast %43 : vector<1x32x32xbf16> to vector<32x32xbf16>
    %cst_43 = arith.constant dense<0.000000e+00> : vector<32x24xf32>
    %45 = tpu.matmul %44, %42, %cst_43 {dimension_numbers = #tpu.dot_dimension_numbers<[1], [0], [0], [1], [0, 0, 1, 1], [], []>} : vector<32x32xbf16>, vector<32x24xbf16>, vector<32x24xf32> -> vector<32x24xf32>
    %46 = arith.addf %40, %45 : vector<32x24xf32>
    %c0_44 = arith.constant 0 : index
    %c0_45 = arith.constant 0 : index
    %c14 = arith.constant 14 : index
    %47 = vector.load %arg1[%c0_44, %c0_45, %c14] : memref<1x32x40xbf16, #tpu.memory_space<vmem>>, vector<1x32x24xbf16>
    %48 = vector.shape_cast %47 : vector<1x32x24xbf16> to vector<32x24xbf16>
    %c8_46 = arith.constant 8 : index
    %c0_47 = arith.constant 0 : index
    %c0_48 = arith.constant 0 : index
    %49 = vector.load %arg2[%c8_46, %c0_47, %c0_48] : memref<9x32x32xbf16, #tpu.memory_space<vmem>>, vector<1x32x32xbf16>
    %50 = vector.shape_cast %49 : vector<1x32x32xbf16> to vector<32x32xbf16>
    %cst_49 = arith.constant dense<0.000000e+00> : vector<32x24xf32>
    %51 = tpu.matmul %50, %48, %cst_49 {dimension_numbers = #tpu.dot_dimension_numbers<[1], [0], [0], [1], [0, 0, 1, 1], [], []>} : vector<32x32xbf16>, vector<32x24xbf16>, vector<32x24xf32> -> vector<32x24xf32>
    %52 = arith.addf %46, %51 : vector<32x24xf32>
    %c0_50 = arith.constant 0 : index
    %c0_51 = arith.constant 0 : index
    %c0_52 = arith.constant 0 : index
    %53 = vector.load %arg3[%c0_50, %c0_51, %c0_52] : memref<1x32x4xf32, #tpu.memory_space<vmem>>, vector<1x32x4xf32>
    %54 = vector.shape_cast %53 : vector<1x32x4xf32> to vector<32x4xf32>
    %55 = vector.extract_strided_slice %54 {offsets = [0, 0], sizes = [32, 1], strides = [1, 1]} : vector<32x4xf32> to vector<32x1xf32>
    %56 = vector.broadcast %55 : vector<32x1xf32> to vector<32x24xf32>
    %57 = arith.addf %52, %56 : vector<32x24xf32>
    %58 = vector.extract_strided_slice %54 {offsets = [0, 1], sizes = [32, 1], strides = [1, 1]} : vector<32x4xf32> to vector<32x1xf32>
    %c0_53 = arith.constant 0 : index
    %c0_54 = arith.constant 0 : index
    %c0_55 = arith.constant 0 : index
    %59 = vector.load %arg4[%c0_53, %c0_54, %c0_55] : memref<1x1x24xf32, #tpu.memory_space<vmem>>, vector<1x1x24xf32>
    %60 = vector.shape_cast %59 : vector<1x1x24xf32> to vector<1x24xf32>
    %61 = vector.broadcast %58 : vector<32x1xf32> to vector<32x24xf32>
    %62 = vector.broadcast %60 : vector<1x24xf32> to vector<32x24xf32>
    %63 = arith.mulf %61, %62 : vector<32x24xf32>
    %64 = arith.addf %57, %63 : vector<32x24xf32>
    %cst_56 = arith.constant 0.000000e+00 : f32
    %65 = vector.broadcast %cst_56 : f32 to vector<32x24xf32>
    %66 = arith.cmpf oge, %64, %65 : vector<32x24xf32>
    %cst_57 = arith.constant 2.000000e-01 : f32
    %67 = vector.broadcast %cst_57 : f32 to vector<32x24xf32>
    %68 = arith.mulf %67, %64 : vector<32x24xf32>
    %69 = arith.select %66, %64, %68 : vector<32x24xi1>, vector<32x24xf32>
    %c0_58 = arith.constant 0 : index
    %c0_59 = arith.constant 0 : index
    %70 = vector.load %arg5[%c0_58, %c0_59] : memref<1x24xf32, #tpu.memory_space<vmem>>, vector<1x24xf32>
    %71 = vector.broadcast %70 : vector<1x24xf32> to vector<32x24xf32>
    %72 = arith.mulf %69, %71 : vector<32x24xf32>
    %cst_60 = arith.constant dense<0.000000e+00> : vector<32xf32>
    %73 = vector.multi_reduction <add>, %72, %cst_60 [1] : vector<32x24xf32> to vector<32xf32>
    %74 = vector.shape_cast %73 : vector<32xf32> to vector<32x1xf32>
    %cst_61 = arith.constant 6.250000e-02 : f32
    %75 = vector.broadcast %cst_61 : f32 to vector<32x1xf32>
    %76 = arith.mulf %74, %75 : vector<32x1xf32>
    %77 = arith.mulf %72, %72 : vector<32x24xf32>
    %cst_62 = arith.constant dense<0.000000e+00> : vector<32xf32>
    %78 = vector.multi_reduction <add>, %77, %cst_62 [1] : vector<32x24xf32> to vector<32xf32>
    %79 = vector.shape_cast %78 : vector<32xf32> to vector<32x1xf32>
    %cst_63 = arith.constant 6.250000e-02 : f32
    %80 = vector.broadcast %cst_63 : f32 to vector<32x1xf32>
    %81 = arith.mulf %79, %80 : vector<32x1xf32>
    %82 = arith.mulf %76, %76 : vector<32x1xf32>
    %83 = arith.subf %81, %82 : vector<32x1xf32>
    %84 = vector.broadcast %76 : vector<32x1xf32> to vector<32x24xf32>
    %85 = arith.subf %72, %84 : vector<32x24xf32>
    %cst_64 = arith.constant 0.000000e+00 : f32
    %86 = vector.broadcast %cst_64 : f32 to vector<32x1xf32>
    %87 = arith.maximumf %83, %86 : vector<32x1xf32>
    %cst_65 = arith.constant 9.99999974E-6 : f32
    %88 = vector.broadcast %cst_65 : f32 to vector<32x1xf32>
    %89 = arith.addf %87, %88 : vector<32x1xf32>
    %90 = math.rsqrt %89 : vector<32x1xf32>
    %91 = vector.broadcast %90 : vector<32x1xf32> to vector<32x24xf32>
    %92 = arith.mulf %85, %91 : vector<32x24xf32>
    %93 = vector.extract_strided_slice %54 {offsets = [0, 2], sizes = [32, 1], strides = [1, 1]} : vector<32x4xf32> to vector<32x1xf32>
    %cst_66 = arith.constant 1.000000e+00 : f32
    %94 = vector.broadcast %cst_66 : f32 to vector<32x1xf32>
    %95 = arith.addf %93, %94 : vector<32x1xf32>
    %96 = vector.broadcast %95 : vector<32x1xf32> to vector<32x24xf32>
    %97 = arith.mulf %92, %96 : vector<32x24xf32>
    %98 = vector.extract_strided_slice %54 {offsets = [0, 3], sizes = [32, 1], strides = [1, 1]} : vector<32x4xf32> to vector<32x1xf32>
    %99 = vector.broadcast %98 : vector<32x1xf32> to vector<32x24xf32>
    %100 = arith.addf %97, %99 : vector<32x24xf32>
    %101 = arith.truncf %100 : vector<32x24xf32> to vector<32x24xbf16>
    %c0_67 = arith.constant 0 : index
    %c0_68 = arith.constant 0 : index
    %c0_69 = arith.constant 0 : index
    %102 = vector.load %arg6[%c0_67, %c0_68, %c0_69] : memref<1x32x24xbf16, #tpu.memory_space<vmem>>, vector<1x32x24xbf16>
    %103 = vector.shape_cast %102 : vector<1x32x24xbf16> to vector<32x24xbf16>
    %104 = vector.shape_cast %101 : vector<32x24xbf16> to vector<1x32x24xbf16>
    tpu.vector_store %arg6[%c0_67, %c0_68, %c0_69], %104 {strides = array<i32>} : memref<1x32x24xbf16, #tpu.memory_space<vmem>>, vector<1x32x24xbf16>,
    return
  }
  func.func @transform_0(%arg0: i32) -> (i32, i32, i32) {
    %c0_i32 = arith.constant 0 : i32
    %c0_i32_0 = arith.constant 0 : i32
    %c0_i32_1 = arith.constant 0 : i32
    return %arg0, %c0_i32, %c0_i32_0 : i32, i32, i32
  }
  func.func @transform_1(%arg0: i32) -> (i32, i32, i32) {
    %c0_i32 = arith.constant 0 : i32
    %c0_i32_0 = arith.constant 0 : i32
    %c0_i32_1 = arith.constant 0 : i32
    %c0_i32_2 = arith.constant 0 : i32
    return %c0_i32, %c0_i32_0, %c0_i32_1 : i32, i32, i32
  }
  func.func @transform_2(%arg0: i32) -> (i32, i32, i32) {
    %c0_i32 = arith.constant 0 : i32
    %c0_i32_0 = arith.constant 0 : i32
    %c0_i32_1 = arith.constant 0 : i32
    return %arg0, %c0_i32, %c0_i32_0 : i32, i32, i32
  }
  func.func @transform_3(%arg0: i32) -> (i32, i32, i32) {
    %c0_i32 = arith.constant 0 : i32
    %c0_i32_0 = arith.constant 0 : i32
    %c0_i32_1 = arith.constant 0 : i32
    return %arg0, %c0_i32, %c0_i32_0 : i32, i32, i32
  }
  func.func @transform_4(%arg0: i32) -> (i32, i32) {
    %c0_i32 = arith.constant 0 : i32
    %c0_i32_0 = arith.constant 0 : i32
    %c0_i32_1 = arith.constant 0 : i32
    return %c0_i32, %c0_i32_0 : i32, i32
  }
  func.func @transform_5(%arg0: i32) -> (i32, i32, i32) {
    %c0_i32 = arith.constant 0 : i32
    %c0_i32_0 = arith.constant 0 : i32
    %c0_i32_1 = arith.constant 0 : i32
    return %arg0, %c0_i32, %c0_i32_0 : i32, i32, i32
  }
}

module attributes {stable_mosaic.version = 11 : i64} {
  func.func @kernel(%arg0: i32, %arg1: memref<1x32x148xbf16, #tpu.memory_space<vmem>>, %arg2: memref<9x32x32xbf16, #tpu.memory_space<vmem>>, %arg3: memref<1x32x4xf32, #tpu.memory_space<vmem>>, %arg4: memref<1x1x96xf32, #tpu.memory_space<vmem>>, %arg5: memref<1x122xf32, #tpu.memory_space<vmem>>, %arg6: memref<1x96xf32, #tpu.memory_space<vmem>>, %arg7: memref<1x32x96xbf16, #tpu.memory_space<vmem>>, %arg8: memref<32x122xf32, #tpu.memory_space<vmem>>) attributes {dimension_semantics = [#tpu.dimension_semantics<parallel>], iteration_bounds = array<i64: 2>, scalar_prefetch = 0 : i64, scratch_operands = 1 : i64, tpu.core_type = #tpu.core_type<tc>, window_params = [{transform_indices = @transform_0, window_bounds = array<i64: 1, 32, 148>}, {pipeline_mode = #tpu.pipeline_mode<synchronous>, transform_indices = @transform_1, window_bounds = array<i64: 9, 32, 32>}, {transform_indices = @transform_2, window_bounds = array<i64: 1, 32, 4>}, {transform_indices = @transform_3, window_bounds = array<i64: 1, 1, 96>}, {pipeline_mode = #tpu.pipeline_mode<synchronous>, transform_indices = @transform_4, window_bounds = array<i64: 1, 122>}, {pipeline_mode = #tpu.pipeline_mode<synchronous>, transform_indices = @transform_5, window_bounds = array<i64: 1, 96>}, {transform_indices = @transform_6, window_bounds = array<i64: 1, 32, 96>}]} {
    %c0 = arith.constant 0 : index
    %c0_0 = arith.constant 0 : index
    %c0_1 = arith.constant 0 : index
    %0 = vector.load %arg1[%c0, %c0_0, %c0_1] : memref<1x32x148xbf16, #tpu.memory_space<vmem>>, vector<1x32x122xbf16>
    %1 = vector.shape_cast %0 : vector<1x32x122xbf16> to vector<32x122xbf16>
    %c0_2 = arith.constant 0 : index
    %c0_3 = arith.constant 0 : index
    %c0_4 = arith.constant 0 : index
    %2 = vector.load %arg2[%c0_2, %c0_3, %c0_4] : memref<9x32x32xbf16, #tpu.memory_space<vmem>>, vector<1x32x32xbf16>
    %3 = vector.shape_cast %2 : vector<1x32x32xbf16> to vector<32x32xbf16>
    %cst = arith.constant dense<0.000000e+00> : vector<32x122xf32>
    %4 = tpu.matmul %3, %1, %cst {dimension_numbers = #tpu.dot_dimension_numbers<[1], [0], [0], [1], [0, 0, 1, 1], [], []>} : vector<32x32xbf16>, vector<32x122xbf16>, vector<32x122xf32> -> vector<32x122xf32>
    %c0_5 = arith.constant 0 : index
    %c0_6 = arith.constant 0 : index
    %c1 = arith.constant 1 : index
    %5 = vector.load %arg1[%c0_5, %c0_6, %c1] : memref<1x32x148xbf16, #tpu.memory_space<vmem>>, vector<1x32x122xbf16>
    %6 = vector.shape_cast %5 : vector<1x32x122xbf16> to vector<32x122xbf16>
    %c1_7 = arith.constant 1 : index
    %c0_8 = arith.constant 0 : index
    %c0_9 = arith.constant 0 : index
    %7 = vector.load %arg2[%c1_7, %c0_8, %c0_9] : memref<9x32x32xbf16, #tpu.memory_space<vmem>>, vector<1x32x32xbf16>
    %8 = vector.shape_cast %7 : vector<1x32x32xbf16> to vector<32x32xbf16>
    %cst_10 = arith.constant dense<0.000000e+00> : vector<32x122xf32>
    %9 = tpu.matmul %8, %6, %cst_10 {dimension_numbers = #tpu.dot_dimension_numbers<[1], [0], [0], [1], [0, 0, 1, 1], [], []>} : vector<32x32xbf16>, vector<32x122xbf16>, vector<32x122xf32> -> vector<32x122xf32>
    %10 = arith.addf %4, %9 : vector<32x122xf32>
    %c0_11 = arith.constant 0 : index
    %c0_12 = arith.constant 0 : index
    %c2 = arith.constant 2 : index
    %11 = vector.load %arg1[%c0_11, %c0_12, %c2] : memref<1x32x148xbf16, #tpu.memory_space<vmem>>, vector<1x32x122xbf16>
    %12 = vector.shape_cast %11 : vector<1x32x122xbf16> to vector<32x122xbf16>
    %c2_13 = arith.constant 2 : index
    %c0_14 = arith.constant 0 : index
    %c0_15 = arith.constant 0 : index
    %13 = vector.load %arg2[%c2_13, %c0_14, %c0_15] : memref<9x32x32xbf16, #tpu.memory_space<vmem>>, vector<1x32x32xbf16>
    %14 = vector.shape_cast %13 : vector<1x32x32xbf16> to vector<32x32xbf16>
    %cst_16 = arith.constant dense<0.000000e+00> : vector<32x122xf32>
    %15 = tpu.matmul %14, %12, %cst_16 {dimension_numbers = #tpu.dot_dimension_numbers<[1], [0], [0], [1], [0, 0, 1, 1], [], []>} : vector<32x32xbf16>, vector<32x122xbf16>, vector<32x122xf32> -> vector<32x122xf32>
    %16 = arith.addf %10, %15 : vector<32x122xf32>
    %c0_17 = arith.constant 0 : index
    %c0_18 = arith.constant 0 : index
    %c12 = arith.constant 12 : index
    %17 = vector.load %arg1[%c0_17, %c0_18, %c12] : memref<1x32x148xbf16, #tpu.memory_space<vmem>>, vector<1x32x122xbf16>
    %18 = vector.shape_cast %17 : vector<1x32x122xbf16> to vector<32x122xbf16>
    %c3 = arith.constant 3 : index
    %c0_19 = arith.constant 0 : index
    %c0_20 = arith.constant 0 : index
    %19 = vector.load %arg2[%c3, %c0_19, %c0_20] : memref<9x32x32xbf16, #tpu.memory_space<vmem>>, vector<1x32x32xbf16>
    %20 = vector.shape_cast %19 : vector<1x32x32xbf16> to vector<32x32xbf16>
    %cst_21 = arith.constant dense<0.000000e+00> : vector<32x122xf32>
    %21 = tpu.matmul %20, %18, %cst_21 {dimension_numbers = #tpu.dot_dimension_numbers<[1], [0], [0], [1], [0, 0, 1, 1], [], []>} : vector<32x32xbf16>, vector<32x122xbf16>, vector<32x122xf32> -> vector<32x122xf32>
    %22 = arith.addf %16, %21 : vector<32x122xf32>
    %c0_22 = arith.constant 0 : index
    %c0_23 = arith.constant 0 : index
    %c13 = arith.constant 13 : index
    %23 = vector.load %arg1[%c0_22, %c0_23, %c13] : memref<1x32x148xbf16, #tpu.memory_space<vmem>>, vector<1x32x122xbf16>
    %24 = vector.shape_cast %23 : vector<1x32x122xbf16> to vector<32x122xbf16>
    %c4 = arith.constant 4 : index
    %c0_24 = arith.constant 0 : index
    %c0_25 = arith.constant 0 : index
    %25 = vector.load %arg2[%c4, %c0_24, %c0_25] : memref<9x32x32xbf16, #tpu.memory_space<vmem>>, vector<1x32x32xbf16>
    %26 = vector.shape_cast %25 : vector<1x32x32xbf16> to vector<32x32xbf16>
    %cst_26 = arith.constant dense<0.000000e+00> : vector<32x122xf32>
    %27 = tpu.matmul %26, %24, %cst_26 {dimension_numbers = #tpu.dot_dimension_numbers<[1], [0], [0], [1], [0, 0, 1, 1], [], []>} : vector<32x32xbf16>, vector<32x122xbf16>, vector<32x122xf32> -> vector<32x122xf32>
    %28 = arith.addf %22, %27 : vector<32x122xf32>
    %c0_27 = arith.constant 0 : index
    %c0_28 = arith.constant 0 : index
    %c14 = arith.constant 14 : index
    %29 = vector.load %arg1[%c0_27, %c0_28, %c14] : memref<1x32x148xbf16, #tpu.memory_space<vmem>>, vector<1x32x122xbf16>
    %30 = vector.shape_cast %29 : vector<1x32x122xbf16> to vector<32x122xbf16>
    %c5 = arith.constant 5 : index
    %c0_29 = arith.constant 0 : index
    %c0_30 = arith.constant 0 : index
    %31 = vector.load %arg2[%c5, %c0_29, %c0_30] : memref<9x32x32xbf16, #tpu.memory_space<vmem>>, vector<1x32x32xbf16>
    %32 = vector.shape_cast %31 : vector<1x32x32xbf16> to vector<32x32xbf16>
    %cst_31 = arith.constant dense<0.000000e+00> : vector<32x122xf32>
    %33 = tpu.matmul %32, %30, %cst_31 {dimension_numbers = #tpu.dot_dimension_numbers<[1], [0], [0], [1], [0, 0, 1, 1], [], []>} : vector<32x32xbf16>, vector<32x122xbf16>, vector<32x122xf32> -> vector<32x122xf32>
    %34 = arith.addf %28, %33 : vector<32x122xf32>
    %c0_32 = arith.constant 0 : index
    %c0_33 = arith.constant 0 : index
    %c24 = arith.constant 24 : index
    %35 = vector.load %arg1[%c0_32, %c0_33, %c24] : memref<1x32x148xbf16, #tpu.memory_space<vmem>>, vector<1x32x122xbf16>
    %36 = vector.shape_cast %35 : vector<1x32x122xbf16> to vector<32x122xbf16>
    %c6 = arith.constant 6 : index
    %c0_34 = arith.constant 0 : index
    %c0_35 = arith.constant 0 : index
    %37 = vector.load %arg2[%c6, %c0_34, %c0_35] : memref<9x32x32xbf16, #tpu.memory_space<vmem>>, vector<1x32x32xbf16>
    %38 = vector.shape_cast %37 : vector<1x32x32xbf16> to vector<32x32xbf16>
    %cst_36 = arith.constant dense<0.000000e+00> : vector<32x122xf32>
    %39 = tpu.matmul %38, %36, %cst_36 {dimension_numbers = #tpu.dot_dimension_numbers<[1], [0], [0], [1], [0, 0, 1, 1], [], []>} : vector<32x32xbf16>, vector<32x122xbf16>, vector<32x122xf32> -> vector<32x122xf32>
    %40 = arith.addf %34, %39 : vector<32x122xf32>
    %c0_37 = arith.constant 0 : index
    %c0_38 = arith.constant 0 : index
    %c25 = arith.constant 25 : index
    %41 = vector.load %arg1[%c0_37, %c0_38, %c25] : memref<1x32x148xbf16, #tpu.memory_space<vmem>>, vector<1x32x122xbf16>
    %42 = vector.shape_cast %41 : vector<1x32x122xbf16> to vector<32x122xbf16>
    %c7 = arith.constant 7 : index
    %c0_39 = arith.constant 0 : index
    %c0_40 = arith.constant 0 : index
    %43 = vector.load %arg2[%c7, %c0_39, %c0_40] : memref<9x32x32xbf16, #tpu.memory_space<vmem>>, vector<1x32x32xbf16>
    %44 = vector.shape_cast %43 : vector<1x32x32xbf16> to vector<32x32xbf16>
    %cst_41 = arith.constant dense<0.000000e+00> : vector<32x122xf32>
    %45 = tpu.matmul %44, %42, %cst_41 {dimension_numbers = #tpu.dot_dimension_numbers<[1], [0], [0], [1], [0, 0, 1, 1], [], []>} : vector<32x32xbf16>, vector<32x122xbf16>, vector<32x122xf32> -> vector<32x122xf32>
    %46 = arith.addf %40, %45 : vector<32x122xf32>
    %c0_42 = arith.constant 0 : index
    %c0_43 = arith.constant 0 : index
    %c26 = arith.constant 26 : index
    %47 = vector.load %arg1[%c0_42, %c0_43, %c26] : memref<1x32x148xbf16, #tpu.memory_space<vmem>>, vector<1x32x122xbf16>
    %48 = vector.shape_cast %47 : vector<1x32x122xbf16> to vector<32x122xbf16>
    %c8 = arith.constant 8 : index
    %c0_44 = arith.constant 0 : index
    %c0_45 = arith.constant 0 : index
    %49 = vector.load %arg2[%c8, %c0_44, %c0_45] : memref<9x32x32xbf16, #tpu.memory_space<vmem>>, vector<1x32x32xbf16>
    %50 = vector.shape_cast %49 : vector<1x32x32xbf16> to vector<32x32xbf16>
    %cst_46 = arith.constant dense<0.000000e+00> : vector<32x122xf32>
    %51 = tpu.matmul %50, %48, %cst_46 {dimension_numbers = #tpu.dot_dimension_numbers<[1], [0], [0], [1], [0, 0, 1, 1], [], []>} : vector<32x32xbf16>, vector<32x122xbf16>, vector<32x122xf32> -> vector<32x122xf32>
    %52 = arith.addf %46, %51 : vector<32x122xf32>
    %c0_47 = arith.constant 0 : index
    %c0_48 = arith.constant 0 : index
    %53 = vector.load %arg5[%c0_47, %c0_48] : memref<1x122xf32, #tpu.memory_space<vmem>>, vector<1x122xf32>
    %54 = vector.broadcast %53 : vector<1x122xf32> to vector<32x122xf32>
    %55 = arith.mulf %52, %54 : vector<32x122xf32>
    %c0_49 = arith.constant 0 : index
    %c0_50 = arith.constant 0 : index
    %56 = vector.load %arg8[%c0_49, %c0_50] : memref<32x122xf32, #tpu.memory_space<vmem>>, vector<32x122xf32>
    tpu.vector_store %arg8[%c0_49, %c0_50], %55 {strides = array<i32>} : memref<32x122xf32, #tpu.memory_space<vmem>>, vector<32x122xf32>,
    %c0_51 = arith.constant 0 : index
    %c0_52 = arith.constant 0 : index
    %57 = vector.load %arg8[%c0_51, %c0_52] : memref<32x122xf32, #tpu.memory_space<vmem>>, vector<32x96xf32>
    %cst_53 = arith.constant 6.250000e-02 : f32
    %58 = vector.broadcast %cst_53 : f32 to vector<32x96xf32>
    %59 = arith.mulf %58, %57 : vector<32x96xf32>
    %c0_54 = arith.constant 0 : index
    %c1_55 = arith.constant 1 : index
    %60 = vector.load %arg8[%c0_54, %c1_55] : memref<32x122xf32, #tpu.memory_space<vmem>>, vector<32x96xf32>
    %cst_56 = arith.constant 1.250000e-01 : f32
    %61 = vector.broadcast %cst_56 : f32 to vector<32x96xf32>
    %62 = arith.mulf %61, %60 : vector<32x96xf32>
    %63 = arith.addf %59, %62 : vector<32x96xf32>
    %c0_57 = arith.constant 0 : index
    %c2_58 = arith.constant 2 : index
    %64 = vector.load %arg8[%c0_57, %c2_58] : memref<32x122xf32, #tpu.memory_space<vmem>>, vector<32x96xf32>
    %cst_59 = arith.constant 6.250000e-02 : f32
    %65 = vector.broadcast %cst_59 : f32 to vector<32x96xf32>
    %66 = arith.mulf %65, %64 : vector<32x96xf32>
    %67 = arith.addf %63, %66 : vector<32x96xf32>
    %c0_60 = arith.constant 0 : index
    %c12_61 = arith.constant 12 : index
    %68 = vector.load %arg8[%c0_60, %c12_61] : memref<32x122xf32, #tpu.memory_space<vmem>>, vector<32x96xf32>
    %cst_62 = arith.constant 1.250000e-01 : f32
    %69 = vector.broadcast %cst_62 : f32 to vector<32x96xf32>
    %70 = arith.mulf %69, %68 : vector<32x96xf32>
    %71 = arith.addf %67, %70 : vector<32x96xf32>
    %c0_63 = arith.constant 0 : index
    %c13_64 = arith.constant 13 : index
    %72 = vector.load %arg8[%c0_63, %c13_64] : memref<32x122xf32, #tpu.memory_space<vmem>>, vector<32x96xf32>
    %cst_65 = arith.constant 2.500000e-01 : f32
    %73 = vector.broadcast %cst_65 : f32 to vector<32x96xf32>
    %74 = arith.mulf %73, %72 : vector<32x96xf32>
    %75 = arith.addf %71, %74 : vector<32x96xf32>
    %c0_66 = arith.constant 0 : index
    %c14_67 = arith.constant 14 : index
    %76 = vector.load %arg8[%c0_66, %c14_67] : memref<32x122xf32, #tpu.memory_space<vmem>>, vector<32x96xf32>
    %cst_68 = arith.constant 1.250000e-01 : f32
    %77 = vector.broadcast %cst_68 : f32 to vector<32x96xf32>
    %78 = arith.mulf %77, %76 : vector<32x96xf32>
    %79 = arith.addf %75, %78 : vector<32x96xf32>
    %c0_69 = arith.constant 0 : index
    %c24_70 = arith.constant 24 : index
    %80 = vector.load %arg8[%c0_69, %c24_70] : memref<32x122xf32, #tpu.memory_space<vmem>>, vector<32x96xf32>
    %cst_71 = arith.constant 6.250000e-02 : f32
    %81 = vector.broadcast %cst_71 : f32 to vector<32x96xf32>
    %82 = arith.mulf %81, %80 : vector<32x96xf32>
    %83 = arith.addf %79, %82 : vector<32x96xf32>
    %c0_72 = arith.constant 0 : index
    %c25_73 = arith.constant 25 : index
    %84 = vector.load %arg8[%c0_72, %c25_73] : memref<32x122xf32, #tpu.memory_space<vmem>>, vector<32x96xf32>
    %cst_74 = arith.constant 1.250000e-01 : f32
    %85 = vector.broadcast %cst_74 : f32 to vector<32x96xf32>
    %86 = arith.mulf %85, %84 : vector<32x96xf32>
    %87 = arith.addf %83, %86 : vector<32x96xf32>
    %c0_75 = arith.constant 0 : index
    %c26_76 = arith.constant 26 : index
    %88 = vector.load %arg8[%c0_75, %c26_76] : memref<32x122xf32, #tpu.memory_space<vmem>>, vector<32x96xf32>
    %cst_77 = arith.constant 6.250000e-02 : f32
    %89 = vector.broadcast %cst_77 : f32 to vector<32x96xf32>
    %90 = arith.mulf %89, %88 : vector<32x96xf32>
    %91 = arith.addf %87, %90 : vector<32x96xf32>
    %c0_78 = arith.constant 0 : index
    %c0_79 = arith.constant 0 : index
    %c0_80 = arith.constant 0 : index
    %92 = vector.load %arg3[%c0_78, %c0_79, %c0_80] : memref<1x32x4xf32, #tpu.memory_space<vmem>>, vector<1x32x4xf32>
    %93 = vector.shape_cast %92 : vector<1x32x4xf32> to vector<32x4xf32>
    %94 = vector.extract_strided_slice %93 {offsets = [0, 0], sizes = [32, 1], strides = [1, 1]} : vector<32x4xf32> to vector<32x1xf32>
    %95 = vector.broadcast %94 : vector<32x1xf32> to vector<32x96xf32>
    %96 = arith.addf %91, %95 : vector<32x96xf32>
    %97 = vector.extract_strided_slice %93 {offsets = [0, 1], sizes = [32, 1], strides = [1, 1]} : vector<32x4xf32> to vector<32x1xf32>
    %c0_81 = arith.constant 0 : index
    %c0_82 = arith.constant 0 : index
    %c0_83 = arith.constant 0 : index
    %98 = vector.load %arg4[%c0_81, %c0_82, %c0_83] : memref<1x1x96xf32, #tpu.memory_space<vmem>>, vector<1x1x96xf32>
    %99 = vector.shape_cast %98 : vector<1x1x96xf32> to vector<1x96xf32>
    %100 = vector.broadcast %97 : vector<32x1xf32> to vector<32x96xf32>
    %101 = vector.broadcast %99 : vector<1x96xf32> to vector<32x96xf32>
    %102 = arith.mulf %100, %101 : vector<32x96xf32>
    %103 = arith.addf %96, %102 : vector<32x96xf32>
    %cst_84 = arith.constant 0.000000e+00 : f32
    %104 = vector.broadcast %cst_84 : f32 to vector<32x96xf32>
    %105 = arith.cmpf oge, %103, %104 : vector<32x96xf32>
    %cst_85 = arith.constant 2.000000e-01 : f32
    %106 = vector.broadcast %cst_85 : f32 to vector<32x96xf32>
    %107 = arith.mulf %106, %103 : vector<32x96xf32>
    %108 = arith.select %105, %103, %107 : vector<32x96xi1>, vector<32x96xf32>
    %c0_86 = arith.constant 0 : index
    %c0_87 = arith.constant 0 : index
    %109 = vector.load %arg6[%c0_86, %c0_87] : memref<1x96xf32, #tpu.memory_space<vmem>>, vector<1x96xf32>
    %110 = vector.broadcast %109 : vector<1x96xf32> to vector<32x96xf32>
    %111 = arith.mulf %108, %110 : vector<32x96xf32>
    %cst_88 = arith.constant dense<0.000000e+00> : vector<32xf32>
    %112 = vector.multi_reduction <add>, %111, %cst_88 [1] : vector<32x96xf32> to vector<32xf32>
    %113 = vector.shape_cast %112 : vector<32xf32> to vector<32x1xf32>
    %cst_89 = arith.constant 1.562500e-02 : f32
    %114 = vector.broadcast %cst_89 : f32 to vector<32x1xf32>
    %115 = arith.mulf %113, %114 : vector<32x1xf32>
    %116 = arith.mulf %111, %111 : vector<32x96xf32>
    %cst_90 = arith.constant dense<0.000000e+00> : vector<32xf32>
    %117 = vector.multi_reduction <add>, %116, %cst_90 [1] : vector<32x96xf32> to vector<32xf32>
    %118 = vector.shape_cast %117 : vector<32xf32> to vector<32x1xf32>
    %cst_91 = arith.constant 1.562500e-02 : f32
    %119 = vector.broadcast %cst_91 : f32 to vector<32x1xf32>
    %120 = arith.mulf %118, %119 : vector<32x1xf32>
    %121 = arith.mulf %115, %115 : vector<32x1xf32>
    %122 = arith.subf %120, %121 : vector<32x1xf32>
    %123 = vector.broadcast %115 : vector<32x1xf32> to vector<32x96xf32>
    %124 = arith.subf %111, %123 : vector<32x96xf32>
    %cst_92 = arith.constant 0.000000e+00 : f32
    %125 = vector.broadcast %cst_92 : f32 to vector<32x1xf32>
    %126 = arith.maximumf %122, %125 : vector<32x1xf32>
    %cst_93 = arith.constant 9.99999974E-6 : f32
    %127 = vector.broadcast %cst_93 : f32 to vector<32x1xf32>
    %128 = arith.addf %126, %127 : vector<32x1xf32>
    %129 = math.rsqrt %128 : vector<32x1xf32>
    %130 = vector.broadcast %129 : vector<32x1xf32> to vector<32x96xf32>
    %131 = arith.mulf %124, %130 : vector<32x96xf32>
    %132 = vector.extract_strided_slice %93 {offsets = [0, 2], sizes = [32, 1], strides = [1, 1]} : vector<32x4xf32> to vector<32x1xf32>
    %cst_94 = arith.constant 1.000000e+00 : f32
    %133 = vector.broadcast %cst_94 : f32 to vector<32x1xf32>
    %134 = arith.addf %132, %133 : vector<32x1xf32>
    %135 = vector.broadcast %134 : vector<32x1xf32> to vector<32x96xf32>
    %136 = arith.mulf %131, %135 : vector<32x96xf32>
    %137 = vector.extract_strided_slice %93 {offsets = [0, 3], sizes = [32, 1], strides = [1, 1]} : vector<32x4xf32> to vector<32x1xf32>
    %138 = vector.broadcast %137 : vector<32x1xf32> to vector<32x96xf32>
    %139 = arith.addf %136, %138 : vector<32x96xf32>
    %140 = arith.truncf %139 : vector<32x96xf32> to vector<32x96xbf16>
    %c0_95 = arith.constant 0 : index
    %c0_96 = arith.constant 0 : index
    %c0_97 = arith.constant 0 : index
    %141 = vector.load %arg7[%c0_95, %c0_96, %c0_97] : memref<1x32x96xbf16, #tpu.memory_space<vmem>>, vector<1x32x96xbf16>
    %142 = vector.shape_cast %141 : vector<1x32x96xbf16> to vector<32x96xbf16>
    %143 = vector.shape_cast %140 : vector<32x96xbf16> to vector<1x32x96xbf16>
    tpu.vector_store %arg7[%c0_95, %c0_96, %c0_97], %143 {strides = array<i32>} : memref<1x32x96xbf16, #tpu.memory_space<vmem>>, vector<1x32x96xbf16>,
    return
  }
  func.func @transform_0(%arg0: i32) -> (i32, i32, i32) {
    %c0_i32 = arith.constant 0 : i32
    %c0_i32_0 = arith.constant 0 : i32
    %c0_i32_1 = arith.constant 0 : i32
    return %arg0, %c0_i32, %c0_i32_0 : i32, i32, i32
  }
  func.func @transform_1(%arg0: i32) -> (i32, i32, i32) {
    %c0_i32 = arith.constant 0 : i32
    %c0_i32_0 = arith.constant 0 : i32
    %c0_i32_1 = arith.constant 0 : i32
    %c0_i32_2 = arith.constant 0 : i32
    return %c0_i32, %c0_i32_0, %c0_i32_1 : i32, i32, i32
  }
  func.func @transform_2(%arg0: i32) -> (i32, i32, i32) {
    %c0_i32 = arith.constant 0 : i32
    %c0_i32_0 = arith.constant 0 : i32
    %c0_i32_1 = arith.constant 0 : i32
    return %arg0, %c0_i32, %c0_i32_0 : i32, i32, i32
  }
  func.func @transform_3(%arg0: i32) -> (i32, i32, i32) {
    %c0_i32 = arith.constant 0 : i32
    %c0_i32_0 = arith.constant 0 : i32
    %c0_i32_1 = arith.constant 0 : i32
    return %arg0, %c0_i32, %c0_i32_0 : i32, i32, i32
  }
  func.func @transform_4(%arg0: i32) -> (i32, i32) {
    %c0_i32 = arith.constant 0 : i32
    %c0_i32_0 = arith.constant 0 : i32
    %c0_i32_1 = arith.constant 0 : i32
    return %c0_i32, %c0_i32_0 : i32, i32
  }
  func.func @transform_5(%arg0: i32) -> (i32, i32) {
    %c0_i32 = arith.constant 0 : i32
    %c0_i32_0 = arith.constant 0 : i32
    %c0_i32_1 = arith.constant 0 : i32
    return %c0_i32, %c0_i32_0 : i32, i32
  }
  func.func @transform_6(%arg0: i32) -> (i32, i32, i32) {
    %c0_i32 = arith.constant 0 : i32
    %c0_i32_0 = arith.constant 0 : i32
    %c0_i32_1 = arith.constant 0 : i32
    return %arg0, %c0_i32, %c0_i32_0 : i32, i32, i32
  }
}

module attributes {stable_mosaic.version = 11 : i64} {
  func.func @kernel(%arg0: i32, %arg1: memref<1x32x104xbf16, #tpu.memory_space<vmem>>, %arg2: memref<9x32x32xbf16, #tpu.memory_space<vmem>>, %arg3: memref<1x32x4xf32, #tpu.memory_space<vmem>>, %arg4: memref<1x1x80xf32, #tpu.memory_space<vmem>>, %arg5: memref<1x80xf32, #tpu.memory_space<vmem>>, %arg6: memref<1x32x80xbf16, #tpu.memory_space<vmem>>) attributes {dimension_semantics = [#tpu.dimension_semantics<parallel>], iteration_bounds = array<i64: 2>, scalar_prefetch = 0 : i64, scratch_operands = 0 : i64, tpu.core_type = #tpu.core_type<tc>, window_params = [{transform_indices = @transform_0, window_bounds = array<i64: 1, 32, 104>}, {pipeline_mode = #tpu.pipeline_mode<synchronous>, transform_indices = @transform_1, window_bounds = array<i64: 9, 32, 32>}, {transform_indices = @transform_2, window_bounds = array<i64: 1, 32, 4>}, {transform_indices = @transform_3, window_bounds = array<i64: 1, 1, 80>}, {pipeline_mode = #tpu.pipeline_mode<synchronous>, transform_indices = @transform_4, window_bounds = array<i64: 1, 80>}, {transform_indices = @transform_5, window_bounds = array<i64: 1, 32, 80>}]} {
    %c0 = arith.constant 0 : index
    %c0_0 = arith.constant 0 : index
    %c0_1 = arith.constant 0 : index
    %0 = vector.load %arg1[%c0, %c0_0, %c0_1] : memref<1x32x104xbf16, #tpu.memory_space<vmem>>, vector<1x32x80xbf16>
    %1 = vector.shape_cast %0 : vector<1x32x80xbf16> to vector<32x80xbf16>
    %c0_2 = arith.constant 0 : index
    %c0_3 = arith.constant 0 : index
    %c0_4 = arith.constant 0 : index
    %2 = vector.load %arg2[%c0_2, %c0_3, %c0_4] : memref<9x32x32xbf16, #tpu.memory_space<vmem>>, vector<1x32x32xbf16>
    %3 = vector.shape_cast %2 : vector<1x32x32xbf16> to vector<32x32xbf16>
    %cst = arith.constant dense<0.000000e+00> : vector<32x80xf32>
    %4 = tpu.matmul %3, %1, %cst {dimension_numbers = #tpu.dot_dimension_numbers<[1], [0], [0], [1], [0, 0, 1, 1], [], []>} : vector<32x32xbf16>, vector<32x80xbf16>, vector<32x80xf32> -> vector<32x80xf32>
    %c0_5 = arith.constant 0 : index
    %c0_6 = arith.constant 0 : index
    %c1 = arith.constant 1 : index
    %5 = vector.load %arg1[%c0_5, %c0_6, %c1] : memref<1x32x104xbf16, #tpu.memory_space<vmem>>, vector<1x32x80xbf16>
    %6 = vector.shape_cast %5 : vector<1x32x80xbf16> to vector<32x80xbf16>
    %c1_7 = arith.constant 1 : index
    %c0_8 = arith.constant 0 : index
    %c0_9 = arith.constant 0 : index
    %7 = vector.load %arg2[%c1_7, %c0_8, %c0_9] : memref<9x32x32xbf16, #tpu.memory_space<vmem>>, vector<1x32x32xbf16>
    %8 = vector.shape_cast %7 : vector<1x32x32xbf16> to vector<32x32xbf16>
    %cst_10 = arith.constant dense<0.000000e+00> : vector<32x80xf32>
    %9 = tpu.matmul %8, %6, %cst_10 {dimension_numbers = #tpu.dot_dimension_numbers<[1], [0], [0], [1], [0, 0, 1, 1], [], []>} : vector<32x32xbf16>, vector<32x80xbf16>, vector<32x80xf32> -> vector<32x80xf32>
    %10 = arith.addf %4, %9 : vector<32x80xf32>
    %c0_11 = arith.constant 0 : index
    %c0_12 = arith.constant 0 : index
    %c2 = arith.constant 2 : index
    %11 = vector.load %arg1[%c0_11, %c0_12, %c2] : memref<1x32x104xbf16, #tpu.memory_space<vmem>>, vector<1x32x80xbf16>
    %12 = vector.shape_cast %11 : vector<1x32x80xbf16> to vector<32x80xbf16>
    %c2_13 = arith.constant 2 : index
    %c0_14 = arith.constant 0 : index
    %c0_15 = arith.constant 0 : index
    %13 = vector.load %arg2[%c2_13, %c0_14, %c0_15] : memref<9x32x32xbf16, #tpu.memory_space<vmem>>, vector<1x32x32xbf16>
    %14 = vector.shape_cast %13 : vector<1x32x32xbf16> to vector<32x32xbf16>
    %cst_16 = arith.constant dense<0.000000e+00> : vector<32x80xf32>
    %15 = tpu.matmul %14, %12, %cst_16 {dimension_numbers = #tpu.dot_dimension_numbers<[1], [0], [0], [1], [0, 0, 1, 1], [], []>} : vector<32x32xbf16>, vector<32x80xbf16>, vector<32x80xf32> -> vector<32x80xf32>
    %16 = arith.addf %10, %15 : vector<32x80xf32>
    %c0_17 = arith.constant 0 : index
    %c0_18 = arith.constant 0 : index
    %c10 = arith.constant 10 : index
    %17 = vector.load %arg1[%c0_17, %c0_18, %c10] : memref<1x32x104xbf16, #tpu.memory_space<vmem>>, vector<1x32x80xbf16>
    %18 = vector.shape_cast %17 : vector<1x32x80xbf16> to vector<32x80xbf16>
    %c3 = arith.constant 3 : index
    %c0_19 = arith.constant 0 : index
    %c0_20 = arith.constant 0 : index
    %19 = vector.load %arg2[%c3, %c0_19, %c0_20] : memref<9x32x32xbf16, #tpu.memory_space<vmem>>, vector<1x32x32xbf16>
    %20 = vector.shape_cast %19 : vector<1x32x32xbf16> to vector<32x32xbf16>
    %cst_21 = arith.constant dense<0.000000e+00> : vector<32x80xf32>
    %21 = tpu.matmul %20, %18, %cst_21 {dimension_numbers = #tpu.dot_dimension_numbers<[1], [0], [0], [1], [0, 0, 1, 1], [], []>} : vector<32x32xbf16>, vector<32x80xbf16>, vector<32x80xf32> -> vector<32x80xf32>
    %22 = arith.addf %16, %21 : vector<32x80xf32>
    %c0_22 = arith.constant 0 : index
    %c0_23 = arith.constant 0 : index
    %c11 = arith.constant 11 : index
    %23 = vector.load %arg1[%c0_22, %c0_23, %c11] : memref<1x32x104xbf16, #tpu.memory_space<vmem>>, vector<1x32x80xbf16>
    %24 = vector.shape_cast %23 : vector<1x32x80xbf16> to vector<32x80xbf16>
    %c4 = arith.constant 4 : index
    %c0_24 = arith.constant 0 : index
    %c0_25 = arith.constant 0 : index
    %25 = vector.load %arg2[%c4, %c0_24, %c0_25] : memref<9x32x32xbf16, #tpu.memory_space<vmem>>, vector<1x32x32xbf16>
    %26 = vector.shape_cast %25 : vector<1x32x32xbf16> to vector<32x32xbf16>
    %cst_26 = arith.constant dense<0.000000e+00> : vector<32x80xf32>
    %27 = tpu.matmul %26, %24, %cst_26 {dimension_numbers = #tpu.dot_dimension_numbers<[1], [0], [0], [1], [0, 0, 1, 1], [], []>} : vector<32x32xbf16>, vector<32x80xbf16>, vector<32x80xf32> -> vector<32x80xf32>
    %28 = arith.addf %22, %27 : vector<32x80xf32>
    %c0_27 = arith.constant 0 : index
    %c0_28 = arith.constant 0 : index
    %c12 = arith.constant 12 : index
    %29 = vector.load %arg1[%c0_27, %c0_28, %c12] : memref<1x32x104xbf16, #tpu.memory_space<vmem>>, vector<1x32x80xbf16>
    %30 = vector.shape_cast %29 : vector<1x32x80xbf16> to vector<32x80xbf16>
    %c5 = arith.constant 5 : index
    %c0_29 = arith.constant 0 : index
    %c0_30 = arith.constant 0 : index
    %31 = vector.load %arg2[%c5, %c0_29, %c0_30] : memref<9x32x32xbf16, #tpu.memory_space<vmem>>, vector<1x32x32xbf16>
    %32 = vector.shape_cast %31 : vector<1x32x32xbf16> to vector<32x32xbf16>
    %cst_31 = arith.constant dense<0.000000e+00> : vector<32x80xf32>
    %33 = tpu.matmul %32, %30, %cst_31 {dimension_numbers = #tpu.dot_dimension_numbers<[1], [0], [0], [1], [0, 0, 1, 1], [], []>} : vector<32x32xbf16>, vector<32x80xbf16>, vector<32x80xf32> -> vector<32x80xf32>
    %34 = arith.addf %28, %33 : vector<32x80xf32>
    %c0_32 = arith.constant 0 : index
    %c0_33 = arith.constant 0 : index
    %c20 = arith.constant 20 : index
    %35 = vector.load %arg1[%c0_32, %c0_33, %c20] : memref<1x32x104xbf16, #tpu.memory_space<vmem>>, vector<1x32x80xbf16>
    %36 = vector.shape_cast %35 : vector<1x32x80xbf16> to vector<32x80xbf16>
    %c6 = arith.constant 6 : index
    %c0_34 = arith.constant 0 : index
    %c0_35 = arith.constant 0 : index
    %37 = vector.load %arg2[%c6, %c0_34, %c0_35] : memref<9x32x32xbf16, #tpu.memory_space<vmem>>, vector<1x32x32xbf16>
    %38 = vector.shape_cast %37 : vector<1x32x32xbf16> to vector<32x32xbf16>
    %cst_36 = arith.constant dense<0.000000e+00> : vector<32x80xf32>
    %39 = tpu.matmul %38, %36, %cst_36 {dimension_numbers = #tpu.dot_dimension_numbers<[1], [0], [0], [1], [0, 0, 1, 1], [], []>} : vector<32x32xbf16>, vector<32x80xbf16>, vector<32x80xf32> -> vector<32x80xf32>
    %40 = arith.addf %34, %39 : vector<32x80xf32>
    %c0_37 = arith.constant 0 : index
    %c0_38 = arith.constant 0 : index
    %c21 = arith.constant 21 : index
    %41 = vector.load %arg1[%c0_37, %c0_38, %c21] : memref<1x32x104xbf16, #tpu.memory_space<vmem>>, vector<1x32x80xbf16>
    %42 = vector.shape_cast %41 : vector<1x32x80xbf16> to vector<32x80xbf16>
    %c7 = arith.constant 7 : index
    %c0_39 = arith.constant 0 : index
    %c0_40 = arith.constant 0 : index
    %43 = vector.load %arg2[%c7, %c0_39, %c0_40] : memref<9x32x32xbf16, #tpu.memory_space<vmem>>, vector<1x32x32xbf16>
    %44 = vector.shape_cast %43 : vector<1x32x32xbf16> to vector<32x32xbf16>
    %cst_41 = arith.constant dense<0.000000e+00> : vector<32x80xf32>
    %45 = tpu.matmul %44, %42, %cst_41 {dimension_numbers = #tpu.dot_dimension_numbers<[1], [0], [0], [1], [0, 0, 1, 1], [], []>} : vector<32x32xbf16>, vector<32x80xbf16>, vector<32x80xf32> -> vector<32x80xf32>
    %46 = arith.addf %40, %45 : vector<32x80xf32>
    %c0_42 = arith.constant 0 : index
    %c0_43 = arith.constant 0 : index
    %c22 = arith.constant 22 : index
    %47 = vector.load %arg1[%c0_42, %c0_43, %c22] : memref<1x32x104xbf16, #tpu.memory_space<vmem>>, vector<1x32x80xbf16>
    %48 = vector.shape_cast %47 : vector<1x32x80xbf16> to vector<32x80xbf16>
    %c8 = arith.constant 8 : index
    %c0_44 = arith.constant 0 : index
    %c0_45 = arith.constant 0 : index
    %49 = vector.load %arg2[%c8, %c0_44, %c0_45] : memref<9x32x32xbf16, #tpu.memory_space<vmem>>, vector<1x32x32xbf16>
    %50 = vector.shape_cast %49 : vector<1x32x32xbf16> to vector<32x32xbf16>
    %cst_46 = arith.constant dense<0.000000e+00> : vector<32x80xf32>
    %51 = tpu.matmul %50, %48, %cst_46 {dimension_numbers = #tpu.dot_dimension_numbers<[1], [0], [0], [1], [0, 0, 1, 1], [], []>} : vector<32x32xbf16>, vector<32x80xbf16>, vector<32x80xf32> -> vector<32x80xf32>
    %52 = arith.addf %46, %51 : vector<32x80xf32>
    %c0_47 = arith.constant 0 : index
    %c0_48 = arith.constant 0 : index
    %c0_49 = arith.constant 0 : index
    %53 = vector.load %arg3[%c0_47, %c0_48, %c0_49] : memref<1x32x4xf32, #tpu.memory_space<vmem>>, vector<1x32x4xf32>
    %54 = vector.shape_cast %53 : vector<1x32x4xf32> to vector<32x4xf32>
    %55 = vector.extract_strided_slice %54 {offsets = [0, 0], sizes = [32, 1], strides = [1, 1]} : vector<32x4xf32> to vector<32x1xf32>
    %56 = vector.broadcast %55 : vector<32x1xf32> to vector<32x80xf32>
    %57 = arith.addf %52, %56 : vector<32x80xf32>
    %58 = vector.extract_strided_slice %54 {offsets = [0, 1], sizes = [32, 1], strides = [1, 1]} : vector<32x4xf32> to vector<32x1xf32>
    %c0_50 = arith.constant 0 : index
    %c0_51 = arith.constant 0 : index
    %c0_52 = arith.constant 0 : index
    %59 = vector.load %arg4[%c0_50, %c0_51, %c0_52] : memref<1x1x80xf32, #tpu.memory_space<vmem>>, vector<1x1x80xf32>
    %60 = vector.shape_cast %59 : vector<1x1x80xf32> to vector<1x80xf32>
    %61 = vector.broadcast %58 : vector<32x1xf32> to vector<32x80xf32>
    %62 = vector.broadcast %60 : vector<1x80xf32> to vector<32x80xf32>
    %63 = arith.mulf %61, %62 : vector<32x80xf32>
    %64 = arith.addf %57, %63 : vector<32x80xf32>
    %cst_53 = arith.constant 0.000000e+00 : f32
    %65 = vector.broadcast %cst_53 : f32 to vector<32x80xf32>
    %66 = arith.cmpf oge, %64, %65 : vector<32x80xf32>
    %cst_54 = arith.constant 2.000000e-01 : f32
    %67 = vector.broadcast %cst_54 : f32 to vector<32x80xf32>
    %68 = arith.mulf %67, %64 : vector<32x80xf32>
    %69 = arith.select %66, %64, %68 : vector<32x80xi1>, vector<32x80xf32>
    %c0_55 = arith.constant 0 : index
    %c0_56 = arith.constant 0 : index
    %70 = vector.load %arg5[%c0_55, %c0_56] : memref<1x80xf32, #tpu.memory_space<vmem>>, vector<1x80xf32>
    %71 = vector.broadcast %70 : vector<1x80xf32> to vector<32x80xf32>
    %72 = arith.mulf %69, %71 : vector<32x80xf32>
    %cst_57 = arith.constant dense<0.000000e+00> : vector<32xf32>
    %73 = vector.multi_reduction <add>, %72, %cst_57 [1] : vector<32x80xf32> to vector<32xf32>
    %74 = vector.shape_cast %73 : vector<32xf32> to vector<32x1xf32>
    %cst_58 = arith.constant 1.562500e-02 : f32
    %75 = vector.broadcast %cst_58 : f32 to vector<32x1xf32>
    %76 = arith.mulf %74, %75 : vector<32x1xf32>
    %77 = arith.mulf %72, %72 : vector<32x80xf32>
    %cst_59 = arith.constant dense<0.000000e+00> : vector<32xf32>
    %78 = vector.multi_reduction <add>, %77, %cst_59 [1] : vector<32x80xf32> to vector<32xf32>
    %79 = vector.shape_cast %78 : vector<32xf32> to vector<32x1xf32>
    %cst_60 = arith.constant 1.562500e-02 : f32
    %80 = vector.broadcast %cst_60 : f32 to vector<32x1xf32>
    %81 = arith.mulf %79, %80 : vector<32x1xf32>
    %82 = arith.mulf %76, %76 : vector<32x1xf32>
    %83 = arith.subf %81, %82 : vector<32x1xf32>
    %84 = vector.broadcast %76 : vector<32x1xf32> to vector<32x80xf32>
    %85 = arith.subf %72, %84 : vector<32x80xf32>
    %cst_61 = arith.constant 0.000000e+00 : f32
    %86 = vector.broadcast %cst_61 : f32 to vector<32x1xf32>
    %87 = arith.maximumf %83, %86 : vector<32x1xf32>
    %cst_62 = arith.constant 9.99999974E-6 : f32
    %88 = vector.broadcast %cst_62 : f32 to vector<32x1xf32>
    %89 = arith.addf %87, %88 : vector<32x1xf32>
    %90 = math.rsqrt %89 : vector<32x1xf32>
    %91 = vector.broadcast %90 : vector<32x1xf32> to vector<32x80xf32>
    %92 = arith.mulf %85, %91 : vector<32x80xf32>
    %93 = vector.extract_strided_slice %54 {offsets = [0, 2], sizes = [32, 1], strides = [1, 1]} : vector<32x4xf32> to vector<32x1xf32>
    %cst_63 = arith.constant 1.000000e+00 : f32
    %94 = vector.broadcast %cst_63 : f32 to vector<32x1xf32>
    %95 = arith.addf %93, %94 : vector<32x1xf32>
    %96 = vector.broadcast %95 : vector<32x1xf32> to vector<32x80xf32>
    %97 = arith.mulf %92, %96 : vector<32x80xf32>
    %98 = vector.extract_strided_slice %54 {offsets = [0, 3], sizes = [32, 1], strides = [1, 1]} : vector<32x4xf32> to vector<32x1xf32>
    %99 = vector.broadcast %98 : vector<32x1xf32> to vector<32x80xf32>
    %100 = arith.addf %97, %99 : vector<32x80xf32>
    %101 = arith.truncf %100 : vector<32x80xf32> to vector<32x80xbf16>
    %c0_64 = arith.constant 0 : index
    %c0_65 = arith.constant 0 : index
    %c0_66 = arith.constant 0 : index
    %102 = vector.load %arg6[%c0_64, %c0_65, %c0_66] : memref<1x32x80xbf16, #tpu.memory_space<vmem>>, vector<1x32x80xbf16>
    %103 = vector.shape_cast %102 : vector<1x32x80xbf16> to vector<32x80xbf16>
    %104 = vector.shape_cast %101 : vector<32x80xbf16> to vector<1x32x80xbf16>
    tpu.vector_store %arg6[%c0_64, %c0_65, %c0_66], %104 {strides = array<i32>} : memref<1x32x80xbf16, #tpu.memory_space<vmem>>, vector<1x32x80xbf16>,
    return
  }
  func.func @transform_0(%arg0: i32) -> (i32, i32, i32) {
    %c0_i32 = arith.constant 0 : i32
    %c0_i32_0 = arith.constant 0 : i32
    %c0_i32_1 = arith.constant 0 : i32
    return %arg0, %c0_i32, %c0_i32_0 : i32, i32, i32
  }
  func.func @transform_1(%arg0: i32) -> (i32, i32, i32) {
    %c0_i32 = arith.constant 0 : i32
    %c0_i32_0 = arith.constant 0 : i32
    %c0_i32_1 = arith.constant 0 : i32
    %c0_i32_2 = arith.constant 0 : i32
    return %c0_i32, %c0_i32_0, %c0_i32_1 : i32, i32, i32
  }
  func.func @transform_2(%arg0: i32) -> (i32, i32, i32) {
    %c0_i32 = arith.constant 0 : i32
    %c0_i32_0 = arith.constant 0 : i32
    %c0_i32_1 = arith.constant 0 : i32
    return %arg0, %c0_i32, %c0_i32_0 : i32, i32, i32
  }
  func.func @transform_3(%arg0: i32) -> (i32, i32, i32) {
    %c0_i32 = arith.constant 0 : i32
    %c0_i32_0 = arith.constant 0 : i32
    %c0_i32_1 = arith.constant 0 : i32
    return %arg0, %c0_i32, %c0_i32_0 : i32, i32, i32
  }
  func.func @transform_4(%arg0: i32) -> (i32, i32) {
    %c0_i32 = arith.constant 0 : i32
    %c0_i32_0 = arith.constant 0 : i32
    %c0_i32_1 = arith.constant 0 : i32
    return %c0_i32, %c0_i32_0 : i32, i32
  }
  func.func @transform_5(%arg0: i32) -> (i32, i32, i32) {
    %c0_i32 = arith.constant 0 : i32
    %c0_i32_0 = arith.constant 0 : i32
    %c0_i32_1 = arith.constant 0 : i32
    return %arg0, %c0_i32, %c0_i32_0 : i32, i32, i32
  }
}

module attributes {stable_mosaic.version = 11 : i64} {
  func.func @kernel(%arg0: i32, %arg1: memref<1x32x404xbf16, #tpu.memory_space<vmem>>, %arg2: memref<9x16x32xbf16, #tpu.memory_space<vmem>>, %arg3: memref<1x16x4xf32, #tpu.memory_space<vmem>>, %arg4: memref<1x1x320xf32, #tpu.memory_space<vmem>>, %arg5: memref<1x362xf32, #tpu.memory_space<vmem>>, %arg6: memref<1x320xf32, #tpu.memory_space<vmem>>, %arg7: memref<1x16x320xbf16, #tpu.memory_space<vmem>>, %arg8: memref<16x362xf32, #tpu.memory_space<vmem>>) attributes {dimension_semantics = [#tpu.dimension_semantics<parallel>], iteration_bounds = array<i64: 2>, scalar_prefetch = 0 : i64, scratch_operands = 1 : i64, tpu.core_type = #tpu.core_type<tc>, window_params = [{transform_indices = @transform_0, window_bounds = array<i64: 1, 32, 404>}, {pipeline_mode = #tpu.pipeline_mode<synchronous>, transform_indices = @transform_1, window_bounds = array<i64: 9, 16, 32>}, {transform_indices = @transform_2, window_bounds = array<i64: 1, 16, 4>}, {transform_indices = @transform_3, window_bounds = array<i64: 1, 1, 320>}, {pipeline_mode = #tpu.pipeline_mode<synchronous>, transform_indices = @transform_4, window_bounds = array<i64: 1, 362>}, {pipeline_mode = #tpu.pipeline_mode<synchronous>, transform_indices = @transform_5, window_bounds = array<i64: 1, 320>}, {transform_indices = @transform_6, window_bounds = array<i64: 1, 16, 320>}]} {
    %c0 = arith.constant 0 : index
    %c0_0 = arith.constant 0 : index
    %c0_1 = arith.constant 0 : index
    %0 = vector.load %arg1[%c0, %c0_0, %c0_1] : memref<1x32x404xbf16, #tpu.memory_space<vmem>>, vector<1x32x362xbf16>
    %1 = vector.shape_cast %0 : vector<1x32x362xbf16> to vector<32x362xbf16>
    %c0_2 = arith.constant 0 : index
    %c0_3 = arith.constant 0 : index
    %c0_4 = arith.constant 0 : index
    %2 = vector.load %arg2[%c0_2, %c0_3, %c0_4] : memref<9x16x32xbf16, #tpu.memory_space<vmem>>, vector<1x16x32xbf16>
    %3 = vector.shape_cast %2 : vector<1x16x32xbf16> to vector<16x32xbf16>
    %cst = arith.constant dense<0.000000e+00> : vector<16x362xf32>
    %4 = tpu.matmul %3, %1, %cst {dimension_numbers = #tpu.dot_dimension_numbers<[1], [0], [0], [1], [0, 0, 1, 1], [], []>} : vector<16x32xbf16>, vector<32x362xbf16>, vector<16x362xf32> -> vector<16x362xf32>
    %c0_5 = arith.constant 0 : index
    %c0_6 = arith.constant 0 : index
    %c1 = arith.constant 1 : index
    %5 = vector.load %arg1[%c0_5, %c0_6, %c1] : memref<1x32x404xbf16, #tpu.memory_space<vmem>>, vector<1x32x362xbf16>
    %6 = vector.shape_cast %5 : vector<1x32x362xbf16> to vector<32x362xbf16>
    %c1_7 = arith.constant 1 : index
    %c0_8 = arith.constant 0 : index
    %c0_9 = arith.constant 0 : index
    %7 = vector.load %arg2[%c1_7, %c0_8, %c0_9] : memref<9x16x32xbf16, #tpu.memory_space<vmem>>, vector<1x16x32xbf16>
    %8 = vector.shape_cast %7 : vector<1x16x32xbf16> to vector<16x32xbf16>
    %cst_10 = arith.constant dense<0.000000e+00> : vector<16x362xf32>
    %9 = tpu.matmul %8, %6, %cst_10 {dimension_numbers = #tpu.dot_dimension_numbers<[1], [0], [0], [1], [0, 0, 1, 1], [], []>} : vector<16x32xbf16>, vector<32x362xbf16>, vector<16x362xf32> -> vector<16x362xf32>
    %10 = arith.addf %4, %9 : vector<16x362xf32>
    %c0_11 = arith.constant 0 : index
    %c0_12 = arith.constant 0 : index
    %c2 = arith.constant 2 : index
    %11 = vector.load %arg1[%c0_11, %c0_12, %c2] : memref<1x32x404xbf16, #tpu.memory_space<vmem>>, vector<1x32x362xbf16>
    %12 = vector.shape_cast %11 : vector<1x32x362xbf16> to vector<32x362xbf16>
    %c2_13 = arith.constant 2 : index
    %c0_14 = arith.constant 0 : index
    %c0_15 = arith.constant 0 : index
    %13 = vector.load %arg2[%c2_13, %c0_14, %c0_15] : memref<9x16x32xbf16, #tpu.memory_space<vmem>>, vector<1x16x32xbf16>
    %14 = vector.shape_cast %13 : vector<1x16x32xbf16> to vector<16x32xbf16>
    %cst_16 = arith.constant dense<0.000000e+00> : vector<16x362xf32>
    %15 = tpu.matmul %14, %12, %cst_16 {dimension_numbers = #tpu.dot_dimension_numbers<[1], [0], [0], [1], [0, 0, 1, 1], [], []>} : vector<16x32xbf16>, vector<32x362xbf16>, vector<16x362xf32> -> vector<16x362xf32>
    %16 = arith.addf %10, %15 : vector<16x362xf32>
    %c0_17 = arith.constant 0 : index
    %c0_18 = arith.constant 0 : index
    %c20 = arith.constant 20 : index
    %17 = vector.load %arg1[%c0_17, %c0_18, %c20] : memref<1x32x404xbf16, #tpu.memory_space<vmem>>, vector<1x32x362xbf16>
    %18 = vector.shape_cast %17 : vector<1x32x362xbf16> to vector<32x362xbf16>
    %c3 = arith.constant 3 : index
    %c0_19 = arith.constant 0 : index
    %c0_20 = arith.constant 0 : index
    %19 = vector.load %arg2[%c3, %c0_19, %c0_20] : memref<9x16x32xbf16, #tpu.memory_space<vmem>>, vector<1x16x32xbf16>
    %20 = vector.shape_cast %19 : vector<1x16x32xbf16> to vector<16x32xbf16>
    %cst_21 = arith.constant dense<0.000000e+00> : vector<16x362xf32>
    %21 = tpu.matmul %20, %18, %cst_21 {dimension_numbers = #tpu.dot_dimension_numbers<[1], [0], [0], [1], [0, 0, 1, 1], [], []>} : vector<16x32xbf16>, vector<32x362xbf16>, vector<16x362xf32> -> vector<16x362xf32>
    %22 = arith.addf %16, %21 : vector<16x362xf32>
    %c0_22 = arith.constant 0 : index
    %c0_23 = arith.constant 0 : index
    %c21 = arith.constant 21 : index
    %23 = vector.load %arg1[%c0_22, %c0_23, %c21] : memref<1x32x404xbf16, #tpu.memory_space<vmem>>, vector<1x32x362xbf16>
    %24 = vector.shape_cast %23 : vector<1x32x362xbf16> to vector<32x362xbf16>
    %c4 = arith.constant 4 : index
    %c0_24 = arith.constant 0 : index
    %c0_25 = arith.constant 0 : index
    %25 = vector.load %arg2[%c4, %c0_24, %c0_25] : memref<9x16x32xbf16, #tpu.memory_space<vmem>>, vector<1x16x32xbf16>
    %26 = vector.shape_cast %25 : vector<1x16x32xbf16> to vector<16x32xbf16>
    %cst_26 = arith.constant dense<0.000000e+00> : vector<16x362xf32>
    %27 = tpu.matmul %26, %24, %cst_26 {dimension_numbers = #tpu.dot_dimension_numbers<[1], [0], [0], [1], [0, 0, 1, 1], [], []>} : vector<16x32xbf16>, vector<32x362xbf16>, vector<16x362xf32> -> vector<16x362xf32>
    %28 = arith.addf %22, %27 : vector<16x362xf32>
    %c0_27 = arith.constant 0 : index
    %c0_28 = arith.constant 0 : index
    %c22 = arith.constant 22 : index
    %29 = vector.load %arg1[%c0_27, %c0_28, %c22] : memref<1x32x404xbf16, #tpu.memory_space<vmem>>, vector<1x32x362xbf16>
    %30 = vector.shape_cast %29 : vector<1x32x362xbf16> to vector<32x362xbf16>
    %c5 = arith.constant 5 : index
    %c0_29 = arith.constant 0 : index
    %c0_30 = arith.constant 0 : index
    %31 = vector.load %arg2[%c5, %c0_29, %c0_30] : memref<9x16x32xbf16, #tpu.memory_space<vmem>>, vector<1x16x32xbf16>
    %32 = vector.shape_cast %31 : vector<1x16x32xbf16> to vector<16x32xbf16>
    %cst_31 = arith.constant dense<0.000000e+00> : vector<16x362xf32>
    %33 = tpu.matmul %32, %30, %cst_31 {dimension_numbers = #tpu.dot_dimension_numbers<[1], [0], [0], [1], [0, 0, 1, 1], [], []>} : vector<16x32xbf16>, vector<32x362xbf16>, vector<16x362xf32> -> vector<16x362xf32>
    %34 = arith.addf %28, %33 : vector<16x362xf32>
    %c0_32 = arith.constant 0 : index
    %c0_33 = arith.constant 0 : index
    %c40 = arith.constant 40 : index
    %35 = vector.load %arg1[%c0_32, %c0_33, %c40] : memref<1x32x404xbf16, #tpu.memory_space<vmem>>, vector<1x32x362xbf16>
    %36 = vector.shape_cast %35 : vector<1x32x362xbf16> to vector<32x362xbf16>
    %c6 = arith.constant 6 : index
    %c0_34 = arith.constant 0 : index
    %c0_35 = arith.constant 0 : index
    %37 = vector.load %arg2[%c6, %c0_34, %c0_35] : memref<9x16x32xbf16, #tpu.memory_space<vmem>>, vector<1x16x32xbf16>
    %38 = vector.shape_cast %37 : vector<1x16x32xbf16> to vector<16x32xbf16>
    %cst_36 = arith.constant dense<0.000000e+00> : vector<16x362xf32>
    %39 = tpu.matmul %38, %36, %cst_36 {dimension_numbers = #tpu.dot_dimension_numbers<[1], [0], [0], [1], [0, 0, 1, 1], [], []>} : vector<16x32xbf16>, vector<32x362xbf16>, vector<16x362xf32> -> vector<16x362xf32>
    %40 = arith.addf %34, %39 : vector<16x362xf32>
    %c0_37 = arith.constant 0 : index
    %c0_38 = arith.constant 0 : index
    %c41 = arith.constant 41 : index
    %41 = vector.load %arg1[%c0_37, %c0_38, %c41] : memref<1x32x404xbf16, #tpu.memory_space<vmem>>, vector<1x32x362xbf16>
    %42 = vector.shape_cast %41 : vector<1x32x362xbf16> to vector<32x362xbf16>
    %c7 = arith.constant 7 : index
    %c0_39 = arith.constant 0 : index
    %c0_40 = arith.constant 0 : index
    %43 = vector.load %arg2[%c7, %c0_39, %c0_40] : memref<9x16x32xbf16, #tpu.memory_space<vmem>>, vector<1x16x32xbf16>
    %44 = vector.shape_cast %43 : vector<1x16x32xbf16> to vector<16x32xbf16>
    %cst_41 = arith.constant dense<0.000000e+00> : vector<16x362xf32>
    %45 = tpu.matmul %44, %42, %cst_41 {dimension_numbers = #tpu.dot_dimension_numbers<[1], [0], [0], [1], [0, 0, 1, 1], [], []>} : vector<16x32xbf16>, vector<32x362xbf16>, vector<16x362xf32> -> vector<16x362xf32>
    %46 = arith.addf %40, %45 : vector<16x362xf32>
    %c0_42 = arith.constant 0 : index
    %c0_43 = arith.constant 0 : index
    %c42 = arith.constant 42 : index
    %47 = vector.load %arg1[%c0_42, %c0_43, %c42] : memref<1x32x404xbf16, #tpu.memory_space<vmem>>, vector<1x32x362xbf16>
    %48 = vector.shape_cast %47 : vector<1x32x362xbf16> to vector<32x362xbf16>
    %c8 = arith.constant 8 : index
    %c0_44 = arith.constant 0 : index
    %c0_45 = arith.constant 0 : index
    %49 = vector.load %arg2[%c8, %c0_44, %c0_45] : memref<9x16x32xbf16, #tpu.memory_space<vmem>>, vector<1x16x32xbf16>
    %50 = vector.shape_cast %49 : vector<1x16x32xbf16> to vector<16x32xbf16>
    %cst_46 = arith.constant dense<0.000000e+00> : vector<16x362xf32>
    %51 = tpu.matmul %50, %48, %cst_46 {dimension_numbers = #tpu.dot_dimension_numbers<[1], [0], [0], [1], [0, 0, 1, 1], [], []>} : vector<16x32xbf16>, vector<32x362xbf16>, vector<16x362xf32> -> vector<16x362xf32>
    %52 = arith.addf %46, %51 : vector<16x362xf32>
    %c0_47 = arith.constant 0 : index
    %c0_48 = arith.constant 0 : index
    %53 = vector.load %arg5[%c0_47, %c0_48] : memref<1x362xf32, #tpu.memory_space<vmem>>, vector<1x362xf32>
    %54 = vector.broadcast %53 : vector<1x362xf32> to vector<16x362xf32>
    %55 = arith.mulf %52, %54 : vector<16x362xf32>
    %c0_49 = arith.constant 0 : index
    %c0_50 = arith.constant 0 : index
    %56 = vector.load %arg8[%c0_49, %c0_50] : memref<16x362xf32, #tpu.memory_space<vmem>>, vector<16x362xf32>
    tpu.vector_store %arg8[%c0_49, %c0_50], %55 {strides = array<i32>} : memref<16x362xf32, #tpu.memory_space<vmem>>, vector<16x362xf32>,
    %c0_51 = arith.constant 0 : index
    %c0_52 = arith.constant 0 : index
    %57 = vector.load %arg8[%c0_51, %c0_52] : memref<16x362xf32, #tpu.memory_space<vmem>>, vector<16x320xf32>
    %cst_53 = arith.constant 6.250000e-02 : f32
    %58 = vector.broadcast %cst_53 : f32 to vector<16x320xf32>
    %59 = arith.mulf %58, %57 : vector<16x320xf32>
    %c0_54 = arith.constant 0 : index
    %c1_55 = arith.constant 1 : index
    %60 = vector.load %arg8[%c0_54, %c1_55] : memref<16x362xf32, #tpu.memory_space<vmem>>, vector<16x320xf32>
    %cst_56 = arith.constant 1.250000e-01 : f32
    %61 = vector.broadcast %cst_56 : f32 to vector<16x320xf32>
    %62 = arith.mulf %61, %60 : vector<16x320xf32>
    %63 = arith.addf %59, %62 : vector<16x320xf32>
    %c0_57 = arith.constant 0 : index
    %c2_58 = arith.constant 2 : index
    %64 = vector.load %arg8[%c0_57, %c2_58] : memref<16x362xf32, #tpu.memory_space<vmem>>, vector<16x320xf32>
    %cst_59 = arith.constant 6.250000e-02 : f32
    %65 = vector.broadcast %cst_59 : f32 to vector<16x320xf32>
    %66 = arith.mulf %65, %64 : vector<16x320xf32>
    %67 = arith.addf %63, %66 : vector<16x320xf32>
    %c0_60 = arith.constant 0 : index
    %c20_61 = arith.constant 20 : index
    %68 = vector.load %arg8[%c0_60, %c20_61] : memref<16x362xf32, #tpu.memory_space<vmem>>, vector<16x320xf32>
    %cst_62 = arith.constant 1.250000e-01 : f32
    %69 = vector.broadcast %cst_62 : f32 to vector<16x320xf32>
    %70 = arith.mulf %69, %68 : vector<16x320xf32>
    %71 = arith.addf %67, %70 : vector<16x320xf32>
    %c0_63 = arith.constant 0 : index
    %c21_64 = arith.constant 21 : index
    %72 = vector.load %arg8[%c0_63, %c21_64] : memref<16x362xf32, #tpu.memory_space<vmem>>, vector<16x320xf32>
    %cst_65 = arith.constant 2.500000e-01 : f32
    %73 = vector.broadcast %cst_65 : f32 to vector<16x320xf32>
    %74 = arith.mulf %73, %72 : vector<16x320xf32>
    %75 = arith.addf %71, %74 : vector<16x320xf32>
    %c0_66 = arith.constant 0 : index
    %c22_67 = arith.constant 22 : index
    %76 = vector.load %arg8[%c0_66, %c22_67] : memref<16x362xf32, #tpu.memory_space<vmem>>, vector<16x320xf32>
    %cst_68 = arith.constant 1.250000e-01 : f32
    %77 = vector.broadcast %cst_68 : f32 to vector<16x320xf32>
    %78 = arith.mulf %77, %76 : vector<16x320xf32>
    %79 = arith.addf %75, %78 : vector<16x320xf32>
    %c0_69 = arith.constant 0 : index
    %c40_70 = arith.constant 40 : index
    %80 = vector.load %arg8[%c0_69, %c40_70] : memref<16x362xf32, #tpu.memory_space<vmem>>, vector<16x320xf32>
    %cst_71 = arith.constant 6.250000e-02 : f32
    %81 = vector.broadcast %cst_71 : f32 to vector<16x320xf32>
    %82 = arith.mulf %81, %80 : vector<16x320xf32>
    %83 = arith.addf %79, %82 : vector<16x320xf32>
    %c0_72 = arith.constant 0 : index
    %c41_73 = arith.constant 41 : index
    %84 = vector.load %arg8[%c0_72, %c41_73] : memref<16x362xf32, #tpu.memory_space<vmem>>, vector<16x320xf32>
    %cst_74 = arith.constant 1.250000e-01 : f32
    %85 = vector.broadcast %cst_74 : f32 to vector<16x320xf32>
    %86 = arith.mulf %85, %84 : vector<16x320xf32>
    %87 = arith.addf %83, %86 : vector<16x320xf32>
    %c0_75 = arith.constant 0 : index
    %c42_76 = arith.constant 42 : index
    %88 = vector.load %arg8[%c0_75, %c42_76] : memref<16x362xf32, #tpu.memory_space<vmem>>, vector<16x320xf32>
    %cst_77 = arith.constant 6.250000e-02 : f32
    %89 = vector.broadcast %cst_77 : f32 to vector<16x320xf32>
    %90 = arith.mulf %89, %88 : vector<16x320xf32>
    %91 = arith.addf %87, %90 : vector<16x320xf32>
    %c0_78 = arith.constant 0 : index
    %c0_79 = arith.constant 0 : index
    %c0_80 = arith.constant 0 : index
    %92 = vector.load %arg3[%c0_78, %c0_79, %c0_80] : memref<1x16x4xf32, #tpu.memory_space<vmem>>, vector<1x16x4xf32>
    %93 = vector.shape_cast %92 : vector<1x16x4xf32> to vector<16x4xf32>
    %94 = vector.extract_strided_slice %93 {offsets = [0, 0], sizes = [16, 1], strides = [1, 1]} : vector<16x4xf32> to vector<16x1xf32>
    %95 = vector.broadcast %94 : vector<16x1xf32> to vector<16x320xf32>
    %96 = arith.addf %91, %95 : vector<16x320xf32>
    %97 = vector.extract_strided_slice %93 {offsets = [0, 1], sizes = [16, 1], strides = [1, 1]} : vector<16x4xf32> to vector<16x1xf32>
    %c0_81 = arith.constant 0 : index
    %c0_82 = arith.constant 0 : index
    %c0_83 = arith.constant 0 : index
    %98 = vector.load %arg4[%c0_81, %c0_82, %c0_83] : memref<1x1x320xf32, #tpu.memory_space<vmem>>, vector<1x1x320xf32>
    %99 = vector.shape_cast %98 : vector<1x1x320xf32> to vector<1x320xf32>
    %100 = vector.broadcast %97 : vector<16x1xf32> to vector<16x320xf32>
    %101 = vector.broadcast %99 : vector<1x320xf32> to vector<16x320xf32>
    %102 = arith.mulf %100, %101 : vector<16x320xf32>
    %103 = arith.addf %96, %102 : vector<16x320xf32>
    %cst_84 = arith.constant 0.000000e+00 : f32
    %104 = vector.broadcast %cst_84 : f32 to vector<16x320xf32>
    %105 = arith.cmpf oge, %103, %104 : vector<16x320xf32>
    %cst_85 = arith.constant 2.000000e-01 : f32
    %106 = vector.broadcast %cst_85 : f32 to vector<16x320xf32>
    %107 = arith.mulf %106, %103 : vector<16x320xf32>
    %108 = arith.select %105, %103, %107 : vector<16x320xi1>, vector<16x320xf32>
    %c0_86 = arith.constant 0 : index
    %c0_87 = arith.constant 0 : index
    %109 = vector.load %arg6[%c0_86, %c0_87] : memref<1x320xf32, #tpu.memory_space<vmem>>, vector<1x320xf32>
    %110 = vector.broadcast %109 : vector<1x320xf32> to vector<16x320xf32>
    %111 = arith.mulf %108, %110 : vector<16x320xf32>
    %cst_88 = arith.constant dense<0.000000e+00> : vector<16xf32>
    %112 = vector.multi_reduction <add>, %111, %cst_88 [1] : vector<16x320xf32> to vector<16xf32>
    %113 = vector.shape_cast %112 : vector<16xf32> to vector<16x1xf32>
    %cst_89 = arith.constant 3.906250e-03 : f32
    %114 = vector.broadcast %cst_89 : f32 to vector<16x1xf32>
    %115 = arith.mulf %113, %114 : vector<16x1xf32>
    %116 = arith.mulf %111, %111 : vector<16x320xf32>
    %cst_90 = arith.constant dense<0.000000e+00> : vector<16xf32>
    %117 = vector.multi_reduction <add>, %116, %cst_90 [1] : vector<16x320xf32> to vector<16xf32>
    %118 = vector.shape_cast %117 : vector<16xf32> to vector<16x1xf32>
    %cst_91 = arith.constant 3.906250e-03 : f32
    %119 = vector.broadcast %cst_91 : f32 to vector<16x1xf32>
    %120 = arith.mulf %118, %119 : vector<16x1xf32>
    %121 = arith.mulf %115, %115 : vector<16x1xf32>
    %122 = arith.subf %120, %121 : vector<16x1xf32>
    %123 = vector.broadcast %115 : vector<16x1xf32> to vector<16x320xf32>
    %124 = arith.subf %111, %123 : vector<16x320xf32>
    %cst_92 = arith.constant 0.000000e+00 : f32
    %125 = vector.broadcast %cst_92 : f32 to vector<16x1xf32>
    %126 = arith.maximumf %122, %125 : vector<16x1xf32>
    %cst_93 = arith.constant 9.99999974E-6 : f32
    %127 = vector.broadcast %cst_93 : f32 to vector<16x1xf32>
    %128 = arith.addf %126, %127 : vector<16x1xf32>
    %129 = math.rsqrt %128 : vector<16x1xf32>
    %130 = vector.broadcast %129 : vector<16x1xf32> to vector<16x320xf32>
    %131 = arith.mulf %124, %130 : vector<16x320xf32>
    %132 = vector.extract_strided_slice %93 {offsets = [0, 2], sizes = [16, 1], strides = [1, 1]} : vector<16x4xf32> to vector<16x1xf32>
    %cst_94 = arith.constant 1.000000e+00 : f32
    %133 = vector.broadcast %cst_94 : f32 to vector<16x1xf32>
    %134 = arith.addf %132, %133 : vector<16x1xf32>
    %135 = vector.broadcast %134 : vector<16x1xf32> to vector<16x320xf32>
    %136 = arith.mulf %131, %135 : vector<16x320xf32>
    %137 = vector.extract_strided_slice %93 {offsets = [0, 3], sizes = [16, 1], strides = [1, 1]} : vector<16x4xf32> to vector<16x1xf32>
    %138 = vector.broadcast %137 : vector<16x1xf32> to vector<16x320xf32>
    %139 = arith.addf %136, %138 : vector<16x320xf32>
    %140 = arith.truncf %139 : vector<16x320xf32> to vector<16x320xbf16>
    %c0_95 = arith.constant 0 : index
    %c0_96 = arith.constant 0 : index
    %c0_97 = arith.constant 0 : index
    %141 = vector.load %arg7[%c0_95, %c0_96, %c0_97] : memref<1x16x320xbf16, #tpu.memory_space<vmem>>, vector<1x16x320xbf16>
    %142 = vector.shape_cast %141 : vector<1x16x320xbf16> to vector<16x320xbf16>
    %143 = vector.shape_cast %140 : vector<16x320xbf16> to vector<1x16x320xbf16>
    tpu.vector_store %arg7[%c0_95, %c0_96, %c0_97], %143 {strides = array<i32>} : memref<1x16x320xbf16, #tpu.memory_space<vmem>>, vector<1x16x320xbf16>,
    return
  }
  func.func @transform_0(%arg0: i32) -> (i32, i32, i32) {
    %c0_i32 = arith.constant 0 : i32
    %c0_i32_0 = arith.constant 0 : i32
    %c0_i32_1 = arith.constant 0 : i32
    return %arg0, %c0_i32, %c0_i32_0 : i32, i32, i32
  }
  func.func @transform_1(%arg0: i32) -> (i32, i32, i32) {
    %c0_i32 = arith.constant 0 : i32
    %c0_i32_0 = arith.constant 0 : i32
    %c0_i32_1 = arith.constant 0 : i32
    %c0_i32_2 = arith.constant 0 : i32
    return %c0_i32, %c0_i32_0, %c0_i32_1 : i32, i32, i32
  }
  func.func @transform_2(%arg0: i32) -> (i32, i32, i32) {
    %c0_i32 = arith.constant 0 : i32
    %c0_i32_0 = arith.constant 0 : i32
    %c0_i32_1 = arith.constant 0 : i32
    return %arg0, %c0_i32, %c0_i32_0 : i32, i32, i32
  }
  func.func @transform_3(%arg0: i32) -> (i32, i32, i32) {
    %c0_i32 = arith.constant 0 : i32
    %c0_i32_0 = arith.constant 0 : i32
    %c0_i32_1 = arith.constant 0 : i32
    return %arg0, %c0_i32, %c0_i32_0 : i32, i32, i32
  }
  func.func @transform_4(%arg0: i32) -> (i32, i32) {
    %c0_i32 = arith.constant 0 : i32
    %c0_i32_0 = arith.constant 0 : i32
    %c0_i32_1 = arith.constant 0 : i32
    return %c0_i32, %c0_i32_0 : i32, i32
  }
  func.func @transform_5(%arg0: i32) -> (i32, i32) {
    %c0_i32 = arith.constant 0 : i32
    %c0_i32_0 = arith.constant 0 : i32
    %c0_i32_1 = arith.constant 0 : i32
    return %c0_i32, %c0_i32_0 : i32, i32
  }
  func.func @transform_6(%arg0: i32) -> (i32, i32, i32) {
    %c0_i32 = arith.constant 0 : i32
    %c0_i32_0 = arith.constant 0 : i32
    %c0_i32_1 = arith.constant 0 : i32
    return %arg0, %c0_i32, %c0_i32_0 : i32, i32, i32
  }
}

module attributes {stable_mosaic.version = 11 : i64} {
  func.func @kernel(%arg0: i32, %arg1: memref<1x16x328xbf16, #tpu.memory_space<vmem>>, %arg2: memref<9x16x16xbf16, #tpu.memory_space<vmem>>, %arg3: memref<1x16x4xf32, #tpu.memory_space<vmem>>, %arg4: memref<1x1x288xf32, #tpu.memory_space<vmem>>, %arg5: memref<1x288xf32, #tpu.memory_space<vmem>>, %arg6: memref<1x16x288xbf16, #tpu.memory_space<vmem>>) attributes {dimension_semantics = [#tpu.dimension_semantics<parallel>], iteration_bounds = array<i64: 2>, scalar_prefetch = 0 : i64, scratch_operands = 0 : i64, tpu.core_type = #tpu.core_type<tc>, window_params = [{transform_indices = @transform_0, window_bounds = array<i64: 1, 16, 328>}, {pipeline_mode = #tpu.pipeline_mode<synchronous>, transform_indices = @transform_1, window_bounds = array<i64: 9, 16, 16>}, {transform_indices = @transform_2, window_bounds = array<i64: 1, 16, 4>}, {transform_indices = @transform_3, window_bounds = array<i64: 1, 1, 288>}, {pipeline_mode = #tpu.pipeline_mode<synchronous>, transform_indices = @transform_4, window_bounds = array<i64: 1, 288>}, {transform_indices = @transform_5, window_bounds = array<i64: 1, 16, 288>}]} {
    %c0 = arith.constant 0 : index
    %c0_0 = arith.constant 0 : index
    %c0_1 = arith.constant 0 : index
    %0 = vector.load %arg1[%c0, %c0_0, %c0_1] : memref<1x16x328xbf16, #tpu.memory_space<vmem>>, vector<1x16x288xbf16>
    %1 = vector.shape_cast %0 : vector<1x16x288xbf16> to vector<16x288xbf16>
    %c0_2 = arith.constant 0 : index
    %c0_3 = arith.constant 0 : index
    %c0_4 = arith.constant 0 : index
    %2 = vector.load %arg2[%c0_2, %c0_3, %c0_4] : memref<9x16x16xbf16, #tpu.memory_space<vmem>>, vector<1x16x16xbf16>
    %3 = vector.shape_cast %2 : vector<1x16x16xbf16> to vector<16x16xbf16>
    %cst = arith.constant dense<0.000000e+00> : vector<16x288xf32>
    %4 = tpu.matmul %3, %1, %cst {dimension_numbers = #tpu.dot_dimension_numbers<[1], [0], [0], [1], [0, 0, 1, 1], [], []>} : vector<16x16xbf16>, vector<16x288xbf16>, vector<16x288xf32> -> vector<16x288xf32>
    %c0_5 = arith.constant 0 : index
    %c0_6 = arith.constant 0 : index
    %c1 = arith.constant 1 : index
    %5 = vector.load %arg1[%c0_5, %c0_6, %c1] : memref<1x16x328xbf16, #tpu.memory_space<vmem>>, vector<1x16x288xbf16>
    %6 = vector.shape_cast %5 : vector<1x16x288xbf16> to vector<16x288xbf16>
    %c1_7 = arith.constant 1 : index
    %c0_8 = arith.constant 0 : index
    %c0_9 = arith.constant 0 : index
    %7 = vector.load %arg2[%c1_7, %c0_8, %c0_9] : memref<9x16x16xbf16, #tpu.memory_space<vmem>>, vector<1x16x16xbf16>
    %8 = vector.shape_cast %7 : vector<1x16x16xbf16> to vector<16x16xbf16>
    %cst_10 = arith.constant dense<0.000000e+00> : vector<16x288xf32>
    %9 = tpu.matmul %8, %6, %cst_10 {dimension_numbers = #tpu.dot_dimension_numbers<[1], [0], [0], [1], [0, 0, 1, 1], [], []>} : vector<16x16xbf16>, vector<16x288xbf16>, vector<16x288xf32> -> vector<16x288xf32>
    %10 = arith.addf %4, %9 : vector<16x288xf32>
    %c0_11 = arith.constant 0 : index
    %c0_12 = arith.constant 0 : index
    %c2 = arith.constant 2 : index
    %11 = vector.load %arg1[%c0_11, %c0_12, %c2] : memref<1x16x328xbf16, #tpu.memory_space<vmem>>, vector<1x16x288xbf16>
    %12 = vector.shape_cast %11 : vector<1x16x288xbf16> to vector<16x288xbf16>
    %c2_13 = arith.constant 2 : index
    %c0_14 = arith.constant 0 : index
    %c0_15 = arith.constant 0 : index
    %13 = vector.load %arg2[%c2_13, %c0_14, %c0_15] : memref<9x16x16xbf16, #tpu.memory_space<vmem>>, vector<1x16x16xbf16>
    %14 = vector.shape_cast %13 : vector<1x16x16xbf16> to vector<16x16xbf16>
    %cst_16 = arith.constant dense<0.000000e+00> : vector<16x288xf32>
    %15 = tpu.matmul %14, %12, %cst_16 {dimension_numbers = #tpu.dot_dimension_numbers<[1], [0], [0], [1], [0, 0, 1, 1], [], []>} : vector<16x16xbf16>, vector<16x288xbf16>, vector<16x288xf32> -> vector<16x288xf32>
    %16 = arith.addf %10, %15 : vector<16x288xf32>
    %c0_17 = arith.constant 0 : index
    %c0_18 = arith.constant 0 : index
    %c18 = arith.constant 18 : index
    %17 = vector.load %arg1[%c0_17, %c0_18, %c18] : memref<1x16x328xbf16, #tpu.memory_space<vmem>>, vector<1x16x288xbf16>
    %18 = vector.shape_cast %17 : vector<1x16x288xbf16> to vector<16x288xbf16>
    %c3 = arith.constant 3 : index
    %c0_19 = arith.constant 0 : index
    %c0_20 = arith.constant 0 : index
    %19 = vector.load %arg2[%c3, %c0_19, %c0_20] : memref<9x16x16xbf16, #tpu.memory_space<vmem>>, vector<1x16x16xbf16>
    %20 = vector.shape_cast %19 : vector<1x16x16xbf16> to vector<16x16xbf16>
    %cst_21 = arith.constant dense<0.000000e+00> : vector<16x288xf32>
    %21 = tpu.matmul %20, %18, %cst_21 {dimension_numbers = #tpu.dot_dimension_numbers<[1], [0], [0], [1], [0, 0, 1, 1], [], []>} : vector<16x16xbf16>, vector<16x288xbf16>, vector<16x288xf32> -> vector<16x288xf32>
    %22 = arith.addf %16, %21 : vector<16x288xf32>
    %c0_22 = arith.constant 0 : index
    %c0_23 = arith.constant 0 : index
    %c19 = arith.constant 19 : index
    %23 = vector.load %arg1[%c0_22, %c0_23, %c19] : memref<1x16x328xbf16, #tpu.memory_space<vmem>>, vector<1x16x288xbf16>
    %24 = vector.shape_cast %23 : vector<1x16x288xbf16> to vector<16x288xbf16>
    %c4 = arith.constant 4 : index
    %c0_24 = arith.constant 0 : index
    %c0_25 = arith.constant 0 : index
    %25 = vector.load %arg2[%c4, %c0_24, %c0_25] : memref<9x16x16xbf16, #tpu.memory_space<vmem>>, vector<1x16x16xbf16>
    %26 = vector.shape_cast %25 : vector<1x16x16xbf16> to vector<16x16xbf16>
    %cst_26 = arith.constant dense<0.000000e+00> : vector<16x288xf32>
    %27 = tpu.matmul %26, %24, %cst_26 {dimension_numbers = #tpu.dot_dimension_numbers<[1], [0], [0], [1], [0, 0, 1, 1], [], []>} : vector<16x16xbf16>, vector<16x288xbf16>, vector<16x288xf32> -> vector<16x288xf32>
    %28 = arith.addf %22, %27 : vector<16x288xf32>
    %c0_27 = arith.constant 0 : index
    %c0_28 = arith.constant 0 : index
    %c20 = arith.constant 20 : index
    %29 = vector.load %arg1[%c0_27, %c0_28, %c20] : memref<1x16x328xbf16, #tpu.memory_space<vmem>>, vector<1x16x288xbf16>
    %30 = vector.shape_cast %29 : vector<1x16x288xbf16> to vector<16x288xbf16>
    %c5 = arith.constant 5 : index
    %c0_29 = arith.constant 0 : index
    %c0_30 = arith.constant 0 : index
    %31 = vector.load %arg2[%c5, %c0_29, %c0_30] : memref<9x16x16xbf16, #tpu.memory_space<vmem>>, vector<1x16x16xbf16>
    %32 = vector.shape_cast %31 : vector<1x16x16xbf16> to vector<16x16xbf16>
    %cst_31 = arith.constant dense<0.000000e+00> : vector<16x288xf32>
    %33 = tpu.matmul %32, %30, %cst_31 {dimension_numbers = #tpu.dot_dimension_numbers<[1], [0], [0], [1], [0, 0, 1, 1], [], []>} : vector<16x16xbf16>, vector<16x288xbf16>, vector<16x288xf32> -> vector<16x288xf32>
    %34 = arith.addf %28, %33 : vector<16x288xf32>
    %c0_32 = arith.constant 0 : index
    %c0_33 = arith.constant 0 : index
    %c36 = arith.constant 36 : index
    %35 = vector.load %arg1[%c0_32, %c0_33, %c36] : memref<1x16x328xbf16, #tpu.memory_space<vmem>>, vector<1x16x288xbf16>
    %36 = vector.shape_cast %35 : vector<1x16x288xbf16> to vector<16x288xbf16>
    %c6 = arith.constant 6 : index
    %c0_34 = arith.constant 0 : index
    %c0_35 = arith.constant 0 : index
    %37 = vector.load %arg2[%c6, %c0_34, %c0_35] : memref<9x16x16xbf16, #tpu.memory_space<vmem>>, vector<1x16x16xbf16>
    %38 = vector.shape_cast %37 : vector<1x16x16xbf16> to vector<16x16xbf16>
    %cst_36 = arith.constant dense<0.000000e+00> : vector<16x288xf32>
    %39 = tpu.matmul %38, %36, %cst_36 {dimension_numbers = #tpu.dot_dimension_numbers<[1], [0], [0], [1], [0, 0, 1, 1], [], []>} : vector<16x16xbf16>, vector<16x288xbf16>, vector<16x288xf32> -> vector<16x288xf32>
    %40 = arith.addf %34, %39 : vector<16x288xf32>
    %c0_37 = arith.constant 0 : index
    %c0_38 = arith.constant 0 : index
    %c37 = arith.constant 37 : index
    %41 = vector.load %arg1[%c0_37, %c0_38, %c37] : memref<1x16x328xbf16, #tpu.memory_space<vmem>>, vector<1x16x288xbf16>
    %42 = vector.shape_cast %41 : vector<1x16x288xbf16> to vector<16x288xbf16>
    %c7 = arith.constant 7 : index
    %c0_39 = arith.constant 0 : index
    %c0_40 = arith.constant 0 : index
    %43 = vector.load %arg2[%c7, %c0_39, %c0_40] : memref<9x16x16xbf16, #tpu.memory_space<vmem>>, vector<1x16x16xbf16>
    %44 = vector.shape_cast %43 : vector<1x16x16xbf16> to vector<16x16xbf16>
    %cst_41 = arith.constant dense<0.000000e+00> : vector<16x288xf32>
    %45 = tpu.matmul %44, %42, %cst_41 {dimension_numbers = #tpu.dot_dimension_numbers<[1], [0], [0], [1], [0, 0, 1, 1], [], []>} : vector<16x16xbf16>, vector<16x288xbf16>, vector<16x288xf32> -> vector<16x288xf32>
    %46 = arith.addf %40, %45 : vector<16x288xf32>
    %c0_42 = arith.constant 0 : index
    %c0_43 = arith.constant 0 : index
    %c38 = arith.constant 38 : index
    %47 = vector.load %arg1[%c0_42, %c0_43, %c38] : memref<1x16x328xbf16, #tpu.memory_space<vmem>>, vector<1x16x288xbf16>
    %48 = vector.shape_cast %47 : vector<1x16x288xbf16> to vector<16x288xbf16>
    %c8 = arith.constant 8 : index
    %c0_44 = arith.constant 0 : index
    %c0_45 = arith.constant 0 : index
    %49 = vector.load %arg2[%c8, %c0_44, %c0_45] : memref<9x16x16xbf16, #tpu.memory_space<vmem>>, vector<1x16x16xbf16>
    %50 = vector.shape_cast %49 : vector<1x16x16xbf16> to vector<16x16xbf16>
    %cst_46 = arith.constant dense<0.000000e+00> : vector<16x288xf32>
    %51 = tpu.matmul %50, %48, %cst_46 {dimension_numbers = #tpu.dot_dimension_numbers<[1], [0], [0], [1], [0, 0, 1, 1], [], []>} : vector<16x16xbf16>, vector<16x288xbf16>, vector<16x288xf32> -> vector<16x288xf32>
    %52 = arith.addf %46, %51 : vector<16x288xf32>
    %c0_47 = arith.constant 0 : index
    %c0_48 = arith.constant 0 : index
    %c0_49 = arith.constant 0 : index
    %53 = vector.load %arg3[%c0_47, %c0_48, %c0_49] : memref<1x16x4xf32, #tpu.memory_space<vmem>>, vector<1x16x4xf32>
    %54 = vector.shape_cast %53 : vector<1x16x4xf32> to vector<16x4xf32>
    %55 = vector.extract_strided_slice %54 {offsets = [0, 0], sizes = [16, 1], strides = [1, 1]} : vector<16x4xf32> to vector<16x1xf32>
    %56 = vector.broadcast %55 : vector<16x1xf32> to vector<16x288xf32>
    %57 = arith.addf %52, %56 : vector<16x288xf32>
    %58 = vector.extract_strided_slice %54 {offsets = [0, 1], sizes = [16, 1], strides = [1, 1]} : vector<16x4xf32> to vector<16x1xf32>
    %c0_50 = arith.constant 0 : index
    %c0_51 = arith.constant 0 : index
    %c0_52 = arith.constant 0 : index
    %59 = vector.load %arg4[%c0_50, %c0_51, %c0_52] : memref<1x1x288xf32, #tpu.memory_space<vmem>>, vector<1x1x288xf32>
    %60 = vector.shape_cast %59 : vector<1x1x288xf32> to vector<1x288xf32>
    %61 = vector.broadcast %58 : vector<16x1xf32> to vector<16x288xf32>
    %62 = vector.broadcast %60 : vector<1x288xf32> to vector<16x288xf32>
    %63 = arith.mulf %61, %62 : vector<16x288xf32>
    %64 = arith.addf %57, %63 : vector<16x288xf32>
    %cst_53 = arith.constant 0.000000e+00 : f32
    %65 = vector.broadcast %cst_53 : f32 to vector<16x288xf32>
    %66 = arith.cmpf oge, %64, %65 : vector<16x288xf32>
    %cst_54 = arith.constant 2.000000e-01 : f32
    %67 = vector.broadcast %cst_54 : f32 to vector<16x288xf32>
    %68 = arith.mulf %67, %64 : vector<16x288xf32>
    %69 = arith.select %66, %64, %68 : vector<16x288xi1>, vector<16x288xf32>
    %c0_55 = arith.constant 0 : index
    %c0_56 = arith.constant 0 : index
    %70 = vector.load %arg5[%c0_55, %c0_56] : memref<1x288xf32, #tpu.memory_space<vmem>>, vector<1x288xf32>
    %71 = vector.broadcast %70 : vector<1x288xf32> to vector<16x288xf32>
    %72 = arith.mulf %69, %71 : vector<16x288xf32>
    %cst_57 = arith.constant dense<0.000000e+00> : vector<16xf32>
    %73 = vector.multi_reduction <add>, %72, %cst_57 [1] : vector<16x288xf32> to vector<16xf32>
    %74 = vector.shape_cast %73 : vector<16xf32> to vector<16x1xf32>
    %cst_58 = arith.constant 3.906250e-03 : f32
    %75 = vector.broadcast %cst_58 : f32 to vector<16x1xf32>
    %76 = arith.mulf %74, %75 : vector<16x1xf32>
    %77 = arith.mulf %72, %72 : vector<16x288xf32>
    %cst_59 = arith.constant dense<0.000000e+00> : vector<16xf32>
    %78 = vector.multi_reduction <add>, %77, %cst_59 [1] : vector<16x288xf32> to vector<16xf32>
    %79 = vector.shape_cast %78 : vector<16xf32> to vector<16x1xf32>
    %cst_60 = arith.constant 3.906250e-03 : f32
    %80 = vector.broadcast %cst_60 : f32 to vector<16x1xf32>
    %81 = arith.mulf %79, %80 : vector<16x1xf32>
    %82 = arith.mulf %76, %76 : vector<16x1xf32>
    %83 = arith.subf %81, %82 : vector<16x1xf32>
    %84 = vector.broadcast %76 : vector<16x1xf32> to vector<16x288xf32>
    %85 = arith.subf %72, %84 : vector<16x288xf32>
    %cst_61 = arith.constant 0.000000e+00 : f32
    %86 = vector.broadcast %cst_61 : f32 to vector<16x1xf32>
    %87 = arith.maximumf %83, %86 : vector<16x1xf32>
    %cst_62 = arith.constant 9.99999974E-6 : f32
    %88 = vector.broadcast %cst_62 : f32 to vector<16x1xf32>
    %89 = arith.addf %87, %88 : vector<16x1xf32>
    %90 = math.rsqrt %89 : vector<16x1xf32>
    %91 = vector.broadcast %90 : vector<16x1xf32> to vector<16x288xf32>
    %92 = arith.mulf %85, %91 : vector<16x288xf32>
    %93 = vector.extract_strided_slice %54 {offsets = [0, 2], sizes = [16, 1], strides = [1, 1]} : vector<16x4xf32> to vector<16x1xf32>
    %cst_63 = arith.constant 1.000000e+00 : f32
    %94 = vector.broadcast %cst_63 : f32 to vector<16x1xf32>
    %95 = arith.addf %93, %94 : vector<16x1xf32>
    %96 = vector.broadcast %95 : vector<16x1xf32> to vector<16x288xf32>
    %97 = arith.mulf %92, %96 : vector<16x288xf32>
    %98 = vector.extract_strided_slice %54 {offsets = [0, 3], sizes = [16, 1], strides = [1, 1]} : vector<16x4xf32> to vector<16x1xf32>
    %99 = vector.broadcast %98 : vector<16x1xf32> to vector<16x288xf32>
    %100 = arith.addf %97, %99 : vector<16x288xf32>
    %101 = arith.truncf %100 : vector<16x288xf32> to vector<16x288xbf16>
    %c0_64 = arith.constant 0 : index
    %c0_65 = arith.constant 0 : index
    %c0_66 = arith.constant 0 : index
    %102 = vector.load %arg6[%c0_64, %c0_65, %c0_66] : memref<1x16x288xbf16, #tpu.memory_space<vmem>>, vector<1x16x288xbf16>
    %103 = vector.shape_cast %102 : vector<1x16x288xbf16> to vector<16x288xbf16>
    %104 = vector.shape_cast %101 : vector<16x288xbf16> to vector<1x16x288xbf16>
    tpu.vector_store %arg6[%c0_64, %c0_65, %c0_66], %104 {strides = array<i32>} : memref<1x16x288xbf16, #tpu.memory_space<vmem>>, vector<1x16x288xbf16>,
    return
  }
  func.func @transform_0(%arg0: i32) -> (i32, i32, i32) {
    %c0_i32 = arith.constant 0 : i32
    %c0_i32_0 = arith.constant 0 : i32
    %c0_i32_1 = arith.constant 0 : i32
    return %arg0, %c0_i32, %c0_i32_0 : i32, i32, i32
  }
  func.func @transform_1(%arg0: i32) -> (i32, i32, i32) {
    %c0_i32 = arith.constant 0 : i32
    %c0_i32_0 = arith.constant 0 : i32
    %c0_i32_1 = arith.constant 0 : i32
    %c0_i32_2 = arith.constant 0 : i32
    return %c0_i32, %c0_i32_0, %c0_i32_1 : i32, i32, i32
  }
  func.func @transform_2(%arg0: i32) -> (i32, i32, i32) {
    %c0_i32 = arith.constant 0 : i32
    %c0_i32_0 = arith.constant 0 : i32
    %c0_i32_1 = arith.constant 0 : i32
    return %arg0, %c0_i32, %c0_i32_0 : i32, i32, i32
  }
  func.func @transform_3(%arg0: i32) -> (i32, i32, i32) {
    %c0_i32 = arith.constant 0 : i32
    %c0_i32_0 = arith.constant 0 : i32
    %c0_i32_1 = arith.constant 0 : i32
    return %arg0, %c0_i32, %c0_i32_0 : i32, i32, i32
  }
  func.func @transform_4(%arg0: i32) -> (i32, i32) {
    %c0_i32 = arith.constant 0 : i32
    %c0_i32_0 = arith.constant 0 : i32
    %c0_i32_1 = arith.constant 0 : i32
    return %c0_i32, %c0_i32_0 : i32, i32
  }
  func.func @transform_5(%arg0: i32) -> (i32, i32, i32) {
    %c0_i32 = arith.constant 0 : i32
    %c0_i32_0 = arith.constant 0 : i32
    %c0_i32_1 = arith.constant 0 : i32
    return %arg0, %c0_i32, %c0_i32_0 : i32, i32, i32
  }
}

module attributes {stable_mosaic.version = 11 : i64} {
  func.func @kernel(%arg0: i32, %arg1: memref<1x16x260xbf16, #tpu.memory_space<vmem>>, %arg2: memref<1x3x16xbf16, #tpu.memory_space<vmem>>, %arg3: memref<1x3x4xf32, #tpu.memory_space<vmem>>, %arg4: memref<1x3x256xf32, #tpu.memory_space<vmem>>) attributes {dimension_semantics = [#tpu.dimension_semantics<parallel>], iteration_bounds = array<i64: 2>, scalar_prefetch = 0 : i64, scratch_operands = 0 : i64, tpu.core_type = #tpu.core_type<tc>, window_params = [{transform_indices = @transform_0, window_bounds = array<i64: 1, 16, 260>}, {pipeline_mode = #tpu.pipeline_mode<synchronous>, transform_indices = @transform_1, window_bounds = array<i64: 1, 3, 16>}, {transform_indices = @transform_2, window_bounds = array<i64: 1, 3, 4>}, {transform_indices = @transform_3, window_bounds = array<i64: 1, 3, 256>}]} {
    %c0 = arith.constant 0 : index
    %c0_0 = arith.constant 0 : index
    %c0_1 = arith.constant 0 : index
    %0 = vector.load %arg1[%c0, %c0_0, %c0_1] : memref<1x16x260xbf16, #tpu.memory_space<vmem>>, vector<1x16x256xbf16>
    %1 = vector.shape_cast %0 : vector<1x16x256xbf16> to vector<16x256xbf16>
    %c0_2 = arith.constant 0 : index
    %c0_3 = arith.constant 0 : index
    %c0_4 = arith.constant 0 : index
    %2 = vector.load %arg2[%c0_2, %c0_3, %c0_4] : memref<1x3x16xbf16, #tpu.memory_space<vmem>>, vector<1x3x16xbf16>
    %3 = vector.shape_cast %2 : vector<1x3x16xbf16> to vector<3x16xbf16>
    %cst = arith.constant dense<0.000000e+00> : vector<3x256xf32>
    %4 = tpu.matmul %3, %1, %cst {dimension_numbers = #tpu.dot_dimension_numbers<[1], [0], [0], [1], [0, 0, 1, 1], [], []>} : vector<3x16xbf16>, vector<16x256xbf16>, vector<3x256xf32> -> vector<3x256xf32>
    %c0_5 = arith.constant 0 : index
    %c0_6 = arith.constant 0 : index
    %c0_7 = arith.constant 0 : index
    %5 = vector.load %arg3[%c0_5, %c0_6, %c0_7] : memref<1x3x4xf32, #tpu.memory_space<vmem>>, vector<1x3x4xf32>
    %6 = vector.shape_cast %5 : vector<1x3x4xf32> to vector<3x4xf32>
    %7 = vector.extract_strided_slice %6 {offsets = [0, 0], sizes = [3, 1], strides = [1, 1]} : vector<3x4xf32> to vector<3x1xf32>
    %8 = vector.broadcast %7 : vector<3x1xf32> to vector<3x256xf32>
    %9 = arith.addf %4, %8 : vector<3x256xf32>
    %c0_8 = arith.constant 0 : index
    %c0_9 = arith.constant 0 : index
    %c0_10 = arith.constant 0 : index
    %10 = vector.load %arg4[%c0_8, %c0_9, %c0_10] : memref<1x3x256xf32, #tpu.memory_space<vmem>>, vector<1x3x256xf32>
    %11 = vector.shape_cast %10 : vector<1x3x256xf32> to vector<3x256xf32>
    %12 = vector.shape_cast %9 : vector<3x256xf32> to vector<1x3x256xf32>
    tpu.vector_store %arg4[%c0_8, %c0_9, %c0_10], %12 {strides = array<i32>} : memref<1x3x256xf32, #tpu.memory_space<vmem>>, vector<1x3x256xf32>,
    return
  }
  func.func @transform_0(%arg0: i32) -> (i32, i32, i32) {
    %c0_i32 = arith.constant 0 : i32
    %c0_i32_0 = arith.constant 0 : i32
    %c0_i32_1 = arith.constant 0 : i32
    return %arg0, %c0_i32, %c0_i32_0 : i32, i32, i32
  }
  func.func @transform_1(%arg0: i32) -> (i32, i32, i32) {
    %c0_i32 = arith.constant 0 : i32
    %c0_i32_0 = arith.constant 0 : i32
    %c0_i32_1 = arith.constant 0 : i32
    %c0_i32_2 = arith.constant 0 : i32
    return %c0_i32, %c0_i32_0, %c0_i32_1 : i32, i32, i32
  }
  func.func @transform_2(%arg0: i32) -> (i32, i32, i32) {
    %c0_i32 = arith.constant 0 : i32
    %c0_i32_0 = arith.constant 0 : i32
    %c0_i32_1 = arith.constant 0 : i32
    return %arg0, %c0_i32, %c0_i32_0 : i32, i32, i32
  }
  func.func @transform_3(%arg0: i32) -> (i32, i32, i32) {
    %c0_i32 = arith.constant 0 : i32
    %c0_i32_0 = arith.constant 0 : i32
    %c0_i32_1 = arith.constant 0 : i32
    return %arg0, %c0_i32, %c0_i32_0 : i32, i32, i32
  }
}

</mosaic_0001>

<llo_original>
// kernel: g_synthesis_forward.7
$region0: #{g_synthesis_forward.7}
  #allocation0 [shape = 'u32[]', space=smem, size = 0x4, offset = 0x4, fixed_abs, tag = 'smem constant byte address 0x4 - core index']
  #allocation1 [shape = 'u32[144,128]{1,0:T(1,128)}', space=vmem, size = 0x12000, scoped, tag = 'internal scratch']
  %s0 = inlined_call_operand.vmem [shape: bf16[2,32,20], index: 0, kind: input, shape index: {}]
  %s1 = inlined_call_operand.vmem [shape: bf16[1,32,32], index: 1, kind: input, shape index: {}]
  %s2 = inlined_call_operand.vmem [shape: f32[2,32,4], index: 2, kind: input, shape index: {}]
  %s3 = inlined_call_operand.vmem [shape: f32[2,1,16], index: 3, kind: input, shape index: {}]
  %s4 = inlined_call_operand.vmem [shape: f32[1,16], index: 4, kind: input, shape index: {}]
  %s5 = inlined_call_operand.vmem [shape: bf16[2,32,16], index: 5, kind: output, shape index: {}]
  %s6 = sld [smem:[#allocation0]]
  $region53: #{g_synthesis_forward.7} parent=0
    _
  %s8 = ssub.s32 1, %s6
  %s9 = scalar_select 0, %s8, %s6
  loop: start=0, step=1, limit=4
  $region2: #{g_synthesis_forward.7} parent=0 // loop_pre_header
    _
  $region3: #{g_synthesis_forward.7} parent=0 // loop_header
    %s11 = sphi 0, %s15
    %p12 = scmp.ge.s32.totalorder %s11, 4
    %s21 = sphi 0, %s23
    %s24 = sphi 0, %s21
    %s25 = sphi 0, %s24
    %s41 = sphi 0, %s25
    %s45 = sphi 0, %s45
    %s47 = sphi 0, %s45
    %s48 = sphi 0, %s47
    %s62 = sphi 0, %s48
    %s68 = sphi 0, %s70
    %s71 = sphi 0, %s68
    %s72 = sphi 0, %s71
    %s88 = sphi 0, %s72
    %s94 = sphi 0, %s96
    %s97 = sphi 0, %s94
    %s98 = sphi 0, %s97
    %s114 = sphi 0, %s98
    %s118 = sphi 0, %s118
    %s120 = sphi 0, %s118
    %s121 = sphi 0, %s120
    %s135 = sphi 0, %s121
    %s141 = sphi 0, %s143
    %s144 = sphi 0, %s141
    %s145 = sphi 0, %s144
    %s161 = sphi 0, %s145
  $region4: #{g_synthesis_forward.7} parent=0 // loop_header_branch
    %14 = sbr.rel (%p12) target = $region8
  $region5: #{g_synthesis_forward.7} parent=0 // loop_body
    %s16 = ssub.s32 %s11, 1
    %s17 = ssub.s32 %s11, 2
    %s18 = sadd.s32 %s11, 1
    %s19 = ssub.s32 %s11, %s18
    %p20 = scmp.eq.s32.totalorder %s19, 0
    %s22 = sadd.s32 %s21, 1
    %s23 = scalar_select %p20, %s21, %s22
    %p26 = pneg %p20
    %p27 = scmp.eq.s32.totalorder %s11, 1
    %p28 = por %p26, %p27
    %p29 = scmp.ne.s32.totalorder %s21, %s24
    %p30 = scmp.eq.s32.totalorder %s11, 0
    %p31 = por %p29, %p30
    %p32 = scmp.ne.s32.totalorder %s21, %s24
    %p33 = scmp.eq.s32.totalorder %s16, 1
    %p34 = por %p32, %p33
    %p35 = scmp.ne.s32.totalorder %s24, %s25
    %p36 = scmp.eq.s32.totalorder %s16, 0
    %p37 = por %p35, %p36
    %p38 = scmp.ne.s32.totalorder %s24, %s25
    %p39 = scmp.eq.s32.totalorder %s17, 1
    %p40 = por %p38, %p39
    %p42 = scmp.ne.s32.totalorder %s25, %s41
    %p43 = scmp.eq.s32.totalorder %s17, 0
    %p44 = por %p42, %p43
    %s46 = sadd.s32 %s45, 1
    %p49 = scmp.eq.s32.totalorder %s11, 1
    %p50 = scmp.ne.s32.totalorder %s45, %s47
    %p51 = scmp.eq.s32.totalorder %s11, 0
    %p52 = por %p50, %p51
    %p53 = scmp.ne.s32.totalorder %s45, %s47
    %p54 = scmp.eq.s32.totalorder %s16, 1
    %p55 = por %p53, %p54
    %p56 = scmp.ne.s32.totalorder %s47, %s48
    %p57 = scmp.eq.s32.totalorder %s16, 0
    %p58 = por %p56, %p57
    %p59 = scmp.ne.s32.totalorder %s47, %s48
    %p60 = scmp.eq.s32.totalorder %s17, 1
    %p61 = por %p59, %p60
    %p63 = scmp.ne.s32.totalorder %s48, %s62
    %p64 = scmp.eq.s32.totalorder %s17, 0
    %p65 = por %p63, %p64
    %s66 = ssub.s32 %s11, %s18
    %p67 = scmp.eq.s32.totalorder %s66, 0
    %s69 = sadd.s32 %s68, 1
    %s70 = scalar_select %p67, %s68, %s69
    %p73 = pneg %p67
    %p74 = scmp.eq.s32.totalorder %s11, 1
    %p75 = por %p73, %p74
    %p76 = scmp.ne.s32.totalorder %s68, %s71
    %p77 = scmp.eq.s32.totalorder %s11, 0
    %p78 = por %p76, %p77
    %p79 = scmp.ne.s32.totalorder %s68, %s71
    %p80 = scmp.eq.s32.totalorder %s16, 1
    %p81 = por %p79, %p80
    %p82 = scmp.ne.s32.totalorder %s71, %s72
    %p83 = scmp.eq.s32.totalorder %s16, 0
    %p84 = por %p82, %p83
    %p85 = scmp.ne.s32.totalorder %s71, %s72
    %p86 = scmp.eq.s32.totalorder %s17, 1
    %p87 = por %p85, %p86
    %p89 = scmp.ne.s32.totalorder %s72, %s88
    %p90 = scmp.eq.s32.totalorder %s17, 0
    %p91 = por %p89, %p90
    %s92 = ssub.s32 %s11, %s18
    %p93 = scmp.eq.s32.totalorder %s92, 0
    %s95 = sadd.s32 %s94, 1
    %s96 = scalar_select %p93, %s94, %s95
    %p99 = pneg %p93
    %p100 = scmp.eq.s32.totalorder %s11, 1
    %p101 = por %p99, %p100
    %p102 = scmp.ne.s32.totalorder %s94, %s97
    %p103 = scmp.eq.s32.totalorder %s11, 0
    %p104 = por %p102, %p103
    %p105 = scmp.ne.s32.totalorder %s94, %s97
    %p106 = scmp.eq.s32.totalorder %s16, 1
    %p107 = por %p105, %p106
    %p108 = scmp.ne.s32.totalorder %s97, %s98
    %p109 = scmp.eq.s32.totalorder %s16, 0
    %p110 = por %p108, %p109
    %p111 = scmp.ne.s32.totalorder %s97, %s98
    %p112 = scmp.eq.s32.totalorder %s17, 1
    %p113 = por %p111, %p112
    %p115 = scmp.ne.s32.totalorder %s98, %s114
    %p116 = scmp.eq.s32.totalorder %s17, 0
    %p117 = por %p115, %p116
    %s119 = sadd.s32 %s118, 1
    %p122 = scmp.eq.s32.totalorder %s11, 1
    %p123 = scmp.ne.s32.totalorder %s118, %s120
    %p124 = scmp.eq.s32.totalorder %s11, 0
    %p125 = por %p123, %p124
    %p126 = scmp.ne.s32.totalorder %s118, %s120
    %p127 = scmp.eq.s32.totalorder %s16, 1
    %p128 = por %p126, %p127
    %p129 = scmp.ne.s32.totalorder %s120, %s121
    %p130 = scmp.eq.s32.totalorder %s16, 0
    %p131 = por %p129, %p130
    %p132 = scmp.ne.s32.totalorder %s120, %s121
    %p133 = scmp.eq.s32.totalorder %s17, 1
    %p134 = por %p132, %p133
    %p136 = scmp.ne.s32.totalorder %s121, %s135
    %p137 = scmp.eq.s32.totalorder %s17, 0
    %p138 = por %p136, %p137
    %s139 = ssub.s32 %s11, %s18
    %p140 = scmp.eq.s32.totalorder %s139, 0
    %s142 = sadd.s32 %s141, 1
    %s143 = scalar_select %p140, %s141, %s142
    %p146 = pneg %p140
    %p147 = scmp.eq.s32.totalorder %s11, 1
    %p148 = por %p146, %p147
    %p149 = scmp.ne.s32.totalorder %s141, %s144
    %p150 = scmp.eq.s32.totalorder %s11, 0
    %p151 = por %p149, %p150
    %p152 = scmp.ne.s32.totalorder %s141, %s144
    %p153 = scmp.eq.s32.totalorder %s16, 1
    %p154 = por %p152, %p153
    %p155 = scmp.ne.s32.totalorder %s144, %s145
    %p156 = scmp.eq.s32.totalorder %s16, 0
    %p157 = por %p155, %p156
    %p158 = scmp.ne.s32.totalorder %s144, %s145
    %p159 = scmp.eq.s32.totalorder %s17, 1
    %p160 = por %p158, %p159
    %p162 = scmp.ne.s32.totalorder %s145, %s161
    %p163 = scmp.eq.s32.totalorder %s17, 0
    %p164 = por %p162, %p163
    %p165 = scmp.le.s32.totalorder 1, %s11
    %p166 = scmp.lt.s32.totalorder %s11, 3
    %p167 = pnand %p165, %p166
    %p168 = pneg %p167
    // Predicated region
    $region9: #{g_synthesis_forward.7} parent=5 // pred_check
      _
    $region10: #{g_synthesis_forward.7} parent=5 // pred_check_branch
      %170 = sbr.rel (%p167) target = $region12
    $region11: #{g_synthesis_forward.7} parent=5 // pred_region
      %s171 = ssub.s32 %s11, 1
      // Predicated region
      $region13: #{g_synthesis_forward.7} parent=11 // pred_check
        %p172 = pneg %p58
      $region14: #{g_synthesis_forward.7} parent=11 // pred_check_branch
        %174 = sbr.rel (%p172) target = $region16
      $region15: #{g_synthesis_forward.7} parent=11 // pred_region
        _
      $region16: #{g_synthesis_forward.7} parent=11 // pred_fallthru
        _
      // Predicated region
      $region17: #{g_synthesis_forward.7} parent=11 // pred_check
        %p175 = pneg %p131
      $region18: #{g_synthesis_forward.7} parent=11 // pred_check_branch
        %177 = sbr.rel (%p175) target = $region20
      $region19: #{g_synthesis_forward.7} parent=11 // pred_region
        _
      $region20: #{g_synthesis_forward.7} parent=11 // pred_fallthru
        _
    $region12: #{g_synthesis_forward.7} parent=5 // pred_fallthru
      _
    %p178 = scmp.lt.s32.totalorder %s11, 2
    // Predicated region
    $region21: #{g_synthesis_forward.7} parent=5 // pred_check
      %p179 = pneg %p178
    $region22: #{g_synthesis_forward.7} parent=5 // pred_check_branch
      %181 = sbr.rel (%p179) target = $region24
    $region23: #{g_synthesis_forward.7} parent=5 // pred_region
      // Predicated region
      $region25: #{g_synthesis_forward.7} parent=23 // pred_check
        %p182 = pneg %p31
      $region26: #{g_synthesis_forward.7} parent=23 // pred_check_branch
        %184 = sbr.rel (%p182) target = $region28
      $region27: #{g_synthesis_forward.7} parent=23 // pred_region
        %p185 = scmp.lt.s32.totalorder %s11, 1
        %s186 = scalar_select %p185, %s11, 1
        %s187 = smul.addr %s186, 4
        %s188 = smul.addr %s187, 4
        %s189 = scalar_lea.vmem %s0, %s188
      $region28: #{g_synthesis_forward.7} parent=23 // pred_fallthru
        _
      // Predicated region
      $region29: #{g_synthesis_forward.7} parent=23 // pred_check
        %p190 = pneg %p78
      $region30: #{g_synthesis_forward.7} parent=23 // pred_check_branch
        %192 = sbr.rel (%p190) target = $region32
      $region31: #{g_synthesis_forward.7} parent=23 // pred_region
        %p193 = scmp.lt.s32.totalorder %s11, 1
        %s194 = scalar_select %p193, %s11, 1
        %s195 = smul.addr %s194, 4
        %s196 = smul.addr %s195, 8
        %s197 = scalar_lea.vmem %s2, %s196
      $region32: #{g_synthesis_forward.7} parent=23 // pred_fallthru
        _
      // Predicated region
      $region33: #{g_synthesis_forward.7} parent=23 // pred_check
        %p198 = pneg %p104
      $region34: #{g_synthesis_forward.7} parent=23 // pred_check_branch
        %200 = sbr.rel (%p198) target = $region36
      $region35: #{g_synthesis_forward.7} parent=23 // pred_region
        %p201 = scmp.lt.s32.totalorder %s11, 1
        %s202 = scalar_select %p201, %s11, 1
        %s203 = scalar_lea.vmem %s3, %s202
      $region36: #{g_synthesis_forward.7} parent=23 // pred_fallthru
        _
    $region24: #{g_synthesis_forward.7} parent=5 // pred_fallthru
      _
    %p204 = scmp.le.s32.totalorder 1, %s11
    %p205 = scmp.lt.s32.totalorder %s11, 3
    %p206 = pnand %p204, %p205
    %p207 = pneg %p206
    // Predicated region
    $region37: #{g_synthesis_forward.7} parent=5 // pred_check
      _
    $region38: #{g_synthesis_forward.7} parent=5 // pred_check_branch
      %209 = sbr.rel (%p206) target = $region40
    $region39: #{g_synthesis_forward.7} parent=5 // pred_region
      %s210 = ssub.s32 %s11, 1
      %p211 = scmp.lt.s32.totalorder %s16, 1
      %s212 = scalar_select %p211, %s16, 1
      %s213 = smul.addr %s212, 4
      %s214 = smul.addr %s213, 4
      %s215 = scalar_lea.vmem %s0, %s214
      %p216 = pneg %p37
      %p217 = pneg %p34
      %p218 = pneg %p58
      %p219 = pneg %p55
      %p220 = scmp.lt.s32.totalorder %s16, 1
      %s221 = scalar_select %p220, %s16, 1
      %s222 = smul.addr %s221, 4
      %s223 = smul.addr %s222, 8
      %s224 = scalar_lea.vmem %s2, %s223
      %p225 = pneg %p84
      %p226 = pneg %p81
      %p227 = scmp.lt.s32.totalorder %s16, 1
      %s228 = scalar_select %p227, %s16, 1
      %s229 = scalar_lea.vmem %s3, %s228
      %p230 = pneg %p110
      %p231 = pneg %p107
      %p232 = pneg %p131
      %p233 = pneg %p128
      %p234 = pneg %p157
      %p235 = pneg %p154
      %p236 = scmp.lt.s32.totalorder %s16, 1
      %s237 = scalar_select %p236, %s16, 1
      %s238 = smul.addr %s237, 4
      %s239 = smul.addr %s238, 4
      %s240 = scalar_lea.vmem %s5, %s239
      %p241 = scmp.lt.s32.totalorder %s16, 1
      %s242 = scalar_select %p241, %s16, 1
      %s243 = smul.addr %s242, 4
      %s244 = smul.addr %s243, 4
      %s245 = scalar_lea.vmem %s0, %s244
      %p246 = scmp.lt.s32.totalorder %s16, 1
      %s247 = scalar_select %p246, %s16, 1
      %s248 = smul.addr %s247, 4
      %s249 = smul.addr %s248, 8
      %s250 = scalar_lea.vmem %s2, %s249
      %p251 = scmp.lt.s32.totalorder %s16, 1
      %s252 = scalar_select %p251, %s16, 1
      %s253 = scalar_lea.vmem %s3, %s252
      %p254 = scmp.lt.s32.totalorder %s16, 1
      %s255 = scalar_select %p254, %s16, 1
      %s256 = smul.addr %s255, 4
      %s257 = smul.addr %s256, 4
      %s258 = scalar_lea.vmem %s5, %s257
      %v260 = vld [vmem:[%s245] sm:$0xf]
      %v261 = vld [vmem:[%s245 + $0x4] sm:$0xf]
      %v262 = vld [vmem:[%s245 + $0x8] sm:$0xf]
      %v263 = vld [vmem:[%s245 + $0xc] sm:$0xf]
      %v264 = vld [vmem:[%s1] sm:$0xf]
      %v265 = vld [vmem:[%s1 + $0x4] sm:$0xf]
      %v266 = vld [vmem:[%s1 + $0x8] sm:$0xf]
      %v267 = vld [vmem:[%s1 + $0xc] sm:$0xf]
      %v268 = vld [vmem:[%s250] sm:$0xff]
      %v269 = vld [vmem:[%s250 + $0x8] sm:$0xff]
      %v270 = vld [vmem:[%s250 + $0x10] sm:$0xff]
      %v271 = vld [vmem:[%s250 + $0x18] sm:$0xff]
      %273 = vset.pattern.permute.xlu0 0
      %274 = vperm.xlu0 %273, %v268
      %v275 = vpop.permute.xlu0 %274
      %278 = vset.pattern.permute.xlu0 0
      %279 = vperm.xlu0 %278, %v269
      %v280 = vpop.permute.xlu0 %279
      %283 = vset.pattern.permute.xlu0 0
      %284 = vperm.xlu0 %283, %v270
      %v285 = vpop.permute.xlu0 %284
      %288 = vset.pattern.permute.xlu0 0
      %289 = vperm.xlu0 %288, %v271
      %v290 = vpop.permute.xlu0 %289
      %v296 = vunpack.c.l.b16 %v264
      %v297 = vunpack.c.l.b16 %v265
      %v298 = vunpack.c.l.b16 %v266
      %v299 = vunpack.c.l.b16 %v267
      %v300 = vpack.c.b16 %v297, %v296
      %v301 = vpack.c.b16 %v299, %v298
      %v306 = vunpack.c.l.b16 %v260
      %v307 = vunpack.c.l.b16 %v261
      %v308 = vunpack.c.l.b16 %v262
      %v309 = vunpack.c.l.b16 %v263
      %v310 = vpack.c.b16 %v307, %v306
      %v311 = vpack.c.b16 %v309, %v308
      %vm314 = vcmask 261120
      %v316 = vsel %vm314, %v300, 0
      %v319 = vsel %vm314, %v301, 0
      %321 = vmatprep.subr.bf16.mxu0 0
      %322 = vmatpush1.bf16.msra.mxu0 0
      %323 = vmatprep.subr.bf16.mxu0 0
      %324 = vmatpush1.bf16.msra.mxu0 0
      %325 = vmatprep.subr.bf16.mxu0 0
      %326 = vmatpush1.bf16.msra.mxu0 0
      %327 = vmatprep.subr.bf16.mxu0 0
      %328 = vmatpush1.bf16.msra.mxu0 0
      %329 = vmatprep.subr.bf16.mxu0 0
      %330 = vmatpush1.bf16.msra.mxu0 0
      %331 = vmatprep.subr.bf16.mxu0 0
      %332 = vmatpush1.bf16.msra.mxu0 0
      %333 = vmatprep.subr.bf16.mxu0 0
      %334 = vmatpush1.bf16.msra.mxu0 %v311
      %335 = vmatprep.subr.bf16.mxu0 0
      %336 = vmatpush1.bf16.msra.mxu0 %v310
      %337 = vmatprep.subr.bf16.mxu0 0
      %338 = vmatpush2.bf16.msra.mxu0 0
      %339 = vmatprep.subr.bf16.mxu0 0
      %340 = vmatpush2.bf16.msra.mxu0 0
      %341 = vmatprep.subr.bf16.mxu0 0
      %342 = vmatpush2.bf16.msra.mxu0 0
      %343 = vmatprep.subr.bf16.mxu0 0
      %344 = vmatpush2.bf16.msra.mxu0 0
      %345 = vmatprep.subr.bf16.mxu0 0
      %346 = vmatpush2.bf16.msra.mxu0 0
      %347 = vmatprep.subr.bf16.mxu0 0
      %348 = vmatpush2.bf16.msra.mxu0 0
      %349 = vmatprep.subr.bf16.mxu0 0
      %350 = vmatpush2.bf16.msra.mxu0 0
      %351 = vmatprep.subr.bf16.mxu0 0
      %352 = vmatpush2.bf16.msra.mxu0 0
      %353 = vmatprep.mubr.bf16.mxu0 0
      %354 = vmatmul.mubr.bf16.gmra.mxu0 %v316
      %v355 = vpop.f32.mrf.mxu0
      %v356 = vadd.f32 %v275, %v355
      %v357 = vpop.f32.mrf.mxu0
      %v358 = vpop.f32.mrf.mxu0
      %v359 = vadd.f32 %v280, %v358
      %v360 = vpop.f32.mrf.mxu0
      %361 = vmatprep.mubr.bf16.mxu0 0
      %362 = vmatmul.mubr.bf16.gmra.mxu0 %v319
      %v363 = vpop.f32.mrf.mxu0
      %v364 = vadd.f32 %v285, %v363
      %v365 = vpop.f32.mrf.mxu0
      %v366 = vpop.f32.mrf.mxu0
      %v367 = vadd.f32 %v290, %v366
      %v368 = vpop.f32.mrf.mxu0
      %369 = vdwg.mxu0
      %v370 = vld [vmem:[%s253] sm:$0x1]
      %371 = vset.pattern.permute.xlu0 1
      %372 = vperm.xlu0 %371, %v268
      %v373 = vpop.permute.xlu0 %372
      %375 = vset.pattern.permute.xlu0 1
      %376 = vperm.xlu0 %375, %v269
      %v377 = vpop.permute.xlu0 %376
      %379 = vset.pattern.permute.xlu0 1
      %380 = vperm.xlu0 %379, %v270
      %v381 = vpop.permute.xlu0 %380
      %383 = vset.pattern.permute.xlu0 1
      %384 = vperm.xlu0 %383, %v271
      %v385 = vpop.permute.xlu0 %384
      %v388 = vlaneseq
      %v389 = vshrl.u32 %v388, 7
      %v390 = vsub.s32 0, %v389
      %v391 = vrot.slane %v370, %v390
      %v393 = vmul.f32 %v373, %v391
      %v394 = vmul.f32 %v377, %v391
      %v395 = vmul.f32 %v381, %v391
      %v396 = vmul.f32 %v385, %v391
      %v397 = vadd.f32 %v356, %v393
      %v398 = vadd.f32 %v359, %v394
      %v399 = vadd.f32 %v364, %v395
      %v400 = vadd.f32 %v367, %v396
      %vm401 = vcmp.ge.f32.partialorder %v397, 0.0
      %vm402 = vcmp.ge.f32.partialorder %v398, 0.0
      %vm403 = vcmp.ge.f32.partialorder %v399, 0.0
      %vm404 = vcmp.ge.f32.partialorder %v400, 0.0
      %v405 = vmul.f32 %v397, 0.2
      %v406 = vmul.f32 %v398, 0.2
      %v407 = vmul.f32 %v399, 0.2
      %v408 = vmul.f32 %v400, 0.2
      %v409 = vsel %vm401, %v397, %v405
      %v410 = vsel %vm402, %v398, %v406
      %v411 = vsel %vm403, %v399, %v407
      %v412 = vsel %vm404, %v400, %v408
      %v413 = vld [vmem:[%s4] sm:$0x1]
      %v415 = vlaneseq
      %v416 = vshrl.u32 %v415, 7
      %v417 = vsub.s32 0, %v416
      %v418 = vrot.slane %v413, %v417
      %v420 = vmul.f32 %v409, %v418
      %v421 = vmul.f32 %v410, %v418
      %v422 = vmul.f32 %v411, %v418
      %v423 = vmul.f32 %v412, %v418
      %vm424 = vcmask 130048
      %v425 = vsel %vm424, %v420, 0.0
      %426 = vadd.xlane.f32.xlu0 %v425
      %v427 = vpop.xlane.xlu0 %426
      %v428 = vsel %vm424, %v421, 0.0
      %429 = vadd.xlane.f32.xlu0 %v428
      %v430 = vpop.xlane.xlu0 %429
      %v431 = vsel %vm424, %v422, 0.0
      %432 = vadd.xlane.f32.xlu0 %v431
      %v433 = vpop.xlane.xlu0 %432
      %v434 = vsel %vm424, %v423, 0.0
      %435 = vadd.xlane.f32.xlu0 %v434
      %v436 = vpop.xlane.xlu0 %435
      %v437 = vmul.f32 %v427, 0.0625
      %v438 = vmul.f32 %v430, 0.0625
      %v439 = vmul.f32 %v433, 0.0625
      %v440 = vmul.f32 %v436, 0.0625
      %v441 = vmul.f32 %v420, %v420
      %v442 = vmul.f32 %v421, %v421
      %v443 = vmul.f32 %v422, %v422
      %v444 = vmul.f32 %v423, %v423
      %v445 = vsel %vm424, %v441, 0.0
      %446 = vadd.xlane.f32.xlu0 %v445
      %v447 = vpop.xlane.xlu0 %446
      %v448 = vsel %vm424, %v442, 0.0
      %449 = vadd.xlane.f32.xlu0 %v448
      %v450 = vpop.xlane.xlu0 %449
      %v451 = vsel %vm424, %v443, 0.0
      %452 = vadd.xlane.f32.xlu0 %v451
      %v453 = vpop.xlane.xlu0 %452
      %v454 = vsel %vm424, %v444, 0.0
      %455 = vadd.xlane.f32.xlu0 %v454
      %v456 = vpop.xlane.xlu0 %455
      %v457 = vmul.f32 %v447, 0.0625
      %v458 = vmul.f32 %v450, 0.0625
      %v459 = vmul.f32 %v453, 0.0625
      %v460 = vmul.f32 %v456, 0.0625
      %v461 = vmul.f32 %v437, %v437
      %v462 = vmul.f32 %v438, %v438
      %v463 = vmul.f32 %v439, %v439
      %v464 = vmul.f32 %v440, %v440
      %v465 = vsub.f32 %v457, %v461
      %v466 = vsub.f32 %v458, %v462
      %v467 = vsub.f32 %v459, %v463
      %v468 = vsub.f32 %v460, %v464
      %v469 = vsub.f32 %v420, %v437
      %v470 = vsub.f32 %v421, %v438
      %v471 = vsub.f32 %v422, %v439
      %v472 = vsub.f32 %v423, %v440
      %v473 = vmax.f32 %v465, 0.0
      %v474 = vmax.f32 %v466, 0.0
      %v475 = vmax.f32 %v467, 0.0
      %v476 = vmax.f32 %v468, 0.0
      %v477 = vadd.f32 %v473, 1e-05
      %v478 = vadd.f32 %v474, 1e-05
      %v479 = vadd.f32 %v475, 1e-05
      %v480 = vadd.f32 %v476, 1e-05
      %v481 = vrsqrt.pop %v477
      %v482 = vrsqrt.pop %v478
      %v483 = vrsqrt.pop %v479
      %v484 = vrsqrt.pop %v480
      %v485 = vmul.f32 %v469, %v481
      %v486 = vmul.f32 %v470, %v482
      %v487 = vmul.f32 %v471, %v483
      %v488 = vmul.f32 %v472, %v484
      %v489 = vadd.f32 %v268, 1.0
      %v490 = vadd.f32 %v269, 1.0
      %v491 = vadd.f32 %v270, 1.0
      %v492 = vadd.f32 %v271, 1.0
      %494 = vset.pattern.permute.xlu0 2
      %495 = vperm.xlu0 %494, %v489
      %v496 = vpop.permute.xlu0 %495
      %499 = vset.pattern.permute.xlu0 2
      %500 = vperm.xlu0 %499, %v490
      %v501 = vpop.permute.xlu0 %500
      %504 = vset.pattern.permute.xlu0 2
      %505 = vperm.xlu0 %504, %v491
      %v506 = vpop.permute.xlu0 %505
      %509 = vset.pattern.permute.xlu0 2
      %510 = vperm.xlu0 %509, %v492
      %v511 = vpop.permute.xlu0 %510
      %v513 = vmul.f32 %v485, %v496
      %v514 = vmul.f32 %v486, %v501
      %v515 = vmul.f32 %v487, %v506
      %v516 = vmul.f32 %v488, %v511
      %517 = vset.pattern.permute.xlu0 3
      %518 = vperm.xlu0 %517, %v268
      %v519 = vpop.permute.xlu0 %518
      %521 = vset.pattern.permute.xlu0 3
      %522 = vperm.xlu0 %521, %v269
      %v523 = vpop.permute.xlu0 %522
      %525 = vset.pattern.permute.xlu0 3
      %526 = vperm.xlu0 %525, %v270
      %v527 = vpop.permute.xlu0 %526
      %529 = vset.pattern.permute.xlu0 3
      %530 = vperm.xlu0 %529, %v271
      %v531 = vpop.permute.xlu0 %530
      %v533 = vadd.f32 %v513, %v519
      %v534 = vadd.f32 %v514, %v523
      %v535 = vadd.f32 %v515, %v527
      %v536 = vadd.f32 %v516, %v531
      %v537 = vpack.c.bf16 %v534, %v533
      %v538 = vpack.c.bf16 %v536, %v535
      %v541 = vunpack.c.l.b16 %v537
      %v542 = vunpack.c.h.b16 %v537
      %v543 = vunpack.c.l.b16 %v538
      %v544 = vunpack.c.h.b16 %v538
      %v545 = vpack.c.b16 %v541, %v541
      %v546 = vpack.c.b16 %v542, %v542
      %v547 = vpack.c.b16 %v543, %v543
      %v548 = vpack.c.b16 %v544, %v544
      %vm553 = vcmask 125952
      %554 = vst.msk [vmem:[%s258] sm:$0xf] %vm553, %v545
      %555 = vst.msk [vmem:[%s258 + $0x4] sm:$0xf] %vm553, %v546
      %556 = vst.msk [vmem:[%s258 + $0x8] sm:$0xf] %vm553, %v547
      %557 = vst.msk [vmem:[%s258 + $0xc] sm:$0xf] %vm553, %v548
      %p558 = scmp.lt.s32.totalorder %s16, 1
      %s559 = scalar_select %p558, %s16, 1
      %s560 = smul.addr %s559, 4
      %s561 = smul.addr %s560, 4
      %s562 = scalar_lea.vmem %s5, %s561
      // Predicated region
      $region41: #{g_synthesis_forward.7} parent=39 // pred_check
        %p563 = pneg %p154
      $region42: #{g_synthesis_forward.7} parent=39 // pred_check_branch
        %565 = sbr.rel (%p563) target = $region44
      $region43: #{g_synthesis_forward.7} parent=39 // pred_region
        _
      $region44: #{g_synthesis_forward.7} parent=39 // pred_fallthru
        _
    $region40: #{g_synthesis_forward.7} parent=5 // pred_fallthru
      _
    %p566 = scmp.le.s32.totalorder 2, %s11
    // Predicated region
    $region45: #{g_synthesis_forward.7} parent=5 // pred_check
      %p567 = pneg %p566
    $region46: #{g_synthesis_forward.7} parent=5 // pred_check_branch
      %569 = sbr.rel (%p567) target = $region48
    $region47: #{g_synthesis_forward.7} parent=5 // pred_region
      %s570 = ssub.s32 %s11, 2
      // Predicated region
      $region49: #{g_synthesis_forward.7} parent=47 // pred_check
        %p571 = pneg %p160
      $region50: #{g_synthesis_forward.7} parent=47 // pred_check_branch
        %573 = sbr.rel (%p571) target = $region52
      $region51: #{g_synthesis_forward.7} parent=47 // pred_region
        %p574 = scmp.lt.s32.totalorder %s17, 1
        %s575 = scalar_select %p574, %s17, 1
        %s576 = smul.addr %s575, 4
        %s577 = smul.addr %s576, 4
        %s578 = scalar_lea.vmem %s5, %s577
      $region52: #{g_synthesis_forward.7} parent=47 // pred_fallthru
        _
    $region48: #{g_synthesis_forward.7} parent=5 // pred_fallthru
      _
  $region6: #{g_synthesis_forward.7} parent=0 // loop_footer
    %s15 = sadd.s32 1, %s11
  $region7: #{g_synthesis_forward.7} parent=0 // loop_footer_branch
    %10 = sbr.rel target = $region3
  $region8: #{g_synthesis_forward.7} parent=0 // loop_exit
    _

// kernel: g_synthesis_forward.8
$region0: #{g_synthesis_forward.8}
  #allocation0 [shape = 'u32[]', space=smem, size = 0x4, offset = 0x4, fixed_abs, tag = 'smem constant byte address 0x4 - core index']
  #allocation1 [shape = 'u32[144,128]{1,0:T(1,128)}', space=vmem, size = 0x12000, scoped, tag = 'internal scratch']
  %s0 = inlined_call_operand.vmem [shape: bf16[2,32,40], index: 0, kind: input, shape index: {}]
  %s1 = inlined_call_operand.vmem [shape: bf16[9,32,32], index: 1, kind: input, shape index: {}]
  %s2 = inlined_call_operand.vmem [shape: f32[2,32,4], index: 2, kind: input, shape index: {}]
  %s3 = inlined_call_operand.vmem [shape: f32[2,1,24], index: 3, kind: input, shape index: {}]
  %s4 = inlined_call_operand.vmem [shape: f32[1,24], index: 4, kind: input, shape index: {}]
  %s5 = inlined_call_operand.vmem [shape: bf16[2,32,24], index: 5, kind: output, shape index: {}]
  %s6 = sld [smem:[#allocation0]]
  $region53: #{g_synthesis_forward.8} parent=0
    _
  %s8 = ssub.s32 1, %s6
  %s9 = scalar_select 0, %s8, %s6
  loop: start=0, step=1, limit=4
  $region2: #{g_synthesis_forward.8} parent=0 // loop_pre_header
    _
  $region3: #{g_synthesis_forward.8} parent=0 // loop_header
    %s11 = sphi 0, %s15
    %p12 = scmp.ge.s32.totalorder %s11, 4
    %s21 = sphi 0, %s23
    %s24 = sphi 0, %s21
    %s25 = sphi 0, %s24
    %s41 = sphi 0, %s25
    %s45 = sphi 0, %s45
    %s47 = sphi 0, %s45
    %s48 = sphi 0, %s47
    %s62 = sphi 0, %s48
    %s68 = sphi 0, %s70
    %s71 = sphi 0, %s68
    %s72 = sphi 0, %s71
    %s88 = sphi 0, %s72
    %s94 = sphi 0, %s96
    %s97 = sphi 0, %s94
    %s98 = sphi 0, %s97
    %s114 = sphi 0, %s98
    %s118 = sphi 0, %s118
    %s120 = sphi 0, %s118
    %s121 = sphi 0, %s120
    %s135 = sphi 0, %s121
    %s141 = sphi 0, %s143
    %s144 = sphi 0, %s141
    %s145 = sphi 0, %s144
    %s161 = sphi 0, %s145
  $region4: #{g_synthesis_forward.8} parent=0 // loop_header_branch
    %14 = sbr.rel (%p12) target = $region8
  $region5: #{g_synthesis_forward.8} parent=0 // loop_body
    %s16 = ssub.s32 %s11, 1
    %s17 = ssub.s32 %s11, 2
    %s18 = sadd.s32 %s11, 1
    %s19 = ssub.s32 %s11, %s18
    %p20 = scmp.eq.s32.totalorder %s19, 0
    %s22 = sadd.s32 %s21, 1
    %s23 = scalar_select %p20, %s21, %s22
    %p26 = pneg %p20
    %p27 = scmp.eq.s32.totalorder %s11, 1
    %p28 = por %p26, %p27
    %p29 = scmp.ne.s32.totalorder %s21, %s24
    %p30 = scmp.eq.s32.totalorder %s11, 0
    %p31 = por %p29, %p30
    %p32 = scmp.ne.s32.totalorder %s21, %s24
    %p33 = scmp.eq.s32.totalorder %s16, 1
    %p34 = por %p32, %p33
    %p35 = scmp.ne.s32.totalorder %s24, %s25
    %p36 = scmp.eq.s32.totalorder %s16, 0
    %p37 = por %p35, %p36
    %p38 = scmp.ne.s32.totalorder %s24, %s25
    %p39 = scmp.eq.s32.totalorder %s17, 1
    %p40 = por %p38, %p39
    %p42 = scmp.ne.s32.totalorder %s25, %s41
    %p43 = scmp.eq.s32.totalorder %s17, 0
    %p44 = por %p42, %p43
    %s46 = sadd.s32 %s45, 1
    %p49 = scmp.eq.s32.totalorder %s11, 1
    %p50 = scmp.ne.s32.totalorder %s45, %s47
    %p51 = scmp.eq.s32.totalorder %s11, 0
    %p52 = por %p50, %p51
    %p53 = scmp.ne.s32.totalorder %s45, %s47
    %p54 = scmp.eq.s32.totalorder %s16, 1
    %p55 = por %p53, %p54
    %p56 = scmp.ne.s32.totalorder %s47, %s48
    %p57 = scmp.eq.s32.totalorder %s16, 0
    %p58 = por %p56, %p57
    %p59 = scmp.ne.s32.totalorder %s47, %s48
    %p60 = scmp.eq.s32.totalorder %s17, 1
    %p61 = por %p59, %p60
    %p63 = scmp.ne.s32.totalorder %s48, %s62
    %p64 = scmp.eq.s32.totalorder %s17, 0
    %p65 = por %p63, %p64
    %s66 = ssub.s32 %s11, %s18
    %p67 = scmp.eq.s32.totalorder %s66, 0
    %s69 = sadd.s32 %s68, 1
    %s70 = scalar_select %p67, %s68, %s69
    %p73 = pneg %p67
    %p74 = scmp.eq.s32.totalorder %s11, 1
    %p75 = por %p73, %p74
    %p76 = scmp.ne.s32.totalorder %s68, %s71
    %p77 = scmp.eq.s32.totalorder %s11, 0
    %p78 = por %p76, %p77
    %p79 = scmp.ne.s32.totalorder %s68, %s71
    %p80 = scmp.eq.s32.totalorder %s16, 1
    %p81 = por %p79, %p80
    %p82 = scmp.ne.s32.totalorder %s71, %s72
    %p83 = scmp.eq.s32.totalorder %s16, 0
    %p84 = por %p82, %p83
    %p85 = scmp.ne.s32.totalorder %s71, %s72
    %p86 = scmp.eq.s32.totalorder %s17, 1
    %p87 = por %p85, %p86
    %p89 = scmp.ne.s32.totalorder %s72, %s88
    %p90 = scmp.eq.s32.totalorder %s17, 0
    %p91 = por %p89, %p90
    %s92 = ssub.s32 %s11, %s18
    %p93 = scmp.eq.s32.totalorder %s92, 0
    %s95 = sadd.s32 %s94, 1
    %s96 = scalar_select %p93, %s94, %s95
    %p99 = pneg %p93
    %p100 = scmp.eq.s32.totalorder %s11, 1
    %p101 = por %p99, %p100
    %p102 = scmp.ne.s32.totalorder %s94, %s97
    %p103 = scmp.eq.s32.totalorder %s11, 0
    %p104 = por %p102, %p103
    %p105 = scmp.ne.s32.totalorder %s94, %s97
    %p106 = scmp.eq.s32.totalorder %s16, 1
    %p107 = por %p105, %p106
    %p108 = scmp.ne.s32.totalorder %s97, %s98
    %p109 = scmp.eq.s32.totalorder %s16, 0
    %p110 = por %p108, %p109
    %p111 = scmp.ne.s32.totalorder %s97, %s98
    %p112 = scmp.eq.s32.totalorder %s17, 1
    %p113 = por %p111, %p112
    %p115 = scmp.ne.s32.totalorder %s98, %s114
    %p116 = scmp.eq.s32.totalorder %s17, 0
    %p117 = por %p115, %p116
    %s119 = sadd.s32 %s118, 1
    %p122 = scmp.eq.s32.totalorder %s11, 1
    %p123 = scmp.ne.s32.totalorder %s118, %s120
    %p124 = scmp.eq.s32.totalorder %s11, 0
    %p125 = por %p123, %p124
    %p126 = scmp.ne.s32.totalorder %s118, %s120
    %p127 = scmp.eq.s32.totalorder %s16, 1
    %p128 = por %p126, %p127
    %p129 = scmp.ne.s32.totalorder %s120, %s121
    %p130 = scmp.eq.s32.totalorder %s16, 0
    %p131 = por %p129, %p130
    %p132 = scmp.ne.s32.totalorder %s120, %s121
    %p133 = scmp.eq.s32.totalorder %s17, 1
    %p134 = por %p132, %p133
    %p136 = scmp.ne.s32.totalorder %s121, %s135
    %p137 = scmp.eq.s32.totalorder %s17, 0
    %p138 = por %p136, %p137
    %s139 = ssub.s32 %s11, %s18
    %p140 = scmp.eq.s32.totalorder %s139, 0
    %s142 = sadd.s32 %s141, 1
    %s143 = scalar_select %p140, %s141, %s142
    %p146 = pneg %p140
    %p147 = scmp.eq.s32.totalorder %s11, 1
    %p148 = por %p146, %p147
    %p149 = scmp.ne.s32.totalorder %s141, %s144
    %p150 = scmp.eq.s32.totalorder %s11, 0
    %p151 = por %p149, %p150
    %p152 = scmp.ne.s32.totalorder %s141, %s144
    %p153 = scmp.eq.s32.totalorder %s16, 1
    %p154 = por %p152, %p153
    %p155 = scmp.ne.s32.totalorder %s144, %s145
    %p156 = scmp.eq.s32.totalorder %s16, 0
    %p157 = por %p155, %p156
    %p158 = scmp.ne.s32.totalorder %s144, %s145
    %p159 = scmp.eq.s32.totalorder %s17, 1
    %p160 = por %p158, %p159
    %p162 = scmp.ne.s32.totalorder %s145, %s161
    %p163 = scmp.eq.s32.totalorder %s17, 0
    %p164 = por %p162, %p163
    %p165 = scmp.le.s32.totalorder 1, %s11
    %p166 = scmp.lt.s32.totalorder %s11, 3
    %p167 = pnand %p165, %p166
    %p168 = pneg %p167
    // Predicated region
    $region9: #{g_synthesis_forward.8} parent=5 // pred_check
      _
    $region10: #{g_synthesis_forward.8} parent=5 // pred_check_branch
      %170 = sbr.rel (%p167) target = $region12
    $region11: #{g_synthesis_forward.8} parent=5 // pred_region
      %s171 = ssub.s32 %s11, 1
      // Predicated region
      $region13: #{g_synthesis_forward.8} parent=11 // pred_check
        %p172 = pneg %p58
      $region14: #{g_synthesis_forward.8} parent=11 // pred_check_branch
        %174 = sbr.rel (%p172) target = $region16
      $region15: #{g_synthesis_forward.8} parent=11 // pred_region
        _
      $region16: #{g_synthesis_forward.8} parent=11 // pred_fallthru
        _
      // Predicated region
      $region17: #{g_synthesis_forward.8} parent=11 // pred_check
        %p175 = pneg %p131
      $region18: #{g_synthesis_forward.8} parent=11 // pred_check_branch
        %177 = sbr.rel (%p175) target = $region20
      $region19: #{g_synthesis_forward.8} parent=11 // pred_region
        _
      $region20: #{g_synthesis_forward.8} parent=11 // pred_fallthru
        _
    $region12: #{g_synthesis_forward.8} parent=5 // pred_fallthru
      _
    %p178 = scmp.lt.s32.totalorder %s11, 2
    // Predicated region
    $region21: #{g_synthesis_forward.8} parent=5 // pred_check
      %p179 = pneg %p178
    $region22: #{g_synthesis_forward.8} parent=5 // pred_check_branch
      %181 = sbr.rel (%p179) target = $region24
    $region23: #{g_synthesis_forward.8} parent=5 // pred_region
      // Predicated region
      $region25: #{g_synthesis_forward.8} parent=23 // pred_check
        %p182 = pneg %p31
      $region26: #{g_synthesis_forward.8} parent=23 // pred_check_branch
        %184 = sbr.rel (%p182) target = $region28
      $region27: #{g_synthesis_forward.8} parent=23 // pred_region
        %p185 = scmp.lt.s32.totalorder %s11, 1
        %s186 = scalar_select %p185, %s11, 1
        %s187 = smul.addr %s186, 4
        %s188 = smul.addr %s187, 4
        %s189 = scalar_lea.vmem %s0, %s188
      $region28: #{g_synthesis_forward.8} parent=23 // pred_fallthru
        _
      // Predicated region
      $region29: #{g_synthesis_forward.8} parent=23 // pred_check
        %p190 = pneg %p78
      $region30: #{g_synthesis_forward.8} parent=23 // pred_check_branch
        %192 = sbr.rel (%p190) target = $region32
      $region31: #{g_synthesis_forward.8} parent=23 // pred_region
        %p193 = scmp.lt.s32.totalorder %s11, 1
        %s194 = scalar_select %p193, %s11, 1
        %s195 = smul.addr %s194, 4
        %s196 = smul.addr %s195, 8
        %s197 = scalar_lea.vmem %s2, %s196
      $region32: #{g_synthesis_forward.8} parent=23 // pred_fallthru
        _
      // Predicated region
      $region33: #{g_synthesis_forward.8} parent=23 // pred_check
        %p198 = pneg %p104
      $region34: #{g_synthesis_forward.8} parent=23 // pred_check_branch
        %200 = sbr.rel (%p198) target = $region36
      $region35: #{g_synthesis_forward.8} parent=23 // pred_region
        %p201 = scmp.lt.s32.totalorder %s11, 1
        %s202 = scalar_select %p201, %s11, 1
        %s203 = scalar_lea.vmem %s3, %s202
      $region36: #{g_synthesis_forward.8} parent=23 // pred_fallthru
        _
    $region24: #{g_synthesis_forward.8} parent=5 // pred_fallthru
      _
    %p204 = scmp.le.s32.totalorder 1, %s11
    %p205 = scmp.lt.s32.totalorder %s11, 3
    %p206 = pnand %p204, %p205
    %p207 = pneg %p206
    // Predicated region
    $region37: #{g_synthesis_forward.8} parent=5 // pred_check
      _
    $region38: #{g_synthesis_forward.8} parent=5 // pred_check_branch
      %209 = sbr.rel (%p206) target = $region40
    $region39: #{g_synthesis_forward.8} parent=5 // pred_region
      %s210 = ssub.s32 %s11, 1
      %p211 = scmp.lt.s32.totalorder %s16, 1
      %s212 = scalar_select %p211, %s16, 1
      %s213 = smul.addr %s212, 4
      %s214 = smul.addr %s213, 4
      %s215 = scalar_lea.vmem %s0, %s214
      %p216 = pneg %p37
      %p217 = pneg %p34
      %p218 = pneg %p58
      %p219 = pneg %p55
      %p220 = scmp.lt.s32.totalorder %s16, 1
      %s221 = scalar_select %p220, %s16, 1
      %s222 = smul.addr %s221, 4
      %s223 = smul.addr %s222, 8
      %s224 = scalar_lea.vmem %s2, %s223
      %p225 = pneg %p84
      %p226 = pneg %p81
      %p227 = scmp.lt.s32.totalorder %s16, 1
      %s228 = scalar_select %p227, %s16, 1
      %s229 = scalar_lea.vmem %s3, %s228
      %p230 = pneg %p110
      %p231 = pneg %p107
      %p232 = pneg %p131
      %p233 = pneg %p128
      %p234 = pneg %p157
      %p235 = pneg %p154
      %p236 = scmp.lt.s32.totalorder %s16, 1
      %s237 = scalar_select %p236, %s16, 1
      %s238 = smul.addr %s237, 4
      %s239 = smul.addr %s238, 4
      %s240 = scalar_lea.vmem %s5, %s239
      %p241 = scmp.lt.s32.totalorder %s16, 1
      %s242 = scalar_select %p241, %s16, 1
      %s243 = smul.addr %s242, 4
      %s244 = smul.addr %s243, 4
      %s245 = scalar_lea.vmem %s0, %s244
      %p246 = scmp.lt.s32.totalorder %s16, 1
      %s247 = scalar_select %p246, %s16, 1
      %s248 = smul.addr %s247, 4
      %s249 = smul.addr %s248, 8
      %s250 = scalar_lea.vmem %s2, %s249
      %p251 = scmp.lt.s32.totalorder %s16, 1
      %s252 = scalar_select %p251, %s16, 1
      %s253 = scalar_lea.vmem %s3, %s252
      %p254 = scmp.lt.s32.totalorder %s16, 1
      %s255 = scalar_select %p254, %s16, 1
      %s256 = smul.addr %s255, 4
      %s257 = smul.addr %s256, 4
      %s258 = scalar_lea.vmem %s5, %s257
      %v260 = vld [vmem:[%s245] sm:$0xf]
      %v261 = vld [vmem:[%s245 + $0x4] sm:$0xf]
      %v262 = vld [vmem:[%s245 + $0x8] sm:$0xf]
      %v263 = vld [vmem:[%s245 + $0xc] sm:$0xf]
      %v264 = vld [vmem:[%s1] sm:$0xf]
      %v265 = vld [vmem:[%s1 + $0x4] sm:$0xf]
      %v266 = vld [vmem:[%s1 + $0x8] sm:$0xf]
      %v267 = vld [vmem:[%s1 + $0xc] sm:$0xf]
      %s268 = scalar_lea.vmem %s1, 16
      %v269 = vld [vmem:[%s268] sm:$0xf]
      %v270 = vld [vmem:[%s268 + $0x4] sm:$0xf]
      %v271 = vld [vmem:[%s268 + $0x8] sm:$0xf]
      %v272 = vld [vmem:[%s268 + $0xc] sm:$0xf]
      %v277 = vunpack.c.l.b16 %v269
      %v278 = vunpack.c.l.b16 %v270
      %v279 = vunpack.c.l.b16 %v271
      %v280 = vunpack.c.l.b16 %v272
      %v281 = vpack.c.b16 %v278, %v277
      %v282 = vpack.c.b16 %v280, %v279
      %v287 = vunpack.c.l.b16 %v260
      %v288 = vunpack.c.l.b16 %v261
      %v289 = vunpack.c.l.b16 %v262
      %v290 = vunpack.c.l.b16 %v263
      %v291 = vpack.c.b16 %v288, %v287
      %v292 = vpack.c.b16 %v290, %v289
      %293 = vrot.lane.b32.xlu0 %v291, 127
      %v294 = vpop.permute.xlu0 %293
      %295 = vrot.lane.b32.xlu0 %v292, 127
      %v296 = vpop.permute.xlu0 %295
      %vm299 = vcmask 261120
      %v301 = vsel %vm299, %v281, 0
      %v304 = vsel %vm299, %v282, 0
      %306 = vmatprep.subr.bf16.mxu0 0
      %307 = vmatpush1.bf16.msra.mxu0 0
      %308 = vmatprep.subr.bf16.mxu0 0
      %309 = vmatpush1.bf16.msra.mxu0 0
      %310 = vmatprep.subr.bf16.mxu0 0
      %311 = vmatpush1.bf16.msra.mxu0 0
      %312 = vmatprep.subr.bf16.mxu0 0
      %313 = vmatpush1.bf16.msra.mxu0 0
      %314 = vmatprep.subr.bf16.mxu0 0
      %315 = vmatpush1.bf16.msra.mxu0 0
      %316 = vmatprep.subr.bf16.mxu0 0
      %317 = vmatpush1.bf16.msra.mxu0 0
      %318 = vmatprep.subr.bf16.mxu0 0
      %319 = vmatpush1.bf16.msra.mxu0 %v296
      %320 = vmatprep.subr.bf16.mxu0 0
      %321 = vmatpush1.bf16.msra.mxu0 %v294
      %322 = vmatprep.subr.bf16.mxu0 0
      %323 = vmatpush2.bf16.msra.mxu0 0
      %324 = vmatprep.subr.bf16.mxu0 0
      %325 = vmatpush2.bf16.msra.mxu0 0
      %326 = vmatprep.subr.bf16.mxu0 0
      %327 = vmatpush2.bf16.msra.mxu0 0
      %328 = vmatprep.subr.bf16.mxu0 0
      %329 = vmatpush2.bf16.msra.mxu0 0
      %330 = vmatprep.subr.bf16.mxu0 0
      %331 = vmatpush2.bf16.msra.mxu0 0
      %332 = vmatprep.subr.bf16.mxu0 0
      %333 = vmatpush2.bf16.msra.mxu0 0
      %334 = vmatprep.subr.bf16.mxu0 0
      %335 = vmatpush2.bf16.msra.mxu0 0
      %336 = vmatprep.subr.bf16.mxu0 0
      %337 = vmatpush2.bf16.msra.mxu0 0
      %338 = vmatprep.mubr.bf16.mxu0 0
      %339 = vmatmul.mubr.bf16.gmra.mxu0 %v301
      %v340 = vpop.f32.mrf.mxu0
      %v341 = vadd.f32 0.0, %v340
      %v342 = vpop.f32.mrf.mxu0
      %v343 = vpop.f32.mrf.mxu0
      %v344 = vadd.f32 0.0, %v343
      %v345 = vpop.f32.mrf.mxu0
      %346 = vmatprep.mubr.bf16.mxu0 0
      %347 = vmatmul.mubr.bf16.gmra.mxu0 %v304
      %v348 = vpop.f32.mrf.mxu0
      %v349 = vadd.f32 0.0, %v348
      %v350 = vpop.f32.mrf.mxu0
      %v351 = vpop.f32.mrf.mxu0
      %v352 = vadd.f32 0.0, %v351
      %v353 = vpop.f32.mrf.mxu0
      %354 = vdwg.mxu0
      %v359 = vunpack.c.l.b16 %v264
      %v360 = vunpack.c.l.b16 %v265
      %v361 = vunpack.c.l.b16 %v266
      %v362 = vunpack.c.l.b16 %v267
      %v363 = vpack.c.b16 %v360, %v359
      %v364 = vpack.c.b16 %v362, %v361
      %v368 = vsel %vm299, %v363, 0
      %v371 = vsel %vm299, %v364, 0
      %373 = vmatprep.subr.bf16.mxu0 0
      %374 = vmatpush1.bf16.msra.mxu0 0
      %375 = vmatprep.subr.bf16.mxu0 0
      %376 = vmatpush1.bf16.msra.mxu0 0
      %377 = vmatprep.subr.bf16.mxu0 0
      %378 = vmatpush1.bf16.msra.mxu0 0
      %379 = vmatprep.subr.bf16.mxu0 0
      %380 = vmatpush1.bf16.msra.mxu0 0
      %381 = vmatprep.subr.bf16.mxu0 0
      %382 = vmatpush1.bf16.msra.mxu0 0
      %383 = vmatprep.subr.bf16.mxu0 0
      %384 = vmatpush1.bf16.msra.mxu0 0
      %385 = vmatprep.subr.bf16.mxu0 0
      %386 = vmatpush1.bf16.msra.mxu0 %v292
      %387 = vmatprep.subr.bf16.mxu0 0
      %388 = vmatpush1.bf16.msra.mxu0 %v291
      %389 = vmatprep.subr.bf16.mxu0 0
      %390 = vmatpush2.bf16.msra.mxu0 0
      %391 = vmatprep.subr.bf16.mxu0 0
      %392 = vmatpush2.bf16.msra.mxu0 0
      %393 = vmatprep.subr.bf16.mxu0 0
      %394 = vmatpush2.bf16.msra.mxu0 0
      %395 = vmatprep.subr.bf16.mxu0 0
      %396 = vmatpush2.bf16.msra.mxu0 0
      %397 = vmatprep.subr.bf16.mxu0 0
      %398 = vmatpush2.bf16.msra.mxu0 0
      %399 = vmatprep.subr.bf16.mxu0 0
      %400 = vmatpush2.bf16.msra.mxu0 0
      %401 = vmatprep.subr.bf16.mxu0 0
      %402 = vmatpush2.bf16.msra.mxu0 0
      %403 = vmatprep.subr.bf16.mxu0 0
      %404 = vmatpush2.bf16.msra.mxu0 0
      %405 = vmatprep.mubr.bf16.mxu0 0
      %406 = vmatmul.mubr.bf16.gmra.mxu0 %v368
      %v407 = vpop.f32.mrf.mxu0
      %v408 = vadd.f32 %v341, %v407
      %v409 = vpop.f32.mrf.mxu0
      %v410 = vpop.f32.mrf.mxu0
      %v411 = vadd.f32 %v344, %v410
      %v412 = vpop.f32.mrf.mxu0
      %413 = vmatprep.mubr.bf16.mxu0 0
      %414 = vmatmul.mubr.bf16.gmra.mxu0 %v371
      %v415 = vpop.f32.mrf.mxu0
      %v416 = vadd.f32 %v349, %v415
      %v417 = vpop.f32.mrf.mxu0
      %v418 = vpop.f32.mrf.mxu0
      %v419 = vadd.f32 %v352, %v418
      %v420 = vpop.f32.mrf.mxu0
      %421 = vdwg.mxu0
      %s422 = scalar_lea.vmem %s1, 32
      %v423 = vld [vmem:[%s422] sm:$0xf]
      %v424 = vld [vmem:[%s422 + $0x4] sm:$0xf]
      %v425 = vld [vmem:[%s422 + $0x8] sm:$0xf]
      %v426 = vld [vmem:[%s422 + $0xc] sm:$0xf]
      %v431 = vunpack.c.l.b16 %v423
      %v432 = vunpack.c.l.b16 %v424
      %v433 = vunpack.c.l.b16 %v425
      %v434 = vunpack.c.l.b16 %v426
      %v435 = vpack.c.b16 %v432, %v431
      %v436 = vpack.c.b16 %v434, %v433
      %437 = vrot.lane.b32.xlu0 %v291, 126
      %v438 = vpop.permute.xlu0 %437
      %439 = vrot.lane.b32.xlu0 %v292, 126
      %v440 = vpop.permute.xlu0 %439
      %v444 = vsel %vm299, %v435, 0
      %v447 = vsel %vm299, %v436, 0
      %449 = vmatprep.subr.bf16.mxu0 0
      %450 = vmatpush1.bf16.msra.mxu0 0
      %451 = vmatprep.subr.bf16.mxu0 0
      %452 = vmatpush1.bf16.msra.mxu0 0
      %453 = vmatprep.subr.bf16.mxu0 0
      %454 = vmatpush1.bf16.msra.mxu0 0
      %455 = vmatprep.subr.bf16.mxu0 0
      %456 = vmatpush1.bf16.msra.mxu0 0
      %457 = vmatprep.subr.bf16.mxu0 0
      %458 = vmatpush1.bf16.msra.mxu0 0
      %459 = vmatprep.subr.bf16.mxu0 0
      %460 = vmatpush1.bf16.msra.mxu0 0
      %461 = vmatprep.subr.bf16.mxu0 0
      %462 = vmatpush1.bf16.msra.mxu0 %v440
      %463 = vmatprep.subr.bf16.mxu0 0
      %464 = vmatpush1.bf16.msra.mxu0 %v438
      %465 = vmatprep.subr.bf16.mxu0 0
      %466 = vmatpush2.bf16.msra.mxu0 0
      %467 = vmatprep.subr.bf16.mxu0 0
      %468 = vmatpush2.bf16.msra.mxu0 0
      %469 = vmatprep.subr.bf16.mxu0 0
      %470 = vmatpush2.bf16.msra.mxu0 0
      %471 = vmatprep.subr.bf16.mxu0 0
      %472 = vmatpush2.bf16.msra.mxu0 0
      %473 = vmatprep.subr.bf16.mxu0 0
      %474 = vmatpush2.bf16.msra.mxu0 0
      %475 = vmatprep.subr.bf16.mxu0 0
      %476 = vmatpush2.bf16.msra.mxu0 0
      %477 = vmatprep.subr.bf16.mxu0 0
      %478 = vmatpush2.bf16.msra.mxu0 0
      %479 = vmatprep.subr.bf16.mxu0 0
      %480 = vmatpush2.bf16.msra.mxu0 0
      %481 = vmatprep.mubr.bf16.mxu0 0
      %482 = vmatmul.mubr.bf16.gmra.mxu0 %v444
      %v483 = vpop.f32.mrf.mxu0
      %v484 = vadd.f32 0.0, %v483
      %v485 = vpop.f32.mrf.mxu0
      %v486 = vpop.f32.mrf.mxu0
      %v487 = vadd.f32 0.0, %v486
      %v488 = vpop.f32.mrf.mxu0
      %489 = vmatprep.mubr.bf16.mxu0 0
      %490 = vmatmul.mubr.bf16.gmra.mxu0 %v447
      %v491 = vpop.f32.mrf.mxu0
      %v492 = vadd.f32 0.0, %v491
      %v493 = vpop.f32.mrf.mxu0
      %v494 = vpop.f32.mrf.mxu0
      %v495 = vadd.f32 0.0, %v494
      %v496 = vpop.f32.mrf.mxu0
      %497 = vdwg.mxu0
      %v498 = vadd.f32 %v408, %v484
      %v499 = vadd.f32 %v411, %v487
      %v500 = vadd.f32 %v416, %v492
      %v501 = vadd.f32 %v419, %v495
      %s502 = scalar_lea.vmem %s1, 48
      %v503 = vld [vmem:[%s502] sm:$0xf]
      %v504 = vld [vmem:[%s502 + $0x4] sm:$0xf]
      %v505 = vld [vmem:[%s502 + $0x8] sm:$0xf]
      %v506 = vld [vmem:[%s502 + $0xc] sm:$0xf]
      %v511 = vunpack.c.l.b16 %v503
      %v512 = vunpack.c.l.b16 %v504
      %v513 = vunpack.c.l.b16 %v505
      %v514 = vunpack.c.l.b16 %v506
      %v515 = vpack.c.b16 %v512, %v511
      %v516 = vpack.c.b16 %v514, %v513
      %517 = vrot.lane.b32.xlu0 %v291, 122
      %v518 = vpop.permute.xlu0 %517
      %519 = vrot.lane.b32.xlu0 %v292, 122
      %v520 = vpop.permute.xlu0 %519
      %v524 = vsel %vm299, %v515, 0
      %v527 = vsel %vm299, %v516, 0
      %529 = vmatprep.subr.bf16.mxu0 0
      %530 = vmatpush1.bf16.msra.mxu0 0
      %531 = vmatprep.subr.bf16.mxu0 0
      %532 = vmatpush1.bf16.msra.mxu0 0
      %533 = vmatprep.subr.bf16.mxu0 0
      %534 = vmatpush1.bf16.msra.mxu0 0
      %535 = vmatprep.subr.bf16.mxu0 0
      %536 = vmatpush1.bf16.msra.mxu0 0
      %537 = vmatprep.subr.bf16.mxu0 0
      %538 = vmatpush1.bf16.msra.mxu0 0
      %539 = vmatprep.subr.bf16.mxu0 0
      %540 = vmatpush1.bf16.msra.mxu0 0
      %541 = vmatprep.subr.bf16.mxu0 0
      %542 = vmatpush1.bf16.msra.mxu0 %v520
      %543 = vmatprep.subr.bf16.mxu0 0
      %544 = vmatpush1.bf16.msra.mxu0 %v518
      %545 = vmatprep.subr.bf16.mxu0 0
      %546 = vmatpush2.bf16.msra.mxu0 0
      %547 = vmatprep.subr.bf16.mxu0 0
      %548 = vmatpush2.bf16.msra.mxu0 0
      %549 = vmatprep.subr.bf16.mxu0 0
      %550 = vmatpush2.bf16.msra.mxu0 0
      %551 = vmatprep.subr.bf16.mxu0 0
      %552 = vmatpush2.bf16.msra.mxu0 0
      %553 = vmatprep.subr.bf16.mxu0 0
      %554 = vmatpush2.bf16.msra.mxu0 0
      %555 = vmatprep.subr.bf16.mxu0 0
      %556 = vmatpush2.bf16.msra.mxu0 0
      %557 = vmatprep.subr.bf16.mxu0 0
      %558 = vmatpush2.bf16.msra.mxu0 0
      %559 = vmatprep.subr.bf16.mxu0 0
      %560 = vmatpush2.bf16.msra.mxu0 0
      %561 = vmatprep.mubr.bf16.mxu0 0
      %562 = vmatmul.mubr.bf16.gmra.mxu0 %v524
      %v563 = vpop.f32.mrf.mxu0
      %v564 = vadd.f32 0.0, %v563
      %v565 = vpop.f32.mrf.mxu0
      %v566 = vpop.f32.mrf.mxu0
      %v567 = vadd.f32 0.0, %v566
      %v568 = vpop.f32.mrf.mxu0
      %569 = vmatprep.mubr.bf16.mxu0 0
      %570 = vmatmul.mubr.bf16.gmra.mxu0 %v527
      %v571 = vpop.f32.mrf.mxu0
      %v572 = vadd.f32 0.0, %v571
      %v573 = vpop.f32.mrf.mxu0
      %v574 = vpop.f32.mrf.mxu0
      %v575 = vadd.f32 0.0, %v574
      %v576 = vpop.f32.mrf.mxu0
      %577 = vdwg.mxu0
      %v578 = vadd.f32 %v498, %v564
      %v579 = vadd.f32 %v499, %v567
      %v580 = vadd.f32 %v500, %v572
      %v581 = vadd.f32 %v501, %v575
      %s582 = scalar_lea.vmem %s1, 64
      %v583 = vld [vmem:[%s582] sm:$0xf]
      %v584 = vld [vmem:[%s582 + $0x4] sm:$0xf]
      %v585 = vld [vmem:[%s582 + $0x8] sm:$0xf]
      %v586 = vld [vmem:[%s582 + $0xc] sm:$0xf]
      %v591 = vunpack.c.l.b16 %v583
      %v592 = vunpack.c.l.b16 %v584
      %v593 = vunpack.c.l.b16 %v585
      %v594 = vunpack.c.l.b16 %v586
      %v595 = vpack.c.b16 %v592, %v591
      %v596 = vpack.c.b16 %v594, %v593
      %597 = vrot.lane.b32.xlu0 %v291, 121
      %v598 = vpop.permute.xlu0 %597
      %599 = vrot.lane.b32.xlu0 %v292, 121
      %v600 = vpop.permute.xlu0 %599
      %v604 = vsel %vm299, %v595, 0
      %v607 = vsel %vm299, %v596, 0
      %609 = vmatprep.subr.bf16.mxu0 0
      %610 = vmatpush1.bf16.msra.mxu0 0
      %611 = vmatprep.subr.bf16.mxu0 0
      %612 = vmatpush1.bf16.msra.mxu0 0
      %613 = vmatprep.subr.bf16.mxu0 0
      %614 = vmatpush1.bf16.msra.mxu0 0
      %615 = vmatprep.subr.bf16.mxu0 0
      %616 = vmatpush1.bf16.msra.mxu0 0
      %617 = vmatprep.subr.bf16.mxu0 0
      %618 = vmatpush1.bf16.msra.mxu0 0
      %619 = vmatprep.subr.bf16.mxu0 0
      %620 = vmatpush1.bf16.msra.mxu0 0
      %621 = vmatprep.subr.bf16.mxu0 0
      %622 = vmatpush1.bf16.msra.mxu0 %v600
      %623 = vmatprep.subr.bf16.mxu0 0
      %624 = vmatpush1.bf16.msra.mxu0 %v598
      %625 = vmatprep.subr.bf16.mxu0 0
      %626 = vmatpush2.bf16.msra.mxu0 0
      %627 = vmatprep.subr.bf16.mxu0 0
      %628 = vmatpush2.bf16.msra.mxu0 0
      %629 = vmatprep.subr.bf16.mxu0 0
      %630 = vmatpush2.bf16.msra.mxu0 0
      %631 = vmatprep.subr.bf16.mxu0 0
      %632 = vmatpush2.bf16.msra.mxu0 0
      %633 = vmatprep.subr.bf16.mxu0 0
      %634 = vmatpush2.bf16.msra.mxu0 0
      %635 = vmatprep.subr.bf16.mxu0 0
      %636 = vmatpush2.bf16.msra.mxu0 0
      %637 = vmatprep.subr.bf16.mxu0 0
      %638 = vmatpush2.bf16.msra.mxu0 0
      %639 = vmatprep.subr.bf16.mxu0 0
      %640 = vmatpush2.bf16.msra.mxu0 0
      %641 = vmatprep.mubr.bf16.mxu0 0
      %642 = vmatmul.mubr.bf16.gmra.mxu0 %v604
      %v643 = vpop.f32.mrf.mxu0
      %v644 = vadd.f32 0.0, %v643
      %v645 = vpop.f32.mrf.mxu0
      %v646 = vpop.f32.mrf.mxu0
      %v647 = vadd.f32 0.0, %v646
      %v648 = vpop.f32.mrf.mxu0
      %649 = vmatprep.mubr.bf16.mxu0 0
      %650 = vmatmul.mubr.bf16.gmra.mxu0 %v607
      %v651 = vpop.f32.mrf.mxu0
      %v652 = vadd.f32 0.0, %v651
      %v653 = vpop.f32.mrf.mxu0
      %v654 = vpop.f32.mrf.mxu0
      %v655 = vadd.f32 0.0, %v654
      %v656 = vpop.f32.mrf.mxu0
      %657 = vdwg.mxu0
      %v658 = vadd.f32 %v578, %v644
      %v659 = vadd.f32 %v579, %v647
      %v660 = vadd.f32 %v580, %v652
      %v661 = vadd.f32 %v581, %v655
      %s662 = scalar_lea.vmem %s1, 80
      %v663 = vld [vmem:[%s662] sm:$0xf]
      %v664 = vld [vmem:[%s662 + $0x4] sm:$0xf]
      %v665 = vld [vmem:[%s662 + $0x8] sm:$0xf]
      %v666 = vld [vmem:[%s662 + $0xc] sm:$0xf]
      %v671 = vunpack.c.l.b16 %v663
      %v672 = vunpack.c.l.b16 %v664
      %v673 = vunpack.c.l.b16 %v665
      %v674 = vunpack.c.l.b16 %v666
      %v675 = vpack.c.b16 %v672, %v671
      %v676 = vpack.c.b16 %v674, %v673
      %677 = vrot.lane.b32.xlu0 %v291, 120
      %v678 = vpop.permute.xlu0 %677
      %679 = vrot.lane.b32.xlu0 %v292, 120
      %v680 = vpop.permute.xlu0 %679
      %v684 = vsel %vm299, %v675, 0
      %v687 = vsel %vm299, %v676, 0
      %689 = vmatprep.subr.bf16.mxu0 0
      %690 = vmatpush1.bf16.msra.mxu0 0
      %691 = vmatprep.subr.bf16.mxu0 0
      %692 = vmatpush1.bf16.msra.mxu0 0
      %693 = vmatprep.subr.bf16.mxu0 0
      %694 = vmatpush1.bf16.msra.mxu0 0
      %695 = vmatprep.subr.bf16.mxu0 0
      %696 = vmatpush1.bf16.msra.mxu0 0
      %697 = vmatprep.subr.bf16.mxu0 0
      %698 = vmatpush1.bf16.msra.mxu0 0
      %699 = vmatprep.subr.bf16.mxu0 0
      %700 = vmatpush1.bf16.msra.mxu0 0
      %701 = vmatprep.subr.bf16.mxu0 0
      %702 = vmatpush1.bf16.msra.mxu0 %v680
      %703 = vmatprep.subr.bf16.mxu0 0
      %704 = vmatpush1.bf16.msra.mxu0 %v678
      %705 = vmatprep.subr.bf16.mxu0 0
      %706 = vmatpush2.bf16.msra.mxu0 0
      %707 = vmatprep.subr.bf16.mxu0 0
      %708 = vmatpush2.bf16.msra.mxu0 0
      %709 = vmatprep.subr.bf16.mxu0 0
      %710 = vmatpush2.bf16.msra.mxu0 0
      %711 = vmatprep.subr.bf16.mxu0 0
      %712 = vmatpush2.bf16.msra.mxu0 0
      %713 = vmatprep.subr.bf16.mxu0 0
      %714 = vmatpush2.bf16.msra.mxu0 0
      %715 = vmatprep.subr.bf16.mxu0 0
      %716 = vmatpush2.bf16.msra.mxu0 0
      %717 = vmatprep.subr.bf16.mxu0 0
      %718 = vmatpush2.bf16.msra.mxu0 0
      %719 = vmatprep.subr.bf16.mxu0 0
      %720 = vmatpush2.bf16.msra.mxu0 0
      %721 = vmatprep.mubr.bf16.mxu0 0
      %722 = vmatmul.mubr.bf16.gmra.mxu0 %v684
      %v723 = vpop.f32.mrf.mxu0
      %v724 = vadd.f32 0.0, %v723
      %v725 = vpop.f32.mrf.mxu0
      %v726 = vpop.f32.mrf.mxu0
      %v727 = vadd.f32 0.0, %v726
      %v728 = vpop.f32.mrf.mxu0
      %729 = vmatprep.mubr.bf16.mxu0 0
      %730 = vmatmul.mubr.bf16.gmra.mxu0 %v687
      %v731 = vpop.f32.mrf.mxu0
      %v732 = vadd.f32 0.0, %v731
      %v733 = vpop.f32.mrf.mxu0
      %v734 = vpop.f32.mrf.mxu0
      %v735 = vadd.f32 0.0, %v734
      %v736 = vpop.f32.mrf.mxu0
      %737 = vdwg.mxu0
      %v738 = vadd.f32 %v658, %v724
      %v739 = vadd.f32 %v659, %v727
      %v740 = vadd.f32 %v660, %v732
      %v741 = vadd.f32 %v661, %v735
      %s742 = scalar_lea.vmem %s1, 96
      %v743 = vld [vmem:[%s742] sm:$0xf]
      %v744 = vld [vmem:[%s742 + $0x4] sm:$0xf]
      %v745 = vld [vmem:[%s742 + $0x8] sm:$0xf]
      %v746 = vld [vmem:[%s742 + $0xc] sm:$0xf]
      %v751 = vunpack.c.l.b16 %v743
      %v752 = vunpack.c.l.b16 %v744
      %v753 = vunpack.c.l.b16 %v745
      %v754 = vunpack.c.l.b16 %v746
      %v755 = vpack.c.b16 %v752, %v751
      %v756 = vpack.c.b16 %v754, %v753
      %757 = vrot.lane.b32.xlu0 %v291, 116
      %v758 = vpop.permute.xlu0 %757
      %759 = vrot.lane.b32.xlu0 %v292, 116
      %v760 = vpop.permute.xlu0 %759
      %v764 = vsel %vm299, %v755, 0
      %v767 = vsel %vm299, %v756, 0
      %769 = vmatprep.subr.bf16.mxu0 0
      %770 = vmatpush1.bf16.msra.mxu0 0
      %771 = vmatprep.subr.bf16.mxu0 0
      %772 = vmatpush1.bf16.msra.mxu0 0
      %773 = vmatprep.subr.bf16.mxu0 0
      %774 = vmatpush1.bf16.msra.mxu0 0
      %775 = vmatprep.subr.bf16.mxu0 0
      %776 = vmatpush1.bf16.msra.mxu0 0
      %777 = vmatprep.subr.bf16.mxu0 0
      %778 = vmatpush1.bf16.msra.mxu0 0
      %779 = vmatprep.subr.bf16.mxu0 0
      %780 = vmatpush1.bf16.msra.mxu0 0
      %781 = vmatprep.subr.bf16.mxu0 0
      %782 = vmatpush1.bf16.msra.mxu0 %v760
      %783 = vmatprep.subr.bf16.mxu0 0
      %784 = vmatpush1.bf16.msra.mxu0 %v758
      %785 = vmatprep.subr.bf16.mxu0 0
      %786 = vmatpush2.bf16.msra.mxu0 0
      %787 = vmatprep.subr.bf16.mxu0 0
      %788 = vmatpush2.bf16.msra.mxu0 0
      %789 = vmatprep.subr.bf16.mxu0 0
      %790 = vmatpush2.bf16.msra.mxu0 0
      %791 = vmatprep.subr.bf16.mxu0 0
      %792 = vmatpush2.bf16.msra.mxu0 0
      %793 = vmatprep.subr.bf16.mxu0 0
      %794 = vmatpush2.bf16.msra.mxu0 0
      %795 = vmatprep.subr.bf16.mxu0 0
      %796 = vmatpush2.bf16.msra.mxu0 0
      %797 = vmatprep.subr.bf16.mxu0 0
      %798 = vmatpush2.bf16.msra.mxu0 0
      %799 = vmatprep.subr.bf16.mxu0 0
      %800 = vmatpush2.bf16.msra.mxu0 0
      %801 = vmatprep.mubr.bf16.mxu0 0
      %802 = vmatmul.mubr.bf16.gmra.mxu0 %v764
      %v803 = vpop.f32.mrf.mxu0
      %v804 = vadd.f32 0.0, %v803
      %v805 = vpop.f32.mrf.mxu0
      %v806 = vpop.f32.mrf.mxu0
      %v807 = vadd.f32 0.0, %v806
      %v808 = vpop.f32.mrf.mxu0
      %809 = vmatprep.mubr.bf16.mxu0 0
      %810 = vmatmul.mubr.bf16.gmra.mxu0 %v767
      %v811 = vpop.f32.mrf.mxu0
      %v812 = vadd.f32 0.0, %v811
      %v813 = vpop.f32.mrf.mxu0
      %v814 = vpop.f32.mrf.mxu0
      %v815 = vadd.f32 0.0, %v814
      %v816 = vpop.f32.mrf.mxu0
      %817 = vdwg.mxu0
      %v818 = vadd.f32 %v738, %v804
      %v819 = vadd.f32 %v739, %v807
      %v820 = vadd.f32 %v740, %v812
      %v821 = vadd.f32 %v741, %v815
      %s822 = scalar_lea.vmem %s1, 112
      %v823 = vld [vmem:[%s822] sm:$0xf]
      %v824 = vld [vmem:[%s822 + $0x4] sm:$0xf]
      %v825 = vld [vmem:[%s822 + $0x8] sm:$0xf]
      %v826 = vld [vmem:[%s822 + $0xc] sm:$0xf]
      %v831 = vunpack.c.l.b16 %v823
      %v832 = vunpack.c.l.b16 %v824
      %v833 = vunpack.c.l.b16 %v825
      %v834 = vunpack.c.l.b16 %v826
      %v835 = vpack.c.b16 %v832, %v831
      %v836 = vpack.c.b16 %v834, %v833
      %837 = vrot.lane.b32.xlu0 %v291, 115
      %v838 = vpop.permute.xlu0 %837
      %839 = vrot.lane.b32.xlu0 %v292, 115
      %v840 = vpop.permute.xlu0 %839
      %v844 = vsel %vm299, %v835, 0
      %v847 = vsel %vm299, %v836, 0
      %849 = vmatprep.subr.bf16.mxu0 0
      %850 = vmatpush1.bf16.msra.mxu0 0
      %851 = vmatprep.subr.bf16.mxu0 0
      %852 = vmatpush1.bf16.msra.mxu0 0
      %853 = vmatprep.subr.bf16.mxu0 0
      %854 = vmatpush1.bf16.msra.mxu0 0
      %855 = vmatprep.subr.bf16.mxu0 0
      %856 = vmatpush1.bf16.msra.mxu0 0
      %857 = vmatprep.subr.bf16.mxu0 0
      %858 = vmatpush1.bf16.msra.mxu0 0
      %859 = vmatprep.subr.bf16.mxu0 0
      %860 = vmatpush1.bf16.msra.mxu0 0
      %861 = vmatprep.subr.bf16.mxu0 0
      %862 = vmatpush1.bf16.msra.mxu0 %v840
      %863 = vmatprep.subr.bf16.mxu0 0
      %864 = vmatpush1.bf16.msra.mxu0 %v838
      %865 = vmatprep.subr.bf16.mxu0 0
      %866 = vmatpush2.bf16.msra.mxu0 0
      %867 = vmatprep.subr.bf16.mxu0 0
      %868 = vmatpush2.bf16.msra.mxu0 0
      %869 = vmatprep.subr.bf16.mxu0 0
      %870 = vmatpush2.bf16.msra.mxu0 0
      %871 = vmatprep.subr.bf16.mxu0 0
      %872 = vmatpush2.bf16.msra.mxu0 0
      %873 = vmatprep.subr.bf16.mxu0 0
      %874 = vmatpush2.bf16.msra.mxu0 0
      %875 = vmatprep.subr.bf16.mxu0 0
      %876 = vmatpush2.bf16.msra.mxu0 0
      %877 = vmatprep.subr.bf16.mxu0 0
      %878 = vmatpush2.bf16.msra.mxu0 0
      %879 = vmatprep.subr.bf16.mxu0 0
      %880 = vmatpush2.bf16.msra.mxu0 0
      %881 = vmatprep.mubr.bf16.mxu0 0
      %882 = vmatmul.mubr.bf16.gmra.mxu0 %v844
      %v883 = vpop.f32.mrf.mxu0
      %v884 = vadd.f32 0.0, %v883
      %v885 = vpop.f32.mrf.mxu0
      %v886 = vpop.f32.mrf.mxu0
      %v887 = vadd.f32 0.0, %v886
      %v888 = vpop.f32.mrf.mxu0
      %889 = vmatprep.mubr.bf16.mxu0 0
      %890 = vmatmul.mubr.bf16.gmra.mxu0 %v847
      %v891 = vpop.f32.mrf.mxu0
      %v892 = vadd.f32 0.0, %v891
      %v893 = vpop.f32.mrf.mxu0
      %v894 = vpop.f32.mrf.mxu0
      %v895 = vadd.f32 0.0, %v894
      %v896 = vpop.f32.mrf.mxu0
      %897 = vdwg.mxu0
      %v898 = vadd.f32 %v818, %v884
      %v899 = vadd.f32 %v819, %v887
      %v900 = vadd.f32 %v820, %v892
      %v901 = vadd.f32 %v821, %v895
      %s902 = scalar_lea.vmem %s1, 128
      %v903 = vld [vmem:[%s902] sm:$0xf]
      %v904 = vld [vmem:[%s902 + $0x4] sm:$0xf]
      %v905 = vld [vmem:[%s902 + $0x8] sm:$0xf]
      %v906 = vld [vmem:[%s902 + $0xc] sm:$0xf]
      %v911 = vunpack.c.l.b16 %v903
      %v912 = vunpack.c.l.b16 %v904
      %v913 = vunpack.c.l.b16 %v905
      %v914 = vunpack.c.l.b16 %v906
      %v915 = vpack.c.b16 %v912, %v911
      %v916 = vpack.c.b16 %v914, %v913
      %917 = vrot.lane.b32.xlu0 %v291, 114
      %v918 = vpop.permute.xlu0 %917
      %919 = vrot.lane.b32.xlu0 %v292, 114
      %v920 = vpop.permute.xlu0 %919
      %v924 = vsel %vm299, %v915, 0
      %v927 = vsel %vm299, %v916, 0
      %929 = vmatprep.subr.bf16.mxu0 0
      %930 = vmatpush1.bf16.msra.mxu0 0
      %931 = vmatprep.subr.bf16.mxu0 0
      %932 = vmatpush1.bf16.msra.mxu0 0
      %933 = vmatprep.subr.bf16.mxu0 0
      %934 = vmatpush1.bf16.msra.mxu0 0
      %935 = vmatprep.subr.bf16.mxu0 0
      %936 = vmatpush1.bf16.msra.mxu0 0
      %937 = vmatprep.subr.bf16.mxu0 0
      %938 = vmatpush1.bf16.msra.mxu0 0
      %939 = vmatprep.subr.bf16.mxu0 0
      %940 = vmatpush1.bf16.msra.mxu0 0
      %941 = vmatprep.subr.bf16.mxu0 0
      %942 = vmatpush1.bf16.msra.mxu0 %v920
      %943 = vmatprep.subr.bf16.mxu0 0
      %944 = vmatpush1.bf16.msra.mxu0 %v918
      %945 = vmatprep.subr.bf16.mxu0 0
      %946 = vmatpush2.bf16.msra.mxu0 0
      %947 = vmatprep.subr.bf16.mxu0 0
      %948 = vmatpush2.bf16.msra.mxu0 0
      %949 = vmatprep.subr.bf16.mxu0 0
      %950 = vmatpush2.bf16.msra.mxu0 0
      %951 = vmatprep.subr.bf16.mxu0 0
      %952 = vmatpush2.bf16.msra.mxu0 0
      %953 = vmatprep.subr.bf16.mxu0 0
      %954 = vmatpush2.bf16.msra.mxu0 0
      %955 = vmatprep.subr.bf16.mxu0 0
      %956 = vmatpush2.bf16.msra.mxu0 0
      %957 = vmatprep.subr.bf16.mxu0 0
      %958 = vmatpush2.bf16.msra.mxu0 0
      %959 = vmatprep.subr.bf16.mxu0 0
      %960 = vmatpush2.bf16.msra.mxu0 0
      %961 = vmatprep.mubr.bf16.mxu0 0
      %962 = vmatmul.mubr.bf16.gmra.mxu0 %v924
      %v963 = vpop.f32.mrf.mxu0
      %v964 = vadd.f32 0.0, %v963
      %v965 = vpop.f32.mrf.mxu0
      %v966 = vpop.f32.mrf.mxu0
      %v967 = vadd.f32 0.0, %v966
      %v968 = vpop.f32.mrf.mxu0
      %969 = vmatprep.mubr.bf16.mxu0 0
      %970 = vmatmul.mubr.bf16.gmra.mxu0 %v927
      %v971 = vpop.f32.mrf.mxu0
      %v972 = vadd.f32 0.0, %v971
      %v973 = vpop.f32.mrf.mxu0
      %v974 = vpop.f32.mrf.mxu0
      %v975 = vadd.f32 0.0, %v974
      %v976 = vpop.f32.mrf.mxu0
      %977 = vdwg.mxu0
      %v978 = vadd.f32 %v898, %v964
      %v979 = vadd.f32 %v899, %v967
      %v980 = vadd.f32 %v900, %v972
      %v981 = vadd.f32 %v901, %v975
      %v982 = vld [vmem:[%s250] sm:$0xff]
      %v983 = vld [vmem:[%s250 + $0x8] sm:$0xff]
      %v984 = vld [vmem:[%s250 + $0x10] sm:$0xff]
      %v985 = vld [vmem:[%s250 + $0x18] sm:$0xff]
      %987 = vset.pattern.permute.xlu0 0
      %988 = vperm.xlu0 %987, %v982
      %v989 = vpop.permute.xlu0 %988
      %992 = vset.pattern.permute.xlu0 0
      %993 = vperm.xlu0 %992, %v983
      %v994 = vpop.permute.xlu0 %993
      %997 = vset.pattern.permute.xlu0 0
      %998 = vperm.xlu0 %997, %v984
      %v999 = vpop.permute.xlu0 %998
      %1002 = vset.pattern.permute.xlu0 0
      %1003 = vperm.xlu0 %1002, %v985
      %v1004 = vpop.permute.xlu0 %1003
      %v1006 = vadd.f32 %v978, %v989
      %v1007 = vadd.f32 %v979, %v994
      %v1008 = vadd.f32 %v980, %v999
      %v1009 = vadd.f32 %v981, %v1004
      %v1010 = vld [vmem:[%s253] sm:$0x1]
      %1011 = vset.pattern.permute.xlu0 1
      %1012 = vperm.xlu0 %1011, %v982
      %v1013 = vpop.permute.xlu0 %1012
      %1015 = vset.pattern.permute.xlu0 1
      %1016 = vperm.xlu0 %1015, %v983
      %v1017 = vpop.permute.xlu0 %1016
      %1019 = vset.pattern.permute.xlu0 1
      %1020 = vperm.xlu0 %1019, %v984
      %v1021 = vpop.permute.xlu0 %1020
      %1023 = vset.pattern.permute.xlu0 1
      %1024 = vperm.xlu0 %1023, %v985
      %v1025 = vpop.permute.xlu0 %1024
      %v1028 = vlaneseq
      %v1029 = vshrl.u32 %v1028, 7
      %v1030 = vsub.s32 0, %v1029
      %v1031 = vrot.slane %v1010, %v1030
      %v1033 = vmul.f32 %v1013, %v1031
      %v1034 = vmul.f32 %v1017, %v1031
      %v1035 = vmul.f32 %v1021, %v1031
      %v1036 = vmul.f32 %v1025, %v1031
      %v1037 = vadd.f32 %v1006, %v1033
      %v1038 = vadd.f32 %v1007, %v1034
      %v1039 = vadd.f32 %v1008, %v1035
      %v1040 = vadd.f32 %v1009, %v1036
      %vm1041 = vcmp.ge.f32.partialorder %v1037, 0.0
      %vm1042 = vcmp.ge.f32.partialorder %v1038, 0.0
      %vm1043 = vcmp.ge.f32.partialorder %v1039, 0.0
      %vm1044 = vcmp.ge.f32.partialorder %v1040, 0.0
      %v1045 = vmul.f32 %v1037, 0.2
      %v1046 = vmul.f32 %v1038, 0.2
      %v1047 = vmul.f32 %v1039, 0.2
      %v1048 = vmul.f32 %v1040, 0.2
      %v1049 = vsel %vm1041, %v1037, %v1045
      %v1050 = vsel %vm1042, %v1038, %v1046
      %v1051 = vsel %vm1043, %v1039, %v1047
      %v1052 = vsel %vm1044, %v1040, %v1048
      %v1053 = vld [vmem:[%s4] sm:$0x1]
      %v1055 = vlaneseq
      %v1056 = vshrl.u32 %v1055, 7
      %v1057 = vsub.s32 0, %v1056
      %v1058 = vrot.slane %v1053, %v1057
      %v1060 = vmul.f32 %v1049, %v1058
      %v1061 = vmul.f32 %v1050, %v1058
      %v1062 = vmul.f32 %v1051, %v1058
      %v1063 = vmul.f32 %v1052, %v1058
      %vm1064 = vcmask 195584
      %v1065 = vsel %vm1064, %v1060, 0.0
      %1066 = vadd.xlane.f32.xlu0 %v1065
      %v1067 = vpop.xlane.xlu0 %1066
      %v1068 = vsel %vm1064, %v1061, 0.0
      %1069 = vadd.xlane.f32.xlu0 %v1068
      %v1070 = vpop.xlane.xlu0 %1069
      %v1071 = vsel %vm1064, %v1062, 0.0
      %1072 = vadd.xlane.f32.xlu0 %v1071
      %v1073 = vpop.xlane.xlu0 %1072
      %v1074 = vsel %vm1064, %v1063, 0.0
      %1075 = vadd.xlane.f32.xlu0 %v1074
      %v1076 = vpop.xlane.xlu0 %1075
      %v1077 = vmul.f32 %v1067, 0.0625
      %v1078 = vmul.f32 %v1070, 0.0625
      %v1079 = vmul.f32 %v1073, 0.0625
      %v1080 = vmul.f32 %v1076, 0.0625
      %v1081 = vmul.f32 %v1060, %v1060
      %v1082 = vmul.f32 %v1061, %v1061
      %v1083 = vmul.f32 %v1062, %v1062
      %v1084 = vmul.f32 %v1063, %v1063
      %v1085 = vsel %vm1064, %v1081, 0.0
      %1086 = vadd.xlane.f32.xlu0 %v1085
      %v1087 = vpop.xlane.xlu0 %1086
      %v1088 = vsel %vm1064, %v1082, 0.0
      %1089 = vadd.xlane.f32.xlu0 %v1088
      %v1090 = vpop.xlane.xlu0 %1089
      %v1091 = vsel %vm1064, %v1083, 0.0
      %1092 = vadd.xlane.f32.xlu0 %v1091
      %v1093 = vpop.xlane.xlu0 %1092
      %v1094 = vsel %vm1064, %v1084, 0.0
      %1095 = vadd.xlane.f32.xlu0 %v1094
      %v1096 = vpop.xlane.xlu0 %1095
      %v1097 = vmul.f32 %v1087, 0.0625
      %v1098 = vmul.f32 %v1090, 0.0625
      %v1099 = vmul.f32 %v1093, 0.0625
      %v1100 = vmul.f32 %v1096, 0.0625
      %v1101 = vmul.f32 %v1077, %v1077
      %v1102 = vmul.f32 %v1078, %v1078
      %v1103 = vmul.f32 %v1079, %v1079
      %v1104 = vmul.f32 %v1080, %v1080
      %v1105 = vsub.f32 %v1097, %v1101
      %v1106 = vsub.f32 %v1098, %v1102
      %v1107 = vsub.f32 %v1099, %v1103
      %v1108 = vsub.f32 %v1100, %v1104
      %v1109 = vsub.f32 %v1060, %v1077
      %v1110 = vsub.f32 %v1061, %v1078
      %v1111 = vsub.f32 %v1062, %v1079
      %v1112 = vsub.f32 %v1063, %v1080
      %v1113 = vmax.f32 %v1105, 0.0
      %v1114 = vmax.f32 %v1106, 0.0
      %v1115 = vmax.f32 %v1107, 0.0
      %v1116 = vmax.f32 %v1108, 0.0
      %v1117 = vadd.f32 %v1113, 1e-05
      %v1118 = vadd.f32 %v1114, 1e-05
      %v1119 = vadd.f32 %v1115, 1e-05
      %v1120 = vadd.f32 %v1116, 1e-05
      %v1121 = vrsqrt.pop %v1117
      %v1122 = vrsqrt.pop %v1118
      %v1123 = vrsqrt.pop %v1119
      %v1124 = vrsqrt.pop %v1120
      %v1125 = vmul.f32 %v1109, %v1121
      %v1126 = vmul.f32 %v1110, %v1122
      %v1127 = vmul.f32 %v1111, %v1123
      %v1128 = vmul.f32 %v1112, %v1124
      %v1129 = vadd.f32 %v982, 1.0
      %v1130 = vadd.f32 %v983, 1.0
      %v1131 = vadd.f32 %v984, 1.0
      %v1132 = vadd.f32 %v985, 1.0
      %1134 = vset.pattern.permute.xlu0 2
      %1135 = vperm.xlu0 %1134, %v1129
      %v1136 = vpop.permute.xlu0 %1135
      %1139 = vset.pattern.permute.xlu0 2
      %1140 = vperm.xlu0 %1139, %v1130
      %v1141 = vpop.permute.xlu0 %1140
      %1144 = vset.pattern.permute.xlu0 2
      %1145 = vperm.xlu0 %1144, %v1131
      %v1146 = vpop.permute.xlu0 %1145
      %1149 = vset.pattern.permute.xlu0 2
      %1150 = vperm.xlu0 %1149, %v1132
      %v1151 = vpop.permute.xlu0 %1150
      %v1153 = vmul.f32 %v1125, %v1136
      %v1154 = vmul.f32 %v1126, %v1141
      %v1155 = vmul.f32 %v1127, %v1146
      %v1156 = vmul.f32 %v1128, %v1151
      %1157 = vset.pattern.permute.xlu0 3
      %1158 = vperm.xlu0 %1157, %v982
      %v1159 = vpop.permute.xlu0 %1158
      %1161 = vset.pattern.permute.xlu0 3
      %1162 = vperm.xlu0 %1161, %v983
      %v1163 = vpop.permute.xlu0 %1162
      %1165 = vset.pattern.permute.xlu0 3
      %1166 = vperm.xlu0 %1165, %v984
      %v1167 = vpop.permute.xlu0 %1166
      %1169 = vset.pattern.permute.xlu0 3
      %1170 = vperm.xlu0 %1169, %v985
      %v1171 = vpop.permute.xlu0 %1170
      %v1173 = vadd.f32 %v1153, %v1159
      %v1174 = vadd.f32 %v1154, %v1163
      %v1175 = vadd.f32 %v1155, %v1167
      %v1176 = vadd.f32 %v1156, %v1171
      %v1177 = vpack.c.bf16 %v1174, %v1173
      %v1178 = vpack.c.bf16 %v1176, %v1175
      %v1181 = vunpack.c.l.b16 %v1177
      %v1182 = vunpack.c.h.b16 %v1177
      %v1183 = vunpack.c.l.b16 %v1178
      %v1184 = vunpack.c.h.b16 %v1178
      %v1185 = vpack.c.b16 %v1181, %v1181
      %v1186 = vpack.c.b16 %v1182, %v1182
      %v1187 = vpack.c.b16 %v1183, %v1183
      %v1188 = vpack.c.b16 %v1184, %v1184
      %vm1193 = vcmask 191488
      %1194 = vst.msk [vmem:[%s258] sm:$0xf] %vm1193, %v1185
      %1195 = vst.msk [vmem:[%s258 + $0x4] sm:$0xf] %vm1193, %v1186
      %1196 = vst.msk [vmem:[%s258 + $0x8] sm:$0xf] %vm1193, %v1187
      %1197 = vst.msk [vmem:[%s258 + $0xc] sm:$0xf] %vm1193, %v1188
      %p1198 = scmp.lt.s32.totalorder %s16, 1
      %s1199 = scalar_select %p1198, %s16, 1
      %s1200 = smul.addr %s1199, 4
      %s1201 = smul.addr %s1200, 4
      %s1202 = scalar_lea.vmem %s5, %s1201
      // Predicated region
      $region41: #{g_synthesis_forward.8} parent=39 // pred_check
        %p1203 = pneg %p154
      $region42: #{g_synthesis_forward.8} parent=39 // pred_check_branch
        %1205 = sbr.rel (%p1203) target = $region44
      $region43: #{g_synthesis_forward.8} parent=39 // pred_region
        _
      $region44: #{g_synthesis_forward.8} parent=39 // pred_fallthru
        _
    $region40: #{g_synthesis_forward.8} parent=5 // pred_fallthru
      _
    %p1206 = scmp.le.s32.totalorder 2, %s11
    // Predicated region
    $region45: #{g_synthesis_forward.8} parent=5 // pred_check
      %p1207 = pneg %p1206
    $region46: #{g_synthesis_forward.8} parent=5 // pred_check_branch
      %1209 = sbr.rel (%p1207) target = $region48
    $region47: #{g_synthesis_forward.8} parent=5 // pred_region
      %s1210 = ssub.s32 %s11, 2
      // Predicated region
      $region49: #{g_synthesis_forward.8} parent=47 // pred_check
        %p1211 = pneg %p160
      $region50: #{g_synthesis_forward.8} parent=47 // pred_check_branch
        %1213 = sbr.rel (%p1211) target = $region52
      $region51: #{g_synthesis_forward.8} parent=47 // pred_region
        %p1214 = scmp.lt.s32.totalorder %s17, 1
        %s1215 = scalar_select %p1214, %s17, 1
        %s1216 = smul.addr %s1215, 4
        %s1217 = smul.addr %s1216, 4
        %s1218 = scalar_lea.vmem %s5, %s1217
      $region52: #{g_synthesis_forward.8} parent=47 // pred_fallthru
        _
    $region48: #{g_synthesis_forward.8} parent=5 // pred_fallthru
      _
  $region6: #{g_synthesis_forward.8} parent=0 // loop_footer
    %s15 = sadd.s32 1, %s11
  $region7: #{g_synthesis_forward.8} parent=0 // loop_footer_branch
    %10 = sbr.rel target = $region3
  $region8: #{g_synthesis_forward.8} parent=0 // loop_exit
    _

// kernel: g_synthesis_forward.9
$region0: #{g_synthesis_forward.9}
  #allocation0 [shape = 'u32[]', space=smem, size = 0x4, offset = 0x4, fixed_abs, tag = 'smem constant byte address 0x4 - core index']
  #allocation1 [shape = 'u32[144,128]{1,0:T(1,128)}', space=vmem, size = 0x12000, scoped, tag = 'internal scratch']
  #allocation2 [shape = 'f32[32,122]{1,0:T(8,128)}', space=vmem, size = 0x4000, scoped, tag = 'scratch operand']
  %s0 = inlined_call_operand.vmem [shape: bf16[2,32,148], index: 0, kind: input, shape index: {}]
  %s1 = inlined_call_operand.vmem [shape: bf16[9,32,32], index: 1, kind: input, shape index: {}]
  %s2 = inlined_call_operand.vmem [shape: f32[2,32,4], index: 2, kind: input, shape index: {}]
  %s3 = inlined_call_operand.vmem [shape: f32[2,1,96], index: 3, kind: input, shape index: {}]
  %s4 = inlined_call_operand.vmem [shape: f32[1,122], index: 4, kind: input, shape index: {}]
  %s5 = inlined_call_operand.vmem [shape: f32[1,96], index: 5, kind: input, shape index: {}]
  %s6 = inlined_call_operand.vmem [shape: bf16[2,32,96], index: 6, kind: output, shape index: {}]
  %s7 = sld [smem:[#allocation0]]
  $region57: #{g_synthesis_forward.9} parent=0
    _
  %s9 = ssub.s32 1, %s7
  %s10 = scalar_select 0, %s9, %s7
  loop: start=0, step=1, limit=4
  $region2: #{g_synthesis_forward.9} parent=0 // loop_pre_header
    _
  $region3: #{g_synthesis_forward.9} parent=0 // loop_header
    %s12 = sphi 0, %s16
    %p13 = scmp.ge.s32.totalorder %s12, 4
    %s22 = sphi 0, %s24
    %s25 = sphi 0, %s22
    %s26 = sphi 0, %s25
    %s42 = sphi 0, %s26
    %s46 = sphi 0, %s46
    %s48 = sphi 0, %s46
    %s49 = sphi 0, %s48
    %s63 = sphi 0, %s49
    %s69 = sphi 0, %s71
    %s72 = sphi 0, %s69
    %s73 = sphi 0, %s72
    %s89 = sphi 0, %s73
    %s95 = sphi 0, %s97
    %s98 = sphi 0, %s95
    %s99 = sphi 0, %s98
    %s115 = sphi 0, %s99
    %s119 = sphi 0, %s119
    %s121 = sphi 0, %s119
    %s122 = sphi 0, %s121
    %s136 = sphi 0, %s122
    %s140 = sphi 0, %s140
    %s142 = sphi 0, %s140
    %s143 = sphi 0, %s142
    %s157 = sphi 0, %s143
    %s163 = sphi 0, %s165
    %s166 = sphi 0, %s163
    %s167 = sphi 0, %s166
    %s183 = sphi 0, %s167
  $region4: #{g_synthesis_forward.9} parent=0 // loop_header_branch
    %15 = sbr.rel (%p13) target = $region8
  $region5: #{g_synthesis_forward.9} parent=0 // loop_body
    %s17 = ssub.s32 %s12, 1
    %s18 = ssub.s32 %s12, 2
    %s19 = sadd.s32 %s12, 1
    %s20 = ssub.s32 %s12, %s19
    %p21 = scmp.eq.s32.totalorder %s20, 0
    %s23 = sadd.s32 %s22, 1
    %s24 = scalar_select %p21, %s22, %s23
    %p27 = pneg %p21
    %p28 = scmp.eq.s32.totalorder %s12, 1
    %p29 = por %p27, %p28
    %p30 = scmp.ne.s32.totalorder %s22, %s25
    %p31 = scmp.eq.s32.totalorder %s12, 0
    %p32 = por %p30, %p31
    %p33 = scmp.ne.s32.totalorder %s22, %s25
    %p34 = scmp.eq.s32.totalorder %s17, 1
    %p35 = por %p33, %p34
    %p36 = scmp.ne.s32.totalorder %s25, %s26
    %p37 = scmp.eq.s32.totalorder %s17, 0
    %p38 = por %p36, %p37
    %p39 = scmp.ne.s32.totalorder %s25, %s26
    %p40 = scmp.eq.s32.totalorder %s18, 1
    %p41 = por %p39, %p40
    %p43 = scmp.ne.s32.totalorder %s26, %s42
    %p44 = scmp.eq.s32.totalorder %s18, 0
    %p45 = por %p43, %p44
    %s47 = sadd.s32 %s46, 1
    %p50 = scmp.eq.s32.totalorder %s12, 1
    %p51 = scmp.ne.s32.totalorder %s46, %s48
    %p52 = scmp.eq.s32.totalorder %s12, 0
    %p53 = por %p51, %p52
    %p54 = scmp.ne.s32.totalorder %s46, %s48
    %p55 = scmp.eq.s32.totalorder %s17, 1
    %p56 = por %p54, %p55
    %p57 = scmp.ne.s32.totalorder %s48, %s49
    %p58 = scmp.eq.s32.totalorder %s17, 0
    %p59 = por %p57, %p58
    %p60 = scmp.ne.s32.totalorder %s48, %s49
    %p61 = scmp.eq.s32.totalorder %s18, 1
    %p62 = por %p60, %p61
    %p64 = scmp.ne.s32.totalorder %s49, %s63
    %p65 = scmp.eq.s32.totalorder %s18, 0
    %p66 = por %p64, %p65
    %s67 = ssub.s32 %s12, %s19
    %p68 = scmp.eq.s32.totalorder %s67, 0
    %s70 = sadd.s32 %s69, 1
    %s71 = scalar_select %p68, %s69, %s70
    %p74 = pneg %p68
    %p75 = scmp.eq.s32.totalorder %s12, 1
    %p76 = por %p74, %p75
    %p77 = scmp.ne.s32.totalorder %s69, %s72
    %p78 = scmp.eq.s32.totalorder %s12, 0
    %p79 = por %p77, %p78
    %p80 = scmp.ne.s32.totalorder %s69, %s72
    %p81 = scmp.eq.s32.totalorder %s17, 1
    %p82 = por %p80, %p81
    %p83 = scmp.ne.s32.totalorder %s72, %s73
    %p84 = scmp.eq.s32.totalorder %s17, 0
    %p85 = por %p83, %p84
    %p86 = scmp.ne.s32.totalorder %s72, %s73
    %p87 = scmp.eq.s32.totalorder %s18, 1
    %p88 = por %p86, %p87
    %p90 = scmp.ne.s32.totalorder %s73, %s89
    %p91 = scmp.eq.s32.totalorder %s18, 0
    %p92 = por %p90, %p91
    %s93 = ssub.s32 %s12, %s19
    %p94 = scmp.eq.s32.totalorder %s93, 0
    %s96 = sadd.s32 %s95, 1
    %s97 = scalar_select %p94, %s95, %s96
    %p100 = pneg %p94
    %p101 = scmp.eq.s32.totalorder %s12, 1
    %p102 = por %p100, %p101
    %p103 = scmp.ne.s32.totalorder %s95, %s98
    %p104 = scmp.eq.s32.totalorder %s12, 0
    %p105 = por %p103, %p104
    %p106 = scmp.ne.s32.totalorder %s95, %s98
    %p107 = scmp.eq.s32.totalorder %s17, 1
    %p108 = por %p106, %p107
    %p109 = scmp.ne.s32.totalorder %s98, %s99
    %p110 = scmp.eq.s32.totalorder %s17, 0
    %p111 = por %p109, %p110
    %p112 = scmp.ne.s32.totalorder %s98, %s99
    %p113 = scmp.eq.s32.totalorder %s18, 1
    %p114 = por %p112, %p113
    %p116 = scmp.ne.s32.totalorder %s99, %s115
    %p117 = scmp.eq.s32.totalorder %s18, 0
    %p118 = por %p116, %p117
    %s120 = sadd.s32 %s119, 1
    %p123 = scmp.eq.s32.totalorder %s12, 1
    %p124 = scmp.ne.s32.totalorder %s119, %s121
    %p125 = scmp.eq.s32.totalorder %s12, 0
    %p126 = por %p124, %p125
    %p127 = scmp.ne.s32.totalorder %s119, %s121
    %p128 = scmp.eq.s32.totalorder %s17, 1
    %p129 = por %p127, %p128
    %p130 = scmp.ne.s32.totalorder %s121, %s122
    %p131 = scmp.eq.s32.totalorder %s17, 0
    %p132 = por %p130, %p131
    %p133 = scmp.ne.s32.totalorder %s121, %s122
    %p134 = scmp.eq.s32.totalorder %s18, 1
    %p135 = por %p133, %p134
    %p137 = scmp.ne.s32.totalorder %s122, %s136
    %p138 = scmp.eq.s32.totalorder %s18, 0
    %p139 = por %p137, %p138
    %s141 = sadd.s32 %s140, 1
    %p144 = scmp.eq.s32.totalorder %s12, 1
    %p145 = scmp.ne.s32.totalorder %s140, %s142
    %p146 = scmp.eq.s32.totalorder %s12, 0
    %p147 = por %p145, %p146
    %p148 = scmp.ne.s32.totalorder %s140, %s142
    %p149 = scmp.eq.s32.totalorder %s17, 1
    %p150 = por %p148, %p149
    %p151 = scmp.ne.s32.totalorder %s142, %s143
    %p152 = scmp.eq.s32.totalorder %s17, 0
    %p153 = por %p151, %p152
    %p154 = scmp.ne.s32.totalorder %s142, %s143
    %p155 = scmp.eq.s32.totalorder %s18, 1
    %p156 = por %p154, %p155
    %p158 = scmp.ne.s32.totalorder %s143, %s157
    %p159 = scmp.eq.s32.totalorder %s18, 0
    %p160 = por %p158, %p159
    %s161 = ssub.s32 %s12, %s19
    %p162 = scmp.eq.s32.totalorder %s161, 0
    %s164 = sadd.s32 %s163, 1
    %s165 = scalar_select %p162, %s163, %s164
    %p168 = pneg %p162
    %p169 = scmp.eq.s32.totalorder %s12, 1
    %p170 = por %p168, %p169
    %p171 = scmp.ne.s32.totalorder %s163, %s166
    %p172 = scmp.eq.s32.totalorder %s12, 0
    %p173 = por %p171, %p172
    %p174 = scmp.ne.s32.totalorder %s163, %s166
    %p175 = scmp.eq.s32.totalorder %s17, 1
    %p176 = por %p174, %p175
    %p177 = scmp.ne.s32.totalorder %s166, %s167
    %p178 = scmp.eq.s32.totalorder %s17, 0
    %p179 = por %p177, %p178
    %p180 = scmp.ne.s32.totalorder %s166, %s167
    %p181 = scmp.eq.s32.totalorder %s18, 1
    %p182 = por %p180, %p181
    %p184 = scmp.ne.s32.totalorder %s167, %s183
    %p185 = scmp.eq.s32.totalorder %s18, 0
    %p186 = por %p184, %p185
    %p187 = scmp.le.s32.totalorder 1, %s12
    %p188 = scmp.lt.s32.totalorder %s12, 3
    %p189 = pnand %p187, %p188
    %p190 = pneg %p189
    // Predicated region
    $region9: #{g_synthesis_forward.9} parent=5 // pred_check
      _
    $region10: #{g_synthesis_forward.9} parent=5 // pred_check_branch
      %192 = sbr.rel (%p189) target = $region12
    $region11: #{g_synthesis_forward.9} parent=5 // pred_region
      %s193 = ssub.s32 %s12, 1
      // Predicated region
      $region13: #{g_synthesis_forward.9} parent=11 // pred_check
        %p194 = pneg %p59
      $region14: #{g_synthesis_forward.9} parent=11 // pred_check_branch
        %196 = sbr.rel (%p194) target = $region16
      $region15: #{g_synthesis_forward.9} parent=11 // pred_region
        _
      $region16: #{g_synthesis_forward.9} parent=11 // pred_fallthru
        _
      // Predicated region
      $region17: #{g_synthesis_forward.9} parent=11 // pred_check
        %p197 = pneg %p132
      $region18: #{g_synthesis_forward.9} parent=11 // pred_check_branch
        %199 = sbr.rel (%p197) target = $region20
      $region19: #{g_synthesis_forward.9} parent=11 // pred_region
        _
      $region20: #{g_synthesis_forward.9} parent=11 // pred_fallthru
        _
      // Predicated region
      $region21: #{g_synthesis_forward.9} parent=11 // pred_check
        %p200 = pneg %p153
      $region22: #{g_synthesis_forward.9} parent=11 // pred_check_branch
        %202 = sbr.rel (%p200) target = $region24
      $region23: #{g_synthesis_forward.9} parent=11 // pred_region
        _
      $region24: #{g_synthesis_forward.9} parent=11 // pred_fallthru
        _
    $region12: #{g_synthesis_forward.9} parent=5 // pred_fallthru
      _
    %p203 = scmp.lt.s32.totalorder %s12, 2
    // Predicated region
    $region25: #{g_synthesis_forward.9} parent=5 // pred_check
      %p204 = pneg %p203
    $region26: #{g_synthesis_forward.9} parent=5 // pred_check_branch
      %206 = sbr.rel (%p204) target = $region28
    $region27: #{g_synthesis_forward.9} parent=5 // pred_region
      // Predicated region
      $region29: #{g_synthesis_forward.9} parent=27 // pred_check
        %p207 = pneg %p32
      $region30: #{g_synthesis_forward.9} parent=27 // pred_check_branch
        %209 = sbr.rel (%p207) target = $region32
      $region31: #{g_synthesis_forward.9} parent=27 // pred_region
        %p210 = scmp.lt.s32.totalorder %s12, 1
        %s211 = scalar_select %p210, %s12, 1
        %s212 = smul.addr %s211, 8
        %s213 = smul.addr %s212, 4
        %s214 = scalar_lea.vmem %s0, %s213
      $region32: #{g_synthesis_forward.9} parent=27 // pred_fallthru
        _
      // Predicated region
      $region33: #{g_synthesis_forward.9} parent=27 // pred_check
        %p215 = pneg %p79
      $region34: #{g_synthesis_forward.9} parent=27 // pred_check_branch
        %217 = sbr.rel (%p215) target = $region36
      $region35: #{g_synthesis_forward.9} parent=27 // pred_region
        %p218 = scmp.lt.s32.totalorder %s12, 1
        %s219 = scalar_select %p218, %s12, 1
        %s220 = smul.addr %s219, 4
        %s221 = smul.addr %s220, 8
        %s222 = scalar_lea.vmem %s2, %s221
      $region36: #{g_synthesis_forward.9} parent=27 // pred_fallthru
        _
      // Predicated region
      $region37: #{g_synthesis_forward.9} parent=27 // pred_check
        %p223 = pneg %p105
      $region38: #{g_synthesis_forward.9} parent=27 // pred_check_branch
        %225 = sbr.rel (%p223) target = $region40
      $region39: #{g_synthesis_forward.9} parent=27 // pred_region
        %p226 = scmp.lt.s32.totalorder %s12, 1
        %s227 = scalar_select %p226, %s12, 1
        %s228 = scalar_lea.vmem %s3, %s227
      $region40: #{g_synthesis_forward.9} parent=27 // pred_fallthru
        _
    $region28: #{g_synthesis_forward.9} parent=5 // pred_fallthru
      _
    %p229 = scmp.le.s32.totalorder 1, %s12
    %p230 = scmp.lt.s32.totalorder %s12, 3
    %p231 = pnand %p229, %p230
    %p232 = pneg %p231
    // Predicated region
    $region41: #{g_synthesis_forward.9} parent=5 // pred_check
      _
    $region42: #{g_synthesis_forward.9} parent=5 // pred_check_branch
      %234 = sbr.rel (%p231) target = $region44
    $region43: #{g_synthesis_forward.9} parent=5 // pred_region
      %s235 = ssub.s32 %s12, 1
      %p236 = scmp.lt.s32.totalorder %s17, 1
      %s237 = scalar_select %p236, %s17, 1
      %s238 = smul.addr %s237, 8
      %s239 = smul.addr %s238, 4
      %s240 = scalar_lea.vmem %s0, %s239
      %p241 = pneg %p38
      %p242 = pneg %p35
      %p243 = pneg %p59
      %p244 = pneg %p56
      %p245 = scmp.lt.s32.totalorder %s17, 1
      %s246 = scalar_select %p245, %s17, 1
      %s247 = smul.addr %s246, 4
      %s248 = smul.addr %s247, 8
      %s249 = scalar_lea.vmem %s2, %s248
      %p250 = pneg %p85
      %p251 = pneg %p82
      %p252 = scmp.lt.s32.totalorder %s17, 1
      %s253 = scalar_select %p252, %s17, 1
      %s254 = scalar_lea.vmem %s3, %s253
      %p255 = pneg %p111
      %p256 = pneg %p108
      %p257 = pneg %p132
      %p258 = pneg %p129
      %p259 = pneg %p153
      %p260 = pneg %p150
      %p261 = pneg %p179
      %p262 = pneg %p176
      %p263 = scmp.lt.s32.totalorder %s17, 1
      %s264 = scalar_select %p263, %s17, 1
      %s265 = smul.addr %s264, 4
      %s266 = smul.addr %s265, 4
      %s267 = scalar_lea.vmem %s6, %s266
      %p268 = scmp.lt.s32.totalorder %s17, 1
      %s269 = scalar_select %p268, %s17, 1
      %s270 = smul.addr %s269, 8
      %s271 = smul.addr %s270, 4
      %s272 = scalar_lea.vmem %s0, %s271
      %p273 = scmp.lt.s32.totalorder %s17, 1
      %s274 = scalar_select %p273, %s17, 1
      %s275 = smul.addr %s274, 4
      %s276 = smul.addr %s275, 8
      %s277 = scalar_lea.vmem %s2, %s276
      %p278 = scmp.lt.s32.totalorder %s17, 1
      %s279 = scalar_select %p278, %s17, 1
      %s280 = scalar_lea.vmem %s3, %s279
      %p281 = scmp.lt.s32.totalorder %s17, 1
      %s282 = scalar_select %p281, %s17, 1
      %s283 = smul.addr %s282, 4
      %s284 = smul.addr %s283, 4
      %s285 = scalar_lea.vmem %s6, %s284
      %v287 = vld [vmem:[%s272] sm:$0xf]
      %v288 = vld [vmem:[%s272 + $0x8] sm:$0xf]
      %v289 = vld [vmem:[%s272 + $0x10] sm:$0xf]
      %v290 = vld [vmem:[%s272 + $0x18] sm:$0xf]
      %v291 = vld [vmem:[%s1] sm:$0xf]
      %v292 = vld [vmem:[%s1 + $0x4] sm:$0xf]
      %v293 = vld [vmem:[%s1 + $0x8] sm:$0xf]
      %v294 = vld [vmem:[%s1 + $0xc] sm:$0xf]
      %s295 = scalar_lea.vmem %s1, 16
      %v296 = vld [vmem:[%s295] sm:$0xf]
      %v297 = vld [vmem:[%s295 + $0x4] sm:$0xf]
      %v298 = vld [vmem:[%s295 + $0x8] sm:$0xf]
      %v299 = vld [vmem:[%s295 + $0xc] sm:$0xf]
      %v304 = vunpack.c.l.b16 %v296
      %v305 = vunpack.c.l.b16 %v297
      %v306 = vunpack.c.l.b16 %v298
      %v307 = vunpack.c.l.b16 %v299
      %v308 = vpack.c.b16 %v305, %v304
      %v309 = vpack.c.b16 %v307, %v306
      %v314 = vunpack.c.l.b16 %v287
      %v315 = vunpack.c.l.b16 %v288
      %v316 = vunpack.c.l.b16 %v289
      %v317 = vunpack.c.l.b16 %v290
      %v318 = vpack.c.b16 %v315, %v314
      %v319 = vpack.c.b16 %v317, %v316
      %320 = vrot.lane.b32.xlu0 %v318, 127
      %v321 = vpop.permute.xlu0 %320
      %322 = vrot.lane.b32.xlu0 %v319, 127
      %v323 = vpop.permute.xlu0 %322
      %vm326 = vcmask 261120
      %v328 = vsel %vm326, %v308, 0
      %v331 = vsel %vm326, %v309, 0
      %333 = vmatprep.subr.bf16.mxu0 0
      %334 = vmatpush1.bf16.msra.mxu0 0
      %335 = vmatprep.subr.bf16.mxu0 0
      %336 = vmatpush1.bf16.msra.mxu0 0
      %337 = vmatprep.subr.bf16.mxu0 0
      %338 = vmatpush1.bf16.msra.mxu0 0
      %339 = vmatprep.subr.bf16.mxu0 0
      %340 = vmatpush1.bf16.msra.mxu0 0
      %341 = vmatprep.subr.bf16.mxu0 0
      %342 = vmatpush1.bf16.msra.mxu0 0
      %343 = vmatprep.subr.bf16.mxu0 0
      %344 = vmatpush1.bf16.msra.mxu0 0
      %345 = vmatprep.subr.bf16.mxu0 0
      %346 = vmatpush1.bf16.msra.mxu0 %v323
      %347 = vmatprep.subr.bf16.mxu0 0
      %348 = vmatpush1.bf16.msra.mxu0 %v321
      %349 = vmatprep.subr.bf16.mxu0 0
      %350 = vmatpush2.bf16.msra.mxu0 0
      %351 = vmatprep.subr.bf16.mxu0 0
      %352 = vmatpush2.bf16.msra.mxu0 0
      %353 = vmatprep.subr.bf16.mxu0 0
      %354 = vmatpush2.bf16.msra.mxu0 0
      %355 = vmatprep.subr.bf16.mxu0 0
      %356 = vmatpush2.bf16.msra.mxu0 0
      %357 = vmatprep.subr.bf16.mxu0 0
      %358 = vmatpush2.bf16.msra.mxu0 0
      %359 = vmatprep.subr.bf16.mxu0 0
      %360 = vmatpush2.bf16.msra.mxu0 0
      %361 = vmatprep.subr.bf16.mxu0 0
      %362 = vmatpush2.bf16.msra.mxu0 0
      %363 = vmatprep.subr.bf16.mxu0 0
      %364 = vmatpush2.bf16.msra.mxu0 0
      %365 = vmatprep.mubr.bf16.mxu0 0
      %366 = vmatmul.mubr.bf16.gmra.mxu0 %v328
      %v367 = vpop.f32.mrf.mxu0
      %v368 = vadd.f32 0.0, %v367
      %v369 = vpop.f32.mrf.mxu0
      %v370 = vpop.f32.mrf.mxu0
      %v371 = vadd.f32 0.0, %v370
      %v372 = vpop.f32.mrf.mxu0
      %373 = vmatprep.mubr.bf16.mxu0 0
      %374 = vmatmul.mubr.bf16.gmra.mxu0 %v331
      %v375 = vpop.f32.mrf.mxu0
      %v376 = vadd.f32 0.0, %v375
      %v377 = vpop.f32.mrf.mxu0
      %v378 = vpop.f32.mrf.mxu0
      %v379 = vadd.f32 0.0, %v378
      %v380 = vpop.f32.mrf.mxu0
      %381 = vdwg.mxu0
      %v386 = vunpack.c.l.b16 %v291
      %v387 = vunpack.c.l.b16 %v292
      %v388 = vunpack.c.l.b16 %v293
      %v389 = vunpack.c.l.b16 %v294
      %v390 = vpack.c.b16 %v387, %v386
      %v391 = vpack.c.b16 %v389, %v388
      %v395 = vsel %vm326, %v390, 0
      %v398 = vsel %vm326, %v391, 0
      %400 = vmatprep.subr.bf16.mxu0 0
      %401 = vmatpush1.bf16.msra.mxu0 0
      %402 = vmatprep.subr.bf16.mxu0 0
      %403 = vmatpush1.bf16.msra.mxu0 0
      %404 = vmatprep.subr.bf16.mxu0 0
      %405 = vmatpush1.bf16.msra.mxu0 0
      %406 = vmatprep.subr.bf16.mxu0 0
      %407 = vmatpush1.bf16.msra.mxu0 0
      %408 = vmatprep.subr.bf16.mxu0 0
      %409 = vmatpush1.bf16.msra.mxu0 0
      %410 = vmatprep.subr.bf16.mxu0 0
      %411 = vmatpush1.bf16.msra.mxu0 0
      %412 = vmatprep.subr.bf16.mxu0 0
      %413 = vmatpush1.bf16.msra.mxu0 %v319
      %414 = vmatprep.subr.bf16.mxu0 0
      %415 = vmatpush1.bf16.msra.mxu0 %v318
      %416 = vmatprep.subr.bf16.mxu0 0
      %417 = vmatpush2.bf16.msra.mxu0 0
      %418 = vmatprep.subr.bf16.mxu0 0
      %419 = vmatpush2.bf16.msra.mxu0 0
      %420 = vmatprep.subr.bf16.mxu0 0
      %421 = vmatpush2.bf16.msra.mxu0 0
      %422 = vmatprep.subr.bf16.mxu0 0
      %423 = vmatpush2.bf16.msra.mxu0 0
      %424 = vmatprep.subr.bf16.mxu0 0
      %425 = vmatpush2.bf16.msra.mxu0 0
      %426 = vmatprep.subr.bf16.mxu0 0
      %427 = vmatpush2.bf16.msra.mxu0 0
      %428 = vmatprep.subr.bf16.mxu0 0
      %429 = vmatpush2.bf16.msra.mxu0 0
      %430 = vmatprep.subr.bf16.mxu0 0
      %431 = vmatpush2.bf16.msra.mxu0 0
      %432 = vmatprep.mubr.bf16.mxu0 0
      %433 = vmatmul.mubr.bf16.gmra.mxu0 %v395
      %v434 = vpop.f32.mrf.mxu0
      %v435 = vadd.f32 %v368, %v434
      %v436 = vpop.f32.mrf.mxu0
      %v437 = vpop.f32.mrf.mxu0
      %v438 = vadd.f32 %v371, %v437
      %v439 = vpop.f32.mrf.mxu0
      %440 = vmatprep.mubr.bf16.mxu0 0
      %441 = vmatmul.mubr.bf16.gmra.mxu0 %v398
      %v442 = vpop.f32.mrf.mxu0
      %v443 = vadd.f32 %v376, %v442
      %v444 = vpop.f32.mrf.mxu0
      %v445 = vpop.f32.mrf.mxu0
      %v446 = vadd.f32 %v379, %v445
      %v447 = vpop.f32.mrf.mxu0
      %448 = vdwg.mxu0
      %s449 = scalar_lea.vmem %s1, 32
      %v450 = vld [vmem:[%s449] sm:$0xf]
      %v451 = vld [vmem:[%s449 + $0x4] sm:$0xf]
      %v452 = vld [vmem:[%s449 + $0x8] sm:$0xf]
      %v453 = vld [vmem:[%s449 + $0xc] sm:$0xf]
      %v458 = vunpack.c.l.b16 %v450
      %v459 = vunpack.c.l.b16 %v451
      %v460 = vunpack.c.l.b16 %v452
      %v461 = vunpack.c.l.b16 %v453
      %v462 = vpack.c.b16 %v459, %v458
      %v463 = vpack.c.b16 %v461, %v460
      %464 = vrot.lane.b32.xlu0 %v318, 126
      %v465 = vpop.permute.xlu0 %464
      %466 = vrot.lane.b32.xlu0 %v319, 126
      %v467 = vpop.permute.xlu0 %466
      %v471 = vsel %vm326, %v462, 0
      %v474 = vsel %vm326, %v463, 0
      %476 = vmatprep.subr.bf16.mxu0 0
      %477 = vmatpush1.bf16.msra.mxu0 0
      %478 = vmatprep.subr.bf16.mxu0 0
      %479 = vmatpush1.bf16.msra.mxu0 0
      %480 = vmatprep.subr.bf16.mxu0 0
      %481 = vmatpush1.bf16.msra.mxu0 0
      %482 = vmatprep.subr.bf16.mxu0 0
      %483 = vmatpush1.bf16.msra.mxu0 0
      %484 = vmatprep.subr.bf16.mxu0 0
      %485 = vmatpush1.bf16.msra.mxu0 0
      %486 = vmatprep.subr.bf16.mxu0 0
      %487 = vmatpush1.bf16.msra.mxu0 0
      %488 = vmatprep.subr.bf16.mxu0 0
      %489 = vmatpush1.bf16.msra.mxu0 %v467
      %490 = vmatprep.subr.bf16.mxu0 0
      %491 = vmatpush1.bf16.msra.mxu0 %v465
      %492 = vmatprep.subr.bf16.mxu0 0
      %493 = vmatpush2.bf16.msra.mxu0 0
      %494 = vmatprep.subr.bf16.mxu0 0
      %495 = vmatpush2.bf16.msra.mxu0 0
      %496 = vmatprep.subr.bf16.mxu0 0
      %497 = vmatpush2.bf16.msra.mxu0 0
      %498 = vmatprep.subr.bf16.mxu0 0
      %499 = vmatpush2.bf16.msra.mxu0 0
      %500 = vmatprep.subr.bf16.mxu0 0
      %501 = vmatpush2.bf16.msra.mxu0 0
      %502 = vmatprep.subr.bf16.mxu0 0
      %503 = vmatpush2.bf16.msra.mxu0 0
      %504 = vmatprep.subr.bf16.mxu0 0
      %505 = vmatpush2.bf16.msra.mxu0 0
      %506 = vmatprep.subr.bf16.mxu0 0
      %507 = vmatpush2.bf16.msra.mxu0 0
      %508 = vmatprep.mubr.bf16.mxu0 0
      %509 = vmatmul.mubr.bf16.gmra.mxu0 %v471
      %v510 = vpop.f32.mrf.mxu0
      %v511 = vadd.f32 0.0, %v510
      %v512 = vpop.f32.mrf.mxu0
      %v513 = vpop.f32.mrf.mxu0
      %v514 = vadd.f32 0.0, %v513
      %v515 = vpop.f32.mrf.mxu0
      %516 = vmatprep.mubr.bf16.mxu0 0
      %517 = vmatmul.mubr.bf16.gmra.mxu0 %v474
      %v518 = vpop.f32.mrf.mxu0
      %v519 = vadd.f32 0.0, %v518
      %v520 = vpop.f32.mrf.mxu0
      %v521 = vpop.f32.mrf.mxu0
      %v522 = vadd.f32 0.0, %v521
      %v523 = vpop.f32.mrf.mxu0
      %524 = vdwg.mxu0
      %v525 = vadd.f32 %v435, %v511
      %v526 = vadd.f32 %v438, %v514
      %v527 = vadd.f32 %v443, %v519
      %v528 = vadd.f32 %v446, %v522
      %v529 = vld [vmem:[%s272] sm:$0xff]
      %v530 = vld [vmem:[%s272 + $0x8] sm:$0xff]
      %v531 = vld [vmem:[%s272 + $0x10] sm:$0xff]
      %v532 = vld [vmem:[%s272 + $0x18] sm:$0xff]
      %s533 = scalar_lea.vmem %s1, 48
      %v534 = vld [vmem:[%s533] sm:$0xf]
      %v535 = vld [vmem:[%s533 + $0x4] sm:$0xf]
      %v536 = vld [vmem:[%s533 + $0x8] sm:$0xf]
      %v537 = vld [vmem:[%s533 + $0xc] sm:$0xf]
      %v542 = vunpack.c.l.b16 %v534
      %v543 = vunpack.c.l.b16 %v535
      %v544 = vunpack.c.l.b16 %v536
      %v545 = vunpack.c.l.b16 %v537
      %v546 = vpack.c.b16 %v543, %v542
      %v547 = vpack.c.b16 %v545, %v544
      %v552 = vunpack.c.l.b16 %v529
      %v553 = vunpack.c.h.b16 %v529
      %v554 = vunpack.c.l.b16 %v530
      %v555 = vunpack.c.h.b16 %v530
      %v556 = vunpack.c.l.b16 %v531
      %v557 = vunpack.c.h.b16 %v531
      %v558 = vunpack.c.l.b16 %v532
      %v559 = vunpack.c.h.b16 %v532
      %v560 = vpack.c.b16 %v554, %v552
      %v561 = vpack.c.b16 %v555, %v553
      %v562 = vpack.c.b16 %v558, %v556
      %v563 = vpack.c.b16 %v559, %v557
      %564 = vrot.lane.b32.xlu0 %v560, 116
      %v565 = vpop.permute.xlu0 %564
      %566 = vrot.lane.b32.xlu0 %v561, 116
      %v567 = vpop.permute.xlu0 %566
      %568 = vrot.lane.b32.xlu0 %v562, 116
      %v569 = vpop.permute.xlu0 %568
      %570 = vrot.lane.b32.xlu0 %v563, 116
      %v571 = vpop.permute.xlu0 %570
      %vm572 = vcmask 949248
      %v573 = vsel %vm572, %v565, %v567
      %v574 = vsel %vm572, %v569, %v571
      %v578 = vsel %vm326, %v546, 0
      %v581 = vsel %vm326, %v547, 0
      %583 = vmatprep.subr.bf16.mxu0 0
      %584 = vmatpush1.bf16.msra.mxu0 0
      %585 = vmatprep.subr.bf16.mxu0 0
      %586 = vmatpush1.bf16.msra.mxu0 0
      %587 = vmatprep.subr.bf16.mxu0 0
      %588 = vmatpush1.bf16.msra.mxu0 0
      %589 = vmatprep.subr.bf16.mxu0 0
      %590 = vmatpush1.bf16.msra.mxu0 0
      %591 = vmatprep.subr.bf16.mxu0 0
      %592 = vmatpush1.bf16.msra.mxu0 0
      %593 = vmatprep.subr.bf16.mxu0 0
      %594 = vmatpush1.bf16.msra.mxu0 0
      %595 = vmatprep.subr.bf16.mxu0 0
      %596 = vmatpush1.bf16.msra.mxu0 %v574
      %597 = vmatprep.subr.bf16.mxu0 0
      %598 = vmatpush1.bf16.msra.mxu0 %v573
      %599 = vmatprep.subr.bf16.mxu0 0
      %600 = vmatpush2.bf16.msra.mxu0 0
      %601 = vmatprep.subr.bf16.mxu0 0
      %602 = vmatpush2.bf16.msra.mxu0 0
      %603 = vmatprep.subr.bf16.mxu0 0
      %604 = vmatpush2.bf16.msra.mxu0 0
      %605 = vmatprep.subr.bf16.mxu0 0
      %606 = vmatpush2.bf16.msra.mxu0 0
      %607 = vmatprep.subr.bf16.mxu0 0
      %608 = vmatpush2.bf16.msra.mxu0 0
      %609 = vmatprep.subr.bf16.mxu0 0
      %610 = vmatpush2.bf16.msra.mxu0 0
      %611 = vmatprep.subr.bf16.mxu0 0
      %612 = vmatpush2.bf16.msra.mxu0 0
      %613 = vmatprep.subr.bf16.mxu0 0
      %614 = vmatpush2.bf16.msra.mxu0 0
      %615 = vmatprep.mubr.bf16.mxu0 0
      %616 = vmatmul.mubr.bf16.gmra.mxu0 %v578
      %v617 = vpop.f32.mrf.mxu0
      %v618 = vadd.f32 0.0, %v617
      %v619 = vpop.f32.mrf.mxu0
      %v620 = vpop.f32.mrf.mxu0
      %v621 = vadd.f32 0.0, %v620
      %v622 = vpop.f32.mrf.mxu0
      %623 = vmatprep.mubr.bf16.mxu0 0
      %624 = vmatmul.mubr.bf16.gmra.mxu0 %v581
      %v625 = vpop.f32.mrf.mxu0
      %v626 = vadd.f32 0.0, %v625
      %v627 = vpop.f32.mrf.mxu0
      %v628 = vpop.f32.mrf.mxu0
      %v629 = vadd.f32 0.0, %v628
      %v630 = vpop.f32.mrf.mxu0
      %631 = vdwg.mxu0
      %v632 = vadd.f32 %v525, %v618
      %v633 = vadd.f32 %v526, %v621
      %v634 = vadd.f32 %v527, %v626
      %v635 = vadd.f32 %v528, %v629
      %s636 = scalar_lea.vmem %s1, 64
      %v637 = vld [vmem:[%s636] sm:$0xf]
      %v638 = vld [vmem:[%s636 + $0x4] sm:$0xf]
      %v639 = vld [vmem:[%s636 + $0x8] sm:$0xf]
      %v640 = vld [vmem:[%s636 + $0xc] sm:$0xf]
      %v645 = vunpack.c.l.b16 %v637
      %v646 = vunpack.c.l.b16 %v638
      %v647 = vunpack.c.l.b16 %v639
      %v648 = vunpack.c.l.b16 %v640
      %v649 = vpack.c.b16 %v646, %v645
      %v650 = vpack.c.b16 %v648, %v647
      %651 = vrot.lane.b32.xlu0 %v560, 115
      %v652 = vpop.permute.xlu0 %651
      %653 = vrot.lane.b32.xlu0 %v561, 115
      %v654 = vpop.permute.xlu0 %653
      %655 = vrot.lane.b32.xlu0 %v562, 115
      %v656 = vpop.permute.xlu0 %655
      %657 = vrot.lane.b32.xlu0 %v563, 115
      %v658 = vpop.permute.xlu0 %657
      %vm659 = vcmask 941056
      %v660 = vsel %vm659, %v652, %v654
      %v661 = vsel %vm659, %v656, %v658
      %v665 = vsel %vm326, %v649, 0
      %v668 = vsel %vm326, %v650, 0
      %670 = vmatprep.subr.bf16.mxu0 0
      %671 = vmatpush1.bf16.msra.mxu0 0
      %672 = vmatprep.subr.bf16.mxu0 0
      %673 = vmatpush1.bf16.msra.mxu0 0
      %674 = vmatprep.subr.bf16.mxu0 0
      %675 = vmatpush1.bf16.msra.mxu0 0
      %676 = vmatprep.subr.bf16.mxu0 0
      %677 = vmatpush1.bf16.msra.mxu0 0
      %678 = vmatprep.subr.bf16.mxu0 0
      %679 = vmatpush1.bf16.msra.mxu0 0
      %680 = vmatprep.subr.bf16.mxu0 0
      %681 = vmatpush1.bf16.msra.mxu0 0
      %682 = vmatprep.subr.bf16.mxu0 0
      %683 = vmatpush1.bf16.msra.mxu0 %v661
      %684 = vmatprep.subr.bf16.mxu0 0
      %685 = vmatpush1.bf16.msra.mxu0 %v660
      %686 = vmatprep.subr.bf16.mxu0 0
      %687 = vmatpush2.bf16.msra.mxu0 0
      %688 = vmatprep.subr.bf16.mxu0 0
      %689 = vmatpush2.bf16.msra.mxu0 0
      %690 = vmatprep.subr.bf16.mxu0 0
      %691 = vmatpush2.bf16.msra.mxu0 0
      %692 = vmatprep.subr.bf16.mxu0 0
      %693 = vmatpush2.bf16.msra.mxu0 0
      %694 = vmatprep.subr.bf16.mxu0 0
      %695 = vmatpush2.bf16.msra.mxu0 0
      %696 = vmatprep.subr.bf16.mxu0 0
      %697 = vmatpush2.bf16.msra.mxu0 0
      %698 = vmatprep.subr.bf16.mxu0 0
      %699 = vmatpush2.bf16.msra.mxu0 0
      %700 = vmatprep.subr.bf16.mxu0 0
      %701 = vmatpush2.bf16.msra.mxu0 0
      %702 = vmatprep.mubr.bf16.mxu0 0
      %703 = vmatmul.mubr.bf16.gmra.mxu0 %v665
      %v704 = vpop.f32.mrf.mxu0
      %v705 = vadd.f32 0.0, %v704
      %v706 = vpop.f32.mrf.mxu0
      %v707 = vpop.f32.mrf.mxu0
      %v708 = vadd.f32 0.0, %v707
      %v709 = vpop.f32.mrf.mxu0
      %710 = vmatprep.mubr.bf16.mxu0 0
      %711 = vmatmul.mubr.bf16.gmra.mxu0 %v668
      %v712 = vpop.f32.mrf.mxu0
      %v713 = vadd.f32 0.0, %v712
      %v714 = vpop.f32.mrf.mxu0
      %v715 = vpop.f32.mrf.mxu0
      %v716 = vadd.f32 0.0, %v715
      %v717 = vpop.f32.mrf.mxu0
      %718 = vdwg.mxu0
      %v719 = vadd.f32 %v632, %v705
      %v720 = vadd.f32 %v633, %v708
      %v721 = vadd.f32 %v634, %v713
      %v722 = vadd.f32 %v635, %v716
      %s723 = scalar_lea.vmem %s1, 80
      %v724 = vld [vmem:[%s723] sm:$0xf]
      %v725 = vld [vmem:[%s723 + $0x4] sm:$0xf]
      %v726 = vld [vmem:[%s723 + $0x8] sm:$0xf]
      %v727 = vld [vmem:[%s723 + $0xc] sm:$0xf]
      %v732 = vunpack.c.l.b16 %v724
      %v733 = vunpack.c.l.b16 %v725
      %v734 = vunpack.c.l.b16 %v726
      %v735 = vunpack.c.l.b16 %v727
      %v736 = vpack.c.b16 %v733, %v732
      %v737 = vpack.c.b16 %v735, %v734
      %738 = vrot.lane.b32.xlu0 %v560, 114
      %v739 = vpop.permute.xlu0 %738
      %740 = vrot.lane.b32.xlu0 %v561, 114
      %v741 = vpop.permute.xlu0 %740
      %742 = vrot.lane.b32.xlu0 %v562, 114
      %v743 = vpop.permute.xlu0 %742
      %744 = vrot.lane.b32.xlu0 %v563, 114
      %v745 = vpop.permute.xlu0 %744
      %vm746 = vcmask 932864
      %v747 = vsel %vm746, %v739, %v741
      %v748 = vsel %vm746, %v743, %v745
      %v752 = vsel %vm326, %v736, 0
      %v755 = vsel %vm326, %v737, 0
      %757 = vmatprep.subr.bf16.mxu0 0
      %758 = vmatpush1.bf16.msra.mxu0 0
      %759 = vmatprep.subr.bf16.mxu0 0
      %760 = vmatpush1.bf16.msra.mxu0 0
      %761 = vmatprep.subr.bf16.mxu0 0
      %762 = vmatpush1.bf16.msra.mxu0 0
      %763 = vmatprep.subr.bf16.mxu0 0
      %764 = vmatpush1.bf16.msra.mxu0 0
      %765 = vmatprep.subr.bf16.mxu0 0
      %766 = vmatpush1.bf16.msra.mxu0 0
      %767 = vmatprep.subr.bf16.mxu0 0
      %768 = vmatpush1.bf16.msra.mxu0 0
      %769 = vmatprep.subr.bf16.mxu0 0
      %770 = vmatpush1.bf16.msra.mxu0 %v748
      %771 = vmatprep.subr.bf16.mxu0 0
      %772 = vmatpush1.bf16.msra.mxu0 %v747
      %773 = vmatprep.subr.bf16.mxu0 0
      %774 = vmatpush2.bf16.msra.mxu0 0
      %775 = vmatprep.subr.bf16.mxu0 0
      %776 = vmatpush2.bf16.msra.mxu0 0
      %777 = vmatprep.subr.bf16.mxu0 0
      %778 = vmatpush2.bf16.msra.mxu0 0
      %779 = vmatprep.subr.bf16.mxu0 0
      %780 = vmatpush2.bf16.msra.mxu0 0
      %781 = vmatprep.subr.bf16.mxu0 0
      %782 = vmatpush2.bf16.msra.mxu0 0
      %783 = vmatprep.subr.bf16.mxu0 0
      %784 = vmatpush2.bf16.msra.mxu0 0
      %785 = vmatprep.subr.bf16.mxu0 0
      %786 = vmatpush2.bf16.msra.mxu0 0
      %787 = vmatprep.subr.bf16.mxu0 0
      %788 = vmatpush2.bf16.msra.mxu0 0
      %789 = vmatprep.mubr.bf16.mxu0 0
      %790 = vmatmul.mubr.bf16.gmra.mxu0 %v752
      %v791 = vpop.f32.mrf.mxu0
      %v792 = vadd.f32 0.0, %v791
      %v793 = vpop.f32.mrf.mxu0
      %v794 = vpop.f32.mrf.mxu0
      %v795 = vadd.f32 0.0, %v794
      %v796 = vpop.f32.mrf.mxu0
      %797 = vmatprep.mubr.bf16.mxu0 0
      %798 = vmatmul.mubr.bf16.gmra.mxu0 %v755
      %v799 = vpop.f32.mrf.mxu0
      %v800 = vadd.f32 0.0, %v799
      %v801 = vpop.f32.mrf.mxu0
      %v802 = vpop.f32.mrf.mxu0
      %v803 = vadd.f32 0.0, %v802
      %v804 = vpop.f32.mrf.mxu0
      %805 = vdwg.mxu0
      %v806 = vadd.f32 %v719, %v792
      %v807 = vadd.f32 %v720, %v795
      %v808 = vadd.f32 %v721, %v800
      %v809 = vadd.f32 %v722, %v803
      %s810 = scalar_lea.vmem %s1, 96
      %v811 = vld [vmem:[%s810] sm:$0xf]
      %v812 = vld [vmem:[%s810 + $0x4] sm:$0xf]
      %v813 = vld [vmem:[%s810 + $0x8] sm:$0xf]
      %v814 = vld [vmem:[%s810 + $0xc] sm:$0xf]
      %v819 = vunpack.c.l.b16 %v811
      %v820 = vunpack.c.l.b16 %v812
      %v821 = vunpack.c.l.b16 %v813
      %v822 = vunpack.c.l.b16 %v814
      %v823 = vpack.c.b16 %v820, %v819
      %v824 = vpack.c.b16 %v822, %v821
      %825 = vrot.lane.b32.xlu0 %v560, 104
      %v826 = vpop.permute.xlu0 %825
      %827 = vrot.lane.b32.xlu0 %v561, 104
      %v828 = vpop.permute.xlu0 %827
      %829 = vrot.lane.b32.xlu0 %v562, 104
      %v830 = vpop.permute.xlu0 %829
      %831 = vrot.lane.b32.xlu0 %v563, 104
      %v832 = vpop.permute.xlu0 %831
      %vm833 = vcmask 850944
      %v834 = vsel %vm833, %v826, %v828
      %v835 = vsel %vm833, %v830, %v832
      %v839 = vsel %vm326, %v823, 0
      %v842 = vsel %vm326, %v824, 0
      %844 = vmatprep.subr.bf16.mxu0 0
      %845 = vmatpush1.bf16.msra.mxu0 0
      %846 = vmatprep.subr.bf16.mxu0 0
      %847 = vmatpush1.bf16.msra.mxu0 0
      %848 = vmatprep.subr.bf16.mxu0 0
      %849 = vmatpush1.bf16.msra.mxu0 0
      %850 = vmatprep.subr.bf16.mxu0 0
      %851 = vmatpush1.bf16.msra.mxu0 0
      %852 = vmatprep.subr.bf16.mxu0 0
      %853 = vmatpush1.bf16.msra.mxu0 0
      %854 = vmatprep.subr.bf16.mxu0 0
      %855 = vmatpush1.bf16.msra.mxu0 0
      %856 = vmatprep.subr.bf16.mxu0 0
      %857 = vmatpush1.bf16.msra.mxu0 %v835
      %858 = vmatprep.subr.bf16.mxu0 0
      %859 = vmatpush1.bf16.msra.mxu0 %v834
      %860 = vmatprep.subr.bf16.mxu0 0
      %861 = vmatpush2.bf16.msra.mxu0 0
      %862 = vmatprep.subr.bf16.mxu0 0
      %863 = vmatpush2.bf16.msra.mxu0 0
      %864 = vmatprep.subr.bf16.mxu0 0
      %865 = vmatpush2.bf16.msra.mxu0 0
      %866 = vmatprep.subr.bf16.mxu0 0
      %867 = vmatpush2.bf16.msra.mxu0 0
      %868 = vmatprep.subr.bf16.mxu0 0
      %869 = vmatpush2.bf16.msra.mxu0 0
      %870 = vmatprep.subr.bf16.mxu0 0
      %871 = vmatpush2.bf16.msra.mxu0 0
      %872 = vmatprep.subr.bf16.mxu0 0
      %873 = vmatpush2.bf16.msra.mxu0 0
      %874 = vmatprep.subr.bf16.mxu0 0
      %875 = vmatpush2.bf16.msra.mxu0 0
      %876 = vmatprep.mubr.bf16.mxu0 0
      %877 = vmatmul.mubr.bf16.gmra.mxu0 %v839
      %v878 = vpop.f32.mrf.mxu0
      %v879 = vadd.f32 0.0, %v878
      %v880 = vpop.f32.mrf.mxu0
      %v881 = vpop.f32.mrf.mxu0
      %v882 = vadd.f32 0.0, %v881
      %v883 = vpop.f32.mrf.mxu0
      %884 = vmatprep.mubr.bf16.mxu0 0
      %885 = vmatmul.mubr.bf16.gmra.mxu0 %v842
      %v886 = vpop.f32.mrf.mxu0
      %v887 = vadd.f32 0.0, %v886
      %v888 = vpop.f32.mrf.mxu0
      %v889 = vpop.f32.mrf.mxu0
      %v890 = vadd.f32 0.0, %v889
      %v891 = vpop.f32.mrf.mxu0
      %892 = vdwg.mxu0
      %v893 = vadd.f32 %v806, %v879
      %v894 = vadd.f32 %v807, %v882
      %v895 = vadd.f32 %v808, %v887
      %v896 = vadd.f32 %v809, %v890
      %s897 = scalar_lea.vmem %s1, 112
      %v898 = vld [vmem:[%s897] sm:$0xf]
      %v899 = vld [vmem:[%s897 + $0x4] sm:$0xf]
      %v900 = vld [vmem:[%s897 + $0x8] sm:$0xf]
      %v901 = vld [vmem:[%s897 + $0xc] sm:$0xf]
      %v906 = vunpack.c.l.b16 %v898
      %v907 = vunpack.c.l.b16 %v899
      %v908 = vunpack.c.l.b16 %v900
      %v909 = vunpack.c.l.b16 %v901
      %v910 = vpack.c.b16 %v907, %v906
      %v911 = vpack.c.b16 %v909, %v908
      %912 = vrot.lane.b32.xlu0 %v560, 103
      %v913 = vpop.permute.xlu0 %912
      %914 = vrot.lane.b32.xlu0 %v561, 103
      %v915 = vpop.permute.xlu0 %914
      %916 = vrot.lane.b32.xlu0 %v562, 103
      %v917 = vpop.permute.xlu0 %916
      %918 = vrot.lane.b32.xlu0 %v563, 103
      %v919 = vpop.permute.xlu0 %918
      %vm920 = vcmask 842752
      %v921 = vsel %vm920, %v913, %v915
      %v922 = vsel %vm920, %v917, %v919
      %v926 = vsel %vm326, %v910, 0
      %v929 = vsel %vm326, %v911, 0
      %931 = vmatprep.subr.bf16.mxu0 0
      %932 = vmatpush1.bf16.msra.mxu0 0
      %933 = vmatprep.subr.bf16.mxu0 0
      %934 = vmatpush1.bf16.msra.mxu0 0
      %935 = vmatprep.subr.bf16.mxu0 0
      %936 = vmatpush1.bf16.msra.mxu0 0
      %937 = vmatprep.subr.bf16.mxu0 0
      %938 = vmatpush1.bf16.msra.mxu0 0
      %939 = vmatprep.subr.bf16.mxu0 0
      %940 = vmatpush1.bf16.msra.mxu0 0
      %941 = vmatprep.subr.bf16.mxu0 0
      %942 = vmatpush1.bf16.msra.mxu0 0
      %943 = vmatprep.subr.bf16.mxu0 0
      %944 = vmatpush1.bf16.msra.mxu0 %v922
      %945 = vmatprep.subr.bf16.mxu0 0
      %946 = vmatpush1.bf16.msra.mxu0 %v921
      %947 = vmatprep.subr.bf16.mxu0 0
      %948 = vmatpush2.bf16.msra.mxu0 0
      %949 = vmatprep.subr.bf16.mxu0 0
      %950 = vmatpush2.bf16.msra.mxu0 0
      %951 = vmatprep.subr.bf16.mxu0 0
      %952 = vmatpush2.bf16.msra.mxu0 0
      %953 = vmatprep.subr.bf16.mxu0 0
      %954 = vmatpush2.bf16.msra.mxu0 0
      %955 = vmatprep.subr.bf16.mxu0 0
      %956 = vmatpush2.bf16.msra.mxu0 0
      %957 = vmatprep.subr.bf16.mxu0 0
      %958 = vmatpush2.bf16.msra.mxu0 0
      %959 = vmatprep.subr.bf16.mxu0 0
      %960 = vmatpush2.bf16.msra.mxu0 0
      %961 = vmatprep.subr.bf16.mxu0 0
      %962 = vmatpush2.bf16.msra.mxu0 0
      %963 = vmatprep.mubr.bf16.mxu0 0
      %964 = vmatmul.mubr.bf16.gmra.mxu0 %v926
      %v965 = vpop.f32.mrf.mxu0
      %v966 = vadd.f32 0.0, %v965
      %v967 = vpop.f32.mrf.mxu0
      %v968 = vpop.f32.mrf.mxu0
      %v969 = vadd.f32 0.0, %v968
      %v970 = vpop.f32.mrf.mxu0
      %971 = vmatprep.mubr.bf16.mxu0 0
      %972 = vmatmul.mubr.bf16.gmra.mxu0 %v929
      %v973 = vpop.f32.mrf.mxu0
      %v974 = vadd.f32 0.0, %v973
      %v975 = vpop.f32.mrf.mxu0
      %v976 = vpop.f32.mrf.mxu0
      %v977 = vadd.f32 0.0, %v976
      %v978 = vpop.f32.mrf.mxu0
      %979 = vdwg.mxu0
      %v980 = vadd.f32 %v893, %v966
      %v981 = vadd.f32 %v894, %v969
      %v982 = vadd.f32 %v895, %v974
      %v983 = vadd.f32 %v896, %v977
      %s984 = scalar_lea.vmem %s1, 128
      %v985 = vld [vmem:[%s984] sm:$0xf]
      %v986 = vld [vmem:[%s984 + $0x4] sm:$0xf]
      %v987 = vld [vmem:[%s984 + $0x8] sm:$0xf]
      %v988 = vld [vmem:[%s984 + $0xc] sm:$0xf]
      %v993 = vunpack.c.l.b16 %v985
      %v994 = vunpack.c.l.b16 %v986
      %v995 = vunpack.c.l.b16 %v987
      %v996 = vunpack.c.l.b16 %v988
      %v997 = vpack.c.b16 %v994, %v993
      %v998 = vpack.c.b16 %v996, %v995
      %999 = vrot.lane.b32.xlu0 %v560, 102
      %v1000 = vpop.permute.xlu0 %999
      %1001 = vrot.lane.b32.xlu0 %v561, 102
      %v1002 = vpop.permute.xlu0 %1001
      %1003 = vrot.lane.b32.xlu0 %v562, 102
      %v1004 = vpop.permute.xlu0 %1003
      %1005 = vrot.lane.b32.xlu0 %v563, 102
      %v1006 = vpop.permute.xlu0 %1005
      %vm1007 = vcmask 834560
      %v1008 = vsel %vm1007, %v1000, %v1002
      %v1009 = vsel %vm1007, %v1004, %v1006
      %v1013 = vsel %vm326, %v997, 0
      %v1016 = vsel %vm326, %v998, 0
      %1018 = vmatprep.subr.bf16.mxu0 0
      %1019 = vmatpush1.bf16.msra.mxu0 0
      %1020 = vmatprep.subr.bf16.mxu0 0
      %1021 = vmatpush1.bf16.msra.mxu0 0
      %1022 = vmatprep.subr.bf16.mxu0 0
      %1023 = vmatpush1.bf16.msra.mxu0 0
      %1024 = vmatprep.subr.bf16.mxu0 0
      %1025 = vmatpush1.bf16.msra.mxu0 0
      %1026 = vmatprep.subr.bf16.mxu0 0
      %1027 = vmatpush1.bf16.msra.mxu0 0
      %1028 = vmatprep.subr.bf16.mxu0 0
      %1029 = vmatpush1.bf16.msra.mxu0 0
      %1030 = vmatprep.subr.bf16.mxu0 0
      %1031 = vmatpush1.bf16.msra.mxu0 %v1009
      %1032 = vmatprep.subr.bf16.mxu0 0
      %1033 = vmatpush1.bf16.msra.mxu0 %v1008
      %1034 = vmatprep.subr.bf16.mxu0 0
      %1035 = vmatpush2.bf16.msra.mxu0 0
      %1036 = vmatprep.subr.bf16.mxu0 0
      %1037 = vmatpush2.bf16.msra.mxu0 0
      %1038 = vmatprep.subr.bf16.mxu0 0
      %1039 = vmatpush2.bf16.msra.mxu0 0
      %1040 = vmatprep.subr.bf16.mxu0 0
      %1041 = vmatpush2.bf16.msra.mxu0 0
      %1042 = vmatprep.subr.bf16.mxu0 0
      %1043 = vmatpush2.bf16.msra.mxu0 0
      %1044 = vmatprep.subr.bf16.mxu0 0
      %1045 = vmatpush2.bf16.msra.mxu0 0
      %1046 = vmatprep.subr.bf16.mxu0 0
      %1047 = vmatpush2.bf16.msra.mxu0 0
      %1048 = vmatprep.subr.bf16.mxu0 0
      %1049 = vmatpush2.bf16.msra.mxu0 0
      %1050 = vmatprep.mubr.bf16.mxu0 0
      %1051 = vmatmul.mubr.bf16.gmra.mxu0 %v1013
      %v1052 = vpop.f32.mrf.mxu0
      %v1053 = vadd.f32 0.0, %v1052
      %v1054 = vpop.f32.mrf.mxu0
      %v1055 = vpop.f32.mrf.mxu0
      %v1056 = vadd.f32 0.0, %v1055
      %v1057 = vpop.f32.mrf.mxu0
      %1058 = vmatprep.mubr.bf16.mxu0 0
      %1059 = vmatmul.mubr.bf16.gmra.mxu0 %v1016
      %v1060 = vpop.f32.mrf.mxu0
      %v1061 = vadd.f32 0.0, %v1060
      %v1062 = vpop.f32.mrf.mxu0
      %v1063 = vpop.f32.mrf.mxu0
      %v1064 = vadd.f32 0.0, %v1063
      %v1065 = vpop.f32.mrf.mxu0
      %1066 = vdwg.mxu0
      %v1067 = vadd.f32 %v980, %v1053
      %v1068 = vadd.f32 %v981, %v1056
      %v1069 = vadd.f32 %v982, %v1061
      %v1070 = vadd.f32 %v983, %v1064
      %v1071 = vld [vmem:[%s4] sm:$0x1]
      %v1073 = vlaneseq
      %v1074 = vshrl.u32 %v1073, 7
      %v1075 = vsub.s32 0, %v1074
      %v1076 = vrot.slane %v1071, %v1075
      %v1078 = vmul.f32 %v1067, %v1076
      %v1079 = vmul.f32 %v1068, %v1076
      %v1080 = vmul.f32 %v1069, %v1076
      %v1081 = vmul.f32 %v1070, %v1076
      %vm1082 = vcmask 998400
      %1083 = vst.msk [vmem:[#allocation2] sm:$0xff] %vm1082, %v1078
      %1084 = vst.msk [vmem:[#allocation2 + $0x8] sm:$0xff] %vm1082, %v1079
      %1085 = vst.msk [vmem:[#allocation2 + $0x10] sm:$0xff] %vm1082, %v1080
      %1086 = vst.msk [vmem:[#allocation2 + $0x18] sm:$0xff] %vm1082, %v1081
      %v1087 = vld [vmem:[#allocation2] sm:$0xff]
      %v1088 = vld [vmem:[#allocation2 + $0x8] sm:$0xff]
      %v1089 = vld [vmem:[#allocation2 + $0x10] sm:$0xff]
      %v1090 = vld [vmem:[#allocation2 + $0x18] sm:$0xff]
      %v1091 = vmul.f32 %v1087, 0.0625
      %v1092 = vmul.f32 %v1088, 0.0625
      %v1093 = vmul.f32 %v1089, 0.0625
      %v1094 = vmul.f32 %v1090, 0.0625
      %v1095 = vmul.f32 %v1087, 0.125
      %v1096 = vmul.f32 %v1088, 0.125
      %v1097 = vmul.f32 %v1089, 0.125
      %v1098 = vmul.f32 %v1090, 0.125
      %1103 = vrot.lane.b32.xlu0 %v1095, 127
      %v1104 = vpop.permute.xlu0 %1103
      %1105 = vrot.lane.b32.xlu0 %v1096, 127
      %v1106 = vpop.permute.xlu0 %1105
      %1107 = vrot.lane.b32.xlu0 %v1097, 127
      %v1108 = vpop.permute.xlu0 %1107
      %1109 = vrot.lane.b32.xlu0 %v1098, 127
      %v1110 = vpop.permute.xlu0 %1109
      %v1115 = vadd.f32 %v1091, %v1104
      %v1116 = vadd.f32 %v1092, %v1106
      %v1117 = vadd.f32 %v1093, %v1108
      %v1118 = vadd.f32 %v1094, %v1110
      %1123 = vrot.lane.b32.xlu0 %v1091, 126
      %v1124 = vpop.permute.xlu0 %1123
      %1125 = vrot.lane.b32.xlu0 %v1092, 126
      %v1126 = vpop.permute.xlu0 %1125
      %1127 = vrot.lane.b32.xlu0 %v1093, 126
      %v1128 = vpop.permute.xlu0 %1127
      %1129 = vrot.lane.b32.xlu0 %v1094, 126
      %v1130 = vpop.permute.xlu0 %1129
      %v1135 = vadd.f32 %v1115, %v1124
      %v1136 = vadd.f32 %v1116, %v1126
      %v1137 = vadd.f32 %v1117, %v1128
      %v1138 = vadd.f32 %v1118, %v1130
      %1139 = vrot.lane.b32.xlu0 %v1095, 116
      %v1140 = vpop.permute.xlu0 %1139
      %1141 = vrot.lane.b32.xlu0 %v1096, 116
      %v1142 = vpop.permute.xlu0 %1141
      %1143 = vrot.lane.b32.xlu0 %v1097, 116
      %v1144 = vpop.permute.xlu0 %1143
      %1145 = vrot.lane.b32.xlu0 %v1098, 116
      %v1146 = vpop.permute.xlu0 %1145
      %v1151 = vadd.f32 %v1135, %v1140
      %v1152 = vadd.f32 %v1136, %v1142
      %v1153 = vadd.f32 %v1137, %v1144
      %v1154 = vadd.f32 %v1138, %v1146
      %v1155 = vmul.f32 %v1087, 0.25
      %v1156 = vmul.f32 %v1088, 0.25
      %v1157 = vmul.f32 %v1089, 0.25
      %v1158 = vmul.f32 %v1090, 0.25
      %1163 = vrot.lane.b32.xlu0 %v1155, 115
      %v1164 = vpop.permute.xlu0 %1163
      %1165 = vrot.lane.b32.xlu0 %v1156, 115
      %v1166 = vpop.permute.xlu0 %1165
      %1167 = vrot.lane.b32.xlu0 %v1157, 115
      %v1168 = vpop.permute.xlu0 %1167
      %1169 = vrot.lane.b32.xlu0 %v1158, 115
      %v1170 = vpop.permute.xlu0 %1169
      %v1175 = vadd.f32 %v1151, %v1164
      %v1176 = vadd.f32 %v1152, %v1166
      %v1177 = vadd.f32 %v1153, %v1168
      %v1178 = vadd.f32 %v1154, %v1170
      %1179 = vrot.lane.b32.xlu0 %v1095, 114
      %v1180 = vpop.permute.xlu0 %1179
      %1181 = vrot.lane.b32.xlu0 %v1096, 114
      %v1182 = vpop.permute.xlu0 %1181
      %1183 = vrot.lane.b32.xlu0 %v1097, 114
      %v1184 = vpop.permute.xlu0 %1183
      %1185 = vrot.lane.b32.xlu0 %v1098, 114
      %v1186 = vpop.permute.xlu0 %1185
      %v1191 = vadd.f32 %v1175, %v1180
      %v1192 = vadd.f32 %v1176, %v1182
      %v1193 = vadd.f32 %v1177, %v1184
      %v1194 = vadd.f32 %v1178, %v1186
      %1195 = vrot.lane.b32.xlu0 %v1091, 104
      %v1196 = vpop.permute.xlu0 %1195
      %1197 = vrot.lane.b32.xlu0 %v1092, 104
      %v1198 = vpop.permute.xlu0 %1197
      %1199 = vrot.lane.b32.xlu0 %v1093, 104
      %v1200 = vpop.permute.xlu0 %1199
      %1201 = vrot.lane.b32.xlu0 %v1094, 104
      %v1202 = vpop.permute.xlu0 %1201
      %v1207 = vadd.f32 %v1191, %v1196
      %v1208 = vadd.f32 %v1192, %v1198
      %v1209 = vadd.f32 %v1193, %v1200
      %v1210 = vadd.f32 %v1194, %v1202
      %1211 = vrot.lane.b32.xlu0 %v1095, 103
      %v1212 = vpop.permute.xlu0 %1211
      %1213 = vrot.lane.b32.xlu0 %v1096, 103
      %v1214 = vpop.permute.xlu0 %1213
      %1215 = vrot.lane.b32.xlu0 %v1097, 103
      %v1216 = vpop.permute.xlu0 %1215
      %1217 = vrot.lane.b32.xlu0 %v1098, 103
      %v1218 = vpop.permute.xlu0 %1217
      %v1223 = vadd.f32 %v1207, %v1212
      %v1224 = vadd.f32 %v1208, %v1214
      %v1225 = vadd.f32 %v1209, %v1216
      %v1226 = vadd.f32 %v1210, %v1218
      %1227 = vrot.lane.b32.xlu0 %v1091, 102
      %v1228 = vpop.permute.xlu0 %1227
      %1229 = vrot.lane.b32.xlu0 %v1092, 102
      %v1230 = vpop.permute.xlu0 %1229
      %1231 = vrot.lane.b32.xlu0 %v1093, 102
      %v1232 = vpop.permute.xlu0 %1231
      %1233 = vrot.lane.b32.xlu0 %v1094, 102
      %v1234 = vpop.permute.xlu0 %1233
      %v1239 = vadd.f32 %v1223, %v1228
      %v1240 = vadd.f32 %v1224, %v1230
      %v1241 = vadd.f32 %v1225, %v1232
      %v1242 = vadd.f32 %v1226, %v1234
      %v1243 = vld [vmem:[%s277] sm:$0xff]
      %v1244 = vld [vmem:[%s277 + $0x8] sm:$0xff]
      %v1245 = vld [vmem:[%s277 + $0x10] sm:$0xff]
      %v1246 = vld [vmem:[%s277 + $0x18] sm:$0xff]
      %1248 = vset.pattern.permute.xlu0 0
      %1249 = vperm.xlu0 %1248, %v1243
      %v1250 = vpop.permute.xlu0 %1249
      %1253 = vset.pattern.permute.xlu0 0
      %1254 = vperm.xlu0 %1253, %v1244
      %v1255 = vpop.permute.xlu0 %1254
      %1258 = vset.pattern.permute.xlu0 0
      %1259 = vperm.xlu0 %1258, %v1245
      %v1260 = vpop.permute.xlu0 %1259
      %1263 = vset.pattern.permute.xlu0 0
      %1264 = vperm.xlu0 %1263, %v1246
      %v1265 = vpop.permute.xlu0 %1264
      %v1267 = vadd.f32 %v1239, %v1250
      %v1268 = vadd.f32 %v1240, %v1255
      %v1269 = vadd.f32 %v1241, %v1260
      %v1270 = vadd.f32 %v1242, %v1265
      %v1271 = vld [vmem:[%s280] sm:$0x1]
      %1272 = vset.pattern.permute.xlu0 1
      %1273 = vperm.xlu0 %1272, %v1243
      %v1274 = vpop.permute.xlu0 %1273
      %1276 = vset.pattern.permute.xlu0 1
      %1277 = vperm.xlu0 %1276, %v1244
      %v1278 = vpop.permute.xlu0 %1277
      %1280 = vset.pattern.permute.xlu0 1
      %1281 = vperm.xlu0 %1280, %v1245
      %v1282 = vpop.permute.xlu0 %1281
      %1284 = vset.pattern.permute.xlu0 1
      %1285 = vperm.xlu0 %1284, %v1246
      %v1286 = vpop.permute.xlu0 %1285
      %v1289 = vlaneseq
      %v1290 = vshrl.u32 %v1289, 7
      %v1291 = vsub.s32 0, %v1290
      %v1292 = vrot.slane %v1271, %v1291
      %v1294 = vmul.f32 %v1274, %v1292
      %v1295 = vmul.f32 %v1278, %v1292
      %v1296 = vmul.f32 %v1282, %v1292
      %v1297 = vmul.f32 %v1286, %v1292
      %v1298 = vadd.f32 %v1267, %v1294
      %v1299 = vadd.f32 %v1268, %v1295
      %v1300 = vadd.f32 %v1269, %v1296
      %v1301 = vadd.f32 %v1270, %v1297
      %vm1302 = vcmp.ge.f32.partialorder %v1298, 0.0
      %vm1303 = vcmp.ge.f32.partialorder %v1299, 0.0
      %vm1304 = vcmp.ge.f32.partialorder %v1300, 0.0
      %vm1305 = vcmp.ge.f32.partialorder %v1301, 0.0
      %v1306 = vmul.f32 %v1298, 0.2
      %v1307 = vmul.f32 %v1299, 0.2
      %v1308 = vmul.f32 %v1300, 0.2
      %v1309 = vmul.f32 %v1301, 0.2
      %v1310 = vsel %vm1302, %v1298, %v1306
      %v1311 = vsel %vm1303, %v1299, %v1307
      %v1312 = vsel %vm1304, %v1300, %v1308
      %v1313 = vsel %vm1305, %v1301, %v1309
      %v1314 = vld [vmem:[%s5] sm:$0x1]
      %v1316 = vlaneseq
      %v1317 = vshrl.u32 %v1316, 7
      %v1318 = vsub.s32 0, %v1317
      %v1319 = vrot.slane %v1314, %v1318
      %v1321 = vmul.f32 %v1310, %v1319
      %v1322 = vmul.f32 %v1311, %v1319
      %v1323 = vmul.f32 %v1312, %v1319
      %v1324 = vmul.f32 %v1313, %v1319
      %vm1325 = vcmask 785408
      %v1326 = vsel %vm1325, %v1321, 0.0
      %1327 = vadd.xlane.f32.xlu0 %v1326
      %v1328 = vpop.xlane.xlu0 %1327
      %v1329 = vsel %vm1325, %v1322, 0.0
      %1330 = vadd.xlane.f32.xlu0 %v1329
      %v1331 = vpop.xlane.xlu0 %1330
      %v1332 = vsel %vm1325, %v1323, 0.0
      %1333 = vadd.xlane.f32.xlu0 %v1332
      %v1334 = vpop.xlane.xlu0 %1333
      %v1335 = vsel %vm1325, %v1324, 0.0
      %1336 = vadd.xlane.f32.xlu0 %v1335
      %v1337 = vpop.xlane.xlu0 %1336
      %v1338 = vmul.f32 %v1328, 0.015625
      %v1339 = vmul.f32 %v1331, 0.015625
      %v1340 = vmul.f32 %v1334, 0.015625
      %v1341 = vmul.f32 %v1337, 0.015625
      %v1342 = vmul.f32 %v1321, %v1321
      %v1343 = vmul.f32 %v1322, %v1322
      %v1344 = vmul.f32 %v1323, %v1323
      %v1345 = vmul.f32 %v1324, %v1324
      %v1346 = vsel %vm1325, %v1342, 0.0
      %1347 = vadd.xlane.f32.xlu0 %v1346
      %v1348 = vpop.xlane.xlu0 %1347
      %v1349 = vsel %vm1325, %v1343, 0.0
      %1350 = vadd.xlane.f32.xlu0 %v1349
      %v1351 = vpop.xlane.xlu0 %1350
      %v1352 = vsel %vm1325, %v1344, 0.0
      %1353 = vadd.xlane.f32.xlu0 %v1352
      %v1354 = vpop.xlane.xlu0 %1353
      %v1355 = vsel %vm1325, %v1345, 0.0
      %1356 = vadd.xlane.f32.xlu0 %v1355
      %v1357 = vpop.xlane.xlu0 %1356
      %v1358 = vmul.f32 %v1348, 0.015625
      %v1359 = vmul.f32 %v1351, 0.015625
      %v1360 = vmul.f32 %v1354, 0.015625
      %v1361 = vmul.f32 %v1357, 0.015625
      %v1362 = vmul.f32 %v1338, %v1338
      %v1363 = vmul.f32 %v1339, %v1339
      %v1364 = vmul.f32 %v1340, %v1340
      %v1365 = vmul.f32 %v1341, %v1341
      %v1366 = vsub.f32 %v1358, %v1362
      %v1367 = vsub.f32 %v1359, %v1363
      %v1368 = vsub.f32 %v1360, %v1364
      %v1369 = vsub.f32 %v1361, %v1365
      %v1370 = vsub.f32 %v1321, %v1338
      %v1371 = vsub.f32 %v1322, %v1339
      %v1372 = vsub.f32 %v1323, %v1340
      %v1373 = vsub.f32 %v1324, %v1341
      %v1374 = vmax.f32 %v1366, 0.0
      %v1375 = vmax.f32 %v1367, 0.0
      %v1376 = vmax.f32 %v1368, 0.0
      %v1377 = vmax.f32 %v1369, 0.0
      %v1378 = vadd.f32 %v1374, 1e-05
      %v1379 = vadd.f32 %v1375, 1e-05
      %v1380 = vadd.f32 %v1376, 1e-05
      %v1381 = vadd.f32 %v1377, 1e-05
      %v1382 = vrsqrt.pop %v1378
      %v1383 = vrsqrt.pop %v1379
      %v1384 = vrsqrt.pop %v1380
      %v1385 = vrsqrt.pop %v1381
      %v1386 = vmul.f32 %v1370, %v1382
      %v1387 = vmul.f32 %v1371, %v1383
      %v1388 = vmul.f32 %v1372, %v1384
      %v1389 = vmul.f32 %v1373, %v1385
      %v1390 = vadd.f32 %v1243, 1.0
      %v1391 = vadd.f32 %v1244, 1.0
      %v1392 = vadd.f32 %v1245, 1.0
      %v1393 = vadd.f32 %v1246, 1.0
      %1395 = vset.pattern.permute.xlu0 2
      %1396 = vperm.xlu0 %1395, %v1390
      %v1397 = vpop.permute.xlu0 %1396
      %1400 = vset.pattern.permute.xlu0 2
      %1401 = vperm.xlu0 %1400, %v1391
      %v1402 = vpop.permute.xlu0 %1401
      %1405 = vset.pattern.permute.xlu0 2
      %1406 = vperm.xlu0 %1405, %v1392
      %v1407 = vpop.permute.xlu0 %1406
      %1410 = vset.pattern.permute.xlu0 2
      %1411 = vperm.xlu0 %1410, %v1393
      %v1412 = vpop.permute.xlu0 %1411
      %v1414 = vmul.f32 %v1386, %v1397
      %v1415 = vmul.f32 %v1387, %v1402
      %v1416 = vmul.f32 %v1388, %v1407
      %v1417 = vmul.f32 %v1389, %v1412
      %1418 = vset.pattern.permute.xlu0 3
      %1419 = vperm.xlu0 %1418, %v1243
      %v1420 = vpop.permute.xlu0 %1419
      %1422 = vset.pattern.permute.xlu0 3
      %1423 = vperm.xlu0 %1422, %v1244
      %v1424 = vpop.permute.xlu0 %1423
      %1426 = vset.pattern.permute.xlu0 3
      %1427 = vperm.xlu0 %1426, %v1245
      %v1428 = vpop.permute.xlu0 %1427
      %1430 = vset.pattern.permute.xlu0 3
      %1431 = vperm.xlu0 %1430, %v1246
      %v1432 = vpop.permute.xlu0 %1431
      %v1434 = vadd.f32 %v1414, %v1420
      %v1435 = vadd.f32 %v1415, %v1424
      %v1436 = vadd.f32 %v1416, %v1428
      %v1437 = vadd.f32 %v1417, %v1432
      %v1438 = vpack.c.bf16 %v1435, %v1434
      %v1439 = vpack.c.bf16 %v1437, %v1436
      %v1442 = vunpack.c.l.b16 %v1438
      %v1443 = vunpack.c.h.b16 %v1438
      %v1444 = vunpack.c.l.b16 %v1439
      %v1445 = vunpack.c.h.b16 %v1439
      %v1446 = vpack.c.b16 %v1442, %v1442
      %v1447 = vpack.c.b16 %v1443, %v1443
      %v1448 = vpack.c.b16 %v1444, %v1444
      %v1449 = vpack.c.b16 %v1445, %v1445
      %vm1454 = vcmask 781312
      %1455 = vst.msk [vmem:[%s285] sm:$0xf] %vm1454, %v1446
      %1456 = vst.msk [vmem:[%s285 + $0x4] sm:$0xf] %vm1454, %v1447
      %1457 = vst.msk [vmem:[%s285 + $0x8] sm:$0xf] %vm1454, %v1448
      %1458 = vst.msk [vmem:[%s285 + $0xc] sm:$0xf] %vm1454, %v1449
      %p1459 = scmp.lt.s32.totalorder %s17, 1
      %s1460 = scalar_select %p1459, %s17, 1
      %s1461 = smul.addr %s1460, 4
      %s1462 = smul.addr %s1461, 4
      %s1463 = scalar_lea.vmem %s6, %s1462
      // Predicated region
      $region45: #{g_synthesis_forward.9} parent=43 // pred_check
        %p1464 = pneg %p176
      $region46: #{g_synthesis_forward.9} parent=43 // pred_check_branch
        %1466 = sbr.rel (%p1464) target = $region48
      $region47: #{g_synthesis_forward.9} parent=43 // pred_region
        _
      $region48: #{g_synthesis_forward.9} parent=43 // pred_fallthru
        _
    $region44: #{g_synthesis_forward.9} parent=5 // pred_fallthru
      _
    %p1467 = scmp.le.s32.totalorder 2, %s12
    // Predicated region
    $region49: #{g_synthesis_forward.9} parent=5 // pred_check
      %p1468 = pneg %p1467
    $region50: #{g_synthesis_forward.9} parent=5 // pred_check_branch
      %1470 = sbr.rel (%p1468) target = $region52
    $region51: #{g_synthesis_forward.9} parent=5 // pred_region
      %s1471 = ssub.s32 %s12, 2
      // Predicated region
      $region53: #{g_synthesis_forward.9} parent=51 // pred_check
        %p1472 = pneg %p182
      $region54: #{g_synthesis_forward.9} parent=51 // pred_check_branch
        %1474 = sbr.rel (%p1472) target = $region56
      $region55: #{g_synthesis_forward.9} parent=51 // pred_region
        %p1475 = scmp.lt.s32.totalorder %s18, 1
        %s1476 = scalar_select %p1475, %s18, 1
        %s1477 = smul.addr %s1476, 4
        %s1478 = smul.addr %s1477, 4
        %s1479 = scalar_lea.vmem %s6, %s1478
      $region56: #{g_synthesis_forward.9} parent=51 // pred_fallthru
        _
    $region52: #{g_synthesis_forward.9} parent=5 // pred_fallthru
      _
  $region6: #{g_synthesis_forward.9} parent=0 // loop_footer
    %s16 = sadd.s32 1, %s12
  $region7: #{g_synthesis_forward.9} parent=0 // loop_footer_branch
    %11 = sbr.rel target = $region3
  $region8: #{g_synthesis_forward.9} parent=0 // loop_exit
    _

// kernel: g_synthesis_forward.10
$region0: #{g_synthesis_forward.10}
  #allocation0 [shape = 'u32[]', space=smem, size = 0x4, offset = 0x4, fixed_abs, tag = 'smem constant byte address 0x4 - core index']
  #allocation1 [shape = 'u32[144,128]{1,0:T(1,128)}', space=vmem, size = 0x12000, scoped, tag = 'internal scratch']
  %s0 = inlined_call_operand.vmem [shape: bf16[2,32,104], index: 0, kind: input, shape index: {}]
  %s1 = inlined_call_operand.vmem [shape: bf16[9,32,32], index: 1, kind: input, shape index: {}]
  %s2 = inlined_call_operand.vmem [shape: f32[2,32,4], index: 2, kind: input, shape index: {}]
  %s3 = inlined_call_operand.vmem [shape: f32[2,1,80], index: 3, kind: input, shape index: {}]
  %s4 = inlined_call_operand.vmem [shape: f32[1,80], index: 4, kind: input, shape index: {}]
  %s5 = inlined_call_operand.vmem [shape: bf16[2,32,80], index: 5, kind: output, shape index: {}]
  %s6 = sld [smem:[#allocation0]]
  $region53: #{g_synthesis_forward.10} parent=0
    _
  %s8 = ssub.s32 1, %s6
  %s9 = scalar_select 0, %s8, %s6
  loop: start=0, step=1, limit=4
  $region2: #{g_synthesis_forward.10} parent=0 // loop_pre_header
    _
  $region3: #{g_synthesis_forward.10} parent=0 // loop_header
    %s11 = sphi 0, %s15
    %p12 = scmp.ge.s32.totalorder %s11, 4
    %s21 = sphi 0, %s23
    %s24 = sphi 0, %s21
    %s25 = sphi 0, %s24
    %s41 = sphi 0, %s25
    %s45 = sphi 0, %s45
    %s47 = sphi 0, %s45
    %s48 = sphi 0, %s47
    %s62 = sphi 0, %s48
    %s68 = sphi 0, %s70
    %s71 = sphi 0, %s68
    %s72 = sphi 0, %s71
    %s88 = sphi 0, %s72
    %s94 = sphi 0, %s96
    %s97 = sphi 0, %s94
    %s98 = sphi 0, %s97
    %s114 = sphi 0, %s98
    %s118 = sphi 0, %s118
    %s120 = sphi 0, %s118
    %s121 = sphi 0, %s120
    %s135 = sphi 0, %s121
    %s141 = sphi 0, %s143
    %s144 = sphi 0, %s141
    %s145 = sphi 0, %s144
    %s161 = sphi 0, %s145
  $region4: #{g_synthesis_forward.10} parent=0 // loop_header_branch
    %14 = sbr.rel (%p12) target = $region8
  $region5: #{g_synthesis_forward.10} parent=0 // loop_body
    %s16 = ssub.s32 %s11, 1
    %s17 = ssub.s32 %s11, 2
    %s18 = sadd.s32 %s11, 1
    %s19 = ssub.s32 %s11, %s18
    %p20 = scmp.eq.s32.totalorder %s19, 0
    %s22 = sadd.s32 %s21, 1
    %s23 = scalar_select %p20, %s21, %s22
    %p26 = pneg %p20
    %p27 = scmp.eq.s32.totalorder %s11, 1
    %p28 = por %p26, %p27
    %p29 = scmp.ne.s32.totalorder %s21, %s24
    %p30 = scmp.eq.s32.totalorder %s11, 0
    %p31 = por %p29, %p30
    %p32 = scmp.ne.s32.totalorder %s21, %s24
    %p33 = scmp.eq.s32.totalorder %s16, 1
    %p34 = por %p32, %p33
    %p35 = scmp.ne.s32.totalorder %s24, %s25
    %p36 = scmp.eq.s32.totalorder %s16, 0
    %p37 = por %p35, %p36
    %p38 = scmp.ne.s32.totalorder %s24, %s25
    %p39 = scmp.eq.s32.totalorder %s17, 1
    %p40 = por %p38, %p39
    %p42 = scmp.ne.s32.totalorder %s25, %s41
    %p43 = scmp.eq.s32.totalorder %s17, 0
    %p44 = por %p42, %p43
    %s46 = sadd.s32 %s45, 1
    %p49 = scmp.eq.s32.totalorder %s11, 1
    %p50 = scmp.ne.s32.totalorder %s45, %s47
    %p51 = scmp.eq.s32.totalorder %s11, 0
    %p52 = por %p50, %p51
    %p53 = scmp.ne.s32.totalorder %s45, %s47
    %p54 = scmp.eq.s32.totalorder %s16, 1
    %p55 = por %p53, %p54
    %p56 = scmp.ne.s32.totalorder %s47, %s48
    %p57 = scmp.eq.s32.totalorder %s16, 0
    %p58 = por %p56, %p57
    %p59 = scmp.ne.s32.totalorder %s47, %s48
    %p60 = scmp.eq.s32.totalorder %s17, 1
    %p61 = por %p59, %p60
    %p63 = scmp.ne.s32.totalorder %s48, %s62
    %p64 = scmp.eq.s32.totalorder %s17, 0
    %p65 = por %p63, %p64
    %s66 = ssub.s32 %s11, %s18
    %p67 = scmp.eq.s32.totalorder %s66, 0
    %s69 = sadd.s32 %s68, 1
    %s70 = scalar_select %p67, %s68, %s69
    %p73 = pneg %p67
    %p74 = scmp.eq.s32.totalorder %s11, 1
    %p75 = por %p73, %p74
    %p76 = scmp.ne.s32.totalorder %s68, %s71
    %p77 = scmp.eq.s32.totalorder %s11, 0
    %p78 = por %p76, %p77
    %p79 = scmp.ne.s32.totalorder %s68, %s71
    %p80 = scmp.eq.s32.totalorder %s16, 1
    %p81 = por %p79, %p80
    %p82 = scmp.ne.s32.totalorder %s71, %s72
    %p83 = scmp.eq.s32.totalorder %s16, 0
    %p84 = por %p82, %p83
    %p85 = scmp.ne.s32.totalorder %s71, %s72
    %p86 = scmp.eq.s32.totalorder %s17, 1
    %p87 = por %p85, %p86
    %p89 = scmp.ne.s32.totalorder %s72, %s88
    %p90 = scmp.eq.s32.totalorder %s17, 0
    %p91 = por %p89, %p90
    %s92 = ssub.s32 %s11, %s18
    %p93 = scmp.eq.s32.totalorder %s92, 0
    %s95 = sadd.s32 %s94, 1
    %s96 = scalar_select %p93, %s94, %s95
    %p99 = pneg %p93
    %p100 = scmp.eq.s32.totalorder %s11, 1
    %p101 = por %p99, %p100
    %p102 = scmp.ne.s32.totalorder %s94, %s97
    %p103 = scmp.eq.s32.totalorder %s11, 0
    %p104 = por %p102, %p103
    %p105 = scmp.ne.s32.totalorder %s94, %s97
    %p106 = scmp.eq.s32.totalorder %s16, 1
    %p107 = por %p105, %p106
    %p108 = scmp.ne.s32.totalorder %s97, %s98
    %p109 = scmp.eq.s32.totalorder %s16, 0
    %p110 = por %p108, %p109
    %p111 = scmp.ne.s32.totalorder %s97, %s98
    %p112 = scmp.eq.s32.totalorder %s17, 1
    %p113 = por %p111, %p112
    %p115 = scmp.ne.s32.totalorder %s98, %s114
    %p116 = scmp.eq.s32.totalorder %s17, 0
    %p117 = por %p115, %p116
    %s119 = sadd.s32 %s118, 1
    %p122 = scmp.eq.s32.totalorder %s11, 1
    %p123 = scmp.ne.s32.totalorder %s118, %s120
    %p124 = scmp.eq.s32.totalorder %s11, 0
    %p125 = por %p123, %p124
    %p126 = scmp.ne.s32.totalorder %s118, %s120
    %p127 = scmp.eq.s32.totalorder %s16, 1
    %p128 = por %p126, %p127
    %p129 = scmp.ne.s32.totalorder %s120, %s121
    %p130 = scmp.eq.s32.totalorder %s16, 0
    %p131 = por %p129, %p130
    %p132 = scmp.ne.s32.totalorder %s120, %s121
    %p133 = scmp.eq.s32.totalorder %s17, 1
    %p134 = por %p132, %p133
    %p136 = scmp.ne.s32.totalorder %s121, %s135
    %p137 = scmp.eq.s32.totalorder %s17, 0
    %p138 = por %p136, %p137
    %s139 = ssub.s32 %s11, %s18
    %p140 = scmp.eq.s32.totalorder %s139, 0
    %s142 = sadd.s32 %s141, 1
    %s143 = scalar_select %p140, %s141, %s142
    %p146 = pneg %p140
    %p147 = scmp.eq.s32.totalorder %s11, 1
    %p148 = por %p146, %p147
    %p149 = scmp.ne.s32.totalorder %s141, %s144
    %p150 = scmp.eq.s32.totalorder %s11, 0
    %p151 = por %p149, %p150
    %p152 = scmp.ne.s32.totalorder %s141, %s144
    %p153 = scmp.eq.s32.totalorder %s16, 1
    %p154 = por %p152, %p153
    %p155 = scmp.ne.s32.totalorder %s144, %s145
    %p156 = scmp.eq.s32.totalorder %s16, 0
    %p157 = por %p155, %p156
    %p158 = scmp.ne.s32.totalorder %s144, %s145
    %p159 = scmp.eq.s32.totalorder %s17, 1
    %p160 = por %p158, %p159
    %p162 = scmp.ne.s32.totalorder %s145, %s161
    %p163 = scmp.eq.s32.totalorder %s17, 0
    %p164 = por %p162, %p163
    %p165 = scmp.le.s32.totalorder 1, %s11
    %p166 = scmp.lt.s32.totalorder %s11, 3
    %p167 = pnand %p165, %p166
    %p168 = pneg %p167
    // Predicated region
    $region9: #{g_synthesis_forward.10} parent=5 // pred_check
      _
    $region10: #{g_synthesis_forward.10} parent=5 // pred_check_branch
      %170 = sbr.rel (%p167) target = $region12
    $region11: #{g_synthesis_forward.10} parent=5 // pred_region
      %s171 = ssub.s32 %s11, 1
      // Predicated region
      $region13: #{g_synthesis_forward.10} parent=11 // pred_check
        %p172 = pneg %p58
      $region14: #{g_synthesis_forward.10} parent=11 // pred_check_branch
        %174 = sbr.rel (%p172) target = $region16
      $region15: #{g_synthesis_forward.10} parent=11 // pred_region
        _
      $region16: #{g_synthesis_forward.10} parent=11 // pred_fallthru
        _
      // Predicated region
      $region17: #{g_synthesis_forward.10} parent=11 // pred_check
        %p175 = pneg %p131
      $region18: #{g_synthesis_forward.10} parent=11 // pred_check_branch
        %177 = sbr.rel (%p175) target = $region20
      $region19: #{g_synthesis_forward.10} parent=11 // pred_region
        _
      $region20: #{g_synthesis_forward.10} parent=11 // pred_fallthru
        _
    $region12: #{g_synthesis_forward.10} parent=5 // pred_fallthru
      _
    %p178 = scmp.lt.s32.totalorder %s11, 2
    // Predicated region
    $region21: #{g_synthesis_forward.10} parent=5 // pred_check
      %p179 = pneg %p178
    $region22: #{g_synthesis_forward.10} parent=5 // pred_check_branch
      %181 = sbr.rel (%p179) target = $region24
    $region23: #{g_synthesis_forward.10} parent=5 // pred_region
      // Predicated region
      $region25: #{g_synthesis_forward.10} parent=23 // pred_check
        %p182 = pneg %p31
      $region26: #{g_synthesis_forward.10} parent=23 // pred_check_branch
        %184 = sbr.rel (%p182) target = $region28
      $region27: #{g_synthesis_forward.10} parent=23 // pred_region
        %p185 = scmp.lt.s32.totalorder %s11, 1
        %s186 = scalar_select %p185, %s11, 1
        %s187 = smul.addr %s186, 4
        %s188 = smul.addr %s187, 4
        %s189 = scalar_lea.vmem %s0, %s188
      $region28: #{g_synthesis_forward.10} parent=23 // pred_fallthru
        _
      // Predicated region
      $region29: #{g_synthesis_forward.10} parent=23 // pred_check
        %p190 = pneg %p78
      $region30: #{g_synthesis_forward.10} parent=23 // pred_check_branch
        %192 = sbr.rel (%p190) target = $region32
      $region31: #{g_synthesis_forward.10} parent=23 // pred_region
        %p193 = scmp.lt.s32.totalorder %s11, 1
        %s194 = scalar_select %p193, %s11, 1
        %s195 = smul.addr %s194, 4
        %s196 = smul.addr %s195, 8
        %s197 = scalar_lea.vmem %s2, %s196
      $region32: #{g_synthesis_forward.10} parent=23 // pred_fallthru
        _
      // Predicated region
      $region33: #{g_synthesis_forward.10} parent=23 // pred_check
        %p198 = pneg %p104
      $region34: #{g_synthesis_forward.10} parent=23 // pred_check_branch
        %200 = sbr.rel (%p198) target = $region36
      $region35: #{g_synthesis_forward.10} parent=23 // pred_region
        %p201 = scmp.lt.s32.totalorder %s11, 1
        %s202 = scalar_select %p201, %s11, 1
        %s203 = scalar_lea.vmem %s3, %s202
      $region36: #{g_synthesis_forward.10} parent=23 // pred_fallthru
        _
    $region24: #{g_synthesis_forward.10} parent=5 // pred_fallthru
      _
    %p204 = scmp.le.s32.totalorder 1, %s11
    %p205 = scmp.lt.s32.totalorder %s11, 3
    %p206 = pnand %p204, %p205
    %p207 = pneg %p206
    // Predicated region
    $region37: #{g_synthesis_forward.10} parent=5 // pred_check
      _
    $region38: #{g_synthesis_forward.10} parent=5 // pred_check_branch
      %209 = sbr.rel (%p206) target = $region40
    $region39: #{g_synthesis_forward.10} parent=5 // pred_region
      %s210 = ssub.s32 %s11, 1
      %p211 = scmp.lt.s32.totalorder %s16, 1
      %s212 = scalar_select %p211, %s16, 1
      %s213 = smul.addr %s212, 4
      %s214 = smul.addr %s213, 4
      %s215 = scalar_lea.vmem %s0, %s214
      %p216 = pneg %p37
      %p217 = pneg %p34
      %p218 = pneg %p58
      %p219 = pneg %p55
      %p220 = scmp.lt.s32.totalorder %s16, 1
      %s221 = scalar_select %p220, %s16, 1
      %s222 = smul.addr %s221, 4
      %s223 = smul.addr %s222, 8
      %s224 = scalar_lea.vmem %s2, %s223
      %p225 = pneg %p84
      %p226 = pneg %p81
      %p227 = scmp.lt.s32.totalorder %s16, 1
      %s228 = scalar_select %p227, %s16, 1
      %s229 = scalar_lea.vmem %s3, %s228
      %p230 = pneg %p110
      %p231 = pneg %p107
      %p232 = pneg %p131
      %p233 = pneg %p128
      %p234 = pneg %p157
      %p235 = pneg %p154
      %p236 = scmp.lt.s32.totalorder %s16, 1
      %s237 = scalar_select %p236, %s16, 1
      %s238 = smul.addr %s237, 4
      %s239 = smul.addr %s238, 4
      %s240 = scalar_lea.vmem %s5, %s239
      %p241 = scmp.lt.s32.totalorder %s16, 1
      %s242 = scalar_select %p241, %s16, 1
      %s243 = smul.addr %s242, 4
      %s244 = smul.addr %s243, 4
      %s245 = scalar_lea.vmem %s0, %s244
      %p246 = scmp.lt.s32.totalorder %s16, 1
      %s247 = scalar_select %p246, %s16, 1
      %s248 = smul.addr %s247, 4
      %s249 = smul.addr %s248, 8
      %s250 = scalar_lea.vmem %s2, %s249
      %p251 = scmp.lt.s32.totalorder %s16, 1
      %s252 = scalar_select %p251, %s16, 1
      %s253 = scalar_lea.vmem %s3, %s252
      %p254 = scmp.lt.s32.totalorder %s16, 1
      %s255 = scalar_select %p254, %s16, 1
      %s256 = smul.addr %s255, 4
      %s257 = smul.addr %s256, 4
      %s258 = scalar_lea.vmem %s5, %s257
      %v260 = vld [vmem:[%s245] sm:$0xf]
      %v261 = vld [vmem:[%s245 + $0x4] sm:$0xf]
      %v262 = vld [vmem:[%s245 + $0x8] sm:$0xf]
      %v263 = vld [vmem:[%s245 + $0xc] sm:$0xf]
      %v264 = vld [vmem:[%s1] sm:$0xf]
      %v265 = vld [vmem:[%s1 + $0x4] sm:$0xf]
      %v266 = vld [vmem:[%s1 + $0x8] sm:$0xf]
      %v267 = vld [vmem:[%s1 + $0xc] sm:$0xf]
      %s268 = scalar_lea.vmem %s1, 16
      %v269 = vld [vmem:[%s268] sm:$0xf]
      %v270 = vld [vmem:[%s268 + $0x4] sm:$0xf]
      %v271 = vld [vmem:[%s268 + $0x8] sm:$0xf]
      %v272 = vld [vmem:[%s268 + $0xc] sm:$0xf]
      %v277 = vunpack.c.l.b16 %v269
      %v278 = vunpack.c.l.b16 %v270
      %v279 = vunpack.c.l.b16 %v271
      %v280 = vunpack.c.l.b16 %v272
      %v281 = vpack.c.b16 %v278, %v277
      %v282 = vpack.c.b16 %v280, %v279
      %v287 = vunpack.c.l.b16 %v260
      %v288 = vunpack.c.l.b16 %v261
      %v289 = vunpack.c.l.b16 %v262
      %v290 = vunpack.c.l.b16 %v263
      %v291 = vpack.c.b16 %v288, %v287
      %v292 = vpack.c.b16 %v290, %v289
      %293 = vrot.lane.b32.xlu0 %v291, 127
      %v294 = vpop.permute.xlu0 %293
      %295 = vrot.lane.b32.xlu0 %v292, 127
      %v296 = vpop.permute.xlu0 %295
      %vm299 = vcmask 261120
      %v301 = vsel %vm299, %v281, 0
      %v304 = vsel %vm299, %v282, 0
      %306 = vmatprep.subr.bf16.mxu0 0
      %307 = vmatpush1.bf16.msra.mxu0 0
      %308 = vmatprep.subr.bf16.mxu0 0
      %309 = vmatpush1.bf16.msra.mxu0 0
      %310 = vmatprep.subr.bf16.mxu0 0
      %311 = vmatpush1.bf16.msra.mxu0 0
      %312 = vmatprep.subr.bf16.mxu0 0
      %313 = vmatpush1.bf16.msra.mxu0 0
      %314 = vmatprep.subr.bf16.mxu0 0
      %315 = vmatpush1.bf16.msra.mxu0 0
      %316 = vmatprep.subr.bf16.mxu0 0
      %317 = vmatpush1.bf16.msra.mxu0 0
      %318 = vmatprep.subr.bf16.mxu0 0
      %319 = vmatpush1.bf16.msra.mxu0 %v296
      %320 = vmatprep.subr.bf16.mxu0 0
      %321 = vmatpush1.bf16.msra.mxu0 %v294
      %322 = vmatprep.subr.bf16.mxu0 0
      %323 = vmatpush2.bf16.msra.mxu0 0
      %324 = vmatprep.subr.bf16.mxu0 0
      %325 = vmatpush2.bf16.msra.mxu0 0
      %326 = vmatprep.subr.bf16.mxu0 0
      %327 = vmatpush2.bf16.msra.mxu0 0
      %328 = vmatprep.subr.bf16.mxu0 0
      %329 = vmatpush2.bf16.msra.mxu0 0
      %330 = vmatprep.subr.bf16.mxu0 0
      %331 = vmatpush2.bf16.msra.mxu0 0
      %332 = vmatprep.subr.bf16.mxu0 0
      %333 = vmatpush2.bf16.msra.mxu0 0
      %334 = vmatprep.subr.bf16.mxu0 0
      %335 = vmatpush2.bf16.msra.mxu0 0
      %336 = vmatprep.subr.bf16.mxu0 0
      %337 = vmatpush2.bf16.msra.mxu0 0
      %338 = vmatprep.mubr.bf16.mxu0 0
      %339 = vmatmul.mubr.bf16.gmra.mxu0 %v301
      %v340 = vpop.f32.mrf.mxu0
      %v341 = vadd.f32 0.0, %v340
      %v342 = vpop.f32.mrf.mxu0
      %v343 = vpop.f32.mrf.mxu0
      %v344 = vadd.f32 0.0, %v343
      %v345 = vpop.f32.mrf.mxu0
      %346 = vmatprep.mubr.bf16.mxu0 0
      %347 = vmatmul.mubr.bf16.gmra.mxu0 %v304
      %v348 = vpop.f32.mrf.mxu0
      %v349 = vadd.f32 0.0, %v348
      %v350 = vpop.f32.mrf.mxu0
      %v351 = vpop.f32.mrf.mxu0
      %v352 = vadd.f32 0.0, %v351
      %v353 = vpop.f32.mrf.mxu0
      %354 = vdwg.mxu0
      %v359 = vunpack.c.l.b16 %v264
      %v360 = vunpack.c.l.b16 %v265
      %v361 = vunpack.c.l.b16 %v266
      %v362 = vunpack.c.l.b16 %v267
      %v363 = vpack.c.b16 %v360, %v359
      %v364 = vpack.c.b16 %v362, %v361
      %v368 = vsel %vm299, %v363, 0
      %v371 = vsel %vm299, %v364, 0
      %373 = vmatprep.subr.bf16.mxu0 0
      %374 = vmatpush1.bf16.msra.mxu0 0
      %375 = vmatprep.subr.bf16.mxu0 0
      %376 = vmatpush1.bf16.msra.mxu0 0
      %377 = vmatprep.subr.bf16.mxu0 0
      %378 = vmatpush1.bf16.msra.mxu0 0
      %379 = vmatprep.subr.bf16.mxu0 0
      %380 = vmatpush1.bf16.msra.mxu0 0
      %381 = vmatprep.subr.bf16.mxu0 0
      %382 = vmatpush1.bf16.msra.mxu0 0
      %383 = vmatprep.subr.bf16.mxu0 0
      %384 = vmatpush1.bf16.msra.mxu0 0
      %385 = vmatprep.subr.bf16.mxu0 0
      %386 = vmatpush1.bf16.msra.mxu0 %v292
      %387 = vmatprep.subr.bf16.mxu0 0
      %388 = vmatpush1.bf16.msra.mxu0 %v291
      %389 = vmatprep.subr.bf16.mxu0 0
      %390 = vmatpush2.bf16.msra.mxu0 0
      %391 = vmatprep.subr.bf16.mxu0 0
      %392 = vmatpush2.bf16.msra.mxu0 0
      %393 = vmatprep.subr.bf16.mxu0 0
      %394 = vmatpush2.bf16.msra.mxu0 0
      %395 = vmatprep.subr.bf16.mxu0 0
      %396 = vmatpush2.bf16.msra.mxu0 0
      %397 = vmatprep.subr.bf16.mxu0 0
      %398 = vmatpush2.bf16.msra.mxu0 0
      %399 = vmatprep.subr.bf16.mxu0 0
      %400 = vmatpush2.bf16.msra.mxu0 0
      %401 = vmatprep.subr.bf16.mxu0 0
      %402 = vmatpush2.bf16.msra.mxu0 0
      %403 = vmatprep.subr.bf16.mxu0 0
      %404 = vmatpush2.bf16.msra.mxu0 0
      %405 = vmatprep.mubr.bf16.mxu0 0
      %406 = vmatmul.mubr.bf16.gmra.mxu0 %v368
      %v407 = vpop.f32.mrf.mxu0
      %v408 = vadd.f32 %v341, %v407
      %v409 = vpop.f32.mrf.mxu0
      %v410 = vpop.f32.mrf.mxu0
      %v411 = vadd.f32 %v344, %v410
      %v412 = vpop.f32.mrf.mxu0
      %413 = vmatprep.mubr.bf16.mxu0 0
      %414 = vmatmul.mubr.bf16.gmra.mxu0 %v371
      %v415 = vpop.f32.mrf.mxu0
      %v416 = vadd.f32 %v349, %v415
      %v417 = vpop.f32.mrf.mxu0
      %v418 = vpop.f32.mrf.mxu0
      %v419 = vadd.f32 %v352, %v418
      %v420 = vpop.f32.mrf.mxu0
      %421 = vdwg.mxu0
      %s422 = scalar_lea.vmem %s1, 32
      %v423 = vld [vmem:[%s422] sm:$0xf]
      %v424 = vld [vmem:[%s422 + $0x4] sm:$0xf]
      %v425 = vld [vmem:[%s422 + $0x8] sm:$0xf]
      %v426 = vld [vmem:[%s422 + $0xc] sm:$0xf]
      %v431 = vunpack.c.l.b16 %v423
      %v432 = vunpack.c.l.b16 %v424
      %v433 = vunpack.c.l.b16 %v425
      %v434 = vunpack.c.l.b16 %v426
      %v435 = vpack.c.b16 %v432, %v431
      %v436 = vpack.c.b16 %v434, %v433
      %437 = vrot.lane.b32.xlu0 %v291, 126
      %v438 = vpop.permute.xlu0 %437
      %439 = vrot.lane.b32.xlu0 %v292, 126
      %v440 = vpop.permute.xlu0 %439
      %v444 = vsel %vm299, %v435, 0
      %v447 = vsel %vm299, %v436, 0
      %449 = vmatprep.subr.bf16.mxu0 0
      %450 = vmatpush1.bf16.msra.mxu0 0
      %451 = vmatprep.subr.bf16.mxu0 0
      %452 = vmatpush1.bf16.msra.mxu0 0
      %453 = vmatprep.subr.bf16.mxu0 0
      %454 = vmatpush1.bf16.msra.mxu0 0
      %455 = vmatprep.subr.bf16.mxu0 0
      %456 = vmatpush1.bf16.msra.mxu0 0
      %457 = vmatprep.subr.bf16.mxu0 0
      %458 = vmatpush1.bf16.msra.mxu0 0
      %459 = vmatprep.subr.bf16.mxu0 0
      %460 = vmatpush1.bf16.msra.mxu0 0
      %461 = vmatprep.subr.bf16.mxu0 0
      %462 = vmatpush1.bf16.msra.mxu0 %v440
      %463 = vmatprep.subr.bf16.mxu0 0
      %464 = vmatpush1.bf16.msra.mxu0 %v438
      %465 = vmatprep.subr.bf16.mxu0 0
      %466 = vmatpush2.bf16.msra.mxu0 0
      %467 = vmatprep.subr.bf16.mxu0 0
      %468 = vmatpush2.bf16.msra.mxu0 0
      %469 = vmatprep.subr.bf16.mxu0 0
      %470 = vmatpush2.bf16.msra.mxu0 0
      %471 = vmatprep.subr.bf16.mxu0 0
      %472 = vmatpush2.bf16.msra.mxu0 0
      %473 = vmatprep.subr.bf16.mxu0 0
      %474 = vmatpush2.bf16.msra.mxu0 0
      %475 = vmatprep.subr.bf16.mxu0 0
      %476 = vmatpush2.bf16.msra.mxu0 0
      %477 = vmatprep.subr.bf16.mxu0 0
      %478 = vmatpush2.bf16.msra.mxu0 0
      %479 = vmatprep.subr.bf16.mxu0 0
      %480 = vmatpush2.bf16.msra.mxu0 0
      %481 = vmatprep.mubr.bf16.mxu0 0
      %482 = vmatmul.mubr.bf16.gmra.mxu0 %v444
      %v483 = vpop.f32.mrf.mxu0
      %v484 = vadd.f32 0.0, %v483
      %v485 = vpop.f32.mrf.mxu0
      %v486 = vpop.f32.mrf.mxu0
      %v487 = vadd.f32 0.0, %v486
      %v488 = vpop.f32.mrf.mxu0
      %489 = vmatprep.mubr.bf16.mxu0 0
      %490 = vmatmul.mubr.bf16.gmra.mxu0 %v447
      %v491 = vpop.f32.mrf.mxu0
      %v492 = vadd.f32 0.0, %v491
      %v493 = vpop.f32.mrf.mxu0
      %v494 = vpop.f32.mrf.mxu0
      %v495 = vadd.f32 0.0, %v494
      %v496 = vpop.f32.mrf.mxu0
      %497 = vdwg.mxu0
      %v498 = vadd.f32 %v408, %v484
      %v499 = vadd.f32 %v411, %v487
      %v500 = vadd.f32 %v416, %v492
      %v501 = vadd.f32 %v419, %v495
      %s502 = scalar_lea.vmem %s1, 48
      %v503 = vld [vmem:[%s502] sm:$0xf]
      %v504 = vld [vmem:[%s502 + $0x4] sm:$0xf]
      %v505 = vld [vmem:[%s502 + $0x8] sm:$0xf]
      %v506 = vld [vmem:[%s502 + $0xc] sm:$0xf]
      %v511 = vunpack.c.l.b16 %v503
      %v512 = vunpack.c.l.b16 %v504
      %v513 = vunpack.c.l.b16 %v505
      %v514 = vunpack.c.l.b16 %v506
      %v515 = vpack.c.b16 %v512, %v511
      %v516 = vpack.c.b16 %v514, %v513
      %517 = vrot.lane.b32.xlu0 %v291, 118
      %v518 = vpop.permute.xlu0 %517
      %519 = vrot.lane.b32.xlu0 %v292, 118
      %v520 = vpop.permute.xlu0 %519
      %v524 = vsel %vm299, %v515, 0
      %v527 = vsel %vm299, %v516, 0
      %529 = vmatprep.subr.bf16.mxu0 0
      %530 = vmatpush1.bf16.msra.mxu0 0
      %531 = vmatprep.subr.bf16.mxu0 0
      %532 = vmatpush1.bf16.msra.mxu0 0
      %533 = vmatprep.subr.bf16.mxu0 0
      %534 = vmatpush1.bf16.msra.mxu0 0
      %535 = vmatprep.subr.bf16.mxu0 0
      %536 = vmatpush1.bf16.msra.mxu0 0
      %537 = vmatprep.subr.bf16.mxu0 0
      %538 = vmatpush1.bf16.msra.mxu0 0
      %539 = vmatprep.subr.bf16.mxu0 0
      %540 = vmatpush1.bf16.msra.mxu0 0
      %541 = vmatprep.subr.bf16.mxu0 0
      %542 = vmatpush1.bf16.msra.mxu0 %v520
      %543 = vmatprep.subr.bf16.mxu0 0
      %544 = vmatpush1.bf16.msra.mxu0 %v518
      %545 = vmatprep.subr.bf16.mxu0 0
      %546 = vmatpush2.bf16.msra.mxu0 0
      %547 = vmatprep.subr.bf16.mxu0 0
      %548 = vmatpush2.bf16.msra.mxu0 0
      %549 = vmatprep.subr.bf16.mxu0 0
      %550 = vmatpush2.bf16.msra.mxu0 0
      %551 = vmatprep.subr.bf16.mxu0 0
      %552 = vmatpush2.bf16.msra.mxu0 0
      %553 = vmatprep.subr.bf16.mxu0 0
      %554 = vmatpush2.bf16.msra.mxu0 0
      %555 = vmatprep.subr.bf16.mxu0 0
      %556 = vmatpush2.bf16.msra.mxu0 0
      %557 = vmatprep.subr.bf16.mxu0 0
      %558 = vmatpush2.bf16.msra.mxu0 0
      %559 = vmatprep.subr.bf16.mxu0 0
      %560 = vmatpush2.bf16.msra.mxu0 0
      %561 = vmatprep.mubr.bf16.mxu0 0
      %562 = vmatmul.mubr.bf16.gmra.mxu0 %v524
      %v563 = vpop.f32.mrf.mxu0
      %v564 = vadd.f32 0.0, %v563
      %v565 = vpop.f32.mrf.mxu0
      %v566 = vpop.f32.mrf.mxu0
      %v567 = vadd.f32 0.0, %v566
      %v568 = vpop.f32.mrf.mxu0
      %569 = vmatprep.mubr.bf16.mxu0 0
      %570 = vmatmul.mubr.bf16.gmra.mxu0 %v527
      %v571 = vpop.f32.mrf.mxu0
      %v572 = vadd.f32 0.0, %v571
      %v573 = vpop.f32.mrf.mxu0
      %v574 = vpop.f32.mrf.mxu0
      %v575 = vadd.f32 0.0, %v574
      %v576 = vpop.f32.mrf.mxu0
      %577 = vdwg.mxu0
      %v578 = vadd.f32 %v498, %v564
      %v579 = vadd.f32 %v499, %v567
      %v580 = vadd.f32 %v500, %v572
      %v581 = vadd.f32 %v501, %v575
      %s582 = scalar_lea.vmem %s1, 64
      %v583 = vld [vmem:[%s582] sm:$0xf]
      %v584 = vld [vmem:[%s582 + $0x4] sm:$0xf]
      %v585 = vld [vmem:[%s582 + $0x8] sm:$0xf]
      %v586 = vld [vmem:[%s582 + $0xc] sm:$0xf]
      %v591 = vunpack.c.l.b16 %v583
      %v592 = vunpack.c.l.b16 %v584
      %v593 = vunpack.c.l.b16 %v585
      %v594 = vunpack.c.l.b16 %v586
      %v595 = vpack.c.b16 %v592, %v591
      %v596 = vpack.c.b16 %v594, %v593
      %597 = vrot.lane.b32.xlu0 %v291, 117
      %v598 = vpop.permute.xlu0 %597
      %599 = vrot.lane.b32.xlu0 %v292, 117
      %v600 = vpop.permute.xlu0 %599
      %v604 = vsel %vm299, %v595, 0
      %v607 = vsel %vm299, %v596, 0
      %609 = vmatprep.subr.bf16.mxu0 0
      %610 = vmatpush1.bf16.msra.mxu0 0
      %611 = vmatprep.subr.bf16.mxu0 0
      %612 = vmatpush1.bf16.msra.mxu0 0
      %613 = vmatprep.subr.bf16.mxu0 0
      %614 = vmatpush1.bf16.msra.mxu0 0
      %615 = vmatprep.subr.bf16.mxu0 0
      %616 = vmatpush1.bf16.msra.mxu0 0
      %617 = vmatprep.subr.bf16.mxu0 0
      %618 = vmatpush1.bf16.msra.mxu0 0
      %619 = vmatprep.subr.bf16.mxu0 0
      %620 = vmatpush1.bf16.msra.mxu0 0
      %621 = vmatprep.subr.bf16.mxu0 0
      %622 = vmatpush1.bf16.msra.mxu0 %v600
      %623 = vmatprep.subr.bf16.mxu0 0
      %624 = vmatpush1.bf16.msra.mxu0 %v598
      %625 = vmatprep.subr.bf16.mxu0 0
      %626 = vmatpush2.bf16.msra.mxu0 0
      %627 = vmatprep.subr.bf16.mxu0 0
      %628 = vmatpush2.bf16.msra.mxu0 0
      %629 = vmatprep.subr.bf16.mxu0 0
      %630 = vmatpush2.bf16.msra.mxu0 0
      %631 = vmatprep.subr.bf16.mxu0 0
      %632 = vmatpush2.bf16.msra.mxu0 0
      %633 = vmatprep.subr.bf16.mxu0 0
      %634 = vmatpush2.bf16.msra.mxu0 0
      %635 = vmatprep.subr.bf16.mxu0 0
      %636 = vmatpush2.bf16.msra.mxu0 0
      %637 = vmatprep.subr.bf16.mxu0 0
      %638 = vmatpush2.bf16.msra.mxu0 0
      %639 = vmatprep.subr.bf16.mxu0 0
      %640 = vmatpush2.bf16.msra.mxu0 0
      %641 = vmatprep.mubr.bf16.mxu0 0
      %642 = vmatmul.mubr.bf16.gmra.mxu0 %v604
      %v643 = vpop.f32.mrf.mxu0
      %v644 = vadd.f32 0.0, %v643
      %v645 = vpop.f32.mrf.mxu0
      %v646 = vpop.f32.mrf.mxu0
      %v647 = vadd.f32 0.0, %v646
      %v648 = vpop.f32.mrf.mxu0
      %649 = vmatprep.mubr.bf16.mxu0 0
      %650 = vmatmul.mubr.bf16.gmra.mxu0 %v607
      %v651 = vpop.f32.mrf.mxu0
      %v652 = vadd.f32 0.0, %v651
      %v653 = vpop.f32.mrf.mxu0
      %v654 = vpop.f32.mrf.mxu0
      %v655 = vadd.f32 0.0, %v654
      %v656 = vpop.f32.mrf.mxu0
      %657 = vdwg.mxu0
      %v658 = vadd.f32 %v578, %v644
      %v659 = vadd.f32 %v579, %v647
      %v660 = vadd.f32 %v580, %v652
      %v661 = vadd.f32 %v581, %v655
      %s662 = scalar_lea.vmem %s1, 80
      %v663 = vld [vmem:[%s662] sm:$0xf]
      %v664 = vld [vmem:[%s662 + $0x4] sm:$0xf]
      %v665 = vld [vmem:[%s662 + $0x8] sm:$0xf]
      %v666 = vld [vmem:[%s662 + $0xc] sm:$0xf]
      %v671 = vunpack.c.l.b16 %v663
      %v672 = vunpack.c.l.b16 %v664
      %v673 = vunpack.c.l.b16 %v665
      %v674 = vunpack.c.l.b16 %v666
      %v675 = vpack.c.b16 %v672, %v671
      %v676 = vpack.c.b16 %v674, %v673
      %677 = vrot.lane.b32.xlu0 %v291, 116
      %v678 = vpop.permute.xlu0 %677
      %679 = vrot.lane.b32.xlu0 %v292, 116
      %v680 = vpop.permute.xlu0 %679
      %v684 = vsel %vm299, %v675, 0
      %v687 = vsel %vm299, %v676, 0
      %689 = vmatprep.subr.bf16.mxu0 0
      %690 = vmatpush1.bf16.msra.mxu0 0
      %691 = vmatprep.subr.bf16.mxu0 0
      %692 = vmatpush1.bf16.msra.mxu0 0
      %693 = vmatprep.subr.bf16.mxu0 0
      %694 = vmatpush1.bf16.msra.mxu0 0
      %695 = vmatprep.subr.bf16.mxu0 0
      %696 = vmatpush1.bf16.msra.mxu0 0
      %697 = vmatprep.subr.bf16.mxu0 0
      %698 = vmatpush1.bf16.msra.mxu0 0
      %699 = vmatprep.subr.bf16.mxu0 0
      %700 = vmatpush1.bf16.msra.mxu0 0
      %701 = vmatprep.subr.bf16.mxu0 0
      %702 = vmatpush1.bf16.msra.mxu0 %v680
      %703 = vmatprep.subr.bf16.mxu0 0
      %704 = vmatpush1.bf16.msra.mxu0 %v678
      %705 = vmatprep.subr.bf16.mxu0 0
      %706 = vmatpush2.bf16.msra.mxu0 0
      %707 = vmatprep.subr.bf16.mxu0 0
      %708 = vmatpush2.bf16.msra.mxu0 0
      %709 = vmatprep.subr.bf16.mxu0 0
      %710 = vmatpush2.bf16.msra.mxu0 0
      %711 = vmatprep.subr.bf16.mxu0 0
      %712 = vmatpush2.bf16.msra.mxu0 0
      %713 = vmatprep.subr.bf16.mxu0 0
      %714 = vmatpush2.bf16.msra.mxu0 0
      %715 = vmatprep.subr.bf16.mxu0 0
      %716 = vmatpush2.bf16.msra.mxu0 0
      %717 = vmatprep.subr.bf16.mxu0 0
      %718 = vmatpush2.bf16.msra.mxu0 0
      %719 = vmatprep.subr.bf16.mxu0 0
      %720 = vmatpush2.bf16.msra.mxu0 0
      %721 = vmatprep.mubr.bf16.mxu0 0
      %722 = vmatmul.mubr.bf16.gmra.mxu0 %v684
      %v723 = vpop.f32.mrf.mxu0
      %v724 = vadd.f32 0.0, %v723
      %v725 = vpop.f32.mrf.mxu0
      %v726 = vpop.f32.mrf.mxu0
      %v727 = vadd.f32 0.0, %v726
      %v728 = vpop.f32.mrf.mxu0
      %729 = vmatprep.mubr.bf16.mxu0 0
      %730 = vmatmul.mubr.bf16.gmra.mxu0 %v687
      %v731 = vpop.f32.mrf.mxu0
      %v732 = vadd.f32 0.0, %v731
      %v733 = vpop.f32.mrf.mxu0
      %v734 = vpop.f32.mrf.mxu0
      %v735 = vadd.f32 0.0, %v734
      %v736 = vpop.f32.mrf.mxu0
      %737 = vdwg.mxu0
      %v738 = vadd.f32 %v658, %v724
      %v739 = vadd.f32 %v659, %v727
      %v740 = vadd.f32 %v660, %v732
      %v741 = vadd.f32 %v661, %v735
      %s742 = scalar_lea.vmem %s1, 96
      %v743 = vld [vmem:[%s742] sm:$0xf]
      %v744 = vld [vmem:[%s742 + $0x4] sm:$0xf]
      %v745 = vld [vmem:[%s742 + $0x8] sm:$0xf]
      %v746 = vld [vmem:[%s742 + $0xc] sm:$0xf]
      %v751 = vunpack.c.l.b16 %v743
      %v752 = vunpack.c.l.b16 %v744
      %v753 = vunpack.c.l.b16 %v745
      %v754 = vunpack.c.l.b16 %v746
      %v755 = vpack.c.b16 %v752, %v751
      %v756 = vpack.c.b16 %v754, %v753
      %757 = vrot.lane.b32.xlu0 %v291, 108
      %v758 = vpop.permute.xlu0 %757
      %759 = vrot.lane.b32.xlu0 %v292, 108
      %v760 = vpop.permute.xlu0 %759
      %v764 = vsel %vm299, %v755, 0
      %v767 = vsel %vm299, %v756, 0
      %769 = vmatprep.subr.bf16.mxu0 0
      %770 = vmatpush1.bf16.msra.mxu0 0
      %771 = vmatprep.subr.bf16.mxu0 0
      %772 = vmatpush1.bf16.msra.mxu0 0
      %773 = vmatprep.subr.bf16.mxu0 0
      %774 = vmatpush1.bf16.msra.mxu0 0
      %775 = vmatprep.subr.bf16.mxu0 0
      %776 = vmatpush1.bf16.msra.mxu0 0
      %777 = vmatprep.subr.bf16.mxu0 0
      %778 = vmatpush1.bf16.msra.mxu0 0
      %779 = vmatprep.subr.bf16.mxu0 0
      %780 = vmatpush1.bf16.msra.mxu0 0
      %781 = vmatprep.subr.bf16.mxu0 0
      %782 = vmatpush1.bf16.msra.mxu0 %v760
      %783 = vmatprep.subr.bf16.mxu0 0
      %784 = vmatpush1.bf16.msra.mxu0 %v758
      %785 = vmatprep.subr.bf16.mxu0 0
      %786 = vmatpush2.bf16.msra.mxu0 0
      %787 = vmatprep.subr.bf16.mxu0 0
      %788 = vmatpush2.bf16.msra.mxu0 0
      %789 = vmatprep.subr.bf16.mxu0 0
      %790 = vmatpush2.bf16.msra.mxu0 0
      %791 = vmatprep.subr.bf16.mxu0 0
      %792 = vmatpush2.bf16.msra.mxu0 0
      %793 = vmatprep.subr.bf16.mxu0 0
      %794 = vmatpush2.bf16.msra.mxu0 0
      %795 = vmatprep.subr.bf16.mxu0 0
      %796 = vmatpush2.bf16.msra.mxu0 0
      %797 = vmatprep.subr.bf16.mxu0 0
      %798 = vmatpush2.bf16.msra.mxu0 0
      %799 = vmatprep.subr.bf16.mxu0 0
      %800 = vmatpush2.bf16.msra.mxu0 0
      %801 = vmatprep.mubr.bf16.mxu0 0
      %802 = vmatmul.mubr.bf16.gmra.mxu0 %v764
      %v803 = vpop.f32.mrf.mxu0
      %v804 = vadd.f32 0.0, %v803
      %v805 = vpop.f32.mrf.mxu0
      %v806 = vpop.f32.mrf.mxu0
      %v807 = vadd.f32 0.0, %v806
      %v808 = vpop.f32.mrf.mxu0
      %809 = vmatprep.mubr.bf16.mxu0 0
      %810 = vmatmul.mubr.bf16.gmra.mxu0 %v767
      %v811 = vpop.f32.mrf.mxu0
      %v812 = vadd.f32 0.0, %v811
      %v813 = vpop.f32.mrf.mxu0
      %v814 = vpop.f32.mrf.mxu0
      %v815 = vadd.f32 0.0, %v814
      %v816 = vpop.f32.mrf.mxu0
      %817 = vdwg.mxu0
      %v818 = vadd.f32 %v738, %v804
      %v819 = vadd.f32 %v739, %v807
      %v820 = vadd.f32 %v740, %v812
      %v821 = vadd.f32 %v741, %v815
      %s822 = scalar_lea.vmem %s1, 112
      %v823 = vld [vmem:[%s822] sm:$0xf]
      %v824 = vld [vmem:[%s822 + $0x4] sm:$0xf]
      %v825 = vld [vmem:[%s822 + $0x8] sm:$0xf]
      %v826 = vld [vmem:[%s822 + $0xc] sm:$0xf]
      %v831 = vunpack.c.l.b16 %v823
      %v832 = vunpack.c.l.b16 %v824
      %v833 = vunpack.c.l.b16 %v825
      %v834 = vunpack.c.l.b16 %v826
      %v835 = vpack.c.b16 %v832, %v831
      %v836 = vpack.c.b16 %v834, %v833
      %837 = vrot.lane.b32.xlu0 %v291, 107
      %v838 = vpop.permute.xlu0 %837
      %839 = vrot.lane.b32.xlu0 %v292, 107
      %v840 = vpop.permute.xlu0 %839
      %v844 = vsel %vm299, %v835, 0
      %v847 = vsel %vm299, %v836, 0
      %849 = vmatprep.subr.bf16.mxu0 0
      %850 = vmatpush1.bf16.msra.mxu0 0
      %851 = vmatprep.subr.bf16.mxu0 0
      %852 = vmatpush1.bf16.msra.mxu0 0
      %853 = vmatprep.subr.bf16.mxu0 0
      %854 = vmatpush1.bf16.msra.mxu0 0
      %855 = vmatprep.subr.bf16.mxu0 0
      %856 = vmatpush1.bf16.msra.mxu0 0
      %857 = vmatprep.subr.bf16.mxu0 0
      %858 = vmatpush1.bf16.msra.mxu0 0
      %859 = vmatprep.subr.bf16.mxu0 0
      %860 = vmatpush1.bf16.msra.mxu0 0
      %861 = vmatprep.subr.bf16.mxu0 0
      %862 = vmatpush1.bf16.msra.mxu0 %v840
      %863 = vmatprep.subr.bf16.mxu0 0
      %864 = vmatpush1.bf16.msra.mxu0 %v838
      %865 = vmatprep.subr.bf16.mxu0 0
      %866 = vmatpush2.bf16.msra.mxu0 0
      %867 = vmatprep.subr.bf16.mxu0 0
      %868 = vmatpush2.bf16.msra.mxu0 0
      %869 = vmatprep.subr.bf16.mxu0 0
      %870 = vmatpush2.bf16.msra.mxu0 0
      %871 = vmatprep.subr.bf16.mxu0 0
      %872 = vmatpush2.bf16.msra.mxu0 0
      %873 = vmatprep.subr.bf16.mxu0 0
      %874 = vmatpush2.bf16.msra.mxu0 0
      %875 = vmatprep.subr.bf16.mxu0 0
      %876 = vmatpush2.bf16.msra.mxu0 0
      %877 = vmatprep.subr.bf16.mxu0 0
      %878 = vmatpush2.bf16.msra.mxu0 0
      %879 = vmatprep.subr.bf16.mxu0 0
      %880 = vmatpush2.bf16.msra.mxu0 0
      %881 = vmatprep.mubr.bf16.mxu0 0
      %882 = vmatmul.mubr.bf16.gmra.mxu0 %v844
      %v883 = vpop.f32.mrf.mxu0
      %v884 = vadd.f32 0.0, %v883
      %v885 = vpop.f32.mrf.mxu0
      %v886 = vpop.f32.mrf.mxu0
      %v887 = vadd.f32 0.0, %v886
      %v888 = vpop.f32.mrf.mxu0
      %889 = vmatprep.mubr.bf16.mxu0 0
      %890 = vmatmul.mubr.bf16.gmra.mxu0 %v847
      %v891 = vpop.f32.mrf.mxu0
      %v892 = vadd.f32 0.0, %v891
      %v893 = vpop.f32.mrf.mxu0
      %v894 = vpop.f32.mrf.mxu0
      %v895 = vadd.f32 0.0, %v894
      %v896 = vpop.f32.mrf.mxu0
      %897 = vdwg.mxu0
      %v898 = vadd.f32 %v818, %v884
      %v899 = vadd.f32 %v819, %v887
      %v900 = vadd.f32 %v820, %v892
      %v901 = vadd.f32 %v821, %v895
      %s902 = scalar_lea.vmem %s1, 128
      %v903 = vld [vmem:[%s902] sm:$0xf]
      %v904 = vld [vmem:[%s902 + $0x4] sm:$0xf]
      %v905 = vld [vmem:[%s902 + $0x8] sm:$0xf]
      %v906 = vld [vmem:[%s902 + $0xc] sm:$0xf]
      %v911 = vunpack.c.l.b16 %v903
      %v912 = vunpack.c.l.b16 %v904
      %v913 = vunpack.c.l.b16 %v905
      %v914 = vunpack.c.l.b16 %v906
      %v915 = vpack.c.b16 %v912, %v911
      %v916 = vpack.c.b16 %v914, %v913
      %917 = vrot.lane.b32.xlu0 %v291, 106
      %v918 = vpop.permute.xlu0 %917
      %919 = vrot.lane.b32.xlu0 %v292, 106
      %v920 = vpop.permute.xlu0 %919
      %v924 = vsel %vm299, %v915, 0
      %v927 = vsel %vm299, %v916, 0
      %929 = vmatprep.subr.bf16.mxu0 0
      %930 = vmatpush1.bf16.msra.mxu0 0
      %931 = vmatprep.subr.bf16.mxu0 0
      %932 = vmatpush1.bf16.msra.mxu0 0
      %933 = vmatprep.subr.bf16.mxu0 0
      %934 = vmatpush1.bf16.msra.mxu0 0
      %935 = vmatprep.subr.bf16.mxu0 0
      %936 = vmatpush1.bf16.msra.mxu0 0
      %937 = vmatprep.subr.bf16.mxu0 0
      %938 = vmatpush1.bf16.msra.mxu0 0
      %939 = vmatprep.subr.bf16.mxu0 0
      %940 = vmatpush1.bf16.msra.mxu0 0
      %941 = vmatprep.subr.bf16.mxu0 0
      %942 = vmatpush1.bf16.msra.mxu0 %v920
      %943 = vmatprep.subr.bf16.mxu0 0
      %944 = vmatpush1.bf16.msra.mxu0 %v918
      %945 = vmatprep.subr.bf16.mxu0 0
      %946 = vmatpush2.bf16.msra.mxu0 0
      %947 = vmatprep.subr.bf16.mxu0 0
      %948 = vmatpush2.bf16.msra.mxu0 0
      %949 = vmatprep.subr.bf16.mxu0 0
      %950 = vmatpush2.bf16.msra.mxu0 0
      %951 = vmatprep.subr.bf16.mxu0 0
      %952 = vmatpush2.bf16.msra.mxu0 0
      %953 = vmatprep.subr.bf16.mxu0 0
      %954 = vmatpush2.bf16.msra.mxu0 0
      %955 = vmatprep.subr.bf16.mxu0 0
      %956 = vmatpush2.bf16.msra.mxu0 0
      %957 = vmatprep.subr.bf16.mxu0 0
      %958 = vmatpush2.bf16.msra.mxu0 0
      %959 = vmatprep.subr.bf16.mxu0 0
      %960 = vmatpush2.bf16.msra.mxu0 0
      %961 = vmatprep.mubr.bf16.mxu0 0
      %962 = vmatmul.mubr.bf16.gmra.mxu0 %v924
      %v963 = vpop.f32.mrf.mxu0
      %v964 = vadd.f32 0.0, %v963
      %v965 = vpop.f32.mrf.mxu0
      %v966 = vpop.f32.mrf.mxu0
      %v967 = vadd.f32 0.0, %v966
      %v968 = vpop.f32.mrf.mxu0
      %969 = vmatprep.mubr.bf16.mxu0 0
      %970 = vmatmul.mubr.bf16.gmra.mxu0 %v927
      %v971 = vpop.f32.mrf.mxu0
      %v972 = vadd.f32 0.0, %v971
      %v973 = vpop.f32.mrf.mxu0
      %v974 = vpop.f32.mrf.mxu0
      %v975 = vadd.f32 0.0, %v974
      %v976 = vpop.f32.mrf.mxu0
      %977 = vdwg.mxu0
      %v978 = vadd.f32 %v898, %v964
      %v979 = vadd.f32 %v899, %v967
      %v980 = vadd.f32 %v900, %v972
      %v981 = vadd.f32 %v901, %v975
      %v982 = vld [vmem:[%s250] sm:$0xff]
      %v983 = vld [vmem:[%s250 + $0x8] sm:$0xff]
      %v984 = vld [vmem:[%s250 + $0x10] sm:$0xff]
      %v985 = vld [vmem:[%s250 + $0x18] sm:$0xff]
      %987 = vset.pattern.permute.xlu0 0
      %988 = vperm.xlu0 %987, %v982
      %v989 = vpop.permute.xlu0 %988
      %992 = vset.pattern.permute.xlu0 0
      %993 = vperm.xlu0 %992, %v983
      %v994 = vpop.permute.xlu0 %993
      %997 = vset.pattern.permute.xlu0 0
      %998 = vperm.xlu0 %997, %v984
      %v999 = vpop.permute.xlu0 %998
      %1002 = vset.pattern.permute.xlu0 0
      %1003 = vperm.xlu0 %1002, %v985
      %v1004 = vpop.permute.xlu0 %1003
      %v1006 = vadd.f32 %v978, %v989
      %v1007 = vadd.f32 %v979, %v994
      %v1008 = vadd.f32 %v980, %v999
      %v1009 = vadd.f32 %v981, %v1004
      %v1010 = vld [vmem:[%s253] sm:$0x1]
      %1011 = vset.pattern.permute.xlu0 1
      %1012 = vperm.xlu0 %1011, %v982
      %v1013 = vpop.permute.xlu0 %1012
      %1015 = vset.pattern.permute.xlu0 1
      %1016 = vperm.xlu0 %1015, %v983
      %v1017 = vpop.permute.xlu0 %1016
      %1019 = vset.pattern.permute.xlu0 1
      %1020 = vperm.xlu0 %1019, %v984
      %v1021 = vpop.permute.xlu0 %1020
      %1023 = vset.pattern.permute.xlu0 1
      %1024 = vperm.xlu0 %1023, %v985
      %v1025 = vpop.permute.xlu0 %1024
      %v1028 = vlaneseq
      %v1029 = vshrl.u32 %v1028, 7
      %v1030 = vsub.s32 0, %v1029
      %v1031 = vrot.slane %v1010, %v1030
      %v1033 = vmul.f32 %v1013, %v1031
      %v1034 = vmul.f32 %v1017, %v1031
      %v1035 = vmul.f32 %v1021, %v1031
      %v1036 = vmul.f32 %v1025, %v1031
      %v1037 = vadd.f32 %v1006, %v1033
      %v1038 = vadd.f32 %v1007, %v1034
      %v1039 = vadd.f32 %v1008, %v1035
      %v1040 = vadd.f32 %v1009, %v1036
      %vm1041 = vcmp.ge.f32.partialorder %v1037, 0.0
      %vm1042 = vcmp.ge.f32.partialorder %v1038, 0.0
      %vm1043 = vcmp.ge.f32.partialorder %v1039, 0.0
      %vm1044 = vcmp.ge.f32.partialorder %v1040, 0.0
      %v1045 = vmul.f32 %v1037, 0.2
      %v1046 = vmul.f32 %v1038, 0.2
      %v1047 = vmul.f32 %v1039, 0.2
      %v1048 = vmul.f32 %v1040, 0.2
      %v1049 = vsel %vm1041, %v1037, %v1045
      %v1050 = vsel %vm1042, %v1038, %v1046
      %v1051 = vsel %vm1043, %v1039, %v1047
      %v1052 = vsel %vm1044, %v1040, %v1048
      %v1053 = vld [vmem:[%s4] sm:$0x1]
      %v1055 = vlaneseq
      %v1056 = vshrl.u32 %v1055, 7
      %v1057 = vsub.s32 0, %v1056
      %v1058 = vrot.slane %v1053, %v1057
      %v1060 = vmul.f32 %v1049, %v1058
      %v1061 = vmul.f32 %v1050, %v1058
      %v1062 = vmul.f32 %v1051, %v1058
      %v1063 = vmul.f32 %v1052, %v1058
      %vm1064 = vcmask 654336
      %v1065 = vsel %vm1064, %v1060, 0.0
      %1066 = vadd.xlane.f32.xlu0 %v1065
      %v1067 = vpop.xlane.xlu0 %1066
      %v1068 = vsel %vm1064, %v1061, 0.0
      %1069 = vadd.xlane.f32.xlu0 %v1068
      %v1070 = vpop.xlane.xlu0 %1069
      %v1071 = vsel %vm1064, %v1062, 0.0
      %1072 = vadd.xlane.f32.xlu0 %v1071
      %v1073 = vpop.xlane.xlu0 %1072
      %v1074 = vsel %vm1064, %v1063, 0.0
      %1075 = vadd.xlane.f32.xlu0 %v1074
      %v1076 = vpop.xlane.xlu0 %1075
      %v1077 = vmul.f32 %v1067, 0.015625
      %v1078 = vmul.f32 %v1070, 0.015625
      %v1079 = vmul.f32 %v1073, 0.015625
      %v1080 = vmul.f32 %v1076, 0.015625
      %v1081 = vmul.f32 %v1060, %v1060
      %v1082 = vmul.f32 %v1061, %v1061
      %v1083 = vmul.f32 %v1062, %v1062
      %v1084 = vmul.f32 %v1063, %v1063
      %v1085 = vsel %vm1064, %v1081, 0.0
      %1086 = vadd.xlane.f32.xlu0 %v1085
      %v1087 = vpop.xlane.xlu0 %1086
      %v1088 = vsel %vm1064, %v1082, 0.0
      %1089 = vadd.xlane.f32.xlu0 %v1088
      %v1090 = vpop.xlane.xlu0 %1089
      %v1091 = vsel %vm1064, %v1083, 0.0
      %1092 = vadd.xlane.f32.xlu0 %v1091
      %v1093 = vpop.xlane.xlu0 %1092
      %v1094 = vsel %vm1064, %v1084, 0.0
      %1095 = vadd.xlane.f32.xlu0 %v1094
      %v1096 = vpop.xlane.xlu0 %1095
      %v1097 = vmul.f32 %v1087, 0.015625
      %v1098 = vmul.f32 %v1090, 0.015625
      %v1099 = vmul.f32 %v1093, 0.015625
      %v1100 = vmul.f32 %v1096, 0.015625
      %v1101 = vmul.f32 %v1077, %v1077
      %v1102 = vmul.f32 %v1078, %v1078
      %v1103 = vmul.f32 %v1079, %v1079
      %v1104 = vmul.f32 %v1080, %v1080
      %v1105 = vsub.f32 %v1097, %v1101
      %v1106 = vsub.f32 %v1098, %v1102
      %v1107 = vsub.f32 %v1099, %v1103
      %v1108 = vsub.f32 %v1100, %v1104
      %v1109 = vsub.f32 %v1060, %v1077
      %v1110 = vsub.f32 %v1061, %v1078
      %v1111 = vsub.f32 %v1062, %v1079
      %v1112 = vsub.f32 %v1063, %v1080
      %v1113 = vmax.f32 %v1105, 0.0
      %v1114 = vmax.f32 %v1106, 0.0
      %v1115 = vmax.f32 %v1107, 0.0
      %v1116 = vmax.f32 %v1108, 0.0
      %v1117 = vadd.f32 %v1113, 1e-05
      %v1118 = vadd.f32 %v1114, 1e-05
      %v1119 = vadd.f32 %v1115, 1e-05
      %v1120 = vadd.f32 %v1116, 1e-05
      %v1121 = vrsqrt.pop %v1117
      %v1122 = vrsqrt.pop %v1118
      %v1123 = vrsqrt.pop %v1119
      %v1124 = vrsqrt.pop %v1120
      %v1125 = vmul.f32 %v1109, %v1121
      %v1126 = vmul.f32 %v1110, %v1122
      %v1127 = vmul.f32 %v1111, %v1123
      %v1128 = vmul.f32 %v1112, %v1124
      %v1129 = vadd.f32 %v982, 1.0
      %v1130 = vadd.f32 %v983, 1.0
      %v1131 = vadd.f32 %v984, 1.0
      %v1132 = vadd.f32 %v985, 1.0
      %1134 = vset.pattern.permute.xlu0 2
      %1135 = vperm.xlu0 %1134, %v1129
      %v1136 = vpop.permute.xlu0 %1135
      %1139 = vset.pattern.permute.xlu0 2
      %1140 = vperm.xlu0 %1139, %v1130
      %v1141 = vpop.permute.xlu0 %1140
      %1144 = vset.pattern.permute.xlu0 2
      %1145 = vperm.xlu0 %1144, %v1131
      %v1146 = vpop.permute.xlu0 %1145
      %1149 = vset.pattern.permute.xlu0 2
      %1150 = vperm.xlu0 %1149, %v1132
      %v1151 = vpop.permute.xlu0 %1150
      %v1153 = vmul.f32 %v1125, %v1136
      %v1154 = vmul.f32 %v1126, %v1141
      %v1155 = vmul.f32 %v1127, %v1146
      %v1156 = vmul.f32 %v1128, %v1151
      %1157 = vset.pattern.permute.xlu0 3
      %1158 = vperm.xlu0 %1157, %v982
      %v1159 = vpop.permute.xlu0 %1158
      %1161 = vset.pattern.permute.xlu0 3
      %1162 = vperm.xlu0 %1161, %v983
      %v1163 = vpop.permute.xlu0 %1162
      %1165 = vset.pattern.permute.xlu0 3
      %1166 = vperm.xlu0 %1165, %v984
      %v1167 = vpop.permute.xlu0 %1166
      %1169 = vset.pattern.permute.xlu0 3
      %1170 = vperm.xlu0 %1169, %v985
      %v1171 = vpop.permute.xlu0 %1170
      %v1173 = vadd.f32 %v1153, %v1159
      %v1174 = vadd.f32 %v1154, %v1163
      %v1175 = vadd.f32 %v1155, %v1167
      %v1176 = vadd.f32 %v1156, %v1171
      %v1177 = vpack.c.bf16 %v1174, %v1173
      %v1178 = vpack.c.bf16 %v1176, %v1175
      %v1181 = vunpack.c.l.b16 %v1177
      %v1182 = vunpack.c.h.b16 %v1177
      %v1183 = vunpack.c.l.b16 %v1178
      %v1184 = vunpack.c.h.b16 %v1178
      %v1185 = vpack.c.b16 %v1181, %v1181
      %v1186 = vpack.c.b16 %v1182, %v1182
      %v1187 = vpack.c.b16 %v1183, %v1183
      %v1188 = vpack.c.b16 %v1184, %v1184
      %vm1193 = vcmask 650240
      %1194 = vst.msk [vmem:[%s258] sm:$0xf] %vm1193, %v1185
      %1195 = vst.msk [vmem:[%s258 + $0x4] sm:$0xf] %vm1193, %v1186
      %1196 = vst.msk [vmem:[%s258 + $0x8] sm:$0xf] %vm1193, %v1187
      %1197 = vst.msk [vmem:[%s258 + $0xc] sm:$0xf] %vm1193, %v1188
      %p1198 = scmp.lt.s32.totalorder %s16, 1
      %s1199 = scalar_select %p1198, %s16, 1
      %s1200 = smul.addr %s1199, 4
      %s1201 = smul.addr %s1200, 4
      %s1202 = scalar_lea.vmem %s5, %s1201
      // Predicated region
      $region41: #{g_synthesis_forward.10} parent=39 // pred_check
        %p1203 = pneg %p154
      $region42: #{g_synthesis_forward.10} parent=39 // pred_check_branch
        %1205 = sbr.rel (%p1203) target = $region44
      $region43: #{g_synthesis_forward.10} parent=39 // pred_region
        _
      $region44: #{g_synthesis_forward.10} parent=39 // pred_fallthru
        _
    $region40: #{g_synthesis_forward.10} parent=5 // pred_fallthru
      _
    %p1206 = scmp.le.s32.totalorder 2, %s11
    // Predicated region
    $region45: #{g_synthesis_forward.10} parent=5 // pred_check
      %p1207 = pneg %p1206
    $region46: #{g_synthesis_forward.10} parent=5 // pred_check_branch
      %1209 = sbr.rel (%p1207) target = $region48
    $region47: #{g_synthesis_forward.10} parent=5 // pred_region
      %s1210 = ssub.s32 %s11, 2
      // Predicated region
      $region49: #{g_synthesis_forward.10} parent=47 // pred_check
        %p1211 = pneg %p160
      $region50: #{g_synthesis_forward.10} parent=47 // pred_check_branch
        %1213 = sbr.rel (%p1211) target = $region52
      $region51: #{g_synthesis_forward.10} parent=47 // pred_region
        %p1214 = scmp.lt.s32.totalorder %s17, 1
        %s1215 = scalar_select %p1214, %s17, 1
        %s1216 = smul.addr %s1215, 4
        %s1217 = smul.addr %s1216, 4
        %s1218 = scalar_lea.vmem %s5, %s1217
      $region52: #{g_synthesis_forward.10} parent=47 // pred_fallthru
        _
    $region48: #{g_synthesis_forward.10} parent=5 // pred_fallthru
      _
  $region6: #{g_synthesis_forward.10} parent=0 // loop_footer
    %s15 = sadd.s32 1, %s11
  $region7: #{g_synthesis_forward.10} parent=0 // loop_footer_branch
    %10 = sbr.rel target = $region3
  $region8: #{g_synthesis_forward.10} parent=0 // loop_exit
    _

// kernel: g_synthesis_forward.11
$region0: #{g_synthesis_forward.11}
  #allocation0 [shape = 'u32[]', space=smem, size = 0x4, offset = 0x4, fixed_abs, tag = 'smem constant byte address 0x4 - core index']
  #allocation1 [shape = 'u32[144,128]{1,0:T(1,128)}', space=vmem, size = 0x12000, scoped, tag = 'internal scratch']
  #allocation2 [shape = 'f32[16,362]{1,0:T(8,128)}', space=vmem, size = 0x6000, scoped, tag = 'scratch operand']
  %s0 = inlined_call_operand.vmem [shape: bf16[2,32,404], index: 0, kind: input, shape index: {}]
  %s1 = inlined_call_operand.vmem [shape: bf16[9,16,32], index: 1, kind: input, shape index: {}]
  %s2 = inlined_call_operand.vmem [shape: f32[2,16,4], index: 2, kind: input, shape index: {}]
  %s3 = inlined_call_operand.vmem [shape: f32[2,1,320], index: 3, kind: input, shape index: {}]
  %s4 = inlined_call_operand.vmem [shape: f32[1,362], index: 4, kind: input, shape index: {}]
  %s5 = inlined_call_operand.vmem [shape: f32[1,320], index: 5, kind: input, shape index: {}]
  %s6 = inlined_call_operand.vmem [shape: bf16[2,16,320], index: 6, kind: output, shape index: {}]
  %s7 = sld [smem:[#allocation0]]
  $region57: #{g_synthesis_forward.11} parent=0
    _
  %s9 = ssub.s32 1, %s7
  %s10 = scalar_select 0, %s9, %s7
  loop: start=0, step=1, limit=4
  $region2: #{g_synthesis_forward.11} parent=0 // loop_pre_header
    _
  $region3: #{g_synthesis_forward.11} parent=0 // loop_header
    %s12 = sphi 0, %s16
    %p13 = scmp.ge.s32.totalorder %s12, 4
    %s22 = sphi 0, %s24
    %s25 = sphi 0, %s22
    %s26 = sphi 0, %s25
    %s42 = sphi 0, %s26
    %s46 = sphi 0, %s46
    %s48 = sphi 0, %s46
    %s49 = sphi 0, %s48
    %s63 = sphi 0, %s49
    %s69 = sphi 0, %s71
    %s72 = sphi 0, %s69
    %s73 = sphi 0, %s72
    %s89 = sphi 0, %s73
    %s95 = sphi 0, %s97
    %s98 = sphi 0, %s95
    %s99 = sphi 0, %s98
    %s115 = sphi 0, %s99
    %s119 = sphi 0, %s119
    %s121 = sphi 0, %s119
    %s122 = sphi 0, %s121
    %s136 = sphi 0, %s122
    %s140 = sphi 0, %s140
    %s142 = sphi 0, %s140
    %s143 = sphi 0, %s142
    %s157 = sphi 0, %s143
    %s163 = sphi 0, %s165
    %s166 = sphi 0, %s163
    %s167 = sphi 0, %s166
    %s183 = sphi 0, %s167
  $region4: #{g_synthesis_forward.11} parent=0 // loop_header_branch
    %15 = sbr.rel (%p13) target = $region8
  $region5: #{g_synthesis_forward.11} parent=0 // loop_body
    %s17 = ssub.s32 %s12, 1
    %s18 = ssub.s32 %s12, 2
    %s19 = sadd.s32 %s12, 1
    %s20 = ssub.s32 %s12, %s19
    %p21 = scmp.eq.s32.totalorder %s20, 0
    %s23 = sadd.s32 %s22, 1
    %s24 = scalar_select %p21, %s22, %s23
    %p27 = pneg %p21
    %p28 = scmp.eq.s32.totalorder %s12, 1
    %p29 = por %p27, %p28
    %p30 = scmp.ne.s32.totalorder %s22, %s25
    %p31 = scmp.eq.s32.totalorder %s12, 0
    %p32 = por %p30, %p31
    %p33 = scmp.ne.s32.totalorder %s22, %s25
    %p34 = scmp.eq.s32.totalorder %s17, 1
    %p35 = por %p33, %p34
    %p36 = scmp.ne.s32.totalorder %s25, %s26
    %p37 = scmp.eq.s32.totalorder %s17, 0
    %p38 = por %p36, %p37
    %p39 = scmp.ne.s32.totalorder %s25, %s26
    %p40 = scmp.eq.s32.totalorder %s18, 1
    %p41 = por %p39, %p40
    %p43 = scmp.ne.s32.totalorder %s26, %s42
    %p44 = scmp.eq.s32.totalorder %s18, 0
    %p45 = por %p43, %p44
    %s47 = sadd.s32 %s46, 1
    %p50 = scmp.eq.s32.totalorder %s12, 1
    %p51 = scmp.ne.s32.totalorder %s46, %s48
    %p52 = scmp.eq.s32.totalorder %s12, 0
    %p53 = por %p51, %p52
    %p54 = scmp.ne.s32.totalorder %s46, %s48
    %p55 = scmp.eq.s32.totalorder %s17, 1
    %p56 = por %p54, %p55
    %p57 = scmp.ne.s32.totalorder %s48, %s49
    %p58 = scmp.eq.s32.totalorder %s17, 0
    %p59 = por %p57, %p58
    %p60 = scmp.ne.s32.totalorder %s48, %s49
    %p61 = scmp.eq.s32.totalorder %s18, 1
    %p62 = por %p60, %p61
    %p64 = scmp.ne.s32.totalorder %s49, %s63
    %p65 = scmp.eq.s32.totalorder %s18, 0
    %p66 = por %p64, %p65
    %s67 = ssub.s32 %s12, %s19
    %p68 = scmp.eq.s32.totalorder %s67, 0
    %s70 = sadd.s32 %s69, 1
    %s71 = scalar_select %p68, %s69, %s70
    %p74 = pneg %p68
    %p75 = scmp.eq.s32.totalorder %s12, 1
    %p76 = por %p74, %p75
    %p77 = scmp.ne.s32.totalorder %s69, %s72
    %p78 = scmp.eq.s32.totalorder %s12, 0
    %p79 = por %p77, %p78
    %p80 = scmp.ne.s32.totalorder %s69, %s72
    %p81 = scmp.eq.s32.totalorder %s17, 1
    %p82 = por %p80, %p81
    %p83 = scmp.ne.s32.totalorder %s72, %s73
    %p84 = scmp.eq.s32.totalorder %s17, 0
    %p85 = por %p83, %p84
    %p86 = scmp.ne.s32.totalorder %s72, %s73
    %p87 = scmp.eq.s32.totalorder %s18, 1
    %p88 = por %p86, %p87
    %p90 = scmp.ne.s32.totalorder %s73, %s89
    %p91 = scmp.eq.s32.totalorder %s18, 0
    %p92 = por %p90, %p91
    %s93 = ssub.s32 %s12, %s19
    %p94 = scmp.eq.s32.totalorder %s93, 0
    %s96 = sadd.s32 %s95, 1
    %s97 = scalar_select %p94, %s95, %s96
    %p100 = pneg %p94
    %p101 = scmp.eq.s32.totalorder %s12, 1
    %p102 = por %p100, %p101
    %p103 = scmp.ne.s32.totalorder %s95, %s98
    %p104 = scmp.eq.s32.totalorder %s12, 0
    %p105 = por %p103, %p104
    %p106 = scmp.ne.s32.totalorder %s95, %s98
    %p107 = scmp.eq.s32.totalorder %s17, 1
    %p108 = por %p106, %p107
    %p109 = scmp.ne.s32.totalorder %s98, %s99
    %p110 = scmp.eq.s32.totalorder %s17, 0
    %p111 = por %p109, %p110
    %p112 = scmp.ne.s32.totalorder %s98, %s99
    %p113 = scmp.eq.s32.totalorder %s18, 1
    %p114 = por %p112, %p113
    %p116 = scmp.ne.s32.totalorder %s99, %s115
    %p117 = scmp.eq.s32.totalorder %s18, 0
    %p118 = por %p116, %p117
    %s120 = sadd.s32 %s119, 1
    %p123 = scmp.eq.s32.totalorder %s12, 1
    %p124 = scmp.ne.s32.totalorder %s119, %s121
    %p125 = scmp.eq.s32.totalorder %s12, 0
    %p126 = por %p124, %p125
    %p127 = scmp.ne.s32.totalorder %s119, %s121
    %p128 = scmp.eq.s32.totalorder %s17, 1
    %p129 = por %p127, %p128
    %p130 = scmp.ne.s32.totalorder %s121, %s122
    %p131 = scmp.eq.s32.totalorder %s17, 0
    %p132 = por %p130, %p131
    %p133 = scmp.ne.s32.totalorder %s121, %s122
    %p134 = scmp.eq.s32.totalorder %s18, 1
    %p135 = por %p133, %p134
    %p137 = scmp.ne.s32.totalorder %s122, %s136
    %p138 = scmp.eq.s32.totalorder %s18, 0
    %p139 = por %p137, %p138
    %s141 = sadd.s32 %s140, 1
    %p144 = scmp.eq.s32.totalorder %s12, 1
    %p145 = scmp.ne.s32.totalorder %s140, %s142
    %p146 = scmp.eq.s32.totalorder %s12, 0
    %p147 = por %p145, %p146
    %p148 = scmp.ne.s32.totalorder %s140, %s142
    %p149 = scmp.eq.s32.totalorder %s17, 1
    %p150 = por %p148, %p149
    %p151 = scmp.ne.s32.totalorder %s142, %s143
    %p152 = scmp.eq.s32.totalorder %s17, 0
    %p153 = por %p151, %p152
    %p154 = scmp.ne.s32.totalorder %s142, %s143
    %p155 = scmp.eq.s32.totalorder %s18, 1
    %p156 = por %p154, %p155
    %p158 = scmp.ne.s32.totalorder %s143, %s157
    %p159 = scmp.eq.s32.totalorder %s18, 0
    %p160 = por %p158, %p159
    %s161 = ssub.s32 %s12, %s19
    %p162 = scmp.eq.s32.totalorder %s161, 0
    %s164 = sadd.s32 %s163, 1
    %s165 = scalar_select %p162, %s163, %s164
    %p168 = pneg %p162
    %p169 = scmp.eq.s32.totalorder %s12, 1
    %p170 = por %p168, %p169
    %p171 = scmp.ne.s32.totalorder %s163, %s166
    %p172 = scmp.eq.s32.totalorder %s12, 0
    %p173 = por %p171, %p172
    %p174 = scmp.ne.s32.totalorder %s163, %s166
    %p175 = scmp.eq.s32.totalorder %s17, 1
    %p176 = por %p174, %p175
    %p177 = scmp.ne.s32.totalorder %s166, %s167
    %p178 = scmp.eq.s32.totalorder %s17, 0
    %p179 = por %p177, %p178
    %p180 = scmp.ne.s32.totalorder %s166, %s167
    %p181 = scmp.eq.s32.totalorder %s18, 1
    %p182 = por %p180, %p181
    %p184 = scmp.ne.s32.totalorder %s167, %s183
    %p185 = scmp.eq.s32.totalorder %s18, 0
    %p186 = por %p184, %p185
    %p187 = scmp.le.s32.totalorder 1, %s12
    %p188 = scmp.lt.s32.totalorder %s12, 3
    %p189 = pnand %p187, %p188
    %p190 = pneg %p189
    // Predicated region
    $region9: #{g_synthesis_forward.11} parent=5 // pred_check
      _
    $region10: #{g_synthesis_forward.11} parent=5 // pred_check_branch
      %192 = sbr.rel (%p189) target = $region12
    $region11: #{g_synthesis_forward.11} parent=5 // pred_region
      %s193 = ssub.s32 %s12, 1
      // Predicated region
      $region13: #{g_synthesis_forward.11} parent=11 // pred_check
        %p194 = pneg %p59
      $region14: #{g_synthesis_forward.11} parent=11 // pred_check_branch
        %196 = sbr.rel (%p194) target = $region16
      $region15: #{g_synthesis_forward.11} parent=11 // pred_region
        _
      $region16: #{g_synthesis_forward.11} parent=11 // pred_fallthru
        _
      // Predicated region
      $region17: #{g_synthesis_forward.11} parent=11 // pred_check
        %p197 = pneg %p132
      $region18: #{g_synthesis_forward.11} parent=11 // pred_check_branch
        %199 = sbr.rel (%p197) target = $region20
      $region19: #{g_synthesis_forward.11} parent=11 // pred_region
        _
      $region20: #{g_synthesis_forward.11} parent=11 // pred_fallthru
        _
      // Predicated region
      $region21: #{g_synthesis_forward.11} parent=11 // pred_check
        %p200 = pneg %p153
      $region22: #{g_synthesis_forward.11} parent=11 // pred_check_branch
        %202 = sbr.rel (%p200) target = $region24
      $region23: #{g_synthesis_forward.11} parent=11 // pred_region
        _
      $region24: #{g_synthesis_forward.11} parent=11 // pred_fallthru
        _
    $region12: #{g_synthesis_forward.11} parent=5 // pred_fallthru
      _
    %p203 = scmp.lt.s32.totalorder %s12, 2
    // Predicated region
    $region25: #{g_synthesis_forward.11} parent=5 // pred_check
      %p204 = pneg %p203
    $region26: #{g_synthesis_forward.11} parent=5 // pred_check_branch
      %206 = sbr.rel (%p204) target = $region28
    $region27: #{g_synthesis_forward.11} parent=5 // pred_region
      // Predicated region
      $region29: #{g_synthesis_forward.11} parent=27 // pred_check
        %p207 = pneg %p32
      $region30: #{g_synthesis_forward.11} parent=27 // pred_check_branch
        %209 = sbr.rel (%p207) target = $region32
      $region31: #{g_synthesis_forward.11} parent=27 // pred_region
        %p210 = scmp.lt.s32.totalorder %s12, 1
        %s211 = scalar_select %p210, %s12, 1
        %s212 = smul.addr %s211, 16
        %s213 = smul.addr %s212, 4
        %s214 = scalar_lea.vmem %s0, %s213
      $region32: #{g_synthesis_forward.11} parent=27 // pred_fallthru
        _
      // Predicated region
      $region33: #{g_synthesis_forward.11} parent=27 // pred_check
        %p215 = pneg %p79
      $region34: #{g_synthesis_forward.11} parent=27 // pred_check_branch
        %217 = sbr.rel (%p215) target = $region36
      $region35: #{g_synthesis_forward.11} parent=27 // pred_region
        %p218 = scmp.lt.s32.totalorder %s12, 1
        %s219 = scalar_select %p218, %s12, 1
        %s220 = smul.addr %s219, 2
        %s221 = smul.addr %s220, 8
        %s222 = scalar_lea.vmem %s2, %s221
      $region36: #{g_synthesis_forward.11} parent=27 // pred_fallthru
        _
      // Predicated region
      $region37: #{g_synthesis_forward.11} parent=27 // pred_check
        %p223 = pneg %p105
      $region38: #{g_synthesis_forward.11} parent=27 // pred_check_branch
        %225 = sbr.rel (%p223) target = $region40
      $region39: #{g_synthesis_forward.11} parent=27 // pred_region
        %p226 = scmp.lt.s32.totalorder %s12, 1
        %s227 = scalar_select %p226, %s12, 1
        %s228 = smul.addr %s227, 3
        %s229 = scalar_lea.vmem %s3, %s228
      $region40: #{g_synthesis_forward.11} parent=27 // pred_fallthru
        _
    $region28: #{g_synthesis_forward.11} parent=5 // pred_fallthru
      _
    %p230 = scmp.le.s32.totalorder 1, %s12
    %p231 = scmp.lt.s32.totalorder %s12, 3
    %p232 = pnand %p230, %p231
    %p233 = pneg %p232
    // Predicated region
    $region41: #{g_synthesis_forward.11} parent=5 // pred_check
      _
    $region42: #{g_synthesis_forward.11} parent=5 // pred_check_branch
      %235 = sbr.rel (%p232) target = $region44
    $region43: #{g_synthesis_forward.11} parent=5 // pred_region
      %s236 = ssub.s32 %s12, 1
      %p237 = scmp.lt.s32.totalorder %s17, 1
      %s238 = scalar_select %p237, %s17, 1
      %s239 = smul.addr %s238, 16
      %s240 = smul.addr %s239, 4
      %s241 = scalar_lea.vmem %s0, %s240
      %p242 = pneg %p38
      %p243 = pneg %p35
      %p244 = pneg %p59
      %p245 = pneg %p56
      %p246 = scmp.lt.s32.totalorder %s17, 1
      %s247 = scalar_select %p246, %s17, 1
      %s248 = smul.addr %s247, 2
      %s249 = smul.addr %s248, 8
      %s250 = scalar_lea.vmem %s2, %s249
      %p251 = pneg %p85
      %p252 = pneg %p82
      %p253 = scmp.lt.s32.totalorder %s17, 1
      %s254 = scalar_select %p253, %s17, 1
      %s255 = smul.addr %s254, 3
      %s256 = scalar_lea.vmem %s3, %s255
      %p257 = pneg %p111
      %p258 = pneg %p108
      %p259 = pneg %p132
      %p260 = pneg %p129
      %p261 = pneg %p153
      %p262 = pneg %p150
      %p263 = pneg %p179
      %p264 = pneg %p176
      %p265 = scmp.lt.s32.totalorder %s17, 1
      %s266 = scalar_select %p265, %s17, 1
      %s267 = smul.addr %s266, 6
      %s268 = smul.addr %s267, 4
      %s269 = scalar_lea.vmem %s6, %s268
      %p270 = scmp.lt.s32.totalorder %s17, 1
      %s271 = scalar_select %p270, %s17, 1
      %s272 = smul.addr %s271, 16
      %s273 = smul.addr %s272, 4
      %s274 = scalar_lea.vmem %s0, %s273
      %p275 = scmp.lt.s32.totalorder %s17, 1
      %s276 = scalar_select %p275, %s17, 1
      %s277 = smul.addr %s276, 2
      %s278 = smul.addr %s277, 8
      %s279 = scalar_lea.vmem %s2, %s278
      %p280 = scmp.lt.s32.totalorder %s17, 1
      %s281 = scalar_select %p280, %s17, 1
      %s282 = smul.addr %s281, 3
      %s283 = scalar_lea.vmem %s3, %s282
      %p284 = scmp.lt.s32.totalorder %s17, 1
      %s285 = scalar_select %p284, %s17, 1
      %s286 = smul.addr %s285, 6
      %s287 = smul.addr %s286, 4
      %s288 = scalar_lea.vmem %s6, %s287
      %v290 = vld [vmem:[%s274] sm:$0xff]
      %v291 = vld [vmem:[%s274 + $0x8] sm:$0xf]
      %v292 = vld [vmem:[%s274 + $0x10] sm:$0xff]
      %v293 = vld [vmem:[%s274 + $0x18] sm:$0xf]
      %v294 = vld [vmem:[%s274 + $0x20] sm:$0xff]
      %v295 = vld [vmem:[%s274 + $0x28] sm:$0xf]
      %v296 = vld [vmem:[%s274 + $0x30] sm:$0xff]
      %v297 = vld [vmem:[%s274 + $0x38] sm:$0xf]
      %v298 = vld [vmem:[%s1] sm:$0xf]
      %v299 = vld [vmem:[%s1 + $0x4] sm:$0xf]
      %s300 = scalar_lea.vmem %s1, 8
      %v301 = vld [vmem:[%s300] sm:$0xf]
      %v302 = vld [vmem:[%s300 + $0x4] sm:$0xf]
      %v305 = vunpack.c.l.b16 %v301
      %v306 = vunpack.c.l.b16 %v302
      %v307 = vpack.c.b16 %v306, %v305
      %v316 = vunpack.c.l.b16 %v290
      %v317 = vunpack.c.h.b16 %v290
      %v318 = vunpack.c.l.b16 %v291
      %v319 = vunpack.c.l.b16 %v292
      %v320 = vunpack.c.h.b16 %v292
      %v321 = vunpack.c.l.b16 %v293
      %v322 = vunpack.c.l.b16 %v294
      %v323 = vunpack.c.h.b16 %v294
      %v324 = vunpack.c.l.b16 %v295
      %v325 = vunpack.c.l.b16 %v296
      %v326 = vunpack.c.h.b16 %v296
      %v327 = vunpack.c.l.b16 %v297
      %v328 = vpack.c.b16 %v319, %v316
      %v329 = vpack.c.b16 %v320, %v317
      %v330 = vpack.c.b16 %v321, %v318
      %v331 = vpack.c.b16 %v325, %v322
      %v332 = vpack.c.b16 %v326, %v323
      %v333 = vpack.c.b16 %v327, %v324
      %334 = vrot.lane.b32.xlu0 %v328, 127
      %v335 = vpop.permute.xlu0 %334
      %336 = vrot.lane.b32.xlu0 %v329, 127
      %v337 = vpop.permute.xlu0 %336
      %338 = vrot.lane.b32.xlu0 %v330, 127
      %v339 = vpop.permute.xlu0 %338
      %340 = vrot.lane.b32.xlu0 %v331, 127
      %v341 = vpop.permute.xlu0 %340
      %342 = vrot.lane.b32.xlu0 %v332, 127
      %v343 = vpop.permute.xlu0 %342
      %344 = vrot.lane.b32.xlu0 %v333, 127
      %v345 = vpop.permute.xlu0 %344
      %vm346 = vcmask 1039360
      %v347 = vsel %vm346, %v335, %v337
      %v348 = vsel %vm346, %v337, %v339
      %v349 = vsel %vm346, %v341, %v343
      %v350 = vsel %vm346, %v343, %v345
      %vm357 = vcmask 261120
      %v359 = vsel %vm357, %v307, 0
      %361 = vmatprep.subr.bf16.mxu0 0
      %362 = vmatpush1.bf16.msra.mxu0 0
      %363 = vmatprep.subr.bf16.mxu0 0
      %364 = vmatpush1.bf16.msra.mxu0 0
      %365 = vmatprep.subr.bf16.mxu0 0
      %366 = vmatpush1.bf16.msra.mxu0 0
      %367 = vmatprep.subr.bf16.mxu0 0
      %368 = vmatpush1.bf16.msra.mxu0 0
      %369 = vmatprep.subr.bf16.mxu0 0
      %370 = vmatpush1.bf16.msra.mxu0 0
      %371 = vmatprep.subr.bf16.mxu0 0
      %372 = vmatpush1.bf16.msra.mxu0 0
      %373 = vmatprep.subr.bf16.mxu0 %v350
      %374 = vmatpush1.bf16.msra.mxu0 %v349
      %375 = vmatprep.subr.bf16.mxu0 %v348
      %376 = vmatpush1.bf16.msra.mxu0 %v347
      %377 = vmatprep.subr.bf16.mxu0 0
      %378 = vmatpush2.bf16.msra.mxu0 0
      %379 = vmatprep.subr.bf16.mxu0 0
      %380 = vmatpush2.bf16.msra.mxu0 0
      %381 = vmatprep.subr.bf16.mxu0 0
      %382 = vmatpush2.bf16.msra.mxu0 0
      %383 = vmatprep.subr.bf16.mxu0 0
      %384 = vmatpush2.bf16.msra.mxu0 0
      %385 = vmatprep.subr.bf16.mxu0 0
      %386 = vmatpush2.bf16.msra.mxu0 0
      %387 = vmatprep.subr.bf16.mxu0 0
      %388 = vmatpush2.bf16.msra.mxu0 0
      %389 = vmatprep.subr.bf16.mxu0 0
      %390 = vmatpush2.bf16.msra.mxu0 0
      %391 = vmatprep.subr.bf16.mxu0 0
      %392 = vmatpush2.bf16.msra.mxu0 0
      %393 = vmatprep.mubr.bf16.mxu0 0
      %394 = vmatmul.mubr.bf16.gmra.mxu0 %v359
      %v395 = vpop.f32.mrf.mxu0
      %v396 = vadd.f32 0.0, %v395
      %v397 = vpop.f32.mrf.mxu0
      %v398 = vadd.f32 0.0, %v397
      %v399 = vpop.f32.mrf.mxu0
      %v400 = vadd.f32 0.0, %v399
      %v401 = vpop.f32.mrf.mxu0
      %v402 = vadd.f32 0.0, %v401
      %403 = vdwg.mxu0
      %404 = vmatprep.subr.bf16.mxu0 0
      %405 = vmatpush1.bf16.msra.mxu0 0
      %406 = vmatprep.subr.bf16.mxu0 0
      %407 = vmatpush1.bf16.msra.mxu0 0
      %408 = vmatprep.subr.bf16.mxu0 0
      %409 = vmatpush1.bf16.msra.mxu0 0
      %410 = vmatprep.subr.bf16.mxu0 0
      %411 = vmatpush1.bf16.msra.mxu0 0
      %412 = vmatprep.subr.bf16.mxu0 0
      %413 = vmatpush1.bf16.msra.mxu0 0
      %414 = vmatprep.subr.bf16.mxu0 0
      %415 = vmatpush1.bf16.msra.mxu0 0
      %416 = vmatprep.subr.bf16.mxu0 0
      %417 = vmatpush1.bf16.msra.mxu0 %v345
      %418 = vmatprep.subr.bf16.mxu0 0
      %419 = vmatpush1.bf16.msra.mxu0 %v339
      %420 = vmatprep.subr.bf16.mxu0 0
      %421 = vmatpush2.bf16.msra.mxu0 0
      %422 = vmatprep.subr.bf16.mxu0 0
      %423 = vmatpush2.bf16.msra.mxu0 0
      %424 = vmatprep.subr.bf16.mxu0 0
      %425 = vmatpush2.bf16.msra.mxu0 0
      %426 = vmatprep.subr.bf16.mxu0 0
      %427 = vmatpush2.bf16.msra.mxu0 0
      %428 = vmatprep.subr.bf16.mxu0 0
      %429 = vmatpush2.bf16.msra.mxu0 0
      %430 = vmatprep.subr.bf16.mxu0 0
      %431 = vmatpush2.bf16.msra.mxu0 0
      %432 = vmatprep.subr.bf16.mxu0 0
      %433 = vmatpush2.bf16.msra.mxu0 0
      %434 = vmatprep.subr.bf16.mxu0 0
      %435 = vmatpush2.bf16.msra.mxu0 0
      %436 = vmatprep.mubr.bf16.mxu0 0
      %437 = vmatmul.mubr.bf16.gmra.mxu0 %v359
      %v438 = vpop.f32.mrf.mxu0
      %v439 = vadd.f32 0.0, %v438
      %v440 = vpop.f32.mrf.mxu0
      %v441 = vpop.f32.mrf.mxu0
      %v442 = vadd.f32 0.0, %v441
      %v443 = vpop.f32.mrf.mxu0
      %444 = vdwg.mxu0
      %v447 = vunpack.c.l.b16 %v298
      %v448 = vunpack.c.l.b16 %v299
      %v449 = vpack.c.b16 %v448, %v447
      %v457 = vsel %vm357, %v449, 0
      %459 = vmatprep.subr.bf16.mxu0 0
      %460 = vmatpush1.bf16.msra.mxu0 0
      %461 = vmatprep.subr.bf16.mxu0 0
      %462 = vmatpush1.bf16.msra.mxu0 0
      %463 = vmatprep.subr.bf16.mxu0 0
      %464 = vmatpush1.bf16.msra.mxu0 0
      %465 = vmatprep.subr.bf16.mxu0 0
      %466 = vmatpush1.bf16.msra.mxu0 0
      %467 = vmatprep.subr.bf16.mxu0 0
      %468 = vmatpush1.bf16.msra.mxu0 0
      %469 = vmatprep.subr.bf16.mxu0 0
      %470 = vmatpush1.bf16.msra.mxu0 0
      %471 = vmatprep.subr.bf16.mxu0 %v332
      %472 = vmatpush1.bf16.msra.mxu0 %v331
      %473 = vmatprep.subr.bf16.mxu0 %v329
      %474 = vmatpush1.bf16.msra.mxu0 %v328
      %475 = vmatprep.subr.bf16.mxu0 0
      %476 = vmatpush2.bf16.msra.mxu0 0
      %477 = vmatprep.subr.bf16.mxu0 0
      %478 = vmatpush2.bf16.msra.mxu0 0
      %479 = vmatprep.subr.bf16.mxu0 0
      %480 = vmatpush2.bf16.msra.mxu0 0
      %481 = vmatprep.subr.bf16.mxu0 0
      %482 = vmatpush2.bf16.msra.mxu0 0
      %483 = vmatprep.subr.bf16.mxu0 0
      %484 = vmatpush2.bf16.msra.mxu0 0
      %485 = vmatprep.subr.bf16.mxu0 0
      %486 = vmatpush2.bf16.msra.mxu0 0
      %487 = vmatprep.subr.bf16.mxu0 0
      %488 = vmatpush2.bf16.msra.mxu0 0
      %489 = vmatprep.subr.bf16.mxu0 0
      %490 = vmatpush2.bf16.msra.mxu0 0
      %491 = vmatprep.mubr.bf16.mxu0 0
      %492 = vmatmul.mubr.bf16.gmra.mxu0 %v457
      %v493 = vpop.f32.mrf.mxu0
      %v494 = vadd.f32 %v396, %v493
      %v495 = vpop.f32.mrf.mxu0
      %v496 = vadd.f32 %v398, %v495
      %v497 = vpop.f32.mrf.mxu0
      %v498 = vadd.f32 %v400, %v497
      %v499 = vpop.f32.mrf.mxu0
      %v500 = vadd.f32 %v402, %v499
      %501 = vdwg.mxu0
      %502 = vmatprep.subr.bf16.mxu0 0
      %503 = vmatpush1.bf16.msra.mxu0 0
      %504 = vmatprep.subr.bf16.mxu0 0
      %505 = vmatpush1.bf16.msra.mxu0 0
      %506 = vmatprep.subr.bf16.mxu0 0
      %507 = vmatpush1.bf16.msra.mxu0 0
      %508 = vmatprep.subr.bf16.mxu0 0
      %509 = vmatpush1.bf16.msra.mxu0 0
      %510 = vmatprep.subr.bf16.mxu0 0
      %511 = vmatpush1.bf16.msra.mxu0 0
      %512 = vmatprep.subr.bf16.mxu0 0
      %513 = vmatpush1.bf16.msra.mxu0 0
      %514 = vmatprep.subr.bf16.mxu0 0
      %515 = vmatpush1.bf16.msra.mxu0 %v333
      %516 = vmatprep.subr.bf16.mxu0 0
      %517 = vmatpush1.bf16.msra.mxu0 %v330
      %518 = vmatprep.subr.bf16.mxu0 0
      %519 = vmatpush2.bf16.msra.mxu0 0
      %520 = vmatprep.subr.bf16.mxu0 0
      %521 = vmatpush2.bf16.msra.mxu0 0
      %522 = vmatprep.subr.bf16.mxu0 0
      %523 = vmatpush2.bf16.msra.mxu0 0
      %524 = vmatprep.subr.bf16.mxu0 0
      %525 = vmatpush2.bf16.msra.mxu0 0
      %526 = vmatprep.subr.bf16.mxu0 0
      %527 = vmatpush2.bf16.msra.mxu0 0
      %528 = vmatprep.subr.bf16.mxu0 0
      %529 = vmatpush2.bf16.msra.mxu0 0
      %530 = vmatprep.subr.bf16.mxu0 0
      %531 = vmatpush2.bf16.msra.mxu0 0
      %532 = vmatprep.subr.bf16.mxu0 0
      %533 = vmatpush2.bf16.msra.mxu0 0
      %534 = vmatprep.mubr.bf16.mxu0 0
      %535 = vmatmul.mubr.bf16.gmra.mxu0 %v457
      %v536 = vpop.f32.mrf.mxu0
      %v537 = vadd.f32 %v439, %v536
      %v538 = vpop.f32.mrf.mxu0
      %v539 = vpop.f32.mrf.mxu0
      %v540 = vadd.f32 %v442, %v539
      %v541 = vpop.f32.mrf.mxu0
      %542 = vdwg.mxu0
      %s543 = scalar_lea.vmem %s1, 16
      %v544 = vld [vmem:[%s543] sm:$0xf]
      %v545 = vld [vmem:[%s543 + $0x4] sm:$0xf]
      %v548 = vunpack.c.l.b16 %v544
      %v549 = vunpack.c.l.b16 %v545
      %v550 = vpack.c.b16 %v549, %v548
      %551 = vrot.lane.b32.xlu0 %v328, 126
      %v552 = vpop.permute.xlu0 %551
      %553 = vrot.lane.b32.xlu0 %v329, 126
      %v554 = vpop.permute.xlu0 %553
      %555 = vrot.lane.b32.xlu0 %v330, 126
      %v556 = vpop.permute.xlu0 %555
      %557 = vrot.lane.b32.xlu0 %v331, 126
      %v558 = vpop.permute.xlu0 %557
      %559 = vrot.lane.b32.xlu0 %v332, 126
      %v560 = vpop.permute.xlu0 %559
      %561 = vrot.lane.b32.xlu0 %v333, 126
      %v562 = vpop.permute.xlu0 %561
      %vm563 = vcmask 1031168
      %v564 = vsel %vm563, %v552, %v554
      %v565 = vsel %vm563, %v554, %v556
      %v566 = vsel %vm563, %v558, %v560
      %v567 = vsel %vm563, %v560, %v562
      %v575 = vsel %vm357, %v550, 0
      %577 = vmatprep.subr.bf16.mxu0 0
      %578 = vmatpush1.bf16.msra.mxu0 0
      %579 = vmatprep.subr.bf16.mxu0 0
      %580 = vmatpush1.bf16.msra.mxu0 0
      %581 = vmatprep.subr.bf16.mxu0 0
      %582 = vmatpush1.bf16.msra.mxu0 0
      %583 = vmatprep.subr.bf16.mxu0 0
      %584 = vmatpush1.bf16.msra.mxu0 0
      %585 = vmatprep.subr.bf16.mxu0 0
      %586 = vmatpush1.bf16.msra.mxu0 0
      %587 = vmatprep.subr.bf16.mxu0 0
      %588 = vmatpush1.bf16.msra.mxu0 0
      %589 = vmatprep.subr.bf16.mxu0 %v567
      %590 = vmatpush1.bf16.msra.mxu0 %v566
      %591 = vmatprep.subr.bf16.mxu0 %v565
      %592 = vmatpush1.bf16.msra.mxu0 %v564
      %593 = vmatprep.subr.bf16.mxu0 0
      %594 = vmatpush2.bf16.msra.mxu0 0
      %595 = vmatprep.subr.bf16.mxu0 0
      %596 = vmatpush2.bf16.msra.mxu0 0
      %597 = vmatprep.subr.bf16.mxu0 0
      %598 = vmatpush2.bf16.msra.mxu0 0
      %599 = vmatprep.subr.bf16.mxu0 0
      %600 = vmatpush2.bf16.msra.mxu0 0
      %601 = vmatprep.subr.bf16.mxu0 0
      %602 = vmatpush2.bf16.msra.mxu0 0
      %603 = vmatprep.subr.bf16.mxu0 0
      %604 = vmatpush2.bf16.msra.mxu0 0
      %605 = vmatprep.subr.bf16.mxu0 0
      %606 = vmatpush2.bf16.msra.mxu0 0
      %607 = vmatprep.subr.bf16.mxu0 0
      %608 = vmatpush2.bf16.msra.mxu0 0
      %609 = vmatprep.mubr.bf16.mxu0 0
      %610 = vmatmul.mubr.bf16.gmra.mxu0 %v575
      %v611 = vpop.f32.mrf.mxu0
      %v612 = vadd.f32 0.0, %v611
      %v613 = vpop.f32.mrf.mxu0
      %v614 = vadd.f32 0.0, %v613
      %v615 = vpop.f32.mrf.mxu0
      %v616 = vadd.f32 0.0, %v615
      %v617 = vpop.f32.mrf.mxu0
      %v618 = vadd.f32 0.0, %v617
      %619 = vdwg.mxu0
      %620 = vmatprep.subr.bf16.mxu0 0
      %621 = vmatpush1.bf16.msra.mxu0 0
      %622 = vmatprep.subr.bf16.mxu0 0
      %623 = vmatpush1.bf16.msra.mxu0 0
      %624 = vmatprep.subr.bf16.mxu0 0
      %625 = vmatpush1.bf16.msra.mxu0 0
      %626 = vmatprep.subr.bf16.mxu0 0
      %627 = vmatpush1.bf16.msra.mxu0 0
      %628 = vmatprep.subr.bf16.mxu0 0
      %629 = vmatpush1.bf16.msra.mxu0 0
      %630 = vmatprep.subr.bf16.mxu0 0
      %631 = vmatpush1.bf16.msra.mxu0 0
      %632 = vmatprep.subr.bf16.mxu0 0
      %633 = vmatpush1.bf16.msra.mxu0 %v562
      %634 = vmatprep.subr.bf16.mxu0 0
      %635 = vmatpush1.bf16.msra.mxu0 %v556
      %636 = vmatprep.subr.bf16.mxu0 0
      %637 = vmatpush2.bf16.msra.mxu0 0
      %638 = vmatprep.subr.bf16.mxu0 0
      %639 = vmatpush2.bf16.msra.mxu0 0
      %640 = vmatprep.subr.bf16.mxu0 0
      %641 = vmatpush2.bf16.msra.mxu0 0
      %642 = vmatprep.subr.bf16.mxu0 0
      %643 = vmatpush2.bf16.msra.mxu0 0
      %644 = vmatprep.subr.bf16.mxu0 0
      %645 = vmatpush2.bf16.msra.mxu0 0
      %646 = vmatprep.subr.bf16.mxu0 0
      %647 = vmatpush2.bf16.msra.mxu0 0
      %648 = vmatprep.subr.bf16.mxu0 0
      %649 = vmatpush2.bf16.msra.mxu0 0
      %650 = vmatprep.subr.bf16.mxu0 0
      %651 = vmatpush2.bf16.msra.mxu0 0
      %652 = vmatprep.mubr.bf16.mxu0 0
      %653 = vmatmul.mubr.bf16.gmra.mxu0 %v575
      %v654 = vpop.f32.mrf.mxu0
      %v655 = vadd.f32 0.0, %v654
      %v656 = vpop.f32.mrf.mxu0
      %v657 = vpop.f32.mrf.mxu0
      %v658 = vadd.f32 0.0, %v657
      %v659 = vpop.f32.mrf.mxu0
      %660 = vdwg.mxu0
      %v661 = vadd.f32 %v494, %v612
      %v662 = vadd.f32 %v496, %v614
      %v663 = vadd.f32 %v537, %v655
      %v664 = vadd.f32 %v498, %v616
      %v665 = vadd.f32 %v500, %v618
      %v666 = vadd.f32 %v540, %v658
      %s667 = scalar_lea.vmem %s1, 24
      %v668 = vld [vmem:[%s667] sm:$0xf]
      %v669 = vld [vmem:[%s667 + $0x4] sm:$0xf]
      %v672 = vunpack.c.l.b16 %v668
      %v673 = vunpack.c.l.b16 %v669
      %v674 = vpack.c.b16 %v673, %v672
      %675 = vrot.lane.b32.xlu0 %v328, 108
      %v676 = vpop.permute.xlu0 %675
      %677 = vrot.lane.b32.xlu0 %v329, 108
      %v678 = vpop.permute.xlu0 %677
      %679 = vrot.lane.b32.xlu0 %v330, 108
      %v680 = vpop.permute.xlu0 %679
      %681 = vrot.lane.b32.xlu0 %v331, 108
      %v682 = vpop.permute.xlu0 %681
      %683 = vrot.lane.b32.xlu0 %v332, 108
      %v684 = vpop.permute.xlu0 %683
      %685 = vrot.lane.b32.xlu0 %v333, 108
      %v686 = vpop.permute.xlu0 %685
      %vm687 = vcmask 883712
      %v688 = vsel %vm687, %v676, %v678
      %v689 = vsel %vm687, %v678, %v680
      %v690 = vsel %vm687, %v682, %v684
      %v691 = vsel %vm687, %v684, %v686
      %v699 = vsel %vm357, %v674, 0
      %701 = vmatprep.subr.bf16.mxu0 0
      %702 = vmatpush1.bf16.msra.mxu0 0
      %703 = vmatprep.subr.bf16.mxu0 0
      %704 = vmatpush1.bf16.msra.mxu0 0
      %705 = vmatprep.subr.bf16.mxu0 0
      %706 = vmatpush1.bf16.msra.mxu0 0
      %707 = vmatprep.subr.bf16.mxu0 0
      %708 = vmatpush1.bf16.msra.mxu0 0
      %709 = vmatprep.subr.bf16.mxu0 0
      %710 = vmatpush1.bf16.msra.mxu0 0
      %711 = vmatprep.subr.bf16.mxu0 0
      %712 = vmatpush1.bf16.msra.mxu0 0
      %713 = vmatprep.subr.bf16.mxu0 %v691
      %714 = vmatpush1.bf16.msra.mxu0 %v690
      %715 = vmatprep.subr.bf16.mxu0 %v689
      %716 = vmatpush1.bf16.msra.mxu0 %v688
      %717 = vmatprep.subr.bf16.mxu0 0
      %718 = vmatpush2.bf16.msra.mxu0 0
      %719 = vmatprep.subr.bf16.mxu0 0
      %720 = vmatpush2.bf16.msra.mxu0 0
      %721 = vmatprep.subr.bf16.mxu0 0
      %722 = vmatpush2.bf16.msra.mxu0 0
      %723 = vmatprep.subr.bf16.mxu0 0
      %724 = vmatpush2.bf16.msra.mxu0 0
      %725 = vmatprep.subr.bf16.mxu0 0
      %726 = vmatpush2.bf16.msra.mxu0 0
      %727 = vmatprep.subr.bf16.mxu0 0
      %728 = vmatpush2.bf16.msra.mxu0 0
      %729 = vmatprep.subr.bf16.mxu0 0
      %730 = vmatpush2.bf16.msra.mxu0 0
      %731 = vmatprep.subr.bf16.mxu0 0
      %732 = vmatpush2.bf16.msra.mxu0 0
      %733 = vmatprep.mubr.bf16.mxu0 0
      %734 = vmatmul.mubr.bf16.gmra.mxu0 %v699
      %v735 = vpop.f32.mrf.mxu0
      %v736 = vadd.f32 0.0, %v735
      %v737 = vpop.f32.mrf.mxu0
      %v738 = vadd.f32 0.0, %v737
      %v739 = vpop.f32.mrf.mxu0
      %v740 = vadd.f32 0.0, %v739
      %v741 = vpop.f32.mrf.mxu0
      %v742 = vadd.f32 0.0, %v741
      %743 = vdwg.mxu0
      %744 = vmatprep.subr.bf16.mxu0 0
      %745 = vmatpush1.bf16.msra.mxu0 0
      %746 = vmatprep.subr.bf16.mxu0 0
      %747 = vmatpush1.bf16.msra.mxu0 0
      %748 = vmatprep.subr.bf16.mxu0 0
      %749 = vmatpush1.bf16.msra.mxu0 0
      %750 = vmatprep.subr.bf16.mxu0 0
      %751 = vmatpush1.bf16.msra.mxu0 0
      %752 = vmatprep.subr.bf16.mxu0 0
      %753 = vmatpush1.bf16.msra.mxu0 0
      %754 = vmatprep.subr.bf16.mxu0 0
      %755 = vmatpush1.bf16.msra.mxu0 0
      %756 = vmatprep.subr.bf16.mxu0 0
      %757 = vmatpush1.bf16.msra.mxu0 %v686
      %758 = vmatprep.subr.bf16.mxu0 0
      %759 = vmatpush1.bf16.msra.mxu0 %v680
      %760 = vmatprep.subr.bf16.mxu0 0
      %761 = vmatpush2.bf16.msra.mxu0 0
      %762 = vmatprep.subr.bf16.mxu0 0
      %763 = vmatpush2.bf16.msra.mxu0 0
      %764 = vmatprep.subr.bf16.mxu0 0
      %765 = vmatpush2.bf16.msra.mxu0 0
      %766 = vmatprep.subr.bf16.mxu0 0
      %767 = vmatpush2.bf16.msra.mxu0 0
      %768 = vmatprep.subr.bf16.mxu0 0
      %769 = vmatpush2.bf16.msra.mxu0 0
      %770 = vmatprep.subr.bf16.mxu0 0
      %771 = vmatpush2.bf16.msra.mxu0 0
      %772 = vmatprep.subr.bf16.mxu0 0
      %773 = vmatpush2.bf16.msra.mxu0 0
      %774 = vmatprep.subr.bf16.mxu0 0
      %775 = vmatpush2.bf16.msra.mxu0 0
      %776 = vmatprep.mubr.bf16.mxu0 0
      %777 = vmatmul.mubr.bf16.gmra.mxu0 %v699
      %v778 = vpop.f32.mrf.mxu0
      %v779 = vadd.f32 0.0, %v778
      %v780 = vpop.f32.mrf.mxu0
      %v781 = vpop.f32.mrf.mxu0
      %v782 = vadd.f32 0.0, %v781
      %v783 = vpop.f32.mrf.mxu0
      %784 = vdwg.mxu0
      %v785 = vadd.f32 %v661, %v736
      %v786 = vadd.f32 %v662, %v738
      %v787 = vadd.f32 %v663, %v779
      %v788 = vadd.f32 %v664, %v740
      %v789 = vadd.f32 %v665, %v742
      %v790 = vadd.f32 %v666, %v782
      %s791 = scalar_lea.vmem %s1, 32
      %v792 = vld [vmem:[%s791] sm:$0xf]
      %v793 = vld [vmem:[%s791 + $0x4] sm:$0xf]
      %v796 = vunpack.c.l.b16 %v792
      %v797 = vunpack.c.l.b16 %v793
      %v798 = vpack.c.b16 %v797, %v796
      %799 = vrot.lane.b32.xlu0 %v328, 107
      %v800 = vpop.permute.xlu0 %799
      %801 = vrot.lane.b32.xlu0 %v329, 107
      %v802 = vpop.permute.xlu0 %801
      %803 = vrot.lane.b32.xlu0 %v330, 107
      %v804 = vpop.permute.xlu0 %803
      %805 = vrot.lane.b32.xlu0 %v331, 107
      %v806 = vpop.permute.xlu0 %805
      %807 = vrot.lane.b32.xlu0 %v332, 107
      %v808 = vpop.permute.xlu0 %807
      %809 = vrot.lane.b32.xlu0 %v333, 107
      %v810 = vpop.permute.xlu0 %809
      %vm811 = vcmask 875520
      %v812 = vsel %vm811, %v800, %v802
      %v813 = vsel %vm811, %v802, %v804
      %v814 = vsel %vm811, %v806, %v808
      %v815 = vsel %vm811, %v808, %v810
      %v823 = vsel %vm357, %v798, 0
      %825 = vmatprep.subr.bf16.mxu0 0
      %826 = vmatpush1.bf16.msra.mxu0 0
      %827 = vmatprep.subr.bf16.mxu0 0
      %828 = vmatpush1.bf16.msra.mxu0 0
      %829 = vmatprep.subr.bf16.mxu0 0
      %830 = vmatpush1.bf16.msra.mxu0 0
      %831 = vmatprep.subr.bf16.mxu0 0
      %832 = vmatpush1.bf16.msra.mxu0 0
      %833 = vmatprep.subr.bf16.mxu0 0
      %834 = vmatpush1.bf16.msra.mxu0 0
      %835 = vmatprep.subr.bf16.mxu0 0
      %836 = vmatpush1.bf16.msra.mxu0 0
      %837 = vmatprep.subr.bf16.mxu0 %v815
      %838 = vmatpush1.bf16.msra.mxu0 %v814
      %839 = vmatprep.subr.bf16.mxu0 %v813
      %840 = vmatpush1.bf16.msra.mxu0 %v812
      %841 = vmatprep.subr.bf16.mxu0 0
      %842 = vmatpush2.bf16.msra.mxu0 0
      %843 = vmatprep.subr.bf16.mxu0 0
      %844 = vmatpush2.bf16.msra.mxu0 0
      %845 = vmatprep.subr.bf16.mxu0 0
      %846 = vmatpush2.bf16.msra.mxu0 0
      %847 = vmatprep.subr.bf16.mxu0 0
      %848 = vmatpush2.bf16.msra.mxu0 0
      %849 = vmatprep.subr.bf16.mxu0 0
      %850 = vmatpush2.bf16.msra.mxu0 0
      %851 = vmatprep.subr.bf16.mxu0 0
      %852 = vmatpush2.bf16.msra.mxu0 0
      %853 = vmatprep.subr.bf16.mxu0 0
      %854 = vmatpush2.bf16.msra.mxu0 0
      %855 = vmatprep.subr.bf16.mxu0 0
      %856 = vmatpush2.bf16.msra.mxu0 0
      %857 = vmatprep.mubr.bf16.mxu0 0
      %858 = vmatmul.mubr.bf16.gmra.mxu0 %v823
      %v859 = vpop.f32.mrf.mxu0
      %v860 = vadd.f32 0.0, %v859
      %v861 = vpop.f32.mrf.mxu0
      %v862 = vadd.f32 0.0, %v861
      %v863 = vpop.f32.mrf.mxu0
      %v864 = vadd.f32 0.0, %v863
      %v865 = vpop.f32.mrf.mxu0
      %v866 = vadd.f32 0.0, %v865
      %867 = vdwg.mxu0
      %868 = vmatprep.subr.bf16.mxu0 0
      %869 = vmatpush1.bf16.msra.mxu0 0
      %870 = vmatprep.subr.bf16.mxu0 0
      %871 = vmatpush1.bf16.msra.mxu0 0
      %872 = vmatprep.subr.bf16.mxu0 0
      %873 = vmatpush1.bf16.msra.mxu0 0
      %874 = vmatprep.subr.bf16.mxu0 0
      %875 = vmatpush1.bf16.msra.mxu0 0
      %876 = vmatprep.subr.bf16.mxu0 0
      %877 = vmatpush1.bf16.msra.mxu0 0
      %878 = vmatprep.subr.bf16.mxu0 0
      %879 = vmatpush1.bf16.msra.mxu0 0
      %880 = vmatprep.subr.bf16.mxu0 0
      %881 = vmatpush1.bf16.msra.mxu0 %v810
      %882 = vmatprep.subr.bf16.mxu0 0
      %883 = vmatpush1.bf16.msra.mxu0 %v804
      %884 = vmatprep.subr.bf16.mxu0 0
      %885 = vmatpush2.bf16.msra.mxu0 0
      %886 = vmatprep.subr.bf16.mxu0 0
      %887 = vmatpush2.bf16.msra.mxu0 0
      %888 = vmatprep.subr.bf16.mxu0 0
      %889 = vmatpush2.bf16.msra.mxu0 0
      %890 = vmatprep.subr.bf16.mxu0 0
      %891 = vmatpush2.bf16.msra.mxu0 0
      %892 = vmatprep.subr.bf16.mxu0 0
      %893 = vmatpush2.bf16.msra.mxu0 0
      %894 = vmatprep.subr.bf16.mxu0 0
      %895 = vmatpush2.bf16.msra.mxu0 0
      %896 = vmatprep.subr.bf16.mxu0 0
      %897 = vmatpush2.bf16.msra.mxu0 0
      %898 = vmatprep.subr.bf16.mxu0 0
      %899 = vmatpush2.bf16.msra.mxu0 0
      %900 = vmatprep.mubr.bf16.mxu0 0
      %901 = vmatmul.mubr.bf16.gmra.mxu0 %v823
      %v902 = vpop.f32.mrf.mxu0
      %v903 = vadd.f32 0.0, %v902
      %v904 = vpop.f32.mrf.mxu0
      %v905 = vpop.f32.mrf.mxu0
      %v906 = vadd.f32 0.0, %v905
      %v907 = vpop.f32.mrf.mxu0
      %908 = vdwg.mxu0
      %v909 = vadd.f32 %v785, %v860
      %v910 = vadd.f32 %v786, %v862
      %v911 = vadd.f32 %v787, %v903
      %v912 = vadd.f32 %v788, %v864
      %v913 = vadd.f32 %v789, %v866
      %v914 = vadd.f32 %v790, %v906
      %s915 = scalar_lea.vmem %s1, 40
      %v916 = vld [vmem:[%s915] sm:$0xf]
      %v917 = vld [vmem:[%s915 + $0x4] sm:$0xf]
      %v920 = vunpack.c.l.b16 %v916
      %v921 = vunpack.c.l.b16 %v917
      %v922 = vpack.c.b16 %v921, %v920
      %923 = vrot.lane.b32.xlu0 %v328, 106
      %v924 = vpop.permute.xlu0 %923
      %925 = vrot.lane.b32.xlu0 %v329, 106
      %v926 = vpop.permute.xlu0 %925
      %927 = vrot.lane.b32.xlu0 %v330, 106
      %v928 = vpop.permute.xlu0 %927
      %929 = vrot.lane.b32.xlu0 %v331, 106
      %v930 = vpop.permute.xlu0 %929
      %931 = vrot.lane.b32.xlu0 %v332, 106
      %v932 = vpop.permute.xlu0 %931
      %933 = vrot.lane.b32.xlu0 %v333, 106
      %v934 = vpop.permute.xlu0 %933
      %vm935 = vcmask 867328
      %v936 = vsel %vm935, %v924, %v926
      %v937 = vsel %vm935, %v926, %v928
      %v938 = vsel %vm935, %v930, %v932
      %v939 = vsel %vm935, %v932, %v934
      %v947 = vsel %vm357, %v922, 0
      %949 = vmatprep.subr.bf16.mxu0 0
      %950 = vmatpush1.bf16.msra.mxu0 0
      %951 = vmatprep.subr.bf16.mxu0 0
      %952 = vmatpush1.bf16.msra.mxu0 0
      %953 = vmatprep.subr.bf16.mxu0 0
      %954 = vmatpush1.bf16.msra.mxu0 0
      %955 = vmatprep.subr.bf16.mxu0 0
      %956 = vmatpush1.bf16.msra.mxu0 0
      %957 = vmatprep.subr.bf16.mxu0 0
      %958 = vmatpush1.bf16.msra.mxu0 0
      %959 = vmatprep.subr.bf16.mxu0 0
      %960 = vmatpush1.bf16.msra.mxu0 0
      %961 = vmatprep.subr.bf16.mxu0 %v939
      %962 = vmatpush1.bf16.msra.mxu0 %v938
      %963 = vmatprep.subr.bf16.mxu0 %v937
      %964 = vmatpush1.bf16.msra.mxu0 %v936
      %965 = vmatprep.subr.bf16.mxu0 0
      %966 = vmatpush2.bf16.msra.mxu0 0
      %967 = vmatprep.subr.bf16.mxu0 0
      %968 = vmatpush2.bf16.msra.mxu0 0
      %969 = vmatprep.subr.bf16.mxu0 0
      %970 = vmatpush2.bf16.msra.mxu0 0
      %971 = vmatprep.subr.bf16.mxu0 0
      %972 = vmatpush2.bf16.msra.mxu0 0
      %973 = vmatprep.subr.bf16.mxu0 0
      %974 = vmatpush2.bf16.msra.mxu0 0
      %975 = vmatprep.subr.bf16.mxu0 0
      %976 = vmatpush2.bf16.msra.mxu0 0
      %977 = vmatprep.subr.bf16.mxu0 0
      %978 = vmatpush2.bf16.msra.mxu0 0
      %979 = vmatprep.subr.bf16.mxu0 0
      %980 = vmatpush2.bf16.msra.mxu0 0
      %981 = vmatprep.mubr.bf16.mxu0 0
      %982 = vmatmul.mubr.bf16.gmra.mxu0 %v947
      %v983 = vpop.f32.mrf.mxu0
      %v984 = vadd.f32 0.0, %v983
      %v985 = vpop.f32.mrf.mxu0
      %v986 = vadd.f32 0.0, %v985
      %v987 = vpop.f32.mrf.mxu0
      %v988 = vadd.f32 0.0, %v987
      %v989 = vpop.f32.mrf.mxu0
      %v990 = vadd.f32 0.0, %v989
      %991 = vdwg.mxu0
      %992 = vmatprep.subr.bf16.mxu0 0
      %993 = vmatpush1.bf16.msra.mxu0 0
      %994 = vmatprep.subr.bf16.mxu0 0
      %995 = vmatpush1.bf16.msra.mxu0 0
      %996 = vmatprep.subr.bf16.mxu0 0
      %997 = vmatpush1.bf16.msra.mxu0 0
      %998 = vmatprep.subr.bf16.mxu0 0
      %999 = vmatpush1.bf16.msra.mxu0 0
      %1000 = vmatprep.subr.bf16.mxu0 0
      %1001 = vmatpush1.bf16.msra.mxu0 0
      %1002 = vmatprep.subr.bf16.mxu0 0
      %1003 = vmatpush1.bf16.msra.mxu0 0
      %1004 = vmatprep.subr.bf16.mxu0 0
      %1005 = vmatpush1.bf16.msra.mxu0 %v934
      %1006 = vmatprep.subr.bf16.mxu0 0
      %1007 = vmatpush1.bf16.msra.mxu0 %v928
      %1008 = vmatprep.subr.bf16.mxu0 0
      %1009 = vmatpush2.bf16.msra.mxu0 0
      %1010 = vmatprep.subr.bf16.mxu0 0
      %1011 = vmatpush2.bf16.msra.mxu0 0
      %1012 = vmatprep.subr.bf16.mxu0 0
      %1013 = vmatpush2.bf16.msra.mxu0 0
      %1014 = vmatprep.subr.bf16.mxu0 0
      %1015 = vmatpush2.bf16.msra.mxu0 0
      %1016 = vmatprep.subr.bf16.mxu0 0
      %1017 = vmatpush2.bf16.msra.mxu0 0
      %1018 = vmatprep.subr.bf16.mxu0 0
      %1019 = vmatpush2.bf16.msra.mxu0 0
      %1020 = vmatprep.subr.bf16.mxu0 0
      %1021 = vmatpush2.bf16.msra.mxu0 0
      %1022 = vmatprep.subr.bf16.mxu0 0
      %1023 = vmatpush2.bf16.msra.mxu0 0
      %1024 = vmatprep.mubr.bf16.mxu0 0
      %1025 = vmatmul.mubr.bf16.gmra.mxu0 %v947
      %v1026 = vpop.f32.mrf.mxu0
      %v1027 = vadd.f32 0.0, %v1026
      %v1028 = vpop.f32.mrf.mxu0
      %v1029 = vpop.f32.mrf.mxu0
      %v1030 = vadd.f32 0.0, %v1029
      %v1031 = vpop.f32.mrf.mxu0
      %1032 = vdwg.mxu0
      %v1033 = vadd.f32 %v909, %v984
      %v1034 = vadd.f32 %v910, %v986
      %v1035 = vadd.f32 %v911, %v1027
      %v1036 = vadd.f32 %v912, %v988
      %v1037 = vadd.f32 %v913, %v990
      %v1038 = vadd.f32 %v914, %v1030
      %v1039 = vld [vmem:[%s274] sm:$0xff]
      %v1040 = vld [vmem:[%s274 + $0x8] sm:$0xff]
      %v1041 = vld [vmem:[%s274 + $0x10] sm:$0xff]
      %v1042 = vld [vmem:[%s274 + $0x18] sm:$0xff]
      %v1043 = vld [vmem:[%s274 + $0x20] sm:$0xff]
      %v1044 = vld [vmem:[%s274 + $0x28] sm:$0xff]
      %v1045 = vld [vmem:[%s274 + $0x30] sm:$0xff]
      %v1046 = vld [vmem:[%s274 + $0x38] sm:$0xff]
      %s1047 = scalar_lea.vmem %s1, 48
      %v1048 = vld [vmem:[%s1047] sm:$0xf]
      %v1049 = vld [vmem:[%s1047 + $0x4] sm:$0xf]
      %v1052 = vunpack.c.l.b16 %v1048
      %v1053 = vunpack.c.l.b16 %v1049
      %v1054 = vpack.c.b16 %v1053, %v1052
      %v1063 = vunpack.c.l.b16 %v1039
      %v1064 = vunpack.c.h.b16 %v1039
      %v1065 = vunpack.c.l.b16 %v1040
      %v1066 = vunpack.c.h.b16 %v1040
      %v1067 = vunpack.c.l.b16 %v1041
      %v1068 = vunpack.c.h.b16 %v1041
      %v1069 = vunpack.c.l.b16 %v1042
      %v1070 = vunpack.c.h.b16 %v1042
      %v1071 = vunpack.c.l.b16 %v1043
      %v1072 = vunpack.c.h.b16 %v1043
      %v1073 = vunpack.c.l.b16 %v1044
      %v1074 = vunpack.c.h.b16 %v1044
      %v1075 = vunpack.c.l.b16 %v1045
      %v1076 = vunpack.c.h.b16 %v1045
      %v1077 = vunpack.c.l.b16 %v1046
      %v1078 = vunpack.c.h.b16 %v1046
      %v1079 = vpack.c.b16 %v1067, %v1063
      %v1080 = vpack.c.b16 %v1068, %v1064
      %v1081 = vpack.c.b16 %v1069, %v1065
      %v1082 = vpack.c.b16 %v1070, %v1066
      %v1083 = vpack.c.b16 %v1075, %v1071
      %v1084 = vpack.c.b16 %v1076, %v1072
      %v1085 = vpack.c.b16 %v1077, %v1073
      %v1086 = vpack.c.b16 %v1078, %v1074
      %1087 = vrot.lane.b32.xlu0 %v1079, 88
      %v1088 = vpop.permute.xlu0 %1087
      %1089 = vrot.lane.b32.xlu0 %v1080, 88
      %v1090 = vpop.permute.xlu0 %1089
      %1091 = vrot.lane.b32.xlu0 %v1081, 88
      %v1092 = vpop.permute.xlu0 %1091
      %1093 = vrot.lane.b32.xlu0 %v1082, 88
      %v1094 = vpop.permute.xlu0 %1093
      %1095 = vrot.lane.b32.xlu0 %v1083, 88
      %v1096 = vpop.permute.xlu0 %1095
      %1097 = vrot.lane.b32.xlu0 %v1084, 88
      %v1098 = vpop.permute.xlu0 %1097
      %1099 = vrot.lane.b32.xlu0 %v1085, 88
      %v1100 = vpop.permute.xlu0 %1099
      %1101 = vrot.lane.b32.xlu0 %v1086, 88
      %v1102 = vpop.permute.xlu0 %1101
      %vm1103 = vcmask 719872
      %v1104 = vsel %vm1103, %v1088, %v1090
      %v1105 = vsel %vm1103, %v1090, %v1092
      %v1106 = vsel %vm1103, %v1092, %v1094
      %v1107 = vsel %vm1103, %v1096, %v1098
      %v1108 = vsel %vm1103, %v1098, %v1100
      %v1109 = vsel %vm1103, %v1100, %v1102
      %v1117 = vsel %vm357, %v1054, 0
      %1119 = vmatprep.subr.bf16.mxu0 0
      %1120 = vmatpush1.bf16.msra.mxu0 0
      %1121 = vmatprep.subr.bf16.mxu0 0
      %1122 = vmatpush1.bf16.msra.mxu0 0
      %1123 = vmatprep.subr.bf16.mxu0 0
      %1124 = vmatpush1.bf16.msra.mxu0 0
      %1125 = vmatprep.subr.bf16.mxu0 0
      %1126 = vmatpush1.bf16.msra.mxu0 0
      %1127 = vmatprep.subr.bf16.mxu0 0
      %1128 = vmatpush1.bf16.msra.mxu0 0
      %1129 = vmatprep.subr.bf16.mxu0 0
      %1130 = vmatpush1.bf16.msra.mxu0 0
      %1131 = vmatprep.subr.bf16.mxu0 %v1108
      %1132 = vmatpush1.bf16.msra.mxu0 %v1107
      %1133 = vmatprep.subr.bf16.mxu0 %v1105
      %1134 = vmatpush1.bf16.msra.mxu0 %v1104
      %1135 = vmatprep.subr.bf16.mxu0 0
      %1136 = vmatpush2.bf16.msra.mxu0 0
      %1137 = vmatprep.subr.bf16.mxu0 0
      %1138 = vmatpush2.bf16.msra.mxu0 0
      %1139 = vmatprep.subr.bf16.mxu0 0
      %1140 = vmatpush2.bf16.msra.mxu0 0
      %1141 = vmatprep.subr.bf16.mxu0 0
      %1142 = vmatpush2.bf16.msra.mxu0 0
      %1143 = vmatprep.subr.bf16.mxu0 0
      %1144 = vmatpush2.bf16.msra.mxu0 0
      %1145 = vmatprep.subr.bf16.mxu0 0
      %1146 = vmatpush2.bf16.msra.mxu0 0
      %1147 = vmatprep.subr.bf16.mxu0 0
      %1148 = vmatpush2.bf16.msra.mxu0 0
      %1149 = vmatprep.subr.bf16.mxu0 0
      %1150 = vmatpush2.bf16.msra.mxu0 0
      %1151 = vmatprep.mubr.bf16.mxu0 0
      %1152 = vmatmul.mubr.bf16.gmra.mxu0 %v1117
      %v1153 = vpop.f32.mrf.mxu0
      %v1154 = vadd.f32 0.0, %v1153
      %v1155 = vpop.f32.mrf.mxu0
      %v1156 = vadd.f32 0.0, %v1155
      %v1157 = vpop.f32.mrf.mxu0
      %v1158 = vadd.f32 0.0, %v1157
      %v1159 = vpop.f32.mrf.mxu0
      %v1160 = vadd.f32 0.0, %v1159
      %1161 = vdwg.mxu0
      %1162 = vmatprep.subr.bf16.mxu0 0
      %1163 = vmatpush1.bf16.msra.mxu0 0
      %1164 = vmatprep.subr.bf16.mxu0 0
      %1165 = vmatpush1.bf16.msra.mxu0 0
      %1166 = vmatprep.subr.bf16.mxu0 0
      %1167 = vmatpush1.bf16.msra.mxu0 0
      %1168 = vmatprep.subr.bf16.mxu0 0
      %1169 = vmatpush1.bf16.msra.mxu0 0
      %1170 = vmatprep.subr.bf16.mxu0 0
      %1171 = vmatpush1.bf16.msra.mxu0 0
      %1172 = vmatprep.subr.bf16.mxu0 0
      %1173 = vmatpush1.bf16.msra.mxu0 0
      %1174 = vmatprep.subr.bf16.mxu0 0
      %1175 = vmatpush1.bf16.msra.mxu0 %v1109
      %1176 = vmatprep.subr.bf16.mxu0 0
      %1177 = vmatpush1.bf16.msra.mxu0 %v1106
      %1178 = vmatprep.subr.bf16.mxu0 0
      %1179 = vmatpush2.bf16.msra.mxu0 0
      %1180 = vmatprep.subr.bf16.mxu0 0
      %1181 = vmatpush2.bf16.msra.mxu0 0
      %1182 = vmatprep.subr.bf16.mxu0 0
      %1183 = vmatpush2.bf16.msra.mxu0 0
      %1184 = vmatprep.subr.bf16.mxu0 0
      %1185 = vmatpush2.bf16.msra.mxu0 0
      %1186 = vmatprep.subr.bf16.mxu0 0
      %1187 = vmatpush2.bf16.msra.mxu0 0
      %1188 = vmatprep.subr.bf16.mxu0 0
      %1189 = vmatpush2.bf16.msra.mxu0 0
      %1190 = vmatprep.subr.bf16.mxu0 0
      %1191 = vmatpush2.bf16.msra.mxu0 0
      %1192 = vmatprep.subr.bf16.mxu0 0
      %1193 = vmatpush2.bf16.msra.mxu0 0
      %1194 = vmatprep.mubr.bf16.mxu0 0
      %1195 = vmatmul.mubr.bf16.gmra.mxu0 %v1117
      %v1196 = vpop.f32.mrf.mxu0
      %v1197 = vadd.f32 0.0, %v1196
      %v1198 = vpop.f32.mrf.mxu0
      %v1199 = vpop.f32.mrf.mxu0
      %v1200 = vadd.f32 0.0, %v1199
      %v1201 = vpop.f32.mrf.mxu0
      %1202 = vdwg.mxu0
      %v1203 = vadd.f32 %v1033, %v1154
      %v1204 = vadd.f32 %v1034, %v1156
      %v1205 = vadd.f32 %v1035, %v1197
      %v1206 = vadd.f32 %v1036, %v1158
      %v1207 = vadd.f32 %v1037, %v1160
      %v1208 = vadd.f32 %v1038, %v1200
      %s1209 = scalar_lea.vmem %s1, 56
      %v1210 = vld [vmem:[%s1209] sm:$0xf]
      %v1211 = vld [vmem:[%s1209 + $0x4] sm:$0xf]
      %v1214 = vunpack.c.l.b16 %v1210
      %v1215 = vunpack.c.l.b16 %v1211
      %v1216 = vpack.c.b16 %v1215, %v1214
      %1217 = vrot.lane.b32.xlu0 %v1079, 87
      %v1218 = vpop.permute.xlu0 %1217
      %1219 = vrot.lane.b32.xlu0 %v1080, 87
      %v1220 = vpop.permute.xlu0 %1219
      %1221 = vrot.lane.b32.xlu0 %v1081, 87
      %v1222 = vpop.permute.xlu0 %1221
      %1223 = vrot.lane.b32.xlu0 %v1082, 87
      %v1224 = vpop.permute.xlu0 %1223
      %1225 = vrot.lane.b32.xlu0 %v1083, 87
      %v1226 = vpop.permute.xlu0 %1225
      %1227 = vrot.lane.b32.xlu0 %v1084, 87
      %v1228 = vpop.permute.xlu0 %1227
      %1229 = vrot.lane.b32.xlu0 %v1085, 87
      %v1230 = vpop.permute.xlu0 %1229
      %1231 = vrot.lane.b32.xlu0 %v1086, 87
      %v1232 = vpop.permute.xlu0 %1231
      %vm1233 = vcmask 711680
      %v1234 = vsel %vm1233, %v1218, %v1220
      %v1235 = vsel %vm1233, %v1220, %v1222
      %v1236 = vsel %vm1233, %v1222, %v1224
      %v1237 = vsel %vm1233, %v1226, %v1228
      %v1238 = vsel %vm1233, %v1228, %v1230
      %v1239 = vsel %vm1233, %v1230, %v1232
      %v1247 = vsel %vm357, %v1216, 0
      %1249 = vmatprep.subr.bf16.mxu0 0
      %1250 = vmatpush1.bf16.msra.mxu0 0
      %1251 = vmatprep.subr.bf16.mxu0 0
      %1252 = vmatpush1.bf16.msra.mxu0 0
      %1253 = vmatprep.subr.bf16.mxu0 0
      %1254 = vmatpush1.bf16.msra.mxu0 0
      %1255 = vmatprep.subr.bf16.mxu0 0
      %1256 = vmatpush1.bf16.msra.mxu0 0
      %1257 = vmatprep.subr.bf16.mxu0 0
      %1258 = vmatpush1.bf16.msra.mxu0 0
      %1259 = vmatprep.subr.bf16.mxu0 0
      %1260 = vmatpush1.bf16.msra.mxu0 0
      %1261 = vmatprep.subr.bf16.mxu0 %v1238
      %1262 = vmatpush1.bf16.msra.mxu0 %v1237
      %1263 = vmatprep.subr.bf16.mxu0 %v1235
      %1264 = vmatpush1.bf16.msra.mxu0 %v1234
      %1265 = vmatprep.subr.bf16.mxu0 0
      %1266 = vmatpush2.bf16.msra.mxu0 0
      %1267 = vmatprep.subr.bf16.mxu0 0
      %1268 = vmatpush2.bf16.msra.mxu0 0
      %1269 = vmatprep.subr.bf16.mxu0 0
      %1270 = vmatpush2.bf16.msra.mxu0 0
      %1271 = vmatprep.subr.bf16.mxu0 0
      %1272 = vmatpush2.bf16.msra.mxu0 0
      %1273 = vmatprep.subr.bf16.mxu0 0
      %1274 = vmatpush2.bf16.msra.mxu0 0
      %1275 = vmatprep.subr.bf16.mxu0 0
      %1276 = vmatpush2.bf16.msra.mxu0 0
      %1277 = vmatprep.subr.bf16.mxu0 0
      %1278 = vmatpush2.bf16.msra.mxu0 0
      %1279 = vmatprep.subr.bf16.mxu0 0
      %1280 = vmatpush2.bf16.msra.mxu0 0
      %1281 = vmatprep.mubr.bf16.mxu0 0
      %1282 = vmatmul.mubr.bf16.gmra.mxu0 %v1247
      %v1283 = vpop.f32.mrf.mxu0
      %v1284 = vadd.f32 0.0, %v1283
      %v1285 = vpop.f32.mrf.mxu0
      %v1286 = vadd.f32 0.0, %v1285
      %v1287 = vpop.f32.mrf.mxu0
      %v1288 = vadd.f32 0.0, %v1287
      %v1289 = vpop.f32.mrf.mxu0
      %v1290 = vadd.f32 0.0, %v1289
      %1291 = vdwg.mxu0
      %1292 = vmatprep.subr.bf16.mxu0 0
      %1293 = vmatpush1.bf16.msra.mxu0 0
      %1294 = vmatprep.subr.bf16.mxu0 0
      %1295 = vmatpush1.bf16.msra.mxu0 0
      %1296 = vmatprep.subr.bf16.mxu0 0
      %1297 = vmatpush1.bf16.msra.mxu0 0
      %1298 = vmatprep.subr.bf16.mxu0 0
      %1299 = vmatpush1.bf16.msra.mxu0 0
      %1300 = vmatprep.subr.bf16.mxu0 0
      %1301 = vmatpush1.bf16.msra.mxu0 0
      %1302 = vmatprep.subr.bf16.mxu0 0
      %1303 = vmatpush1.bf16.msra.mxu0 0
      %1304 = vmatprep.subr.bf16.mxu0 0
      %1305 = vmatpush1.bf16.msra.mxu0 %v1239
      %1306 = vmatprep.subr.bf16.mxu0 0
      %1307 = vmatpush1.bf16.msra.mxu0 %v1236
      %1308 = vmatprep.subr.bf16.mxu0 0
      %1309 = vmatpush2.bf16.msra.mxu0 0
      %1310 = vmatprep.subr.bf16.mxu0 0
      %1311 = vmatpush2.bf16.msra.mxu0 0
      %1312 = vmatprep.subr.bf16.mxu0 0
      %1313 = vmatpush2.bf16.msra.mxu0 0
      %1314 = vmatprep.subr.bf16.mxu0 0
      %1315 = vmatpush2.bf16.msra.mxu0 0
      %1316 = vmatprep.subr.bf16.mxu0 0
      %1317 = vmatpush2.bf16.msra.mxu0 0
      %1318 = vmatprep.subr.bf16.mxu0 0
      %1319 = vmatpush2.bf16.msra.mxu0 0
      %1320 = vmatprep.subr.bf16.mxu0 0
      %1321 = vmatpush2.bf16.msra.mxu0 0
      %1322 = vmatprep.subr.bf16.mxu0 0
      %1323 = vmatpush2.bf16.msra.mxu0 0
      %1324 = vmatprep.mubr.bf16.mxu0 0
      %1325 = vmatmul.mubr.bf16.gmra.mxu0 %v1247
      %v1326 = vpop.f32.mrf.mxu0
      %v1327 = vadd.f32 0.0, %v1326
      %v1328 = vpop.f32.mrf.mxu0
      %v1329 = vpop.f32.mrf.mxu0
      %v1330 = vadd.f32 0.0, %v1329
      %v1331 = vpop.f32.mrf.mxu0
      %1332 = vdwg.mxu0
      %v1333 = vadd.f32 %v1203, %v1284
      %v1334 = vadd.f32 %v1204, %v1286
      %v1335 = vadd.f32 %v1205, %v1327
      %v1336 = vadd.f32 %v1206, %v1288
      %v1337 = vadd.f32 %v1207, %v1290
      %v1338 = vadd.f32 %v1208, %v1330
      %s1339 = scalar_lea.vmem %s1, 64
      %v1340 = vld [vmem:[%s1339] sm:$0xf]
      %v1341 = vld [vmem:[%s1339 + $0x4] sm:$0xf]
      %v1344 = vunpack.c.l.b16 %v1340
      %v1345 = vunpack.c.l.b16 %v1341
      %v1346 = vpack.c.b16 %v1345, %v1344
      %1347 = vrot.lane.b32.xlu0 %v1079, 86
      %v1348 = vpop.permute.xlu0 %1347
      %1349 = vrot.lane.b32.xlu0 %v1080, 86
      %v1350 = vpop.permute.xlu0 %1349
      %1351 = vrot.lane.b32.xlu0 %v1081, 86
      %v1352 = vpop.permute.xlu0 %1351
      %1353 = vrot.lane.b32.xlu0 %v1082, 86
      %v1354 = vpop.permute.xlu0 %1353
      %1355 = vrot.lane.b32.xlu0 %v1083, 86
      %v1356 = vpop.permute.xlu0 %1355
      %1357 = vrot.lane.b32.xlu0 %v1084, 86
      %v1358 = vpop.permute.xlu0 %1357
      %1359 = vrot.lane.b32.xlu0 %v1085, 86
      %v1360 = vpop.permute.xlu0 %1359
      %1361 = vrot.lane.b32.xlu0 %v1086, 86
      %v1362 = vpop.permute.xlu0 %1361
      %vm1363 = vcmask 703488
      %v1364 = vsel %vm1363, %v1348, %v1350
      %v1365 = vsel %vm1363, %v1350, %v1352
      %v1366 = vsel %vm1363, %v1352, %v1354
      %v1367 = vsel %vm1363, %v1356, %v1358
      %v1368 = vsel %vm1363, %v1358, %v1360
      %v1369 = vsel %vm1363, %v1360, %v1362
      %v1377 = vsel %vm357, %v1346, 0
      %1379 = vmatprep.subr.bf16.mxu0 0
      %1380 = vmatpush1.bf16.msra.mxu0 0
      %1381 = vmatprep.subr.bf16.mxu0 0
      %1382 = vmatpush1.bf16.msra.mxu0 0
      %1383 = vmatprep.subr.bf16.mxu0 0
      %1384 = vmatpush1.bf16.msra.mxu0 0
      %1385 = vmatprep.subr.bf16.mxu0 0
      %1386 = vmatpush1.bf16.msra.mxu0 0
      %1387 = vmatprep.subr.bf16.mxu0 0
      %1388 = vmatpush1.bf16.msra.mxu0 0
      %1389 = vmatprep.subr.bf16.mxu0 0
      %1390 = vmatpush1.bf16.msra.mxu0 0
      %1391 = vmatprep.subr.bf16.mxu0 %v1368
      %1392 = vmatpush1.bf16.msra.mxu0 %v1367
      %1393 = vmatprep.subr.bf16.mxu0 %v1365
      %1394 = vmatpush1.bf16.msra.mxu0 %v1364
      %1395 = vmatprep.subr.bf16.mxu0 0
      %1396 = vmatpush2.bf16.msra.mxu0 0
      %1397 = vmatprep.subr.bf16.mxu0 0
      %1398 = vmatpush2.bf16.msra.mxu0 0
      %1399 = vmatprep.subr.bf16.mxu0 0
      %1400 = vmatpush2.bf16.msra.mxu0 0
      %1401 = vmatprep.subr.bf16.mxu0 0
      %1402 = vmatpush2.bf16.msra.mxu0 0
      %1403 = vmatprep.subr.bf16.mxu0 0
      %1404 = vmatpush2.bf16.msra.mxu0 0
      %1405 = vmatprep.subr.bf16.mxu0 0
      %1406 = vmatpush2.bf16.msra.mxu0 0
      %1407 = vmatprep.subr.bf16.mxu0 0
      %1408 = vmatpush2.bf16.msra.mxu0 0
      %1409 = vmatprep.subr.bf16.mxu0 0
      %1410 = vmatpush2.bf16.msra.mxu0 0
      %1411 = vmatprep.mubr.bf16.mxu0 0
      %1412 = vmatmul.mubr.bf16.gmra.mxu0 %v1377
      %v1413 = vpop.f32.mrf.mxu0
      %v1414 = vadd.f32 0.0, %v1413
      %v1415 = vpop.f32.mrf.mxu0
      %v1416 = vadd.f32 0.0, %v1415
      %v1417 = vpop.f32.mrf.mxu0
      %v1418 = vadd.f32 0.0, %v1417
      %v1419 = vpop.f32.mrf.mxu0
      %v1420 = vadd.f32 0.0, %v1419
      %1421 = vdwg.mxu0
      %1422 = vmatprep.subr.bf16.mxu0 0
      %1423 = vmatpush1.bf16.msra.mxu0 0
      %1424 = vmatprep.subr.bf16.mxu0 0
      %1425 = vmatpush1.bf16.msra.mxu0 0
      %1426 = vmatprep.subr.bf16.mxu0 0
      %1427 = vmatpush1.bf16.msra.mxu0 0
      %1428 = vmatprep.subr.bf16.mxu0 0
      %1429 = vmatpush1.bf16.msra.mxu0 0
      %1430 = vmatprep.subr.bf16.mxu0 0
      %1431 = vmatpush1.bf16.msra.mxu0 0
      %1432 = vmatprep.subr.bf16.mxu0 0
      %1433 = vmatpush1.bf16.msra.mxu0 0
      %1434 = vmatprep.subr.bf16.mxu0 0
      %1435 = vmatpush1.bf16.msra.mxu0 %v1369
      %1436 = vmatprep.subr.bf16.mxu0 0
      %1437 = vmatpush1.bf16.msra.mxu0 %v1366
      %1438 = vmatprep.subr.bf16.mxu0 0
      %1439 = vmatpush2.bf16.msra.mxu0 0
      %1440 = vmatprep.subr.bf16.mxu0 0
      %1441 = vmatpush2.bf16.msra.mxu0 0
      %1442 = vmatprep.subr.bf16.mxu0 0
      %1443 = vmatpush2.bf16.msra.mxu0 0
      %1444 = vmatprep.subr.bf16.mxu0 0
      %1445 = vmatpush2.bf16.msra.mxu0 0
      %1446 = vmatprep.subr.bf16.mxu0 0
      %1447 = vmatpush2.bf16.msra.mxu0 0
      %1448 = vmatprep.subr.bf16.mxu0 0
      %1449 = vmatpush2.bf16.msra.mxu0 0
      %1450 = vmatprep.subr.bf16.mxu0 0
      %1451 = vmatpush2.bf16.msra.mxu0 0
      %1452 = vmatprep.subr.bf16.mxu0 0
      %1453 = vmatpush2.bf16.msra.mxu0 0
      %1454 = vmatprep.mubr.bf16.mxu0 0
      %1455 = vmatmul.mubr.bf16.gmra.mxu0 %v1377
      %v1456 = vpop.f32.mrf.mxu0
      %v1457 = vadd.f32 0.0, %v1456
      %v1458 = vpop.f32.mrf.mxu0
      %v1459 = vpop.f32.mrf.mxu0
      %v1460 = vadd.f32 0.0, %v1459
      %v1461 = vpop.f32.mrf.mxu0
      %1462 = vdwg.mxu0
      %v1463 = vadd.f32 %v1333, %v1414
      %v1464 = vadd.f32 %v1334, %v1416
      %v1465 = vadd.f32 %v1335, %v1457
      %v1466 = vadd.f32 %v1336, %v1418
      %v1467 = vadd.f32 %v1337, %v1420
      %v1468 = vadd.f32 %v1338, %v1460
      %v1469 = vld [vmem:[%s4] sm:$0x7]
      %v1471 = vlaneseq
      %v1472 = vshrl.u32 %v1471, 7
      %v1473 = vsub.s32 0, %v1472
      %v1474 = vrot.slane %v1469, %v1473
      %v1475 = vlaneseq
      %v1476 = vshrl.u32 %v1475, 7
      %v1477 = vsub.s32 1, %v1476
      %v1478 = vrot.slane %v1469, %v1477
      %v1479 = vlaneseq
      %v1480 = vshrl.u32 %v1479, 7
      %v1481 = vsub.s32 2, %v1480
      %v1482 = vrot.slane %v1469, %v1481
      %v1486 = vmul.f32 %v1463, %v1474
      %v1487 = vmul.f32 %v1464, %v1478
      %v1488 = vmul.f32 %v1465, %v1482
      %v1489 = vmul.f32 %v1466, %v1474
      %v1490 = vmul.f32 %v1467, %v1478
      %v1491 = vmul.f32 %v1468, %v1482
      %1492 = vst [vmem:[#allocation2] sm:$0xff] %v1486
      %1493 = vst [vmem:[#allocation2 + $0x8] sm:$0xff] %v1487
      %vm1494 = vcmask 867328
      %1495 = vst.msk [vmem:[#allocation2 + $0x10] sm:$0xff] %vm1494, %v1488
      %1496 = vst [vmem:[#allocation2 + $0x18] sm:$0xff] %v1489
      %1497 = vst [vmem:[#allocation2 + $0x20] sm:$0xff] %v1490
      %1498 = vst.msk [vmem:[#allocation2 + $0x28] sm:$0xff] %vm1494, %v1491
      %v1499 = vld [vmem:[#allocation2] sm:$0xff]
      %v1500 = vld [vmem:[#allocation2 + $0x8] sm:$0xff]
      %v1501 = vld [vmem:[#allocation2 + $0x10] sm:$0xff]
      %v1502 = vld [vmem:[#allocation2 + $0x18] sm:$0xff]
      %v1503 = vld [vmem:[#allocation2 + $0x20] sm:$0xff]
      %v1504 = vld [vmem:[#allocation2 + $0x28] sm:$0xff]
      %v1505 = vmul.f32 %v1499, 0.0625
      %v1506 = vmul.f32 %v1500, 0.0625
      %v1507 = vmul.f32 %v1501, 0.0625
      %v1508 = vmul.f32 %v1502, 0.0625
      %v1509 = vmul.f32 %v1503, 0.0625
      %v1510 = vmul.f32 %v1504, 0.0625
      %v1511 = vmul.f32 %v1499, 0.125
      %v1512 = vmul.f32 %v1500, 0.125
      %v1513 = vmul.f32 %v1501, 0.125
      %v1514 = vmul.f32 %v1502, 0.125
      %v1515 = vmul.f32 %v1503, 0.125
      %v1516 = vmul.f32 %v1504, 0.125
      %1523 = vrot.lane.b32.xlu0 %v1511, 127
      %v1524 = vpop.permute.xlu0 %1523
      %1525 = vrot.lane.b32.xlu0 %v1512, 127
      %v1526 = vpop.permute.xlu0 %1525
      %1527 = vrot.lane.b32.xlu0 %v1513, 127
      %v1528 = vpop.permute.xlu0 %1527
      %1529 = vrot.lane.b32.xlu0 %v1514, 127
      %v1530 = vpop.permute.xlu0 %1529
      %1531 = vrot.lane.b32.xlu0 %v1515, 127
      %v1532 = vpop.permute.xlu0 %1531
      %1533 = vrot.lane.b32.xlu0 %v1516, 127
      %v1534 = vpop.permute.xlu0 %1533
      %vm1535 = vcmask 1039360
      %v1536 = vsel %vm1535, %v1524, %v1526
      %v1537 = vsel %vm1535, %v1526, %v1528
      %v1538 = vsel %vm1535, %v1530, %v1532
      %v1539 = vsel %vm1535, %v1532, %v1534
      %v1546 = vadd.f32 %v1505, %v1536
      %v1547 = vadd.f32 %v1506, %v1537
      %v1548 = vadd.f32 %v1507, %v1528
      %v1549 = vadd.f32 %v1508, %v1538
      %v1550 = vadd.f32 %v1509, %v1539
      %v1551 = vadd.f32 %v1510, %v1534
      %1558 = vrot.lane.b32.xlu0 %v1505, 126
      %v1559 = vpop.permute.xlu0 %1558
      %1560 = vrot.lane.b32.xlu0 %v1506, 126
      %v1561 = vpop.permute.xlu0 %1560
      %1562 = vrot.lane.b32.xlu0 %v1507, 126
      %v1563 = vpop.permute.xlu0 %1562
      %1564 = vrot.lane.b32.xlu0 %v1508, 126
      %v1565 = vpop.permute.xlu0 %1564
      %1566 = vrot.lane.b32.xlu0 %v1509, 126
      %v1567 = vpop.permute.xlu0 %1566
      %1568 = vrot.lane.b32.xlu0 %v1510, 126
      %v1569 = vpop.permute.xlu0 %1568
      %vm1570 = vcmask 1031168
      %v1571 = vsel %vm1570, %v1559, %v1561
      %v1572 = vsel %vm1570, %v1561, %v1563
      %v1573 = vsel %vm1570, %v1565, %v1567
      %v1574 = vsel %vm1570, %v1567, %v1569
      %v1581 = vadd.f32 %v1546, %v1571
      %v1582 = vadd.f32 %v1547, %v1572
      %v1583 = vadd.f32 %v1548, %v1563
      %v1584 = vadd.f32 %v1549, %v1573
      %v1585 = vadd.f32 %v1550, %v1574
      %v1586 = vadd.f32 %v1551, %v1569
      %1587 = vrot.lane.b32.xlu0 %v1511, 108
      %v1588 = vpop.permute.xlu0 %1587
      %1589 = vrot.lane.b32.xlu0 %v1512, 108
      %v1590 = vpop.permute.xlu0 %1589
      %1591 = vrot.lane.b32.xlu0 %v1513, 108
      %v1592 = vpop.permute.xlu0 %1591
      %1593 = vrot.lane.b32.xlu0 %v1514, 108
      %v1594 = vpop.permute.xlu0 %1593
      %1595 = vrot.lane.b32.xlu0 %v1515, 108
      %v1596 = vpop.permute.xlu0 %1595
      %1597 = vrot.lane.b32.xlu0 %v1516, 108
      %v1598 = vpop.permute.xlu0 %1597
      %vm1599 = vcmask 883712
      %v1600 = vsel %vm1599, %v1588, %v1590
      %v1601 = vsel %vm1599, %v1590, %v1592
      %v1602 = vsel %vm1599, %v1594, %v1596
      %v1603 = vsel %vm1599, %v1596, %v1598
      %v1610 = vadd.f32 %v1581, %v1600
      %v1611 = vadd.f32 %v1582, %v1601
      %v1612 = vadd.f32 %v1583, %v1592
      %v1613 = vadd.f32 %v1584, %v1602
      %v1614 = vadd.f32 %v1585, %v1603
      %v1615 = vadd.f32 %v1586, %v1598
      %v1616 = vmul.f32 %v1499, 0.25
      %v1617 = vmul.f32 %v1500, 0.25
      %v1618 = vmul.f32 %v1501, 0.25
      %v1619 = vmul.f32 %v1502, 0.25
      %v1620 = vmul.f32 %v1503, 0.25
      %v1621 = vmul.f32 %v1504, 0.25
      %1628 = vrot.lane.b32.xlu0 %v1616, 107
      %v1629 = vpop.permute.xlu0 %1628
      %1630 = vrot.lane.b32.xlu0 %v1617, 107
      %v1631 = vpop.permute.xlu0 %1630
      %1632 = vrot.lane.b32.xlu0 %v1618, 107
      %v1633 = vpop.permute.xlu0 %1632
      %1634 = vrot.lane.b32.xlu0 %v1619, 107
      %v1635 = vpop.permute.xlu0 %1634
      %1636 = vrot.lane.b32.xlu0 %v1620, 107
      %v1637 = vpop.permute.xlu0 %1636
      %1638 = vrot.lane.b32.xlu0 %v1621, 107
      %v1639 = vpop.permute.xlu0 %1638
      %vm1640 = vcmask 875520
      %v1641 = vsel %vm1640, %v1629, %v1631
      %v1642 = vsel %vm1640, %v1631, %v1633
      %v1643 = vsel %vm1640, %v1635, %v1637
      %v1644 = vsel %vm1640, %v1637, %v1639
      %v1651 = vadd.f32 %v1610, %v1641
      %v1652 = vadd.f32 %v1611, %v1642
      %v1653 = vadd.f32 %v1612, %v1633
      %v1654 = vadd.f32 %v1613, %v1643
      %v1655 = vadd.f32 %v1614, %v1644
      %v1656 = vadd.f32 %v1615, %v1639
      %1657 = vrot.lane.b32.xlu0 %v1511, 106
      %v1658 = vpop.permute.xlu0 %1657
      %1659 = vrot.lane.b32.xlu0 %v1512, 106
      %v1660 = vpop.permute.xlu0 %1659
      %1661 = vrot.lane.b32.xlu0 %v1513, 106
      %v1662 = vpop.permute.xlu0 %1661
      %1663 = vrot.lane.b32.xlu0 %v1514, 106
      %v1664 = vpop.permute.xlu0 %1663
      %1665 = vrot.lane.b32.xlu0 %v1515, 106
      %v1666 = vpop.permute.xlu0 %1665
      %1667 = vrot.lane.b32.xlu0 %v1516, 106
      %v1668 = vpop.permute.xlu0 %1667
      %v1669 = vsel %vm1494, %v1658, %v1660
      %v1670 = vsel %vm1494, %v1660, %v1662
      %v1671 = vsel %vm1494, %v1664, %v1666
      %v1672 = vsel %vm1494, %v1666, %v1668
      %v1679 = vadd.f32 %v1651, %v1669
      %v1680 = vadd.f32 %v1652, %v1670
      %v1681 = vadd.f32 %v1653, %v1662
      %v1682 = vadd.f32 %v1654, %v1671
      %v1683 = vadd.f32 %v1655, %v1672
      %v1684 = vadd.f32 %v1656, %v1668
      %1685 = vrot.lane.b32.xlu0 %v1505, 88
      %v1686 = vpop.permute.xlu0 %1685
      %1687 = vrot.lane.b32.xlu0 %v1506, 88
      %v1688 = vpop.permute.xlu0 %1687
      %1689 = vrot.lane.b32.xlu0 %v1507, 88
      %v1690 = vpop.permute.xlu0 %1689
      %1691 = vrot.lane.b32.xlu0 %v1508, 88
      %v1692 = vpop.permute.xlu0 %1691
      %1693 = vrot.lane.b32.xlu0 %v1509, 88
      %v1694 = vpop.permute.xlu0 %1693
      %1695 = vrot.lane.b32.xlu0 %v1510, 88
      %v1696 = vpop.permute.xlu0 %1695
      %vm1697 = vcmask 719872
      %v1698 = vsel %vm1697, %v1686, %v1688
      %v1699 = vsel %vm1697, %v1688, %v1690
      %v1700 = vsel %vm1697, %v1692, %v1694
      %v1701 = vsel %vm1697, %v1694, %v1696
      %v1708 = vadd.f32 %v1679, %v1698
      %v1709 = vadd.f32 %v1680, %v1699
      %v1710 = vadd.f32 %v1681, %v1690
      %v1711 = vadd.f32 %v1682, %v1700
      %v1712 = vadd.f32 %v1683, %v1701
      %v1713 = vadd.f32 %v1684, %v1696
      %1714 = vrot.lane.b32.xlu0 %v1511, 87
      %v1715 = vpop.permute.xlu0 %1714
      %1716 = vrot.lane.b32.xlu0 %v1512, 87
      %v1717 = vpop.permute.xlu0 %1716
      %1718 = vrot.lane.b32.xlu0 %v1513, 87
      %v1719 = vpop.permute.xlu0 %1718
      %1720 = vrot.lane.b32.xlu0 %v1514, 87
      %v1721 = vpop.permute.xlu0 %1720
      %1722 = vrot.lane.b32.xlu0 %v1515, 87
      %v1723 = vpop.permute.xlu0 %1722
      %1724 = vrot.lane.b32.xlu0 %v1516, 87
      %v1725 = vpop.permute.xlu0 %1724
      %vm1726 = vcmask 711680
      %v1727 = vsel %vm1726, %v1715, %v1717
      %v1728 = vsel %vm1726, %v1717, %v1719
      %v1729 = vsel %vm1726, %v1721, %v1723
      %v1730 = vsel %vm1726, %v1723, %v1725
      %v1737 = vadd.f32 %v1708, %v1727
      %v1738 = vadd.f32 %v1709, %v1728
      %v1739 = vadd.f32 %v1710, %v1719
      %v1740 = vadd.f32 %v1711, %v1729
      %v1741 = vadd.f32 %v1712, %v1730
      %v1742 = vadd.f32 %v1713, %v1725
      %1743 = vrot.lane.b32.xlu0 %v1505, 86
      %v1744 = vpop.permute.xlu0 %1743
      %1745 = vrot.lane.b32.xlu0 %v1506, 86
      %v1746 = vpop.permute.xlu0 %1745
      %1747 = vrot.lane.b32.xlu0 %v1507, 86
      %v1748 = vpop.permute.xlu0 %1747
      %1749 = vrot.lane.b32.xlu0 %v1508, 86
      %v1750 = vpop.permute.xlu0 %1749
      %1751 = vrot.lane.b32.xlu0 %v1509, 86
      %v1752 = vpop.permute.xlu0 %1751
      %1753 = vrot.lane.b32.xlu0 %v1510, 86
      %v1754 = vpop.permute.xlu0 %1753
      %vm1755 = vcmask 703488
      %v1756 = vsel %vm1755, %v1744, %v1746
      %v1757 = vsel %vm1755, %v1746, %v1748
      %v1758 = vsel %vm1755, %v1750, %v1752
      %v1759 = vsel %vm1755, %v1752, %v1754
      %v1766 = vadd.f32 %v1737, %v1756
      %v1767 = vadd.f32 %v1738, %v1757
      %v1768 = vadd.f32 %v1739, %v1748
      %v1769 = vadd.f32 %v1740, %v1758
      %v1770 = vadd.f32 %v1741, %v1759
      %v1771 = vadd.f32 %v1742, %v1754
      %v1772 = vld [vmem:[%s279] sm:$0xff]
      %v1773 = vld [vmem:[%s279 + $0x8] sm:$0xff]
      %1775 = vset.pattern.permute.xlu0 0
      %1776 = vperm.xlu0 %1775, %v1772
      %v1777 = vpop.permute.xlu0 %1776
      %1780 = vset.pattern.permute.xlu0 0
      %1781 = vperm.xlu0 %1780, %v1773
      %v1782 = vpop.permute.xlu0 %1781
      %v1784 = vadd.f32 %v1766, %v1777
      %v1785 = vadd.f32 %v1767, %v1777
      %v1786 = vadd.f32 %v1768, %v1777
      %v1787 = vadd.f32 %v1769, %v1782
      %v1788 = vadd.f32 %v1770, %v1782
      %v1789 = vadd.f32 %v1771, %v1782
      %v1790 = vld [vmem:[%s283] sm:$0x7]
      %1791 = vset.pattern.permute.xlu0 1
      %1792 = vperm.xlu0 %1791, %v1772
      %v1793 = vpop.permute.xlu0 %1792
      %1795 = vset.pattern.permute.xlu0 1
      %1796 = vperm.xlu0 %1795, %v1773
      %v1797 = vpop.permute.xlu0 %1796
      %v1800 = vlaneseq
      %v1801 = vshrl.u32 %v1800, 7
      %v1802 = vsub.s32 0, %v1801
      %v1803 = vrot.slane %v1790, %v1802
      %v1804 = vlaneseq
      %v1805 = vshrl.u32 %v1804, 7
      %v1806 = vsub.s32 1, %v1805
      %v1807 = vrot.slane %v1790, %v1806
      %v1808 = vlaneseq
      %v1809 = vshrl.u32 %v1808, 7
      %v1810 = vsub.s32 2, %v1809
      %v1811 = vrot.slane %v1790, %v1810
      %v1815 = vmul.f32 %v1793, %v1803
      %v1816 = vmul.f32 %v1793, %v1807
      %v1817 = vmul.f32 %v1793, %v1811
      %v1818 = vmul.f32 %v1797, %v1803
      %v1819 = vmul.f32 %v1797, %v1807
      %v1820 = vmul.f32 %v1797, %v1811
      %v1821 = vadd.f32 %v1784, %v1815
      %v1822 = vadd.f32 %v1785, %v1816
      %v1823 = vadd.f32 %v1786, %v1817
      %v1824 = vadd.f32 %v1787, %v1818
      %v1825 = vadd.f32 %v1788, %v1819
      %v1826 = vadd.f32 %v1789, %v1820
      %vm1827 = vcmp.ge.f32.partialorder %v1821, 0.0
      %vm1828 = vcmp.ge.f32.partialorder %v1822, 0.0
      %vm1829 = vcmp.ge.f32.partialorder %v1823, 0.0
      %vm1830 = vcmp.ge.f32.partialorder %v1824, 0.0
      %vm1831 = vcmp.ge.f32.partialorder %v1825, 0.0
      %vm1832 = vcmp.ge.f32.partialorder %v1826, 0.0
      %v1833 = vmul.f32 %v1821, 0.2
      %v1834 = vmul.f32 %v1822, 0.2
      %v1835 = vmul.f32 %v1823, 0.2
      %v1836 = vmul.f32 %v1824, 0.2
      %v1837 = vmul.f32 %v1825, 0.2
      %v1838 = vmul.f32 %v1826, 0.2
      %v1839 = vsel %vm1827, %v1821, %v1833
      %v1840 = vsel %vm1828, %v1822, %v1834
      %v1841 = vsel %vm1829, %v1823, %v1835
      %v1842 = vsel %vm1830, %v1824, %v1836
      %v1843 = vsel %vm1831, %v1825, %v1837
      %v1844 = vsel %vm1832, %v1826, %v1838
      %v1845 = vld [vmem:[%s5] sm:$0x7]
      %v1847 = vlaneseq
      %v1848 = vshrl.u32 %v1847, 7
      %v1849 = vsub.s32 0, %v1848
      %v1850 = vrot.slane %v1845, %v1849
      %v1851 = vlaneseq
      %v1852 = vshrl.u32 %v1851, 7
      %v1853 = vsub.s32 1, %v1852
      %v1854 = vrot.slane %v1845, %v1853
      %v1855 = vlaneseq
      %v1856 = vshrl.u32 %v1855, 7
      %v1857 = vsub.s32 2, %v1856
      %v1858 = vrot.slane %v1845, %v1857
      %v1862 = vmul.f32 %v1839, %v1850
      %v1863 = vmul.f32 %v1840, %v1854
      %v1864 = vmul.f32 %v1841, %v1858
      %v1865 = vmul.f32 %v1842, %v1850
      %v1866 = vmul.f32 %v1843, %v1854
      %v1867 = vmul.f32 %v1844, %v1858
      %v1868 = vadd.f32 %v1862, %v1863
      %vm1869 = vcmask 523264
      %v1870 = vsel %vm1869, %v1864, 0.0
      %v1871 = vadd.f32 %v1868, %v1870
      %1872 = vadd.xlane.f32.xlu0 %v1871
      %v1873 = vpop.xlane.xlu0 %1872
      %v1874 = vadd.f32 %v1865, %v1866
      %v1875 = vsel %vm1869, %v1867, 0.0
      %v1876 = vadd.f32 %v1874, %v1875
      %1877 = vadd.xlane.f32.xlu0 %v1876
      %v1878 = vpop.xlane.xlu0 %1877
      %v1879 = vmul.f32 %v1873, 0.00390625
      %v1880 = vmul.f32 %v1878, 0.00390625
      %v1881 = vmul.f32 %v1862, %v1862
      %v1882 = vmul.f32 %v1863, %v1863
      %v1883 = vmul.f32 %v1864, %v1864
      %v1884 = vmul.f32 %v1865, %v1865
      %v1885 = vmul.f32 %v1866, %v1866
      %v1886 = vmul.f32 %v1867, %v1867
      %v1887 = vadd.f32 %v1881, %v1882
      %v1888 = vsel %vm1869, %v1883, 0.0
      %v1889 = vadd.f32 %v1887, %v1888
      %1890 = vadd.xlane.f32.xlu0 %v1889
      %v1891 = vpop.xlane.xlu0 %1890
      %v1892 = vadd.f32 %v1884, %v1885
      %v1893 = vsel %vm1869, %v1886, 0.0
      %v1894 = vadd.f32 %v1892, %v1893
      %1895 = vadd.xlane.f32.xlu0 %v1894
      %v1896 = vpop.xlane.xlu0 %1895
      %v1897 = vmul.f32 %v1891, 0.00390625
      %v1898 = vmul.f32 %v1896, 0.00390625
      %v1899 = vmul.f32 %v1879, %v1879
      %v1900 = vmul.f32 %v1880, %v1880
      %v1901 = vsub.f32 %v1897, %v1899
      %v1902 = vsub.f32 %v1898, %v1900
      %v1903 = vsub.f32 %v1862, %v1879
      %v1904 = vsub.f32 %v1863, %v1879
      %v1905 = vsub.f32 %v1864, %v1879
      %v1906 = vsub.f32 %v1865, %v1880
      %v1907 = vsub.f32 %v1866, %v1880
      %v1908 = vsub.f32 %v1867, %v1880
      %v1909 = vmax.f32 %v1901, 0.0
      %v1910 = vmax.f32 %v1902, 0.0
      %v1911 = vadd.f32 %v1909, 1e-05
      %v1912 = vadd.f32 %v1910, 1e-05
      %v1913 = vrsqrt.pop %v1911
      %v1914 = vrsqrt.pop %v1912
      %v1915 = vmul.f32 %v1903, %v1913
      %v1916 = vmul.f32 %v1904, %v1913
      %v1917 = vmul.f32 %v1905, %v1913
      %v1918 = vmul.f32 %v1906, %v1914
      %v1919 = vmul.f32 %v1907, %v1914
      %v1920 = vmul.f32 %v1908, %v1914
      %v1921 = vadd.f32 %v1772, 1.0
      %v1922 = vadd.f32 %v1773, 1.0
      %1924 = vset.pattern.permute.xlu0 2
      %1925 = vperm.xlu0 %1924, %v1921
      %v1926 = vpop.permute.xlu0 %1925
      %1929 = vset.pattern.permute.xlu0 2
      %1930 = vperm.xlu0 %1929, %v1922
      %v1931 = vpop.permute.xlu0 %1930
      %v1933 = vmul.f32 %v1915, %v1926
      %v1934 = vmul.f32 %v1916, %v1926
      %v1935 = vmul.f32 %v1917, %v1926
      %v1936 = vmul.f32 %v1918, %v1931
      %v1937 = vmul.f32 %v1919, %v1931
      %v1938 = vmul.f32 %v1920, %v1931
      %1939 = vset.pattern.permute.xlu0 3
      %1940 = vperm.xlu0 %1939, %v1772
      %v1941 = vpop.permute.xlu0 %1940
      %1943 = vset.pattern.permute.xlu0 3
      %1944 = vperm.xlu0 %1943, %v1773
      %v1945 = vpop.permute.xlu0 %1944
      %v1947 = vadd.f32 %v1933, %v1941
      %v1948 = vadd.f32 %v1934, %v1941
      %v1949 = vadd.f32 %v1935, %v1941
      %v1950 = vadd.f32 %v1936, %v1945
      %v1951 = vadd.f32 %v1937, %v1945
      %v1952 = vadd.f32 %v1938, %v1945
      %v1953 = vpack.c.bf16 %v1950, %v1947
      %v1954 = vpack.c.bf16 %v1951, %v1948
      %v1955 = vpack.c.bf16 %v1952, %v1949
      %v1959 = vunpack.c.l.b16 %v1953
      %v1960 = vunpack.c.l.b16 %v1954
      %v1961 = vunpack.c.l.b16 %v1955
      %v1962 = vunpack.c.h.b16 %v1953
      %v1963 = vunpack.c.h.b16 %v1954
      %v1964 = vunpack.c.h.b16 %v1955
      %v1965 = vpack.c.b16 %v1960, %v1959
      %v1966 = vpack.c.b16 %v1961, %v1961
      %v1967 = vpack.c.b16 %v1963, %v1962
      %v1968 = vpack.c.b16 %v1964, %v1964
      %1973 = vst [vmem:[%s288] sm:$0xff] %v1965
      %vm1974 = vcmask 519168
      %1975 = vst.msk [vmem:[%s288 + $0x8] sm:$0xf] %vm1974, %v1966
      %1976 = vst [vmem:[%s288 + $0xc] sm:$0xff] %v1967
      %1977 = vst.msk [vmem:[%s288 + $0x14] sm:$0xf] %vm1974, %v1968
      %p1978 = scmp.lt.s32.totalorder %s17, 1
      %s1979 = scalar_select %p1978, %s17, 1
      %s1980 = smul.addr %s1979, 6
      %s1981 = smul.addr %s1980, 4
      %s1982 = scalar_lea.vmem %s6, %s1981
      // Predicated region
      $region45: #{g_synthesis_forward.11} parent=43 // pred_check
        %p1983 = pneg %p176
      $region46: #{g_synthesis_forward.11} parent=43 // pred_check_branch
        %1985 = sbr.rel (%p1983) target = $region48
      $region47: #{g_synthesis_forward.11} parent=43 // pred_region
        _
      $region48: #{g_synthesis_forward.11} parent=43 // pred_fallthru
        _
    $region44: #{g_synthesis_forward.11} parent=5 // pred_fallthru
      _
    %p1986 = scmp.le.s32.totalorder 2, %s12
    // Predicated region
    $region49: #{g_synthesis_forward.11} parent=5 // pred_check
      %p1987 = pneg %p1986
    $region50: #{g_synthesis_forward.11} parent=5 // pred_check_branch
      %1989 = sbr.rel (%p1987) target = $region52
    $region51: #{g_synthesis_forward.11} parent=5 // pred_region
      %s1990 = ssub.s32 %s12, 2
      // Predicated region
      $region53: #{g_synthesis_forward.11} parent=51 // pred_check
        %p1991 = pneg %p182
      $region54: #{g_synthesis_forward.11} parent=51 // pred_check_branch
        %1993 = sbr.rel (%p1991) target = $region56
      $region55: #{g_synthesis_forward.11} parent=51 // pred_region
        %p1994 = scmp.lt.s32.totalorder %s18, 1
        %s1995 = scalar_select %p1994, %s18, 1
        %s1996 = smul.addr %s1995, 6
        %s1997 = smul.addr %s1996, 4
        %s1998 = scalar_lea.vmem %s6, %s1997
      $region56: #{g_synthesis_forward.11} parent=51 // pred_fallthru
        _
    $region52: #{g_synthesis_forward.11} parent=5 // pred_fallthru
      _
  $region6: #{g_synthesis_forward.11} parent=0 // loop_footer
    %s16 = sadd.s32 1, %s12
  $region7: #{g_synthesis_forward.11} parent=0 // loop_footer_branch
    %11 = sbr.rel target = $region3
  $region8: #{g_synthesis_forward.11} parent=0 // loop_exit
    _

// kernel: g_synthesis_forward.12
$region0: #{g_synthesis_forward.12}
  #allocation0 [shape = 'u32[]', space=smem, size = 0x4, offset = 0x4, fixed_abs, tag = 'smem constant byte address 0x4 - core index']
  #allocation1 [shape = 'u32[144,128]{1,0:T(1,128)}', space=vmem, size = 0x12000, scoped, tag = 'internal scratch']
  %s0 = inlined_call_operand.vmem [shape: bf16[2,16,328], index: 0, kind: input, shape index: {}]
  %s1 = inlined_call_operand.vmem [shape: bf16[9,16,16], index: 1, kind: input, shape index: {}]
  %s2 = inlined_call_operand.vmem [shape: f32[2,16,4], index: 2, kind: input, shape index: {}]
  %s3 = inlined_call_operand.vmem [shape: f32[2,1,288], index: 3, kind: input, shape index: {}]
  %s4 = inlined_call_operand.vmem [shape: f32[1,288], index: 4, kind: input, shape index: {}]
  %s5 = inlined_call_operand.vmem [shape: bf16[2,16,288], index: 5, kind: output, shape index: {}]
  %s6 = sld [smem:[#allocation0]]
  $region53: #{g_synthesis_forward.12} parent=0
    _
  %s8 = ssub.s32 1, %s6
  %s9 = scalar_select 0, %s8, %s6
  loop: start=0, step=1, limit=4
  $region2: #{g_synthesis_forward.12} parent=0 // loop_pre_header
    _
  $region3: #{g_synthesis_forward.12} parent=0 // loop_header
    %s11 = sphi 0, %s15
    %p12 = scmp.ge.s32.totalorder %s11, 4
    %s21 = sphi 0, %s23
    %s24 = sphi 0, %s21
    %s25 = sphi 0, %s24
    %s41 = sphi 0, %s25
    %s45 = sphi 0, %s45
    %s47 = sphi 0, %s45
    %s48 = sphi 0, %s47
    %s62 = sphi 0, %s48
    %s68 = sphi 0, %s70
    %s71 = sphi 0, %s68
    %s72 = sphi 0, %s71
    %s88 = sphi 0, %s72
    %s94 = sphi 0, %s96
    %s97 = sphi 0, %s94
    %s98 = sphi 0, %s97
    %s114 = sphi 0, %s98
    %s118 = sphi 0, %s118
    %s120 = sphi 0, %s118
    %s121 = sphi 0, %s120
    %s135 = sphi 0, %s121
    %s141 = sphi 0, %s143
    %s144 = sphi 0, %s141
    %s145 = sphi 0, %s144
    %s161 = sphi 0, %s145
  $region4: #{g_synthesis_forward.12} parent=0 // loop_header_branch
    %14 = sbr.rel (%p12) target = $region8
  $region5: #{g_synthesis_forward.12} parent=0 // loop_body
    %s16 = ssub.s32 %s11, 1
    %s17 = ssub.s32 %s11, 2
    %s18 = sadd.s32 %s11, 1
    %s19 = ssub.s32 %s11, %s18
    %p20 = scmp.eq.s32.totalorder %s19, 0
    %s22 = sadd.s32 %s21, 1
    %s23 = scalar_select %p20, %s21, %s22
    %p26 = pneg %p20
    %p27 = scmp.eq.s32.totalorder %s11, 1
    %p28 = por %p26, %p27
    %p29 = scmp.ne.s32.totalorder %s21, %s24
    %p30 = scmp.eq.s32.totalorder %s11, 0
    %p31 = por %p29, %p30
    %p32 = scmp.ne.s32.totalorder %s21, %s24
    %p33 = scmp.eq.s32.totalorder %s16, 1
    %p34 = por %p32, %p33
    %p35 = scmp.ne.s32.totalorder %s24, %s25
    %p36 = scmp.eq.s32.totalorder %s16, 0
    %p37 = por %p35, %p36
    %p38 = scmp.ne.s32.totalorder %s24, %s25
    %p39 = scmp.eq.s32.totalorder %s17, 1
    %p40 = por %p38, %p39
    %p42 = scmp.ne.s32.totalorder %s25, %s41
    %p43 = scmp.eq.s32.totalorder %s17, 0
    %p44 = por %p42, %p43
    %s46 = sadd.s32 %s45, 1
    %p49 = scmp.eq.s32.totalorder %s11, 1
    %p50 = scmp.ne.s32.totalorder %s45, %s47
    %p51 = scmp.eq.s32.totalorder %s11, 0
    %p52 = por %p50, %p51
    %p53 = scmp.ne.s32.totalorder %s45, %s47
    %p54 = scmp.eq.s32.totalorder %s16, 1
    %p55 = por %p53, %p54
    %p56 = scmp.ne.s32.totalorder %s47, %s48
    %p57 = scmp.eq.s32.totalorder %s16, 0
    %p58 = por %p56, %p57
    %p59 = scmp.ne.s32.totalorder %s47, %s48
    %p60 = scmp.eq.s32.totalorder %s17, 1
    %p61 = por %p59, %p60
    %p63 = scmp.ne.s32.totalorder %s48, %s62
    %p64 = scmp.eq.s32.totalorder %s17, 0
    %p65 = por %p63, %p64
    %s66 = ssub.s32 %s11, %s18
    %p67 = scmp.eq.s32.totalorder %s66, 0
    %s69 = sadd.s32 %s68, 1
    %s70 = scalar_select %p67, %s68, %s69
    %p73 = pneg %p67
    %p74 = scmp.eq.s32.totalorder %s11, 1
    %p75 = por %p73, %p74
    %p76 = scmp.ne.s32.totalorder %s68, %s71
    %p77 = scmp.eq.s32.totalorder %s11, 0
    %p78 = por %p76, %p77
    %p79 = scmp.ne.s32.totalorder %s68, %s71
    %p80 = scmp.eq.s32.totalorder %s16, 1
    %p81 = por %p79, %p80
    %p82 = scmp.ne.s32.totalorder %s71, %s72
    %p83 = scmp.eq.s32.totalorder %s16, 0
    %p84 = por %p82, %p83
    %p85 = scmp.ne.s32.totalorder %s71, %s72
    %p86 = scmp.eq.s32.totalorder %s17, 1
    %p87 = por %p85, %p86
    %p89 = scmp.ne.s32.totalorder %s72, %s88
    %p90 = scmp.eq.s32.totalorder %s17, 0
    %p91 = por %p89, %p90
    %s92 = ssub.s32 %s11, %s18
    %p93 = scmp.eq.s32.totalorder %s92, 0
    %s95 = sadd.s32 %s94, 1
    %s96 = scalar_select %p93, %s94, %s95
    %p99 = pneg %p93
    %p100 = scmp.eq.s32.totalorder %s11, 1
    %p101 = por %p99, %p100
    %p102 = scmp.ne.s32.totalorder %s94, %s97
    %p103 = scmp.eq.s32.totalorder %s11, 0
    %p104 = por %p102, %p103
    %p105 = scmp.ne.s32.totalorder %s94, %s97
    %p106 = scmp.eq.s32.totalorder %s16, 1
    %p107 = por %p105, %p106
    %p108 = scmp.ne.s32.totalorder %s97, %s98
    %p109 = scmp.eq.s32.totalorder %s16, 0
    %p110 = por %p108, %p109
    %p111 = scmp.ne.s32.totalorder %s97, %s98
    %p112 = scmp.eq.s32.totalorder %s17, 1
    %p113 = por %p111, %p112
    %p115 = scmp.ne.s32.totalorder %s98, %s114
    %p116 = scmp.eq.s32.totalorder %s17, 0
    %p117 = por %p115, %p116
    %s119 = sadd.s32 %s118, 1
    %p122 = scmp.eq.s32.totalorder %s11, 1
    %p123 = scmp.ne.s32.totalorder %s118, %s120
    %p124 = scmp.eq.s32.totalorder %s11, 0
    %p125 = por %p123, %p124
    %p126 = scmp.ne.s32.totalorder %s118, %s120
    %p127 = scmp.eq.s32.totalorder %s16, 1
    %p128 = por %p126, %p127
    %p129 = scmp.ne.s32.totalorder %s120, %s121
    %p130 = scmp.eq.s32.totalorder %s16, 0
    %p131 = por %p129, %p130
    %p132 = scmp.ne.s32.totalorder %s120, %s121
    %p133 = scmp.eq.s32.totalorder %s17, 1
    %p134 = por %p132, %p133
    %p136 = scmp.ne.s32.totalorder %s121, %s135
    %p137 = scmp.eq.s32.totalorder %s17, 0
    %p138 = por %p136, %p137
    %s139 = ssub.s32 %s11, %s18
    %p140 = scmp.eq.s32.totalorder %s139, 0
    %s142 = sadd.s32 %s141, 1
    %s143 = scalar_select %p140, %s141, %s142
    %p146 = pneg %p140
    %p147 = scmp.eq.s32.totalorder %s11, 1
    %p148 = por %p146, %p147
    %p149 = scmp.ne.s32.totalorder %s141, %s144
    %p150 = scmp.eq.s32.totalorder %s11, 0
    %p151 = por %p149, %p150
    %p152 = scmp.ne.s32.totalorder %s141, %s144
    %p153 = scmp.eq.s32.totalorder %s16, 1
    %p154 = por %p152, %p153
    %p155 = scmp.ne.s32.totalorder %s144, %s145
    %p156 = scmp.eq.s32.totalorder %s16, 0
    %p157 = por %p155, %p156
    %p158 = scmp.ne.s32.totalorder %s144, %s145
    %p159 = scmp.eq.s32.totalorder %s17, 1
    %p160 = por %p158, %p159
    %p162 = scmp.ne.s32.totalorder %s145, %s161
    %p163 = scmp.eq.s32.totalorder %s17, 0
    %p164 = por %p162, %p163
    %p165 = scmp.le.s32.totalorder 1, %s11
    %p166 = scmp.lt.s32.totalorder %s11, 3
    %p167 = pnand %p165, %p166
    %p168 = pneg %p167
    // Predicated region
    $region9: #{g_synthesis_forward.12} parent=5 // pred_check
      _
    $region10: #{g_synthesis_forward.12} parent=5 // pred_check_branch
      %170 = sbr.rel (%p167) target = $region12
    $region11: #{g_synthesis_forward.12} parent=5 // pred_region
      %s171 = ssub.s32 %s11, 1
      // Predicated region
      $region13: #{g_synthesis_forward.12} parent=11 // pred_check
        %p172 = pneg %p58
      $region14: #{g_synthesis_forward.12} parent=11 // pred_check_branch
        %174 = sbr.rel (%p172) target = $region16
      $region15: #{g_synthesis_forward.12} parent=11 // pred_region
        _
      $region16: #{g_synthesis_forward.12} parent=11 // pred_fallthru
        _
      // Predicated region
      $region17: #{g_synthesis_forward.12} parent=11 // pred_check
        %p175 = pneg %p131
      $region18: #{g_synthesis_forward.12} parent=11 // pred_check_branch
        %177 = sbr.rel (%p175) target = $region20
      $region19: #{g_synthesis_forward.12} parent=11 // pred_region
        _
      $region20: #{g_synthesis_forward.12} parent=11 // pred_fallthru
        _
    $region12: #{g_synthesis_forward.12} parent=5 // pred_fallthru
      _
    %p178 = scmp.lt.s32.totalorder %s11, 2
    // Predicated region
    $region21: #{g_synthesis_forward.12} parent=5 // pred_check
      %p179 = pneg %p178
    $region22: #{g_synthesis_forward.12} parent=5 // pred_check_branch
      %181 = sbr.rel (%p179) target = $region24
    $region23: #{g_synthesis_forward.12} parent=5 // pred_region
      // Predicated region
      $region25: #{g_synthesis_forward.12} parent=23 // pred_check
        %p182 = pneg %p31
      $region26: #{g_synthesis_forward.12} parent=23 // pred_check_branch
        %184 = sbr.rel (%p182) target = $region28
      $region27: #{g_synthesis_forward.12} parent=23 // pred_region
        %p185 = scmp.lt.s32.totalorder %s11, 1
        %s186 = scalar_select %p185, %s11, 1
        %s187 = smul.addr %s186, 6
        %s188 = smul.addr %s187, 4
        %s189 = scalar_lea.vmem %s0, %s188
      $region28: #{g_synthesis_forward.12} parent=23 // pred_fallthru
        _
      // Predicated region
      $region29: #{g_synthesis_forward.12} parent=23 // pred_check
        %p190 = pneg %p78
      $region30: #{g_synthesis_forward.12} parent=23 // pred_check_branch
        %192 = sbr.rel (%p190) target = $region32
      $region31: #{g_synthesis_forward.12} parent=23 // pred_region
        %p193 = scmp.lt.s32.totalorder %s11, 1
        %s194 = scalar_select %p193, %s11, 1
        %s195 = smul.addr %s194, 2
        %s196 = smul.addr %s195, 8
        %s197 = scalar_lea.vmem %s2, %s196
      $region32: #{g_synthesis_forward.12} parent=23 // pred_fallthru
        _
      // Predicated region
      $region33: #{g_synthesis_forward.12} parent=23 // pred_check
        %p198 = pneg %p104
      $region34: #{g_synthesis_forward.12} parent=23 // pred_check_branch
        %200 = sbr.rel (%p198) target = $region36
      $region35: #{g_synthesis_forward.12} parent=23 // pred_region
        %p201 = scmp.lt.s32.totalorder %s11, 1
        %s202 = scalar_select %p201, %s11, 1
        %s203 = smul.addr %s202, 3
        %s204 = scalar_lea.vmem %s3, %s203
      $region36: #{g_synthesis_forward.12} parent=23 // pred_fallthru
        _
    $region24: #{g_synthesis_forward.12} parent=5 // pred_fallthru
      _
    %p205 = scmp.le.s32.totalorder 1, %s11
    %p206 = scmp.lt.s32.totalorder %s11, 3
    %p207 = pnand %p205, %p206
    %p208 = pneg %p207
    // Predicated region
    $region37: #{g_synthesis_forward.12} parent=5 // pred_check
      _
    $region38: #{g_synthesis_forward.12} parent=5 // pred_check_branch
      %210 = sbr.rel (%p207) target = $region40
    $region39: #{g_synthesis_forward.12} parent=5 // pred_region
      %s211 = ssub.s32 %s11, 1
      %p212 = scmp.lt.s32.totalorder %s16, 1
      %s213 = scalar_select %p212, %s16, 1
      %s214 = smul.addr %s213, 6
      %s215 = smul.addr %s214, 4
      %s216 = scalar_lea.vmem %s0, %s215
      %p217 = pneg %p37
      %p218 = pneg %p34
      %p219 = pneg %p58
      %p220 = pneg %p55
      %p221 = scmp.lt.s32.totalorder %s16, 1
      %s222 = scalar_select %p221, %s16, 1
      %s223 = smul.addr %s222, 2
      %s224 = smul.addr %s223, 8
      %s225 = scalar_lea.vmem %s2, %s224
      %p226 = pneg %p84
      %p227 = pneg %p81
      %p228 = scmp.lt.s32.totalorder %s16, 1
      %s229 = scalar_select %p228, %s16, 1
      %s230 = smul.addr %s229, 3
      %s231 = scalar_lea.vmem %s3, %s230
      %p232 = pneg %p110
      %p233 = pneg %p107
      %p234 = pneg %p131
      %p235 = pneg %p128
      %p236 = pneg %p157
      %p237 = pneg %p154
      %p238 = scmp.lt.s32.totalorder %s16, 1
      %s239 = scalar_select %p238, %s16, 1
      %s240 = smul.addr %s239, 6
      %s241 = smul.addr %s240, 4
      %s242 = scalar_lea.vmem %s5, %s241
      %p243 = scmp.lt.s32.totalorder %s16, 1
      %s244 = scalar_select %p243, %s16, 1
      %s245 = smul.addr %s244, 6
      %s246 = smul.addr %s245, 4
      %s247 = scalar_lea.vmem %s0, %s246
      %p248 = scmp.lt.s32.totalorder %s16, 1
      %s249 = scalar_select %p248, %s16, 1
      %s250 = smul.addr %s249, 2
      %s251 = smul.addr %s250, 8
      %s252 = scalar_lea.vmem %s2, %s251
      %p253 = scmp.lt.s32.totalorder %s16, 1
      %s254 = scalar_select %p253, %s16, 1
      %s255 = smul.addr %s254, 3
      %s256 = scalar_lea.vmem %s3, %s255
      %p257 = scmp.lt.s32.totalorder %s16, 1
      %s258 = scalar_select %p257, %s16, 1
      %s259 = smul.addr %s258, 6
      %s260 = smul.addr %s259, 4
      %s261 = scalar_lea.vmem %s5, %s260
      %v263 = vld [vmem:[%s247] sm:$0xff]
      %v264 = vld [vmem:[%s247 + $0x8] sm:$0xf]
      %v265 = vld [vmem:[%s247 + $0xc] sm:$0xff]
      %v266 = vld [vmem:[%s247 + $0x14] sm:$0xf]
      %v267 = vld [vmem:[%s1] sm:$0xf]
      %v268 = vld [vmem:[%s1 + $0x4] sm:$0xf]
      %s269 = scalar_lea.vmem %s1, 8
      %v270 = vld [vmem:[%s269] sm:$0xf]
      %v271 = vld [vmem:[%s269 + $0x4] sm:$0xf]
      %v274 = vunpack.c.l.b16 %v270
      %v275 = vunpack.c.l.b16 %v271
      %v276 = vpack.c.b16 %v275, %v274
      %v281 = vunpack.c.l.b16 %v263
      %v282 = vunpack.c.h.b16 %v263
      %v283 = vunpack.c.l.b16 %v264
      %v284 = vunpack.c.l.b16 %v265
      %v285 = vunpack.c.h.b16 %v265
      %v286 = vunpack.c.l.b16 %v266
      %v287 = vpack.c.b16 %v284, %v281
      %v288 = vpack.c.b16 %v285, %v282
      %v289 = vpack.c.b16 %v286, %v283
      %290 = vrot.lane.b32.xlu0 %v287, 127
      %v291 = vpop.permute.xlu0 %290
      %292 = vrot.lane.b32.xlu0 %v288, 127
      %v293 = vpop.permute.xlu0 %292
      %294 = vrot.lane.b32.xlu0 %v289, 127
      %v295 = vpop.permute.xlu0 %294
      %vm296 = vcmask 1039360
      %v297 = vsel %vm296, %v291, %v293
      %v298 = vsel %vm296, %v293, %v295
      %vm302 = vcmask 130048
      %v304 = vsel %vm302, %v276, 0
      %306 = vmatprep.subr.bf16.mxu0 0
      %307 = vmatpush1.bf16.msra.mxu0 0
      %308 = vmatprep.subr.bf16.mxu0 0
      %309 = vmatpush1.bf16.msra.mxu0 0
      %310 = vmatprep.subr.bf16.mxu0 0
      %311 = vmatpush1.bf16.msra.mxu0 0
      %312 = vmatprep.subr.bf16.mxu0 0
      %313 = vmatpush1.bf16.msra.mxu0 0
      %314 = vmatprep.subr.bf16.mxu0 0
      %315 = vmatpush1.bf16.msra.mxu0 0
      %316 = vmatprep.subr.bf16.mxu0 0
      %317 = vmatpush1.bf16.msra.mxu0 0
      %318 = vmatprep.subr.bf16.mxu0 0
      %319 = vmatpush1.bf16.msra.mxu0 0
      %320 = vmatprep.subr.bf16.mxu0 %v298
      %321 = vmatpush1.bf16.msra.mxu0 %v297
      %322 = vmatprep.subr.bf16.mxu0 0
      %323 = vmatpush2.bf16.msra.mxu0 0
      %324 = vmatprep.subr.bf16.mxu0 0
      %325 = vmatpush2.bf16.msra.mxu0 0
      %326 = vmatprep.subr.bf16.mxu0 0
      %327 = vmatpush2.bf16.msra.mxu0 0
      %328 = vmatprep.subr.bf16.mxu0 0
      %329 = vmatpush2.bf16.msra.mxu0 0
      %330 = vmatprep.subr.bf16.mxu0 0
      %331 = vmatpush2.bf16.msra.mxu0 0
      %332 = vmatprep.subr.bf16.mxu0 0
      %333 = vmatpush2.bf16.msra.mxu0 0
      %334 = vmatprep.subr.bf16.mxu0 0
      %335 = vmatpush2.bf16.msra.mxu0 0
      %336 = vmatprep.subr.bf16.mxu0 0
      %337 = vmatpush2.bf16.msra.mxu0 0
      %338 = vmatprep.mubr.bf16.mxu0 0
      %339 = vmatmul.mubr.bf16.gmra.mxu0 %v304
      %v340 = vpop.f32.mrf.mxu0
      %v341 = vadd.f32 0.0, %v340
      %v342 = vpop.f32.mrf.mxu0
      %v343 = vadd.f32 0.0, %v342
      %v344 = vpop.f32.mrf.mxu0
      %v345 = vadd.f32 0.0, %v344
      %v346 = vpop.f32.mrf.mxu0
      %v347 = vadd.f32 0.0, %v346
      %348 = vdwg.mxu0
      %349 = vmatprep.subr.bf16.mxu0 0
      %350 = vmatpush1.bf16.msra.mxu0 0
      %351 = vmatprep.subr.bf16.mxu0 0
      %352 = vmatpush1.bf16.msra.mxu0 0
      %353 = vmatprep.subr.bf16.mxu0 0
      %354 = vmatpush1.bf16.msra.mxu0 0
      %355 = vmatprep.subr.bf16.mxu0 0
      %356 = vmatpush1.bf16.msra.mxu0 0
      %357 = vmatprep.subr.bf16.mxu0 0
      %358 = vmatpush1.bf16.msra.mxu0 0
      %359 = vmatprep.subr.bf16.mxu0 0
      %360 = vmatpush1.bf16.msra.mxu0 0
      %361 = vmatprep.subr.bf16.mxu0 0
      %362 = vmatpush1.bf16.msra.mxu0 0
      %363 = vmatprep.subr.bf16.mxu0 0
      %364 = vmatpush1.bf16.msra.mxu0 %v295
      %365 = vmatprep.subr.bf16.mxu0 0
      %366 = vmatpush2.bf16.msra.mxu0 0
      %367 = vmatprep.subr.bf16.mxu0 0
      %368 = vmatpush2.bf16.msra.mxu0 0
      %369 = vmatprep.subr.bf16.mxu0 0
      %370 = vmatpush2.bf16.msra.mxu0 0
      %371 = vmatprep.subr.bf16.mxu0 0
      %372 = vmatpush2.bf16.msra.mxu0 0
      %373 = vmatprep.subr.bf16.mxu0 0
      %374 = vmatpush2.bf16.msra.mxu0 0
      %375 = vmatprep.subr.bf16.mxu0 0
      %376 = vmatpush2.bf16.msra.mxu0 0
      %377 = vmatprep.subr.bf16.mxu0 0
      %378 = vmatpush2.bf16.msra.mxu0 0
      %379 = vmatprep.subr.bf16.mxu0 0
      %380 = vmatpush2.bf16.msra.mxu0 0
      %381 = vmatprep.mubr.bf16.mxu0 0
      %382 = vmatmul.mubr.bf16.gmra.mxu0 %v304
      %v383 = vpop.f32.mrf.mxu0
      %v384 = vadd.f32 0.0, %v383
      %v385 = vpop.f32.mrf.mxu0
      %v386 = vpop.f32.mrf.mxu0
      %v387 = vadd.f32 0.0, %v386
      %v388 = vpop.f32.mrf.mxu0
      %389 = vdwg.mxu0
      %v392 = vunpack.c.l.b16 %v267
      %v393 = vunpack.c.l.b16 %v268
      %v394 = vpack.c.b16 %v393, %v392
      %v399 = vsel %vm302, %v394, 0
      %401 = vmatprep.subr.bf16.mxu0 0
      %402 = vmatpush1.bf16.msra.mxu0 0
      %403 = vmatprep.subr.bf16.mxu0 0
      %404 = vmatpush1.bf16.msra.mxu0 0
      %405 = vmatprep.subr.bf16.mxu0 0
      %406 = vmatpush1.bf16.msra.mxu0 0
      %407 = vmatprep.subr.bf16.mxu0 0
      %408 = vmatpush1.bf16.msra.mxu0 0
      %409 = vmatprep.subr.bf16.mxu0 0
      %410 = vmatpush1.bf16.msra.mxu0 0
      %411 = vmatprep.subr.bf16.mxu0 0
      %412 = vmatpush1.bf16.msra.mxu0 0
      %413 = vmatprep.subr.bf16.mxu0 0
      %414 = vmatpush1.bf16.msra.mxu0 0
      %415 = vmatprep.subr.bf16.mxu0 %v288
      %416 = vmatpush1.bf16.msra.mxu0 %v287
      %417 = vmatprep.subr.bf16.mxu0 0
      %418 = vmatpush2.bf16.msra.mxu0 0
      %419 = vmatprep.subr.bf16.mxu0 0
      %420 = vmatpush2.bf16.msra.mxu0 0
      %421 = vmatprep.subr.bf16.mxu0 0
      %422 = vmatpush2.bf16.msra.mxu0 0
      %423 = vmatprep.subr.bf16.mxu0 0
      %424 = vmatpush2.bf16.msra.mxu0 0
      %425 = vmatprep.subr.bf16.mxu0 0
      %426 = vmatpush2.bf16.msra.mxu0 0
      %427 = vmatprep.subr.bf16.mxu0 0
      %428 = vmatpush2.bf16.msra.mxu0 0
      %429 = vmatprep.subr.bf16.mxu0 0
      %430 = vmatpush2.bf16.msra.mxu0 0
      %431 = vmatprep.subr.bf16.mxu0 0
      %432 = vmatpush2.bf16.msra.mxu0 0
      %433 = vmatprep.mubr.bf16.mxu0 0
      %434 = vmatmul.mubr.bf16.gmra.mxu0 %v399
      %v435 = vpop.f32.mrf.mxu0
      %v436 = vadd.f32 %v341, %v435
      %v437 = vpop.f32.mrf.mxu0
      %v438 = vadd.f32 %v343, %v437
      %v439 = vpop.f32.mrf.mxu0
      %v440 = vadd.f32 %v345, %v439
      %v441 = vpop.f32.mrf.mxu0
      %v442 = vadd.f32 %v347, %v441
      %443 = vdwg.mxu0
      %444 = vmatprep.subr.bf16.mxu0 0
      %445 = vmatpush1.bf16.msra.mxu0 0
      %446 = vmatprep.subr.bf16.mxu0 0
      %447 = vmatpush1.bf16.msra.mxu0 0
      %448 = vmatprep.subr.bf16.mxu0 0
      %449 = vmatpush1.bf16.msra.mxu0 0
      %450 = vmatprep.subr.bf16.mxu0 0
      %451 = vmatpush1.bf16.msra.mxu0 0
      %452 = vmatprep.subr.bf16.mxu0 0
      %453 = vmatpush1.bf16.msra.mxu0 0
      %454 = vmatprep.subr.bf16.mxu0 0
      %455 = vmatpush1.bf16.msra.mxu0 0
      %456 = vmatprep.subr.bf16.mxu0 0
      %457 = vmatpush1.bf16.msra.mxu0 0
      %458 = vmatprep.subr.bf16.mxu0 0
      %459 = vmatpush1.bf16.msra.mxu0 %v289
      %460 = vmatprep.subr.bf16.mxu0 0
      %461 = vmatpush2.bf16.msra.mxu0 0
      %462 = vmatprep.subr.bf16.mxu0 0
      %463 = vmatpush2.bf16.msra.mxu0 0
      %464 = vmatprep.subr.bf16.mxu0 0
      %465 = vmatpush2.bf16.msra.mxu0 0
      %466 = vmatprep.subr.bf16.mxu0 0
      %467 = vmatpush2.bf16.msra.mxu0 0
      %468 = vmatprep.subr.bf16.mxu0 0
      %469 = vmatpush2.bf16.msra.mxu0 0
      %470 = vmatprep.subr.bf16.mxu0 0
      %471 = vmatpush2.bf16.msra.mxu0 0
      %472 = vmatprep.subr.bf16.mxu0 0
      %473 = vmatpush2.bf16.msra.mxu0 0
      %474 = vmatprep.subr.bf16.mxu0 0
      %475 = vmatpush2.bf16.msra.mxu0 0
      %476 = vmatprep.mubr.bf16.mxu0 0
      %477 = vmatmul.mubr.bf16.gmra.mxu0 %v399
      %v478 = vpop.f32.mrf.mxu0
      %v479 = vadd.f32 %v384, %v478
      %v480 = vpop.f32.mrf.mxu0
      %v481 = vpop.f32.mrf.mxu0
      %v482 = vadd.f32 %v387, %v481
      %v483 = vpop.f32.mrf.mxu0
      %484 = vdwg.mxu0
      %s485 = scalar_lea.vmem %s1, 16
      %v486 = vld [vmem:[%s485] sm:$0xf]
      %v487 = vld [vmem:[%s485 + $0x4] sm:$0xf]
      %v490 = vunpack.c.l.b16 %v486
      %v491 = vunpack.c.l.b16 %v487
      %v492 = vpack.c.b16 %v491, %v490
      %493 = vrot.lane.b32.xlu0 %v287, 126
      %v494 = vpop.permute.xlu0 %493
      %495 = vrot.lane.b32.xlu0 %v288, 126
      %v496 = vpop.permute.xlu0 %495
      %497 = vrot.lane.b32.xlu0 %v289, 126
      %v498 = vpop.permute.xlu0 %497
      %vm499 = vcmask 1031168
      %v500 = vsel %vm499, %v494, %v496
      %v501 = vsel %vm499, %v496, %v498
      %v506 = vsel %vm302, %v492, 0
      %508 = vmatprep.subr.bf16.mxu0 0
      %509 = vmatpush1.bf16.msra.mxu0 0
      %510 = vmatprep.subr.bf16.mxu0 0
      %511 = vmatpush1.bf16.msra.mxu0 0
      %512 = vmatprep.subr.bf16.mxu0 0
      %513 = vmatpush1.bf16.msra.mxu0 0
      %514 = vmatprep.subr.bf16.mxu0 0
      %515 = vmatpush1.bf16.msra.mxu0 0
      %516 = vmatprep.subr.bf16.mxu0 0
      %517 = vmatpush1.bf16.msra.mxu0 0
      %518 = vmatprep.subr.bf16.mxu0 0
      %519 = vmatpush1.bf16.msra.mxu0 0
      %520 = vmatprep.subr.bf16.mxu0 0
      %521 = vmatpush1.bf16.msra.mxu0 0
      %522 = vmatprep.subr.bf16.mxu0 %v501
      %523 = vmatpush1.bf16.msra.mxu0 %v500
      %524 = vmatprep.subr.bf16.mxu0 0
      %525 = vmatpush2.bf16.msra.mxu0 0
      %526 = vmatprep.subr.bf16.mxu0 0
      %527 = vmatpush2.bf16.msra.mxu0 0
      %528 = vmatprep.subr.bf16.mxu0 0
      %529 = vmatpush2.bf16.msra.mxu0 0
      %530 = vmatprep.subr.bf16.mxu0 0
      %531 = vmatpush2.bf16.msra.mxu0 0
      %532 = vmatprep.subr.bf16.mxu0 0
      %533 = vmatpush2.bf16.msra.mxu0 0
      %534 = vmatprep.subr.bf16.mxu0 0
      %535 = vmatpush2.bf16.msra.mxu0 0
      %536 = vmatprep.subr.bf16.mxu0 0
      %537 = vmatpush2.bf16.msra.mxu0 0
      %538 = vmatprep.subr.bf16.mxu0 0
      %539 = vmatpush2.bf16.msra.mxu0 0
      %540 = vmatprep.mubr.bf16.mxu0 0
      %541 = vmatmul.mubr.bf16.gmra.mxu0 %v506
      %v542 = vpop.f32.mrf.mxu0
      %v543 = vadd.f32 0.0, %v542
      %v544 = vpop.f32.mrf.mxu0
      %v545 = vadd.f32 0.0, %v544
      %v546 = vpop.f32.mrf.mxu0
      %v547 = vadd.f32 0.0, %v546
      %v548 = vpop.f32.mrf.mxu0
      %v549 = vadd.f32 0.0, %v548
      %550 = vdwg.mxu0
      %551 = vmatprep.subr.bf16.mxu0 0
      %552 = vmatpush1.bf16.msra.mxu0 0
      %553 = vmatprep.subr.bf16.mxu0 0
      %554 = vmatpush1.bf16.msra.mxu0 0
      %555 = vmatprep.subr.bf16.mxu0 0
      %556 = vmatpush1.bf16.msra.mxu0 0
      %557 = vmatprep.subr.bf16.mxu0 0
      %558 = vmatpush1.bf16.msra.mxu0 0
      %559 = vmatprep.subr.bf16.mxu0 0
      %560 = vmatpush1.bf16.msra.mxu0 0
      %561 = vmatprep.subr.bf16.mxu0 0
      %562 = vmatpush1.bf16.msra.mxu0 0
      %563 = vmatprep.subr.bf16.mxu0 0
      %564 = vmatpush1.bf16.msra.mxu0 0
      %565 = vmatprep.subr.bf16.mxu0 0
      %566 = vmatpush1.bf16.msra.mxu0 %v498
      %567 = vmatprep.subr.bf16.mxu0 0
      %568 = vmatpush2.bf16.msra.mxu0 0
      %569 = vmatprep.subr.bf16.mxu0 0
      %570 = vmatpush2.bf16.msra.mxu0 0
      %571 = vmatprep.subr.bf16.mxu0 0
      %572 = vmatpush2.bf16.msra.mxu0 0
      %573 = vmatprep.subr.bf16.mxu0 0
      %574 = vmatpush2.bf16.msra.mxu0 0
      %575 = vmatprep.subr.bf16.mxu0 0
      %576 = vmatpush2.bf16.msra.mxu0 0
      %577 = vmatprep.subr.bf16.mxu0 0
      %578 = vmatpush2.bf16.msra.mxu0 0
      %579 = vmatprep.subr.bf16.mxu0 0
      %580 = vmatpush2.bf16.msra.mxu0 0
      %581 = vmatprep.subr.bf16.mxu0 0
      %582 = vmatpush2.bf16.msra.mxu0 0
      %583 = vmatprep.mubr.bf16.mxu0 0
      %584 = vmatmul.mubr.bf16.gmra.mxu0 %v506
      %v585 = vpop.f32.mrf.mxu0
      %v586 = vadd.f32 0.0, %v585
      %v587 = vpop.f32.mrf.mxu0
      %v588 = vpop.f32.mrf.mxu0
      %v589 = vadd.f32 0.0, %v588
      %v590 = vpop.f32.mrf.mxu0
      %591 = vdwg.mxu0
      %v592 = vadd.f32 %v436, %v543
      %v593 = vadd.f32 %v438, %v545
      %v594 = vadd.f32 %v479, %v586
      %v595 = vadd.f32 %v440, %v547
      %v596 = vadd.f32 %v442, %v549
      %v597 = vadd.f32 %v482, %v589
      %s598 = scalar_lea.vmem %s1, 24
      %v599 = vld [vmem:[%s598] sm:$0xf]
      %v600 = vld [vmem:[%s598 + $0x4] sm:$0xf]
      %v603 = vunpack.c.l.b16 %v599
      %v604 = vunpack.c.l.b16 %v600
      %v605 = vpack.c.b16 %v604, %v603
      %606 = vrot.lane.b32.xlu0 %v287, 110
      %v607 = vpop.permute.xlu0 %606
      %608 = vrot.lane.b32.xlu0 %v288, 110
      %v609 = vpop.permute.xlu0 %608
      %610 = vrot.lane.b32.xlu0 %v289, 110
      %v611 = vpop.permute.xlu0 %610
      %vm612 = vcmask 900096
      %v613 = vsel %vm612, %v607, %v609
      %v614 = vsel %vm612, %v609, %v611
      %v619 = vsel %vm302, %v605, 0
      %621 = vmatprep.subr.bf16.mxu0 0
      %622 = vmatpush1.bf16.msra.mxu0 0
      %623 = vmatprep.subr.bf16.mxu0 0
      %624 = vmatpush1.bf16.msra.mxu0 0
      %625 = vmatprep.subr.bf16.mxu0 0
      %626 = vmatpush1.bf16.msra.mxu0 0
      %627 = vmatprep.subr.bf16.mxu0 0
      %628 = vmatpush1.bf16.msra.mxu0 0
      %629 = vmatprep.subr.bf16.mxu0 0
      %630 = vmatpush1.bf16.msra.mxu0 0
      %631 = vmatprep.subr.bf16.mxu0 0
      %632 = vmatpush1.bf16.msra.mxu0 0
      %633 = vmatprep.subr.bf16.mxu0 0
      %634 = vmatpush1.bf16.msra.mxu0 0
      %635 = vmatprep.subr.bf16.mxu0 %v614
      %636 = vmatpush1.bf16.msra.mxu0 %v613
      %637 = vmatprep.subr.bf16.mxu0 0
      %638 = vmatpush2.bf16.msra.mxu0 0
      %639 = vmatprep.subr.bf16.mxu0 0
      %640 = vmatpush2.bf16.msra.mxu0 0
      %641 = vmatprep.subr.bf16.mxu0 0
      %642 = vmatpush2.bf16.msra.mxu0 0
      %643 = vmatprep.subr.bf16.mxu0 0
      %644 = vmatpush2.bf16.msra.mxu0 0
      %645 = vmatprep.subr.bf16.mxu0 0
      %646 = vmatpush2.bf16.msra.mxu0 0
      %647 = vmatprep.subr.bf16.mxu0 0
      %648 = vmatpush2.bf16.msra.mxu0 0
      %649 = vmatprep.subr.bf16.mxu0 0
      %650 = vmatpush2.bf16.msra.mxu0 0
      %651 = vmatprep.subr.bf16.mxu0 0
      %652 = vmatpush2.bf16.msra.mxu0 0
      %653 = vmatprep.mubr.bf16.mxu0 0
      %654 = vmatmul.mubr.bf16.gmra.mxu0 %v619
      %v655 = vpop.f32.mrf.mxu0
      %v656 = vadd.f32 0.0, %v655
      %v657 = vpop.f32.mrf.mxu0
      %v658 = vadd.f32 0.0, %v657
      %v659 = vpop.f32.mrf.mxu0
      %v660 = vadd.f32 0.0, %v659
      %v661 = vpop.f32.mrf.mxu0
      %v662 = vadd.f32 0.0, %v661
      %663 = vdwg.mxu0
      %664 = vmatprep.subr.bf16.mxu0 0
      %665 = vmatpush1.bf16.msra.mxu0 0
      %666 = vmatprep.subr.bf16.mxu0 0
      %667 = vmatpush1.bf16.msra.mxu0 0
      %668 = vmatprep.subr.bf16.mxu0 0
      %669 = vmatpush1.bf16.msra.mxu0 0
      %670 = vmatprep.subr.bf16.mxu0 0
      %671 = vmatpush1.bf16.msra.mxu0 0
      %672 = vmatprep.subr.bf16.mxu0 0
      %673 = vmatpush1.bf16.msra.mxu0 0
      %674 = vmatprep.subr.bf16.mxu0 0
      %675 = vmatpush1.bf16.msra.mxu0 0
      %676 = vmatprep.subr.bf16.mxu0 0
      %677 = vmatpush1.bf16.msra.mxu0 0
      %678 = vmatprep.subr.bf16.mxu0 0
      %679 = vmatpush1.bf16.msra.mxu0 %v611
      %680 = vmatprep.subr.bf16.mxu0 0
      %681 = vmatpush2.bf16.msra.mxu0 0
      %682 = vmatprep.subr.bf16.mxu0 0
      %683 = vmatpush2.bf16.msra.mxu0 0
      %684 = vmatprep.subr.bf16.mxu0 0
      %685 = vmatpush2.bf16.msra.mxu0 0
      %686 = vmatprep.subr.bf16.mxu0 0
      %687 = vmatpush2.bf16.msra.mxu0 0
      %688 = vmatprep.subr.bf16.mxu0 0
      %689 = vmatpush2.bf16.msra.mxu0 0
      %690 = vmatprep.subr.bf16.mxu0 0
      %691 = vmatpush2.bf16.msra.mxu0 0
      %692 = vmatprep.subr.bf16.mxu0 0
      %693 = vmatpush2.bf16.msra.mxu0 0
      %694 = vmatprep.subr.bf16.mxu0 0
      %695 = vmatpush2.bf16.msra.mxu0 0
      %696 = vmatprep.mubr.bf16.mxu0 0
      %697 = vmatmul.mubr.bf16.gmra.mxu0 %v619
      %v698 = vpop.f32.mrf.mxu0
      %v699 = vadd.f32 0.0, %v698
      %v700 = vpop.f32.mrf.mxu0
      %v701 = vpop.f32.mrf.mxu0
      %v702 = vadd.f32 0.0, %v701
      %v703 = vpop.f32.mrf.mxu0
      %704 = vdwg.mxu0
      %v705 = vadd.f32 %v592, %v656
      %v706 = vadd.f32 %v593, %v658
      %v707 = vadd.f32 %v594, %v699
      %v708 = vadd.f32 %v595, %v660
      %v709 = vadd.f32 %v596, %v662
      %v710 = vadd.f32 %v597, %v702
      %s711 = scalar_lea.vmem %s1, 32
      %v712 = vld [vmem:[%s711] sm:$0xf]
      %v713 = vld [vmem:[%s711 + $0x4] sm:$0xf]
      %v716 = vunpack.c.l.b16 %v712
      %v717 = vunpack.c.l.b16 %v713
      %v718 = vpack.c.b16 %v717, %v716
      %719 = vrot.lane.b32.xlu0 %v287, 109
      %v720 = vpop.permute.xlu0 %719
      %721 = vrot.lane.b32.xlu0 %v288, 109
      %v722 = vpop.permute.xlu0 %721
      %723 = vrot.lane.b32.xlu0 %v289, 109
      %v724 = vpop.permute.xlu0 %723
      %vm725 = vcmask 891904
      %v726 = vsel %vm725, %v720, %v722
      %v727 = vsel %vm725, %v722, %v724
      %v732 = vsel %vm302, %v718, 0
      %734 = vmatprep.subr.bf16.mxu0 0
      %735 = vmatpush1.bf16.msra.mxu0 0
      %736 = vmatprep.subr.bf16.mxu0 0
      %737 = vmatpush1.bf16.msra.mxu0 0
      %738 = vmatprep.subr.bf16.mxu0 0
      %739 = vmatpush1.bf16.msra.mxu0 0
      %740 = vmatprep.subr.bf16.mxu0 0
      %741 = vmatpush1.bf16.msra.mxu0 0
      %742 = vmatprep.subr.bf16.mxu0 0
      %743 = vmatpush1.bf16.msra.mxu0 0
      %744 = vmatprep.subr.bf16.mxu0 0
      %745 = vmatpush1.bf16.msra.mxu0 0
      %746 = vmatprep.subr.bf16.mxu0 0
      %747 = vmatpush1.bf16.msra.mxu0 0
      %748 = vmatprep.subr.bf16.mxu0 %v727
      %749 = vmatpush1.bf16.msra.mxu0 %v726
      %750 = vmatprep.subr.bf16.mxu0 0
      %751 = vmatpush2.bf16.msra.mxu0 0
      %752 = vmatprep.subr.bf16.mxu0 0
      %753 = vmatpush2.bf16.msra.mxu0 0
      %754 = vmatprep.subr.bf16.mxu0 0
      %755 = vmatpush2.bf16.msra.mxu0 0
      %756 = vmatprep.subr.bf16.mxu0 0
      %757 = vmatpush2.bf16.msra.mxu0 0
      %758 = vmatprep.subr.bf16.mxu0 0
      %759 = vmatpush2.bf16.msra.mxu0 0
      %760 = vmatprep.subr.bf16.mxu0 0
      %761 = vmatpush2.bf16.msra.mxu0 0
      %762 = vmatprep.subr.bf16.mxu0 0
      %763 = vmatpush2.bf16.msra.mxu0 0
      %764 = vmatprep.subr.bf16.mxu0 0
      %765 = vmatpush2.bf16.msra.mxu0 0
      %766 = vmatprep.mubr.bf16.mxu0 0
      %767 = vmatmul.mubr.bf16.gmra.mxu0 %v732
      %v768 = vpop.f32.mrf.mxu0
      %v769 = vadd.f32 0.0, %v768
      %v770 = vpop.f32.mrf.mxu0
      %v771 = vadd.f32 0.0, %v770
      %v772 = vpop.f32.mrf.mxu0
      %v773 = vadd.f32 0.0, %v772
      %v774 = vpop.f32.mrf.mxu0
      %v775 = vadd.f32 0.0, %v774
      %776 = vdwg.mxu0
      %777 = vmatprep.subr.bf16.mxu0 0
      %778 = vmatpush1.bf16.msra.mxu0 0
      %779 = vmatprep.subr.bf16.mxu0 0
      %780 = vmatpush1.bf16.msra.mxu0 0
      %781 = vmatprep.subr.bf16.mxu0 0
      %782 = vmatpush1.bf16.msra.mxu0 0
      %783 = vmatprep.subr.bf16.mxu0 0
      %784 = vmatpush1.bf16.msra.mxu0 0
      %785 = vmatprep.subr.bf16.mxu0 0
      %786 = vmatpush1.bf16.msra.mxu0 0
      %787 = vmatprep.subr.bf16.mxu0 0
      %788 = vmatpush1.bf16.msra.mxu0 0
      %789 = vmatprep.subr.bf16.mxu0 0
      %790 = vmatpush1.bf16.msra.mxu0 0
      %791 = vmatprep.subr.bf16.mxu0 0
      %792 = vmatpush1.bf16.msra.mxu0 %v724
      %793 = vmatprep.subr.bf16.mxu0 0
      %794 = vmatpush2.bf16.msra.mxu0 0
      %795 = vmatprep.subr.bf16.mxu0 0
      %796 = vmatpush2.bf16.msra.mxu0 0
      %797 = vmatprep.subr.bf16.mxu0 0
      %798 = vmatpush2.bf16.msra.mxu0 0
      %799 = vmatprep.subr.bf16.mxu0 0
      %800 = vmatpush2.bf16.msra.mxu0 0
      %801 = vmatprep.subr.bf16.mxu0 0
      %802 = vmatpush2.bf16.msra.mxu0 0
      %803 = vmatprep.subr.bf16.mxu0 0
      %804 = vmatpush2.bf16.msra.mxu0 0
      %805 = vmatprep.subr.bf16.mxu0 0
      %806 = vmatpush2.bf16.msra.mxu0 0
      %807 = vmatprep.subr.bf16.mxu0 0
      %808 = vmatpush2.bf16.msra.mxu0 0
      %809 = vmatprep.mubr.bf16.mxu0 0
      %810 = vmatmul.mubr.bf16.gmra.mxu0 %v732
      %v811 = vpop.f32.mrf.mxu0
      %v812 = vadd.f32 0.0, %v811
      %v813 = vpop.f32.mrf.mxu0
      %v814 = vpop.f32.mrf.mxu0
      %v815 = vadd.f32 0.0, %v814
      %v816 = vpop.f32.mrf.mxu0
      %817 = vdwg.mxu0
      %v818 = vadd.f32 %v705, %v769
      %v819 = vadd.f32 %v706, %v771
      %v820 = vadd.f32 %v707, %v812
      %v821 = vadd.f32 %v708, %v773
      %v822 = vadd.f32 %v709, %v775
      %v823 = vadd.f32 %v710, %v815
      %s824 = scalar_lea.vmem %s1, 40
      %v825 = vld [vmem:[%s824] sm:$0xf]
      %v826 = vld [vmem:[%s824 + $0x4] sm:$0xf]
      %v829 = vunpack.c.l.b16 %v825
      %v830 = vunpack.c.l.b16 %v826
      %v831 = vpack.c.b16 %v830, %v829
      %832 = vrot.lane.b32.xlu0 %v287, 108
      %v833 = vpop.permute.xlu0 %832
      %834 = vrot.lane.b32.xlu0 %v288, 108
      %v835 = vpop.permute.xlu0 %834
      %836 = vrot.lane.b32.xlu0 %v289, 108
      %v837 = vpop.permute.xlu0 %836
      %vm838 = vcmask 883712
      %v839 = vsel %vm838, %v833, %v835
      %v840 = vsel %vm838, %v835, %v837
      %v845 = vsel %vm302, %v831, 0
      %847 = vmatprep.subr.bf16.mxu0 0
      %848 = vmatpush1.bf16.msra.mxu0 0
      %849 = vmatprep.subr.bf16.mxu0 0
      %850 = vmatpush1.bf16.msra.mxu0 0
      %851 = vmatprep.subr.bf16.mxu0 0
      %852 = vmatpush1.bf16.msra.mxu0 0
      %853 = vmatprep.subr.bf16.mxu0 0
      %854 = vmatpush1.bf16.msra.mxu0 0
      %855 = vmatprep.subr.bf16.mxu0 0
      %856 = vmatpush1.bf16.msra.mxu0 0
      %857 = vmatprep.subr.bf16.mxu0 0
      %858 = vmatpush1.bf16.msra.mxu0 0
      %859 = vmatprep.subr.bf16.mxu0 0
      %860 = vmatpush1.bf16.msra.mxu0 0
      %861 = vmatprep.subr.bf16.mxu0 %v840
      %862 = vmatpush1.bf16.msra.mxu0 %v839
      %863 = vmatprep.subr.bf16.mxu0 0
      %864 = vmatpush2.bf16.msra.mxu0 0
      %865 = vmatprep.subr.bf16.mxu0 0
      %866 = vmatpush2.bf16.msra.mxu0 0
      %867 = vmatprep.subr.bf16.mxu0 0
      %868 = vmatpush2.bf16.msra.mxu0 0
      %869 = vmatprep.subr.bf16.mxu0 0
      %870 = vmatpush2.bf16.msra.mxu0 0
      %871 = vmatprep.subr.bf16.mxu0 0
      %872 = vmatpush2.bf16.msra.mxu0 0
      %873 = vmatprep.subr.bf16.mxu0 0
      %874 = vmatpush2.bf16.msra.mxu0 0
      %875 = vmatprep.subr.bf16.mxu0 0
      %876 = vmatpush2.bf16.msra.mxu0 0
      %877 = vmatprep.subr.bf16.mxu0 0
      %878 = vmatpush2.bf16.msra.mxu0 0
      %879 = vmatprep.mubr.bf16.mxu0 0
      %880 = vmatmul.mubr.bf16.gmra.mxu0 %v845
      %v881 = vpop.f32.mrf.mxu0
      %v882 = vadd.f32 0.0, %v881
      %v883 = vpop.f32.mrf.mxu0
      %v884 = vadd.f32 0.0, %v883
      %v885 = vpop.f32.mrf.mxu0
      %v886 = vadd.f32 0.0, %v885
      %v887 = vpop.f32.mrf.mxu0
      %v888 = vadd.f32 0.0, %v887
      %889 = vdwg.mxu0
      %890 = vmatprep.subr.bf16.mxu0 0
      %891 = vmatpush1.bf16.msra.mxu0 0
      %892 = vmatprep.subr.bf16.mxu0 0
      %893 = vmatpush1.bf16.msra.mxu0 0
      %894 = vmatprep.subr.bf16.mxu0 0
      %895 = vmatpush1.bf16.msra.mxu0 0
      %896 = vmatprep.subr.bf16.mxu0 0
      %897 = vmatpush1.bf16.msra.mxu0 0
      %898 = vmatprep.subr.bf16.mxu0 0
      %899 = vmatpush1.bf16.msra.mxu0 0
      %900 = vmatprep.subr.bf16.mxu0 0
      %901 = vmatpush1.bf16.msra.mxu0 0
      %902 = vmatprep.subr.bf16.mxu0 0
      %903 = vmatpush1.bf16.msra.mxu0 0
      %904 = vmatprep.subr.bf16.mxu0 0
      %905 = vmatpush1.bf16.msra.mxu0 %v837
      %906 = vmatprep.subr.bf16.mxu0 0
      %907 = vmatpush2.bf16.msra.mxu0 0
      %908 = vmatprep.subr.bf16.mxu0 0
      %909 = vmatpush2.bf16.msra.mxu0 0
      %910 = vmatprep.subr.bf16.mxu0 0
      %911 = vmatpush2.bf16.msra.mxu0 0
      %912 = vmatprep.subr.bf16.mxu0 0
      %913 = vmatpush2.bf16.msra.mxu0 0
      %914 = vmatprep.subr.bf16.mxu0 0
      %915 = vmatpush2.bf16.msra.mxu0 0
      %916 = vmatprep.subr.bf16.mxu0 0
      %917 = vmatpush2.bf16.msra.mxu0 0
      %918 = vmatprep.subr.bf16.mxu0 0
      %919 = vmatpush2.bf16.msra.mxu0 0
      %920 = vmatprep.subr.bf16.mxu0 0
      %921 = vmatpush2.bf16.msra.mxu0 0
      %922 = vmatprep.mubr.bf16.mxu0 0
      %923 = vmatmul.mubr.bf16.gmra.mxu0 %v845
      %v924 = vpop.f32.mrf.mxu0
      %v925 = vadd.f32 0.0, %v924
      %v926 = vpop.f32.mrf.mxu0
      %v927 = vpop.f32.mrf.mxu0
      %v928 = vadd.f32 0.0, %v927
      %v929 = vpop.f32.mrf.mxu0
      %930 = vdwg.mxu0
      %v931 = vadd.f32 %v818, %v882
      %v932 = vadd.f32 %v819, %v884
      %v933 = vadd.f32 %v820, %v925
      %v934 = vadd.f32 %v821, %v886
      %v935 = vadd.f32 %v822, %v888
      %v936 = vadd.f32 %v823, %v928
      %s937 = scalar_lea.vmem %s1, 48
      %v938 = vld [vmem:[%s937] sm:$0xf]
      %v939 = vld [vmem:[%s937 + $0x4] sm:$0xf]
      %v942 = vunpack.c.l.b16 %v938
      %v943 = vunpack.c.l.b16 %v939
      %v944 = vpack.c.b16 %v943, %v942
      %945 = vrot.lane.b32.xlu0 %v287, 92
      %v946 = vpop.permute.xlu0 %945
      %947 = vrot.lane.b32.xlu0 %v288, 92
      %v948 = vpop.permute.xlu0 %947
      %949 = vrot.lane.b32.xlu0 %v289, 92
      %v950 = vpop.permute.xlu0 %949
      %vm951 = vcmask 752640
      %v952 = vsel %vm951, %v946, %v948
      %v953 = vsel %vm951, %v948, %v950
      %v958 = vsel %vm302, %v944, 0
      %960 = vmatprep.subr.bf16.mxu0 0
      %961 = vmatpush1.bf16.msra.mxu0 0
      %962 = vmatprep.subr.bf16.mxu0 0
      %963 = vmatpush1.bf16.msra.mxu0 0
      %964 = vmatprep.subr.bf16.mxu0 0
      %965 = vmatpush1.bf16.msra.mxu0 0
      %966 = vmatprep.subr.bf16.mxu0 0
      %967 = vmatpush1.bf16.msra.mxu0 0
      %968 = vmatprep.subr.bf16.mxu0 0
      %969 = vmatpush1.bf16.msra.mxu0 0
      %970 = vmatprep.subr.bf16.mxu0 0
      %971 = vmatpush1.bf16.msra.mxu0 0
      %972 = vmatprep.subr.bf16.mxu0 0
      %973 = vmatpush1.bf16.msra.mxu0 0
      %974 = vmatprep.subr.bf16.mxu0 %v953
      %975 = vmatpush1.bf16.msra.mxu0 %v952
      %976 = vmatprep.subr.bf16.mxu0 0
      %977 = vmatpush2.bf16.msra.mxu0 0
      %978 = vmatprep.subr.bf16.mxu0 0
      %979 = vmatpush2.bf16.msra.mxu0 0
      %980 = vmatprep.subr.bf16.mxu0 0
      %981 = vmatpush2.bf16.msra.mxu0 0
      %982 = vmatprep.subr.bf16.mxu0 0
      %983 = vmatpush2.bf16.msra.mxu0 0
      %984 = vmatprep.subr.bf16.mxu0 0
      %985 = vmatpush2.bf16.msra.mxu0 0
      %986 = vmatprep.subr.bf16.mxu0 0
      %987 = vmatpush2.bf16.msra.mxu0 0
      %988 = vmatprep.subr.bf16.mxu0 0
      %989 = vmatpush2.bf16.msra.mxu0 0
      %990 = vmatprep.subr.bf16.mxu0 0
      %991 = vmatpush2.bf16.msra.mxu0 0
      %992 = vmatprep.mubr.bf16.mxu0 0
      %993 = vmatmul.mubr.bf16.gmra.mxu0 %v958
      %v994 = vpop.f32.mrf.mxu0
      %v995 = vadd.f32 0.0, %v994
      %v996 = vpop.f32.mrf.mxu0
      %v997 = vadd.f32 0.0, %v996
      %v998 = vpop.f32.mrf.mxu0
      %v999 = vadd.f32 0.0, %v998
      %v1000 = vpop.f32.mrf.mxu0
      %v1001 = vadd.f32 0.0, %v1000
      %1002 = vdwg.mxu0
      %1003 = vmatprep.subr.bf16.mxu0 0
      %1004 = vmatpush1.bf16.msra.mxu0 0
      %1005 = vmatprep.subr.bf16.mxu0 0
      %1006 = vmatpush1.bf16.msra.mxu0 0
      %1007 = vmatprep.subr.bf16.mxu0 0
      %1008 = vmatpush1.bf16.msra.mxu0 0
      %1009 = vmatprep.subr.bf16.mxu0 0
      %1010 = vmatpush1.bf16.msra.mxu0 0
      %1011 = vmatprep.subr.bf16.mxu0 0
      %1012 = vmatpush1.bf16.msra.mxu0 0
      %1013 = vmatprep.subr.bf16.mxu0 0
      %1014 = vmatpush1.bf16.msra.mxu0 0
      %1015 = vmatprep.subr.bf16.mxu0 0
      %1016 = vmatpush1.bf16.msra.mxu0 0
      %1017 = vmatprep.subr.bf16.mxu0 0
      %1018 = vmatpush1.bf16.msra.mxu0 %v950
      %1019 = vmatprep.subr.bf16.mxu0 0
      %1020 = vmatpush2.bf16.msra.mxu0 0
      %1021 = vmatprep.subr.bf16.mxu0 0
      %1022 = vmatpush2.bf16.msra.mxu0 0
      %1023 = vmatprep.subr.bf16.mxu0 0
      %1024 = vmatpush2.bf16.msra.mxu0 0
      %1025 = vmatprep.subr.bf16.mxu0 0
      %1026 = vmatpush2.bf16.msra.mxu0 0
      %1027 = vmatprep.subr.bf16.mxu0 0
      %1028 = vmatpush2.bf16.msra.mxu0 0
      %1029 = vmatprep.subr.bf16.mxu0 0
      %1030 = vmatpush2.bf16.msra.mxu0 0
      %1031 = vmatprep.subr.bf16.mxu0 0
      %1032 = vmatpush2.bf16.msra.mxu0 0
      %1033 = vmatprep.subr.bf16.mxu0 0
      %1034 = vmatpush2.bf16.msra.mxu0 0
      %1035 = vmatprep.mubr.bf16.mxu0 0
      %1036 = vmatmul.mubr.bf16.gmra.mxu0 %v958
      %v1037 = vpop.f32.mrf.mxu0
      %v1038 = vadd.f32 0.0, %v1037
      %v1039 = vpop.f32.mrf.mxu0
      %v1040 = vpop.f32.mrf.mxu0
      %v1041 = vadd.f32 0.0, %v1040
      %v1042 = vpop.f32.mrf.mxu0
      %1043 = vdwg.mxu0
      %v1044 = vadd.f32 %v931, %v995
      %v1045 = vadd.f32 %v932, %v997
      %v1046 = vadd.f32 %v933, %v1038
      %v1047 = vadd.f32 %v934, %v999
      %v1048 = vadd.f32 %v935, %v1001
      %v1049 = vadd.f32 %v936, %v1041
      %s1050 = scalar_lea.vmem %s1, 56
      %v1051 = vld [vmem:[%s1050] sm:$0xf]
      %v1052 = vld [vmem:[%s1050 + $0x4] sm:$0xf]
      %v1055 = vunpack.c.l.b16 %v1051
      %v1056 = vunpack.c.l.b16 %v1052
      %v1057 = vpack.c.b16 %v1056, %v1055
      %1058 = vrot.lane.b32.xlu0 %v287, 91
      %v1059 = vpop.permute.xlu0 %1058
      %1060 = vrot.lane.b32.xlu0 %v288, 91
      %v1061 = vpop.permute.xlu0 %1060
      %1062 = vrot.lane.b32.xlu0 %v289, 91
      %v1063 = vpop.permute.xlu0 %1062
      %vm1064 = vcmask 744448
      %v1065 = vsel %vm1064, %v1059, %v1061
      %v1066 = vsel %vm1064, %v1061, %v1063
      %v1071 = vsel %vm302, %v1057, 0
      %1073 = vmatprep.subr.bf16.mxu0 0
      %1074 = vmatpush1.bf16.msra.mxu0 0
      %1075 = vmatprep.subr.bf16.mxu0 0
      %1076 = vmatpush1.bf16.msra.mxu0 0
      %1077 = vmatprep.subr.bf16.mxu0 0
      %1078 = vmatpush1.bf16.msra.mxu0 0
      %1079 = vmatprep.subr.bf16.mxu0 0
      %1080 = vmatpush1.bf16.msra.mxu0 0
      %1081 = vmatprep.subr.bf16.mxu0 0
      %1082 = vmatpush1.bf16.msra.mxu0 0
      %1083 = vmatprep.subr.bf16.mxu0 0
      %1084 = vmatpush1.bf16.msra.mxu0 0
      %1085 = vmatprep.subr.bf16.mxu0 0
      %1086 = vmatpush1.bf16.msra.mxu0 0
      %1087 = vmatprep.subr.bf16.mxu0 %v1066
      %1088 = vmatpush1.bf16.msra.mxu0 %v1065
      %1089 = vmatprep.subr.bf16.mxu0 0
      %1090 = vmatpush2.bf16.msra.mxu0 0
      %1091 = vmatprep.subr.bf16.mxu0 0
      %1092 = vmatpush2.bf16.msra.mxu0 0
      %1093 = vmatprep.subr.bf16.mxu0 0
      %1094 = vmatpush2.bf16.msra.mxu0 0
      %1095 = vmatprep.subr.bf16.mxu0 0
      %1096 = vmatpush2.bf16.msra.mxu0 0
      %1097 = vmatprep.subr.bf16.mxu0 0
      %1098 = vmatpush2.bf16.msra.mxu0 0
      %1099 = vmatprep.subr.bf16.mxu0 0
      %1100 = vmatpush2.bf16.msra.mxu0 0
      %1101 = vmatprep.subr.bf16.mxu0 0
      %1102 = vmatpush2.bf16.msra.mxu0 0
      %1103 = vmatprep.subr.bf16.mxu0 0
      %1104 = vmatpush2.bf16.msra.mxu0 0
      %1105 = vmatprep.mubr.bf16.mxu0 0
      %1106 = vmatmul.mubr.bf16.gmra.mxu0 %v1071
      %v1107 = vpop.f32.mrf.mxu0
      %v1108 = vadd.f32 0.0, %v1107
      %v1109 = vpop.f32.mrf.mxu0
      %v1110 = vadd.f32 0.0, %v1109
      %v1111 = vpop.f32.mrf.mxu0
      %v1112 = vadd.f32 0.0, %v1111
      %v1113 = vpop.f32.mrf.mxu0
      %v1114 = vadd.f32 0.0, %v1113
      %1115 = vdwg.mxu0
      %1116 = vmatprep.subr.bf16.mxu0 0
      %1117 = vmatpush1.bf16.msra.mxu0 0
      %1118 = vmatprep.subr.bf16.mxu0 0
      %1119 = vmatpush1.bf16.msra.mxu0 0
      %1120 = vmatprep.subr.bf16.mxu0 0
      %1121 = vmatpush1.bf16.msra.mxu0 0
      %1122 = vmatprep.subr.bf16.mxu0 0
      %1123 = vmatpush1.bf16.msra.mxu0 0
      %1124 = vmatprep.subr.bf16.mxu0 0
      %1125 = vmatpush1.bf16.msra.mxu0 0
      %1126 = vmatprep.subr.bf16.mxu0 0
      %1127 = vmatpush1.bf16.msra.mxu0 0
      %1128 = vmatprep.subr.bf16.mxu0 0
      %1129 = vmatpush1.bf16.msra.mxu0 0
      %1130 = vmatprep.subr.bf16.mxu0 0
      %1131 = vmatpush1.bf16.msra.mxu0 %v1063
      %1132 = vmatprep.subr.bf16.mxu0 0
      %1133 = vmatpush2.bf16.msra.mxu0 0
      %1134 = vmatprep.subr.bf16.mxu0 0
      %1135 = vmatpush2.bf16.msra.mxu0 0
      %1136 = vmatprep.subr.bf16.mxu0 0
      %1137 = vmatpush2.bf16.msra.mxu0 0
      %1138 = vmatprep.subr.bf16.mxu0 0
      %1139 = vmatpush2.bf16.msra.mxu0 0
      %1140 = vmatprep.subr.bf16.mxu0 0
      %1141 = vmatpush2.bf16.msra.mxu0 0
      %1142 = vmatprep.subr.bf16.mxu0 0
      %1143 = vmatpush2.bf16.msra.mxu0 0
      %1144 = vmatprep.subr.bf16.mxu0 0
      %1145 = vmatpush2.bf16.msra.mxu0 0
      %1146 = vmatprep.subr.bf16.mxu0 0
      %1147 = vmatpush2.bf16.msra.mxu0 0
      %1148 = vmatprep.mubr.bf16.mxu0 0
      %1149 = vmatmul.mubr.bf16.gmra.mxu0 %v1071
      %v1150 = vpop.f32.mrf.mxu0
      %v1151 = vadd.f32 0.0, %v1150
      %v1152 = vpop.f32.mrf.mxu0
      %v1153 = vpop.f32.mrf.mxu0
      %v1154 = vadd.f32 0.0, %v1153
      %v1155 = vpop.f32.mrf.mxu0
      %1156 = vdwg.mxu0
      %v1157 = vadd.f32 %v1044, %v1108
      %v1158 = vadd.f32 %v1045, %v1110
      %v1159 = vadd.f32 %v1046, %v1151
      %v1160 = vadd.f32 %v1047, %v1112
      %v1161 = vadd.f32 %v1048, %v1114
      %v1162 = vadd.f32 %v1049, %v1154
      %s1163 = scalar_lea.vmem %s1, 64
      %v1164 = vld [vmem:[%s1163] sm:$0xf]
      %v1165 = vld [vmem:[%s1163 + $0x4] sm:$0xf]
      %v1168 = vunpack.c.l.b16 %v1164
      %v1169 = vunpack.c.l.b16 %v1165
      %v1170 = vpack.c.b16 %v1169, %v1168
      %1171 = vrot.lane.b32.xlu0 %v287, 90
      %v1172 = vpop.permute.xlu0 %1171
      %1173 = vrot.lane.b32.xlu0 %v288, 90
      %v1174 = vpop.permute.xlu0 %1173
      %1175 = vrot.lane.b32.xlu0 %v289, 90
      %v1176 = vpop.permute.xlu0 %1175
      %vm1177 = vcmask 736256
      %v1178 = vsel %vm1177, %v1172, %v1174
      %v1179 = vsel %vm1177, %v1174, %v1176
      %v1184 = vsel %vm302, %v1170, 0
      %1186 = vmatprep.subr.bf16.mxu0 0
      %1187 = vmatpush1.bf16.msra.mxu0 0
      %1188 = vmatprep.subr.bf16.mxu0 0
      %1189 = vmatpush1.bf16.msra.mxu0 0
      %1190 = vmatprep.subr.bf16.mxu0 0
      %1191 = vmatpush1.bf16.msra.mxu0 0
      %1192 = vmatprep.subr.bf16.mxu0 0
      %1193 = vmatpush1.bf16.msra.mxu0 0
      %1194 = vmatprep.subr.bf16.mxu0 0
      %1195 = vmatpush1.bf16.msra.mxu0 0
      %1196 = vmatprep.subr.bf16.mxu0 0
      %1197 = vmatpush1.bf16.msra.mxu0 0
      %1198 = vmatprep.subr.bf16.mxu0 0
      %1199 = vmatpush1.bf16.msra.mxu0 0
      %1200 = vmatprep.subr.bf16.mxu0 %v1179
      %1201 = vmatpush1.bf16.msra.mxu0 %v1178
      %1202 = vmatprep.subr.bf16.mxu0 0
      %1203 = vmatpush2.bf16.msra.mxu0 0
      %1204 = vmatprep.subr.bf16.mxu0 0
      %1205 = vmatpush2.bf16.msra.mxu0 0
      %1206 = vmatprep.subr.bf16.mxu0 0
      %1207 = vmatpush2.bf16.msra.mxu0 0
      %1208 = vmatprep.subr.bf16.mxu0 0
      %1209 = vmatpush2.bf16.msra.mxu0 0
      %1210 = vmatprep.subr.bf16.mxu0 0
      %1211 = vmatpush2.bf16.msra.mxu0 0
      %1212 = vmatprep.subr.bf16.mxu0 0
      %1213 = vmatpush2.bf16.msra.mxu0 0
      %1214 = vmatprep.subr.bf16.mxu0 0
      %1215 = vmatpush2.bf16.msra.mxu0 0
      %1216 = vmatprep.subr.bf16.mxu0 0
      %1217 = vmatpush2.bf16.msra.mxu0 0
      %1218 = vmatprep.mubr.bf16.mxu0 0
      %1219 = vmatmul.mubr.bf16.gmra.mxu0 %v1184
      %v1220 = vpop.f32.mrf.mxu0
      %v1221 = vadd.f32 0.0, %v1220
      %v1222 = vpop.f32.mrf.mxu0
      %v1223 = vadd.f32 0.0, %v1222
      %v1224 = vpop.f32.mrf.mxu0
      %v1225 = vadd.f32 0.0, %v1224
      %v1226 = vpop.f32.mrf.mxu0
      %v1227 = vadd.f32 0.0, %v1226
      %1228 = vdwg.mxu0
      %1229 = vmatprep.subr.bf16.mxu0 0
      %1230 = vmatpush1.bf16.msra.mxu0 0
      %1231 = vmatprep.subr.bf16.mxu0 0
      %1232 = vmatpush1.bf16.msra.mxu0 0
      %1233 = vmatprep.subr.bf16.mxu0 0
      %1234 = vmatpush1.bf16.msra.mxu0 0
      %1235 = vmatprep.subr.bf16.mxu0 0
      %1236 = vmatpush1.bf16.msra.mxu0 0
      %1237 = vmatprep.subr.bf16.mxu0 0
      %1238 = vmatpush1.bf16.msra.mxu0 0
      %1239 = vmatprep.subr.bf16.mxu0 0
      %1240 = vmatpush1.bf16.msra.mxu0 0
      %1241 = vmatprep.subr.bf16.mxu0 0
      %1242 = vmatpush1.bf16.msra.mxu0 0
      %1243 = vmatprep.subr.bf16.mxu0 0
      %1244 = vmatpush1.bf16.msra.mxu0 %v1176
      %1245 = vmatprep.subr.bf16.mxu0 0
      %1246 = vmatpush2.bf16.msra.mxu0 0
      %1247 = vmatprep.subr.bf16.mxu0 0
      %1248 = vmatpush2.bf16.msra.mxu0 0
      %1249 = vmatprep.subr.bf16.mxu0 0
      %1250 = vmatpush2.bf16.msra.mxu0 0
      %1251 = vmatprep.subr.bf16.mxu0 0
      %1252 = vmatpush2.bf16.msra.mxu0 0
      %1253 = vmatprep.subr.bf16.mxu0 0
      %1254 = vmatpush2.bf16.msra.mxu0 0
      %1255 = vmatprep.subr.bf16.mxu0 0
      %1256 = vmatpush2.bf16.msra.mxu0 0
      %1257 = vmatprep.subr.bf16.mxu0 0
      %1258 = vmatpush2.bf16.msra.mxu0 0
      %1259 = vmatprep.subr.bf16.mxu0 0
      %1260 = vmatpush2.bf16.msra.mxu0 0
      %1261 = vmatprep.mubr.bf16.mxu0 0
      %1262 = vmatmul.mubr.bf16.gmra.mxu0 %v1184
      %v1263 = vpop.f32.mrf.mxu0
      %v1264 = vadd.f32 0.0, %v1263
      %v1265 = vpop.f32.mrf.mxu0
      %v1266 = vpop.f32.mrf.mxu0
      %v1267 = vadd.f32 0.0, %v1266
      %v1268 = vpop.f32.mrf.mxu0
      %1269 = vdwg.mxu0
      %v1270 = vadd.f32 %v1157, %v1221
      %v1271 = vadd.f32 %v1158, %v1223
      %v1272 = vadd.f32 %v1159, %v1264
      %v1273 = vadd.f32 %v1160, %v1225
      %v1274 = vadd.f32 %v1161, %v1227
      %v1275 = vadd.f32 %v1162, %v1267
      %v1276 = vld [vmem:[%s252] sm:$0xff]
      %v1277 = vld [vmem:[%s252 + $0x8] sm:$0xff]
      %1279 = vset.pattern.permute.xlu0 0
      %1280 = vperm.xlu0 %1279, %v1276
      %v1281 = vpop.permute.xlu0 %1280
      %1284 = vset.pattern.permute.xlu0 0
      %1285 = vperm.xlu0 %1284, %v1277
      %v1286 = vpop.permute.xlu0 %1285
      %v1288 = vadd.f32 %v1270, %v1281
      %v1289 = vadd.f32 %v1271, %v1281
      %v1290 = vadd.f32 %v1272, %v1281
      %v1291 = vadd.f32 %v1273, %v1286
      %v1292 = vadd.f32 %v1274, %v1286
      %v1293 = vadd.f32 %v1275, %v1286
      %v1294 = vld [vmem:[%s256] sm:$0x7]
      %1295 = vset.pattern.permute.xlu0 1
      %1296 = vperm.xlu0 %1295, %v1276
      %v1297 = vpop.permute.xlu0 %1296
      %1299 = vset.pattern.permute.xlu0 1
      %1300 = vperm.xlu0 %1299, %v1277
      %v1301 = vpop.permute.xlu0 %1300
      %v1304 = vlaneseq
      %v1305 = vshrl.u32 %v1304, 7
      %v1306 = vsub.s32 0, %v1305
      %v1307 = vrot.slane %v1294, %v1306
      %v1308 = vlaneseq
      %v1309 = vshrl.u32 %v1308, 7
      %v1310 = vsub.s32 1, %v1309
      %v1311 = vrot.slane %v1294, %v1310
      %v1312 = vlaneseq
      %v1313 = vshrl.u32 %v1312, 7
      %v1314 = vsub.s32 2, %v1313
      %v1315 = vrot.slane %v1294, %v1314
      %v1319 = vmul.f32 %v1297, %v1307
      %v1320 = vmul.f32 %v1297, %v1311
      %v1321 = vmul.f32 %v1297, %v1315
      %v1322 = vmul.f32 %v1301, %v1307
      %v1323 = vmul.f32 %v1301, %v1311
      %v1324 = vmul.f32 %v1301, %v1315
      %v1325 = vadd.f32 %v1288, %v1319
      %v1326 = vadd.f32 %v1289, %v1320
      %v1327 = vadd.f32 %v1290, %v1321
      %v1328 = vadd.f32 %v1291, %v1322
      %v1329 = vadd.f32 %v1292, %v1323
      %v1330 = vadd.f32 %v1293, %v1324
      %vm1331 = vcmp.ge.f32.partialorder %v1325, 0.0
      %vm1332 = vcmp.ge.f32.partialorder %v1326, 0.0
      %vm1333 = vcmp.ge.f32.partialorder %v1327, 0.0
      %vm1334 = vcmp.ge.f32.partialorder %v1328, 0.0
      %vm1335 = vcmp.ge.f32.partialorder %v1329, 0.0
      %vm1336 = vcmp.ge.f32.partialorder %v1330, 0.0
      %v1337 = vmul.f32 %v1325, 0.2
      %v1338 = vmul.f32 %v1326, 0.2
      %v1339 = vmul.f32 %v1327, 0.2
      %v1340 = vmul.f32 %v1328, 0.2
      %v1341 = vmul.f32 %v1329, 0.2
      %v1342 = vmul.f32 %v1330, 0.2
      %v1343 = vsel %vm1331, %v1325, %v1337
      %v1344 = vsel %vm1332, %v1326, %v1338
      %v1345 = vsel %vm1333, %v1327, %v1339
      %v1346 = vsel %vm1334, %v1328, %v1340
      %v1347 = vsel %vm1335, %v1329, %v1341
      %v1348 = vsel %vm1336, %v1330, %v1342
      %v1349 = vld [vmem:[%s4] sm:$0x7]
      %v1351 = vlaneseq
      %v1352 = vshrl.u32 %v1351, 7
      %v1353 = vsub.s32 0, %v1352
      %v1354 = vrot.slane %v1349, %v1353
      %v1355 = vlaneseq
      %v1356 = vshrl.u32 %v1355, 7
      %v1357 = vsub.s32 1, %v1356
      %v1358 = vrot.slane %v1349, %v1357
      %v1359 = vlaneseq
      %v1360 = vshrl.u32 %v1359, 7
      %v1361 = vsub.s32 2, %v1360
      %v1362 = vrot.slane %v1349, %v1361
      %v1366 = vmul.f32 %v1343, %v1354
      %v1367 = vmul.f32 %v1344, %v1358
      %v1368 = vmul.f32 %v1345, %v1362
      %v1369 = vmul.f32 %v1346, %v1354
      %v1370 = vmul.f32 %v1347, %v1358
      %v1371 = vmul.f32 %v1348, %v1362
      %v1372 = vadd.f32 %v1366, %v1367
      %vm1373 = vcmask 261120
      %v1374 = vsel %vm1373, %v1368, 0.0
      %v1375 = vadd.f32 %v1372, %v1374
      %1376 = vadd.xlane.f32.xlu0 %v1375
      %v1377 = vpop.xlane.xlu0 %1376
      %v1378 = vadd.f32 %v1369, %v1370
      %v1379 = vsel %vm1373, %v1371, 0.0
      %v1380 = vadd.f32 %v1378, %v1379
      %1381 = vadd.xlane.f32.xlu0 %v1380
      %v1382 = vpop.xlane.xlu0 %1381
      %v1383 = vmul.f32 %v1377, 0.00390625
      %v1384 = vmul.f32 %v1382, 0.00390625
      %v1385 = vmul.f32 %v1366, %v1366
      %v1386 = vmul.f32 %v1367, %v1367
      %v1387 = vmul.f32 %v1368, %v1368
      %v1388 = vmul.f32 %v1369, %v1369
      %v1389 = vmul.f32 %v1370, %v1370
      %v1390 = vmul.f32 %v1371, %v1371
      %v1391 = vadd.f32 %v1385, %v1386
      %v1392 = vsel %vm1373, %v1387, 0.0
      %v1393 = vadd.f32 %v1391, %v1392
      %1394 = vadd.xlane.f32.xlu0 %v1393
      %v1395 = vpop.xlane.xlu0 %1394
      %v1396 = vadd.f32 %v1388, %v1389
      %v1397 = vsel %vm1373, %v1390, 0.0
      %v1398 = vadd.f32 %v1396, %v1397
      %1399 = vadd.xlane.f32.xlu0 %v1398
      %v1400 = vpop.xlane.xlu0 %1399
      %v1401 = vmul.f32 %v1395, 0.00390625
      %v1402 = vmul.f32 %v1400, 0.00390625
      %v1403 = vmul.f32 %v1383, %v1383
      %v1404 = vmul.f32 %v1384, %v1384
      %v1405 = vsub.f32 %v1401, %v1403
      %v1406 = vsub.f32 %v1402, %v1404
      %v1407 = vsub.f32 %v1366, %v1383
      %v1408 = vsub.f32 %v1367, %v1383
      %v1409 = vsub.f32 %v1368, %v1383
      %v1410 = vsub.f32 %v1369, %v1384
      %v1411 = vsub.f32 %v1370, %v1384
      %v1412 = vsub.f32 %v1371, %v1384
      %v1413 = vmax.f32 %v1405, 0.0
      %v1414 = vmax.f32 %v1406, 0.0
      %v1415 = vadd.f32 %v1413, 1e-05
      %v1416 = vadd.f32 %v1414, 1e-05
      %v1417 = vrsqrt.pop %v1415
      %v1418 = vrsqrt.pop %v1416
      %v1419 = vmul.f32 %v1407, %v1417
      %v1420 = vmul.f32 %v1408, %v1417
      %v1421 = vmul.f32 %v1409, %v1417
      %v1422 = vmul.f32 %v1410, %v1418
      %v1423 = vmul.f32 %v1411, %v1418
      %v1424 = vmul.f32 %v1412, %v1418
      %v1425 = vadd.f32 %v1276, 1.0
      %v1426 = vadd.f32 %v1277, 1.0
      %1428 = vset.pattern.permute.xlu0 2
      %1429 = vperm.xlu0 %1428, %v1425
      %v1430 = vpop.permute.xlu0 %1429
      %1433 = vset.pattern.permute.xlu0 2
      %1434 = vperm.xlu0 %1433, %v1426
      %v1435 = vpop.permute.xlu0 %1434
      %v1437 = vmul.f32 %v1419, %v1430
      %v1438 = vmul.f32 %v1420, %v1430
      %v1439 = vmul.f32 %v1421, %v1430
      %v1440 = vmul.f32 %v1422, %v1435
      %v1441 = vmul.f32 %v1423, %v1435
      %v1442 = vmul.f32 %v1424, %v1435
      %1443 = vset.pattern.permute.xlu0 3
      %1444 = vperm.xlu0 %1443, %v1276
      %v1445 = vpop.permute.xlu0 %1444
      %1447 = vset.pattern.permute.xlu0 3
      %1448 = vperm.xlu0 %1447, %v1277
      %v1449 = vpop.permute.xlu0 %1448
      %v1451 = vadd.f32 %v1437, %v1445
      %v1452 = vadd.f32 %v1438, %v1445
      %v1453 = vadd.f32 %v1439, %v1445
      %v1454 = vadd.f32 %v1440, %v1449
      %v1455 = vadd.f32 %v1441, %v1449
      %v1456 = vadd.f32 %v1442, %v1449
      %v1457 = vpack.c.bf16 %v1454, %v1451
      %v1458 = vpack.c.bf16 %v1455, %v1452
      %v1459 = vpack.c.bf16 %v1456, %v1453
      %v1463 = vunpack.c.l.b16 %v1457
      %v1464 = vunpack.c.l.b16 %v1458
      %v1465 = vunpack.c.l.b16 %v1459
      %v1466 = vunpack.c.h.b16 %v1457
      %v1467 = vunpack.c.h.b16 %v1458
      %v1468 = vunpack.c.h.b16 %v1459
      %v1469 = vpack.c.b16 %v1464, %v1463
      %v1470 = vpack.c.b16 %v1465, %v1465
      %v1471 = vpack.c.b16 %v1467, %v1466
      %v1472 = vpack.c.b16 %v1468, %v1468
      %1477 = vst [vmem:[%s261] sm:$0xff] %v1469
      %vm1478 = vcmask 257024
      %1479 = vst.msk [vmem:[%s261 + $0x8] sm:$0xf] %vm1478, %v1470
      %1480 = vst [vmem:[%s261 + $0xc] sm:$0xff] %v1471
      %1481 = vst.msk [vmem:[%s261 + $0x14] sm:$0xf] %vm1478, %v1472
      %p1482 = scmp.lt.s32.totalorder %s16, 1
      %s1483 = scalar_select %p1482, %s16, 1
      %s1484 = smul.addr %s1483, 6
      %s1485 = smul.addr %s1484, 4
      %s1486 = scalar_lea.vmem %s5, %s1485
      // Predicated region
      $region41: #{g_synthesis_forward.12} parent=39 // pred_check
        %p1487 = pneg %p154
      $region42: #{g_synthesis_forward.12} parent=39 // pred_check_branch
        %1489 = sbr.rel (%p1487) target = $region44
      $region43: #{g_synthesis_forward.12} parent=39 // pred_region
        _
      $region44: #{g_synthesis_forward.12} parent=39 // pred_fallthru
        _
    $region40: #{g_synthesis_forward.12} parent=5 // pred_fallthru
      _
    %p1490 = scmp.le.s32.totalorder 2, %s11
    // Predicated region
    $region45: #{g_synthesis_forward.12} parent=5 // pred_check
      %p1491 = pneg %p1490
    $region46: #{g_synthesis_forward.12} parent=5 // pred_check_branch
      %1493 = sbr.rel (%p1491) target = $region48
    $region47: #{g_synthesis_forward.12} parent=5 // pred_region
      %s1494 = ssub.s32 %s11, 2
      // Predicated region
      $region49: #{g_synthesis_forward.12} parent=47 // pred_check
        %p1495 = pneg %p160
      $region50: #{g_synthesis_forward.12} parent=47 // pred_check_branch
        %1497 = sbr.rel (%p1495) target = $region52
      $region51: #{g_synthesis_forward.12} parent=47 // pred_region
        %p1498 = scmp.lt.s32.totalorder %s17, 1
        %s1499 = scalar_select %p1498, %s17, 1
        %s1500 = smul.addr %s1499, 6
        %s1501 = smul.addr %s1500, 4
        %s1502 = scalar_lea.vmem %s5, %s1501
      $region52: #{g_synthesis_forward.12} parent=47 // pred_fallthru
        _
    $region48: #{g_synthesis_forward.12} parent=5 // pred_fallthru
      _
  $region6: #{g_synthesis_forward.12} parent=0 // loop_footer
    %s15 = sadd.s32 1, %s11
  $region7: #{g_synthesis_forward.12} parent=0 // loop_footer_branch
    %10 = sbr.rel target = $region3
  $region8: #{g_synthesis_forward.12} parent=0 // loop_exit
    _

// kernel: g_synthesis_forward.13
$region0: #{g_synthesis_forward.13}
  #allocation0 [shape = 'u32[]', space=smem, size = 0x4, offset = 0x4, fixed_abs, tag = 'smem constant byte address 0x4 - core index']
  #allocation1 [shape = 'u32[144,128]{1,0:T(1,128)}', space=vmem, size = 0x12000, scoped, tag = 'internal scratch']
  %s0 = inlined_call_operand.vmem [shape: bf16[2,16,260], index: 0, kind: input, shape index: {}]
  %s1 = inlined_call_operand.vmem [shape: bf16[1,3,16], index: 1, kind: input, shape index: {}]
  %s2 = inlined_call_operand.vmem [shape: f32[2,3,4], index: 2, kind: input, shape index: {}]
  %s3 = inlined_call_operand.vmem [shape: f32[2,3,256], index: 3, kind: output, shape index: {}]
  %s4 = sld [smem:[#allocation0]]
  $region45: #{g_synthesis_forward.13} parent=0
    _
  %s6 = ssub.s32 1, %s4
  %s7 = scalar_select 0, %s6, %s4
  loop: start=0, step=1, limit=4
  $region2: #{g_synthesis_forward.13} parent=0 // loop_pre_header
    _
  $region3: #{g_synthesis_forward.13} parent=0 // loop_header
    %s9 = sphi 0, %s13
    %p10 = scmp.ge.s32.totalorder %s9, 4
    %s19 = sphi 0, %s21
    %s22 = sphi 0, %s19
    %s23 = sphi 0, %s22
    %s39 = sphi 0, %s23
    %s43 = sphi 0, %s43
    %s45 = sphi 0, %s43
    %s46 = sphi 0, %s45
    %s60 = sphi 0, %s46
    %s66 = sphi 0, %s68
    %s69 = sphi 0, %s66
    %s70 = sphi 0, %s69
    %s86 = sphi 0, %s70
    %s92 = sphi 0, %s94
    %s95 = sphi 0, %s92
    %s96 = sphi 0, %s95
    %s112 = sphi 0, %s96
  $region4: #{g_synthesis_forward.13} parent=0 // loop_header_branch
    %12 = sbr.rel (%p10) target = $region8
  $region5: #{g_synthesis_forward.13} parent=0 // loop_body
    %s14 = ssub.s32 %s9, 1
    %s15 = ssub.s32 %s9, 2
    %s16 = sadd.s32 %s9, 1
    %s17 = ssub.s32 %s9, %s16
    %p18 = scmp.eq.s32.totalorder %s17, 0
    %s20 = sadd.s32 %s19, 1
    %s21 = scalar_select %p18, %s19, %s20
    %p24 = pneg %p18
    %p25 = scmp.eq.s32.totalorder %s9, 1
    %p26 = por %p24, %p25
    %p27 = scmp.ne.s32.totalorder %s19, %s22
    %p28 = scmp.eq.s32.totalorder %s9, 0
    %p29 = por %p27, %p28
    %p30 = scmp.ne.s32.totalorder %s19, %s22
    %p31 = scmp.eq.s32.totalorder %s14, 1
    %p32 = por %p30, %p31
    %p33 = scmp.ne.s32.totalorder %s22, %s23
    %p34 = scmp.eq.s32.totalorder %s14, 0
    %p35 = por %p33, %p34
    %p36 = scmp.ne.s32.totalorder %s22, %s23
    %p37 = scmp.eq.s32.totalorder %s15, 1
    %p38 = por %p36, %p37
    %p40 = scmp.ne.s32.totalorder %s23, %s39
    %p41 = scmp.eq.s32.totalorder %s15, 0
    %p42 = por %p40, %p41
    %s44 = sadd.s32 %s43, 1
    %p47 = scmp.eq.s32.totalorder %s9, 1
    %p48 = scmp.ne.s32.totalorder %s43, %s45
    %p49 = scmp.eq.s32.totalorder %s9, 0
    %p50 = por %p48, %p49
    %p51 = scmp.ne.s32.totalorder %s43, %s45
    %p52 = scmp.eq.s32.totalorder %s14, 1
    %p53 = por %p51, %p52
    %p54 = scmp.ne.s32.totalorder %s45, %s46
    %p55 = scmp.eq.s32.totalorder %s14, 0
    %p56 = por %p54, %p55
    %p57 = scmp.ne.s32.totalorder %s45, %s46
    %p58 = scmp.eq.s32.totalorder %s15, 1
    %p59 = por %p57, %p58
    %p61 = scmp.ne.s32.totalorder %s46, %s60
    %p62 = scmp.eq.s32.totalorder %s15, 0
    %p63 = por %p61, %p62
    %s64 = ssub.s32 %s9, %s16
    %p65 = scmp.eq.s32.totalorder %s64, 0
    %s67 = sadd.s32 %s66, 1
    %s68 = scalar_select %p65, %s66, %s67
    %p71 = pneg %p65
    %p72 = scmp.eq.s32.totalorder %s9, 1
    %p73 = por %p71, %p72
    %p74 = scmp.ne.s32.totalorder %s66, %s69
    %p75 = scmp.eq.s32.totalorder %s9, 0
    %p76 = por %p74, %p75
    %p77 = scmp.ne.s32.totalorder %s66, %s69
    %p78 = scmp.eq.s32.totalorder %s14, 1
    %p79 = por %p77, %p78
    %p80 = scmp.ne.s32.totalorder %s69, %s70
    %p81 = scmp.eq.s32.totalorder %s14, 0
    %p82 = por %p80, %p81
    %p83 = scmp.ne.s32.totalorder %s69, %s70
    %p84 = scmp.eq.s32.totalorder %s15, 1
    %p85 = por %p83, %p84
    %p87 = scmp.ne.s32.totalorder %s70, %s86
    %p88 = scmp.eq.s32.totalorder %s15, 0
    %p89 = por %p87, %p88
    %s90 = ssub.s32 %s9, %s16
    %p91 = scmp.eq.s32.totalorder %s90, 0
    %s93 = sadd.s32 %s92, 1
    %s94 = scalar_select %p91, %s92, %s93
    %p97 = pneg %p91
    %p98 = scmp.eq.s32.totalorder %s9, 1
    %p99 = por %p97, %p98
    %p100 = scmp.ne.s32.totalorder %s92, %s95
    %p101 = scmp.eq.s32.totalorder %s9, 0
    %p102 = por %p100, %p101
    %p103 = scmp.ne.s32.totalorder %s92, %s95
    %p104 = scmp.eq.s32.totalorder %s14, 1
    %p105 = por %p103, %p104
    %p106 = scmp.ne.s32.totalorder %s95, %s96
    %p107 = scmp.eq.s32.totalorder %s14, 0
    %p108 = por %p106, %p107
    %p109 = scmp.ne.s32.totalorder %s95, %s96
    %p110 = scmp.eq.s32.totalorder %s15, 1
    %p111 = por %p109, %p110
    %p113 = scmp.ne.s32.totalorder %s96, %s112
    %p114 = scmp.eq.s32.totalorder %s15, 0
    %p115 = por %p113, %p114
    %p116 = scmp.le.s32.totalorder 1, %s9
    %p117 = scmp.lt.s32.totalorder %s9, 3
    %p118 = pnand %p116, %p117
    %p119 = pneg %p118
    // Predicated region
    $region9: #{g_synthesis_forward.13} parent=5 // pred_check
      _
    $region10: #{g_synthesis_forward.13} parent=5 // pred_check_branch
      %121 = sbr.rel (%p118) target = $region12
    $region11: #{g_synthesis_forward.13} parent=5 // pred_region
      %s122 = ssub.s32 %s9, 1
      // Predicated region
      $region13: #{g_synthesis_forward.13} parent=11 // pred_check
        %p123 = pneg %p56
      $region14: #{g_synthesis_forward.13} parent=11 // pred_check_branch
        %125 = sbr.rel (%p123) target = $region16
      $region15: #{g_synthesis_forward.13} parent=11 // pred_region
        _
      $region16: #{g_synthesis_forward.13} parent=11 // pred_fallthru
        _
    $region12: #{g_synthesis_forward.13} parent=5 // pred_fallthru
      _
    %p126 = scmp.lt.s32.totalorder %s9, 2
    // Predicated region
    $region17: #{g_synthesis_forward.13} parent=5 // pred_check
      %p127 = pneg %p126
    $region18: #{g_synthesis_forward.13} parent=5 // pred_check_branch
      %129 = sbr.rel (%p127) target = $region20
    $region19: #{g_synthesis_forward.13} parent=5 // pred_region
      // Predicated region
      $region21: #{g_synthesis_forward.13} parent=19 // pred_check
        %p130 = pneg %p29
      $region22: #{g_synthesis_forward.13} parent=19 // pred_check_branch
        %132 = sbr.rel (%p130) target = $region24
      $region23: #{g_synthesis_forward.13} parent=19 // pred_region
        %p133 = scmp.lt.s32.totalorder %s9, 1
        %s134 = scalar_select %p133, %s9, 1
        %s135 = smul.addr %s134, 6
        %s136 = smul.addr %s135, 4
        %s137 = scalar_lea.vmem %s0, %s136
      $region24: #{g_synthesis_forward.13} parent=19 // pred_fallthru
        _
      // Predicated region
      $region25: #{g_synthesis_forward.13} parent=19 // pred_check
        %p138 = pneg %p76
      $region26: #{g_synthesis_forward.13} parent=19 // pred_check_branch
        %140 = sbr.rel (%p138) target = $region28
      $region27: #{g_synthesis_forward.13} parent=19 // pred_region
        %p141 = scmp.lt.s32.totalorder %s9, 1
        %s142 = scalar_select %p141, %s9, 1
        %s143 = smul.addr %s142, 4
        %s144 = scalar_lea.vmem %s2, %s143
      $region28: #{g_synthesis_forward.13} parent=19 // pred_fallthru
        _
    $region20: #{g_synthesis_forward.13} parent=5 // pred_fallthru
      _
    %p145 = scmp.le.s32.totalorder 1, %s9
    %p146 = scmp.lt.s32.totalorder %s9, 3
    %p147 = pnand %p145, %p146
    %p148 = pneg %p147
    // Predicated region
    $region29: #{g_synthesis_forward.13} parent=5 // pred_check
      _
    $region30: #{g_synthesis_forward.13} parent=5 // pred_check_branch
      %150 = sbr.rel (%p147) target = $region32
    $region31: #{g_synthesis_forward.13} parent=5 // pred_region
      %s151 = ssub.s32 %s9, 1
      %p152 = scmp.lt.s32.totalorder %s14, 1
      %s153 = scalar_select %p152, %s14, 1
      %s154 = smul.addr %s153, 6
      %s155 = smul.addr %s154, 4
      %s156 = scalar_lea.vmem %s0, %s155
      %p157 = pneg %p35
      %p158 = pneg %p32
      %p159 = pneg %p56
      %p160 = pneg %p53
      %p161 = scmp.lt.s32.totalorder %s14, 1
      %s162 = scalar_select %p161, %s14, 1
      %s163 = smul.addr %s162, 4
      %s164 = scalar_lea.vmem %s2, %s163
      %p165 = pneg %p82
      %p166 = pneg %p79
      %p167 = pneg %p108
      %p168 = pneg %p105
      %p169 = scmp.lt.s32.totalorder %s14, 1
      %s170 = scalar_select %p169, %s14, 1
      %s171 = smul.addr %s170, 2
      %s172 = smul.addr %s171, 4
      %s173 = scalar_lea.vmem %s3, %s172
      %p174 = scmp.lt.s32.totalorder %s14, 1
      %s175 = scalar_select %p174, %s14, 1
      %s176 = smul.addr %s175, 6
      %s177 = smul.addr %s176, 4
      %s178 = scalar_lea.vmem %s0, %s177
      %p179 = scmp.lt.s32.totalorder %s14, 1
      %s180 = scalar_select %p179, %s14, 1
      %s181 = smul.addr %s180, 4
      %s182 = scalar_lea.vmem %s2, %s181
      %p183 = scmp.lt.s32.totalorder %s14, 1
      %s184 = scalar_select %p183, %s14, 1
      %s185 = smul.addr %s184, 2
      %s186 = smul.addr %s185, 4
      %s187 = scalar_lea.vmem %s3, %s186
      %v189 = vld [vmem:[%s178] sm:$0xff]
      %v190 = vld [vmem:[%s178 + $0xc] sm:$0xff]
      %v191 = vld [vmem:[%s1] sm:$0x3]
      %v192 = vld [vmem:[%s182] sm:$0x7]
      %194 = vset.pattern.permute.xlu0 0
      %195 = vperm.xlu0 %194, %v192
      %v196 = vpop.permute.xlu0 %195
      %v200 = vunpack.c.l.b16 %v189
      %v201 = vunpack.c.h.b16 %v189
      %v202 = vunpack.c.l.b16 %v190
      %v203 = vunpack.c.h.b16 %v190
      %v204 = vpack.c.b16 %v202, %v200
      %v205 = vpack.c.b16 %v203, %v201
      %vm208 = vcmask 130048
      %v210 = vsel %vm208, %v191, 0
      %212 = vmatprep.subr.bf16.mxu0 0
      %213 = vmatpush1.bf16.msra.mxu0 0
      %214 = vmatprep.subr.bf16.mxu0 0
      %215 = vmatpush1.bf16.msra.mxu0 0
      %216 = vmatprep.subr.bf16.mxu0 0
      %217 = vmatpush1.bf16.msra.mxu0 0
      %218 = vmatprep.subr.bf16.mxu0 0
      %219 = vmatpush1.bf16.msra.mxu0 0
      %220 = vmatprep.subr.bf16.mxu0 0
      %221 = vmatpush1.bf16.msra.mxu0 0
      %222 = vmatprep.subr.bf16.mxu0 0
      %223 = vmatpush1.bf16.msra.mxu0 0
      %224 = vmatprep.subr.bf16.mxu0 0
      %225 = vmatpush1.bf16.msra.mxu0 0
      %226 = vmatprep.subr.bf16.mxu0 %v205
      %227 = vmatpush1.bf16.msra.mxu0 %v204
      %228 = vmatprep.subr.bf16.mxu0 0
      %229 = vmatpush2.bf16.msra.mxu0 0
      %230 = vmatprep.subr.bf16.mxu0 0
      %231 = vmatpush2.bf16.msra.mxu0 0
      %232 = vmatprep.subr.bf16.mxu0 0
      %233 = vmatpush2.bf16.msra.mxu0 0
      %234 = vmatprep.subr.bf16.mxu0 0
      %235 = vmatpush2.bf16.msra.mxu0 0
      %236 = vmatprep.subr.bf16.mxu0 0
      %237 = vmatpush2.bf16.msra.mxu0 0
      %238 = vmatprep.subr.bf16.mxu0 0
      %239 = vmatpush2.bf16.msra.mxu0 0
      %240 = vmatprep.subr.bf16.mxu0 0
      %241 = vmatpush2.bf16.msra.mxu0 0
      %242 = vmatprep.subr.bf16.mxu0 0
      %243 = vmatpush2.bf16.msra.mxu0 0
      %244 = vmatprep.mubr.bf16.mxu0 0
      %245 = vmatmul.mubr.bf16.gmra.mxu0 %v210
      %v246 = vpop.f32.mrf.mxu0
      %v247 = vadd.f32 %v196, %v246
      %v248 = vpop.f32.mrf.mxu0
      %v249 = vadd.f32 %v196, %v248
      %v250 = vpop.f32.mrf.mxu0
      %v251 = vpop.f32.mrf.mxu0
      %252 = vdwg.mxu0
      %v255 = vcombine.low %v247, %v249
      %257 = vst [vmem:[%s187] sm:$0x77] %v255
      %p258 = scmp.lt.s32.totalorder %s14, 1
      %s259 = scalar_select %p258, %s14, 1
      %s260 = smul.addr %s259, 2
      %s261 = smul.addr %s260, 4
      %s262 = scalar_lea.vmem %s3, %s261
      // Predicated region
      $region33: #{g_synthesis_forward.13} parent=31 // pred_check
        %p263 = pneg %p105
      $region34: #{g_synthesis_forward.13} parent=31 // pred_check_branch
        %265 = sbr.rel (%p263) target = $region36
      $region35: #{g_synthesis_forward.13} parent=31 // pred_region
        _
      $region36: #{g_synthesis_forward.13} parent=31 // pred_fallthru
        _
    $region32: #{g_synthesis_forward.13} parent=5 // pred_fallthru
      _
    %p266 = scmp.le.s32.totalorder 2, %s9
    // Predicated region
    $region37: #{g_synthesis_forward.13} parent=5 // pred_check
      %p267 = pneg %p266
    $region38: #{g_synthesis_forward.13} parent=5 // pred_check_branch
      %269 = sbr.rel (%p267) target = $region40
    $region39: #{g_synthesis_forward.13} parent=5 // pred_region
      %s270 = ssub.s32 %s9, 2
      // Predicated region
      $region41: #{g_synthesis_forward.13} parent=39 // pred_check
        %p271 = pneg %p111
      $region42: #{g_synthesis_forward.13} parent=39 // pred_check_branch
        %273 = sbr.rel (%p271) target = $region44
      $region43: #{g_synthesis_forward.13} parent=39 // pred_region
        %p274 = scmp.lt.s32.totalorder %s15, 1
        %s275 = scalar_select %p274, %s15, 1
        %s276 = smul.addr %s275, 2
        %s277 = smul.addr %s276, 4
        %s278 = scalar_lea.vmem %s3, %s277
      $region44: #{g_synthesis_forward.13} parent=39 // pred_fallthru
        _
    $region40: #{g_synthesis_forward.13} parent=5 // pred_fallthru
      _
  $region6: #{g_synthesis_forward.13} parent=0 // loop_footer
    %s13 = sadd.s32 1, %s9
  $region7: #{g_synthesis_forward.13} parent=0 // loop_footer_branch
    %8 = sbr.rel target = $region3
  $region8: #{g_synthesis_forward.13} parent=0 // loop_exit
    _

</llo_original>
